<compile_context>
chip_gen: v5e
topology: v5e:2x2
jax: 0.10.0
libtpu: 0.0.40
codegen_flags: <defaults>
</compile_context>

<pallas_src>
from functools import partial

import jax
import jax.numpy as jnp
from jax.experimental import pallas as pl
from jax.experimental.pallas import tpu as pltpu


# ---------------------------------------------------------------------------
# Tunables
# ---------------------------------------------------------------------------
_CHUNK_BYTES = 128 * 1024        # in-kernel chunk: fits the 64 x 4 KiB vreg file + temps
_MAX_CHUNKS = 32                 # chunks per grid block (block <= ~4 MiB, bounded unroll)
_TARGET_GRID_STEPS = 8           # aim for >= this many M-axis grid steps when m permits
_FASTPATH_BYTES = 4 * 1024       # per-channel maps below this go to lax.reduce_window


# ---------------------------------------------------------------------------
# Pallas kernel
# ---------------------------------------------------------------------------

def _make_maxpool_kernel(k, mc, nc):
    """k: pool factor, mc: fused-NC rows per in-kernel chunk, nc: chunks per grid block."""

    def kernel(x_ref, o_ref):
        # x_ref: (tm, Hb*k | H, W) VMEM block; o_ref: (tm, Hb | Ho, Wo) VMEM block.
        hob = o_ref.shape[1]            # pooled rows produced by this block (static)
        wo = o_ref.shape[2]
        wv = wo * k                     # input cols actually pooled (floor mode)

        def chunk(ci, carry):
            start = pl.multiple_of(ci * mc, mc)
            # --- H pool: k sublane-strided reads, max-accumulated on the VPU -----------
            acc = x_ref[pl.ds(start, mc), pl.ds(0, hob, stride=k), :]
            for j in range(1, k):
                acc = jnp.maximum(
                    acc, x_ref[pl.ds(start, mc), pl.ds(j, hob, stride=k), :])
            # --- W pool: regroup lanes as (Wo, k) windows and reduce --------------------
            # TODO(synk): Mosaic strided loads require a unit stride on the minormost dim,
            # so the review's lane-strided-read variant is not lowerable; a roll-cascade +
            # one-hot MXU decimation could remove this lane regroup entirely.
            xw = jnp.max(acc[:, :, :wv].reshape(mc, hob, wo, k), axis=-1)
            o_ref[pl.ds(start, mc), :, :] = xw.astype(o_ref.dtype)
            return carry

        jax.lax.fori_loop(0, nc, chunk, 0, unroll=True)

    return kernel


# ---------------------------------------------------------------------------
# Reference / fast-path pooling (pure XLA)
# ---------------------------------------------------------------------------

def _maxpool_reference(x, k):
    init = jnp.array(-jnp.inf, dtype=x.dtype)
    return jax.lax.reduce_window(
        x, init, jax.lax.max,
        window_dimensions=(1, 1, k, k),
        window_strides=(1, 1, k, k),
        padding="VALID",
    )


# ---------------------------------------------------------------------------
# Wrapper
# ---------------------------------------------------------------------------

@partial(jax.jit, static_argnames=("k",))
def maxpool2d_pallas(x, *, k):
    """Non-overlapping max pool (kernel=stride=k, padding=0, floor mode) over NCHW."""
    n, c, h, w = x.shape
    k = int(k)
    ho, wo = h // k, w // k
    if ho < 1 or wo < 1:
        raise ValueError(f"pool window {k} larger than spatial dims {(h, w)}")
    if k == 1:
        return x

    itemsize = jnp.dtype(x.dtype).itemsize

    # Tiny-map fast path (typical deep pyramid levels, e.g. 16x16 ViT maps): at W << 128
    # lanes the NCHW Pallas layout runs at a few % lane occupancy and per-call overhead
    # dominates, so defer to XLA.
    # TODO(synk): a channels-last Pallas variant (C on lanes) would cover this natively.
    if h * w * itemsize <= _FASTPATH_BYTES:
        return _maxpool_reference(x, k)

    m = n * c
    x3 = x.reshape(m, h, w)                       # contiguous reshape: no data movement

    # ---- optional H-axis split: keep one grid block's input <= ~4 MiB -----------------
    block_budget = _CHUNK_BYTES * _MAX_CHUNKS
    if h * w * itemsize > block_budget and ho > 8:
        hb = (block_budget // (k * w * itemsize)) // 8 * 8    # multiple of 8 for BlockSpec
        hb = int(max(8, min(hb, ho)))
        grid_h = int(pl.cdiv(ho, hb))
    else:
        hb, grid_h = ho, 1
    if grid_h == 1:
        hb = ho
        h_in_blk = h                 # full extent (also covers h % k != 0, floor mode)
    else:
        h_in_blk = hb * k

    # ---- fused-NC (M) tiling -----------------------------------------------------------
    row_bytes = h_in_blk * w * itemsize
    # ~128 KiB of input per in-kernel chunk, but allow >= 2 M-chunks when m permits.
    mc = int(max(1, min(m, _CHUNK_BYTES // row_bytes, pl.cdiv(m, 2))))
    rows_budget = max(mc, block_budget // row_bytes)              # block <= ~4 MiB
    rows_steps = max(mc, int(pl.cdiv(m, _TARGET_GRID_STEPS)))     # >= ~8 grid steps if possible
    tm = int(min(m, rows_budget, rows_steps))
    nc = int(min(_MAX_CHUNKS, pl.cdiv(tm, mc)))
    tm = nc * mc
    grid_m = int(pl.cdiv(m, tm))

    out3 = pl.pallas_call(
        _make_maxpool_kernel(k, mc, nc),
        out_shape=jax.ShapeDtypeStruct((m, ho, wo), x.dtype),
        grid=(grid_m, grid_h),
        in_specs=[pl.BlockSpec((tm, h_in_blk, w), lambda i, j: (i, j, 0))],
        out_specs=pl.BlockSpec((tm, hb, wo), lambda i, j: (i, j, 0)),
        compiler_params=pltpu.CompilerParams(
            dimension_semantics=("parallel", "parallel"),   # shardable across v7x's 2 TCs
            vmem_limit_bytes=32 * 1024 * 1024,
        ),
        cost_estimate=pl.CostEstimate(
            flops=m * ho * wo * (k * k - 1),                # max-compares
            transcendentals=0,
            bytes_accessed=(m * h * w + m * ho * wo) * itemsize,
        ),
    )(x3)
    return out3.reshape(n, c, ho, wo)


# ---------------------------------------------------------------------------
# Module
# ---------------------------------------------------------------------------

class MaxpoolToPyramidalPallas:
    """Pallas TPU port of terratorch's MaxpoolToPyramidal neck (forward pass)."""

    def __init__(self, channel_list, kernel_size: int = 2):
        self.channel_list = list(channel_list)
        self.kernel_size = int(kernel_size)

    def process_channel_list(self, channel_list):
        return list(channel_list)

    def __call__(self, features):
        out = []
        for exponent, x in enumerate(features):
            k = self.kernel_size ** exponent
            if k == 1:
                # torch's x.clone(): JAX arrays are immutable, so returning x is
                # value-equivalent and avoids an extra HBM read+write.
                out.append(x)
            else:
                out.append(maxpool2d_pallas(x, k=k))
        return out


# ---------------------------------------------------------------------------

if __name__ == "__main__":
    key = jax.random.PRNGKey(0)

    # ---- MaxpoolToPyramidal forward at module-typical shapes (Pallas path on levels>0) ----
    batch, channels, spatial = 2, 4, 64
    num_levels, kernel_size = 4, 2               # pool factors 1, 2, 4, 8
    channel_list = [channels] * num_levels

    feats = []
    for _ in range(num_levels):
        key, sub = jax.random.split(key)
        feats.append(jax.random.normal(sub, (batch, channels, spatial, spatial), jnp.float32))

    neck = MaxpoolToPyramidalPallas(channel_list, kernel_size=kernel_size)
    outs = jax.block_until_ready(neck(feats))

    for i, (x, o) in enumerate(zip(feats, outs)):
        k = kernel_size ** i
        ref = x if k == 1 else _maxpool_reference(x, k)
        assert o.shape == ref.shape, (i, o.shape, ref.shape)
        # max pooling is pure selection -> results must be bit-exact
        assert bool(jnp.array_equal(o, ref)), f"mismatch at level {i} (k={k})"

    # ---- wide maps (W >= 128): lane-occupied Pallas path with several grid steps ----
    key, sub = jax.random.split(key)
    x_wide = jax.random.normal(sub, (2, 3, 96, 256), jnp.float32)
    for k in (2, 4):
        o = jax.block_until_ready(maxpool2d_pallas(x_wide, k=k))
        r = _maxpool_reference(x_wide, k)
        assert o.shape == r.shape, (k, o.shape, r.shape)
        assert bool(jnp.array_equal(o, r)), f"wide-map mismatch (k={k})"

    # ---- floor mode: trailing rows/cols that don't fill a full window are dropped ----
    key, sub = jax.random.split(key)
    x_odd = jax.random.normal(sub, (1, 3, 70, 258), jnp.float32)
    o_odd = jax.block_until_ready(maxpool2d_pallas(x_odd, k=4))
    r_odd = _maxpool_reference(x_odd, 4)
    assert o_odd.shape == (1, 3, 17, 64), o_odd.shape
    assert bool(jnp.array_equal(o_odd, r_odd)), "floor-mode mismatch"

    # ---- tiny deep-pyramid maps take the reduce_window fast path ----
    key, sub = jax.random.split(key)
    x_tiny = jax.random.normal(sub, (2, 4, 16, 16), jnp.float32)
    o_tiny = jax.block_until_ready(maxpool2d_pallas(x_tiny, k=2))
    assert bool(jnp.array_equal(o_tiny, _maxpool_reference(x_tiny, 2))), "tiny-map mismatch"

    print("KERNEL_OK")
</pallas_src>

<mosaic_0001>
module attributes {stable_mosaic.version = 11 : i64} {
  func.func @kernel(%arg0: i32, %arg1: i32, %arg2: memref<4x64x64xf32, #tpu.memory_space<vmem>>, %arg3: memref<4x32x32xf32, #tpu.memory_space<vmem>>) attributes {dimension_semantics = [#tpu.dimension_semantics<parallel>, #tpu.dimension_semantics<parallel>], iteration_bounds = array<i64: 2, 1>, scalar_prefetch = 0 : i64, scratch_operands = 0 : i64, tpu.core_type = #tpu.core_type<tc>, window_params = [{transform_indices = @transform_0, window_bounds = array<i64: 4, 64, 64>}, {transform_indices = @transform_1, window_bounds = array<i64: 4, 32, 32>}]} {
    %c0_i32 = arith.constant 0 : i32
    %c4_i32 = arith.constant 4 : i32
    %0 = arith.muli %c0_i32, %c4_i32 : i32
    %1 = tpu.assume_multiple %0, 4 : i32
    %2 = arith.index_cast %1 : i32 to index
    %c0 = arith.constant 0 : index
    %c0_0 = arith.constant 0 : index
    %3 = tpu.strided_load %arg2[%2, %c0, %c0_0] {strides = array<i32: 1, 2, 1>} : memref<4x64x64xf32, #tpu.memory_space<vmem>>, vector<4x32x64xf32>
    %4 = arith.index_cast %1 : i32 to index
    %c1 = arith.constant 1 : index
    %c0_1 = arith.constant 0 : index
    %5 = tpu.strided_load %arg2[%4, %c1, %c0_1] {strides = array<i32: 1, 2, 1>} : memref<4x64x64xf32, #tpu.memory_space<vmem>>, vector<4x32x64xf32>
    %6 = arith.maximumf %3, %5 : vector<4x32x64xf32>
    %7 = vector.shape_cast %6 : vector<4x32x64xf32> to vector<4x32x32x2xf32>
    %cst = arith.constant dense<0xFF800000> : vector<4x32x32xf32>
    %8 = vector.multi_reduction <maximumf>, %7, %cst [3] : vector<4x32x32x2xf32> to vector<4x32x32xf32>
    %9 = arith.index_cast %1 : i32 to index
    %c0_2 = arith.constant 0 : index
    %c0_3 = arith.constant 0 : index
    %10 = vector.load %arg3[%9, %c0_2, %c0_3] : memref<4x32x32xf32, #tpu.memory_space<vmem>>, vector<4x32x32xf32>
    tpu.vector_store %arg3[%9, %c0_2, %c0_3], %8 {strides = array<i32>} : memref<4x32x32xf32, #tpu.memory_space<vmem>>, vector<4x32x32xf32>,
    %c1_i32 = arith.constant 1 : i32
    return
  }
  func.func @transform_0(%arg0: i32, %arg1: i32) -> (i32, i32, i32) {
    %c0_i32 = arith.constant 0 : i32
    %c0_i32_0 = arith.constant 0 : i32
    return %arg0, %arg1, %c0_i32 : i32, i32, i32
  }
  func.func @transform_1(%arg0: i32, %arg1: i32) -> (i32, i32, i32) {
    %c0_i32 = arith.constant 0 : i32
    %c0_i32_0 = arith.constant 0 : i32
    return %arg0, %arg1, %c0_i32 : i32, i32, i32
  }
}

</mosaic_0001>

<llo_original>
// kernel: maxpool2d_pallas.1
$region0: #{maxpool2d_pallas.1}
  #allocation0 [shape = 'u32[]', space=smem, size = 0x4, offset = 0x4, fixed_abs, tag = 'smem constant byte address 0x4 - core index']
  #allocation1 [shape = 'u32[72,128]{1,0:T(1,128)}', space=vmem, size = 0x9000, scoped, tag = 'internal scratch']
  %s0 = inlined_call_operand.hbm [shape: f32[8,64,64], index: 0, kind: input, shape index: {}]
  %s1 = inlined_call_operand.hbm [shape: f32[8,32,32], index: 1, kind: output, shape index: {}]
  %s2 = sld [smem:[#allocation0]]
  $region41: #{maxpool2d_pallas.1} parent=0
    _
  %s4 = ssub.s32 1, %s2
  %s5 = scalar_select 0, %s4, %s2
  $region1: #{maxpool2d_pallas.1} parent=0
    #allocation2 [shape = 'u8[262144]{0}', space=vmem, size = 0x40000, scoped, tag = 'input window, operand 0']
    #allocation3 [shape = 's32[2]{0}', space=sflag, size = 0x8, scoped, tag = 'scoped memory for maxpool2d_pallas.1']
    #allocation4 [shape = 's32[2]{0}', space=sflag, size = 0x8, scoped, tag = 'scoped memory for maxpool2d_pallas.1']
    #allocation5 [shape = 'u8[131072]{0}', space=vmem, size = 0x20000, scoped, tag = 'output window, operand 0']
    %6 = vsyncpa [#allocation3], 0
    %s7 = scalar_lea.sflag [#allocation3], 1
    %8 = vsyncpa %s7, 0
    %9 = vsyncpa [#allocation4], 0
    %s10 = scalar_lea.sflag [#allocation4], 1
    %11 = vsyncpa %s10, 0
    loop: start=0, step=1, limit=4
    $region2: #{maxpool2d_pallas.1} parent=1 // loop_pre_header
      _
    $region3: #{maxpool2d_pallas.1} parent=1 // loop_header
      %s13 = sphi 0, %s17
      %p14 = scmp.ge.s32.totalorder %s13, 4
      %s20 = sphi 0, %s32
      %s21 = sphi 0, %s28
      %s22 = sphi 0, %s20
      %s23 = sphi 0, %s21
      %s24 = sphi 0, %s22
      %s25 = sphi 0, %s23
      %s37 = sphi 0, %s39
      %s40 = sphi 0, %s37
      %s41 = sphi 0, %s40
      %s57 = sphi 0, %s41
      %s65 = sphi 0, %s67
      %s68 = sphi 0, %s65
      %s69 = sphi 0, %s68
      %s85 = sphi 0, %s69
    $region4: #{maxpool2d_pallas.1} parent=1 // loop_header_branch
      %16 = sbr.rel (%p14) target = $region8
    $region5: #{maxpool2d_pallas.1} parent=1 // loop_body
      %s18 = ssub.s32 %s13, 1
      %s19 = ssub.s32 %s13, 2
      %s26 = sadd.s32 1, %s21
      %p27 = scmp.ge.s32.totalorder %s26, 1
      %s28 = scalar_select %p27, 0, %s26
      %s29 = sadd.s32 1, %s20
      %s30 = scalar_select %p27, %s29, %s20
      %p31 = scmp.ge.s32.totalorder %s30, 2
      %s32 = scalar_select %p31, 0, %s30
      %s33 = ssub.s32 %s20, %s32
      %s34 = ssub.s32 %s21, %s28
      %s35 = sor.u32 %s33, %s34
      %p36 = scmp.eq.s32.totalorder %s35, 0
      %s38 = sadd.s32 %s37, 1
      %s39 = scalar_select %p36, %s37, %s38
      %p42 = pneg %p36
      %p43 = scmp.eq.s32.totalorder %s13, 1
      %p44 = por %p42, %p43
      %p45 = scmp.ne.s32.totalorder %s37, %s40
      %p46 = scmp.eq.s32.totalorder %s13, 0
      %p47 = por %p45, %p46
      %p48 = scmp.ne.s32.totalorder %s37, %s40
      %p49 = scmp.eq.s32.totalorder %s18, 1
      %p50 = por %p48, %p49
      %p51 = scmp.ne.s32.totalorder %s40, %s41
      %p52 = scmp.eq.s32.totalorder %s18, 0
      %p53 = por %p51, %p52
      %p54 = scmp.ne.s32.totalorder %s40, %s41
      %p55 = scmp.eq.s32.totalorder %s19, 1
      %p56 = por %p54, %p55
      %p58 = scmp.ne.s32.totalorder %s41, %s57
      %p59 = scmp.eq.s32.totalorder %s19, 0
      %p60 = por %p58, %p59
      %s61 = ssub.s32 %s20, %s32
      %s62 = ssub.s32 %s21, %s28
      %s63 = sor.u32 %s61, %s62
      %p64 = scmp.eq.s32.totalorder %s63, 0
      %s66 = sadd.s32 %s65, 1
      %s67 = scalar_select %p64, %s65, %s66
      %p70 = pneg %p64
      %p71 = scmp.eq.s32.totalorder %s13, 1
      %p72 = por %p70, %p71
      %p73 = scmp.ne.s32.totalorder %s65, %s68
      %p74 = scmp.eq.s32.totalorder %s13, 0
      %p75 = por %p73, %p74
      %p76 = scmp.ne.s32.totalorder %s65, %s68
      %p77 = scmp.eq.s32.totalorder %s18, 1
      %p78 = por %p76, %p77
      %p79 = scmp.ne.s32.totalorder %s68, %s69
      %p80 = scmp.eq.s32.totalorder %s18, 0
      %p81 = por %p79, %p80
      %p82 = scmp.ne.s32.totalorder %s68, %s69
      %p83 = scmp.eq.s32.totalorder %s19, 1
      %p84 = por %p82, %p83
      %p86 = scmp.ne.s32.totalorder %s69, %s85
      %p87 = scmp.eq.s32.totalorder %s19, 0
      %p88 = por %p86, %p87
      %p89 = scmp.le.s32.totalorder 1, %s13
      %p90 = scmp.lt.s32.totalorder %s13, 3
      %p91 = pnand %p89, %p90
      %p92 = pneg %p91
      // Predicated region
      $region9: #{maxpool2d_pallas.1} parent=5 // pred_check
        _
      $region10: #{maxpool2d_pallas.1} parent=5 // pred_check_branch
        %94 = sbr.rel (%p91) target = $region12
      $region11: #{maxpool2d_pallas.1} parent=5 // pred_region
        %s95 = ssub.s32 %s13, 1
      $region12: #{maxpool2d_pallas.1} parent=5 // pred_fallthru
        _
      %p96 = scmp.lt.s32.totalorder %s13, 2
      // Predicated region
      $region13: #{maxpool2d_pallas.1} parent=5 // pred_check
        %p97 = pneg %p96
      $region14: #{maxpool2d_pallas.1} parent=5 // pred_check_branch
        %99 = sbr.rel (%p97) target = $region16
      $region15: #{maxpool2d_pallas.1} parent=5 // pred_region
        // Predicated region
        $region17: #{maxpool2d_pallas.1} parent=15 // pred_check
          %p100 = pneg %p47
        $region18: #{maxpool2d_pallas.1} parent=15 // pred_check_branch
          %102 = sbr.rel (%p100) target = $region20
        $region19: #{maxpool2d_pallas.1} parent=15 // pred_region
          %s103 = sand.u32 %s37, 1
          %s104 = scalar_lea.sflag [#allocation3], %s103
          %s105 = sand.u32 %s37, 1
          %s106 = smul.addr %s105, 256
          %s107 = scalar_lea.vmem [#allocation2], %s106
          %s108 = smul.u32 4, %s20
          %s109 = smul.u32 8, %s21
          %111 = vsyncadd %s104, 0
          %s112 = smul.addr %s108, 8
          %s113 = sadd.s32 %s109, %s112
          %s114 = smul.addr %s113, 8
          %s115 = scalar_lea.hbm %s0, %s114
          %s116 = sshll.u32 %s115, 4
          %s117 = int_to_ptr.hbm [resolvable:$true] %s116
          %s118 = sshll.u32 %s107, 4
          %s119 = int_to_ptr.vmem [resolvable:$true] %s118
          %124 = dma.hbm_to_vmem [thread:$0]  %s117, 4096, %s119, %s104, 128, 128, 8
        $region20: #{maxpool2d_pallas.1} parent=15 // pred_fallthru
          _
      $region16: #{maxpool2d_pallas.1} parent=5 // pred_fallthru
        _
      %p125 = scmp.le.s32.totalorder 1, %s13
      %p126 = scmp.lt.s32.totalorder %s13, 3
      %p127 = pnand %p125, %p126
      %p128 = pneg %p127
      // Predicated region
      $region21: #{maxpool2d_pallas.1} parent=5 // pred_check
        _
      $region22: #{maxpool2d_pallas.1} parent=5 // pred_check_branch
        %130 = sbr.rel (%p127) target = $region24
      $region23: #{maxpool2d_pallas.1} parent=5 // pred_region
        %s131 = ssub.s32 %s13, 1
        %s132 = sand.u32 %s40, 1
        %s133 = scalar_lea.sflag [#allocation3], %s132
        %s134 = sand.u32 %s40, 1
        %s135 = smul.addr %s134, 256
        %s136 = scalar_lea.vmem [#allocation2], %s135
        // Predicated region
        $region25: #{maxpool2d_pallas.1} parent=23 // pred_check
          %p137 = pneg %p53
        $region26: #{maxpool2d_pallas.1} parent=23 // pred_check_branch
          %139 = sbr.rel (%p137) target = $region28
        $region27: #{maxpool2d_pallas.1} parent=23 // pred_region
          %141 = dma.done %s133, 4096
        $region28: #{maxpool2d_pallas.1} parent=23 // pred_fallthru
          _
        %s142 = sand.u32 %s40, 1
        %s143 = scalar_lea.sflag [#allocation3], %s142
        %s144 = sand.u32 %s40, 1
        %s145 = smul.addr %s144, 256
        %s146 = scalar_lea.vmem [#allocation2], %s145
        %p147 = pneg %p53
        %p148 = pneg %p50
        %p149 = pneg %p81
        %p150 = pneg %p78
        %s151 = sand.u32 %s68, 1
        %s152 = scalar_lea.sflag [#allocation4], %s151
        %s153 = sand.u32 %s68, 1
        %s154 = smul.addr %s153, 128
        %s155 = scalar_lea.vmem [#allocation5], %s154
        %s156 = smul.u32 4, %s22
        %s157 = smul.u32 8, %s23
        %s158 = smul.u32 4, %s22
        %s159 = smul.u32 4, %s23
        %s160 = smul.u32 0, 64
        %s161 = scalar_lea.vmem %s136, %s160 [#allocation2]
        %v162 = vld [vmem:[%s161] ss:$2 sm:$0xff]
        %s163 = scalar_lea.vmem %s161, 16 [#allocation2]
        %v164 = vld [vmem:[%s163] ss:$2 sm:$0xff]
        %s165 = scalar_lea.vmem %s161, 32 [#allocation2]
        %v166 = vld [vmem:[%s165] ss:$2 sm:$0xff]
        %s167 = scalar_lea.vmem %s161, 48 [#allocation2]
        %v168 = vld [vmem:[%s167] ss:$2 sm:$0xff]
        %s169 = scalar_lea.vmem %s161, 64 [#allocation2]
        %v170 = vld [vmem:[%s169] ss:$2 sm:$0xff]
        %s171 = scalar_lea.vmem %s161, 80 [#allocation2]
        %v172 = vld [vmem:[%s171] ss:$2 sm:$0xff]
        %s173 = scalar_lea.vmem %s161, 96 [#allocation2]
        %v174 = vld [vmem:[%s173] ss:$2 sm:$0xff]
        %s175 = scalar_lea.vmem %s161, 112 [#allocation2]
        %v176 = vld [vmem:[%s175] ss:$2 sm:$0xff]
        %s177 = scalar_lea.vmem %s161, 128 [#allocation2]
        %v178 = vld [vmem:[%s177] ss:$2 sm:$0xff]
        %s179 = scalar_lea.vmem %s161, 144 [#allocation2]
        %v180 = vld [vmem:[%s179] ss:$2 sm:$0xff]
        %s181 = scalar_lea.vmem %s161, 160 [#allocation2]
        %v182 = vld [vmem:[%s181] ss:$2 sm:$0xff]
        %s183 = scalar_lea.vmem %s161, 176 [#allocation2]
        %v184 = vld [vmem:[%s183] ss:$2 sm:$0xff]
        %s185 = scalar_lea.vmem %s161, 192 [#allocation2]
        %v186 = vld [vmem:[%s185] ss:$2 sm:$0xff]
        %s187 = scalar_lea.vmem %s161, 208 [#allocation2]
        %v188 = vld [vmem:[%s187] ss:$2 sm:$0xff]
        %s189 = scalar_lea.vmem %s161, 224 [#allocation2]
        %v190 = vld [vmem:[%s189] ss:$2 sm:$0xff]
        %s191 = scalar_lea.vmem %s161, 240 [#allocation2]
        %v192 = vld [vmem:[%s191] ss:$2 sm:$0xff]
        %s193 = scalar_lea.vmem %s161, 1 [#allocation2]
        %v194 = vld [vmem:[%s193] ss:$2 sm:$0xff]
        %s195 = scalar_lea.vmem %s161, 17 [#allocation2]
        %v196 = vld [vmem:[%s195] ss:$2 sm:$0xff]
        %s197 = scalar_lea.vmem %s161, 33 [#allocation2]
        %v198 = vld [vmem:[%s197] ss:$2 sm:$0xff]
        %s199 = scalar_lea.vmem %s161, 49 [#allocation2]
        %v200 = vld [vmem:[%s199] ss:$2 sm:$0xff]
        %s201 = scalar_lea.vmem %s161, 65 [#allocation2]
        %v202 = vld [vmem:[%s201] ss:$2 sm:$0xff]
        %s203 = scalar_lea.vmem %s161, 81 [#allocation2]
        %v204 = vld [vmem:[%s203] ss:$2 sm:$0xff]
        %s205 = scalar_lea.vmem %s161, 97 [#allocation2]
        %v206 = vld [vmem:[%s205] ss:$2 sm:$0xff]
        %s207 = scalar_lea.vmem %s161, 113 [#allocation2]
        %v208 = vld [vmem:[%s207] ss:$2 sm:$0xff]
        %s209 = scalar_lea.vmem %s161, 129 [#allocation2]
        %v210 = vld [vmem:[%s209] ss:$2 sm:$0xff]
        %s211 = scalar_lea.vmem %s161, 145 [#allocation2]
        %v212 = vld [vmem:[%s211] ss:$2 sm:$0xff]
        %s213 = scalar_lea.vmem %s161, 161 [#allocation2]
        %v214 = vld [vmem:[%s213] ss:$2 sm:$0xff]
        %s215 = scalar_lea.vmem %s161, 177 [#allocation2]
        %v216 = vld [vmem:[%s215] ss:$2 sm:$0xff]
        %s217 = scalar_lea.vmem %s161, 193 [#allocation2]
        %v218 = vld [vmem:[%s217] ss:$2 sm:$0xff]
        %s219 = scalar_lea.vmem %s161, 209 [#allocation2]
        %v220 = vld [vmem:[%s219] ss:$2 sm:$0xff]
        %s221 = scalar_lea.vmem %s161, 225 [#allocation2]
        %v222 = vld [vmem:[%s221] ss:$2 sm:$0xff]
        %s223 = scalar_lea.vmem %s161, 241 [#allocation2]
        %v224 = vld [vmem:[%s223] ss:$2 sm:$0xff]
        %v225 = vmax.f32 %v162, %v194
        %v226 = vmax.f32 %v164, %v196
        %v227 = vmax.f32 %v166, %v198
        %v228 = vmax.f32 %v168, %v200
        %v229 = vmax.f32 %v170, %v202
        %v230 = vmax.f32 %v172, %v204
        %v231 = vmax.f32 %v174, %v206
        %v232 = vmax.f32 %v176, %v208
        %v233 = vmax.f32 %v178, %v210
        %v234 = vmax.f32 %v180, %v212
        %v235 = vmax.f32 %v182, %v214
        %v236 = vmax.f32 %v184, %v216
        %v237 = vmax.f32 %v186, %v218
        %v238 = vmax.f32 %v188, %v220
        %v239 = vmax.f32 %v190, %v222
        %v240 = vmax.f32 %v192, %v224
        %257 = vrot.lane.b32.xlu0 %v225, 126
        %v258 = vpop.permute.xlu0 %257
        %259 = vrot.lane.b32.xlu0 %v226, 126
        %v260 = vpop.permute.xlu0 %259
        %261 = vrot.lane.b32.xlu0 %v227, 126
        %v262 = vpop.permute.xlu0 %261
        %263 = vrot.lane.b32.xlu0 %v228, 126
        %v264 = vpop.permute.xlu0 %263
        %265 = vrot.lane.b32.xlu0 %v229, 126
        %v266 = vpop.permute.xlu0 %265
        %267 = vrot.lane.b32.xlu0 %v230, 126
        %v268 = vpop.permute.xlu0 %267
        %269 = vrot.lane.b32.xlu0 %v231, 126
        %v270 = vpop.permute.xlu0 %269
        %271 = vrot.lane.b32.xlu0 %v232, 126
        %v272 = vpop.permute.xlu0 %271
        %273 = vrot.lane.b32.xlu0 %v233, 126
        %v274 = vpop.permute.xlu0 %273
        %275 = vrot.lane.b32.xlu0 %v234, 126
        %v276 = vpop.permute.xlu0 %275
        %277 = vrot.lane.b32.xlu0 %v235, 126
        %v278 = vpop.permute.xlu0 %277
        %279 = vrot.lane.b32.xlu0 %v236, 126
        %v280 = vpop.permute.xlu0 %279
        %281 = vrot.lane.b32.xlu0 %v237, 126
        %v282 = vpop.permute.xlu0 %281
        %283 = vrot.lane.b32.xlu0 %v238, 126
        %v284 = vpop.permute.xlu0 %283
        %285 = vrot.lane.b32.xlu0 %v239, 126
        %v286 = vpop.permute.xlu0 %285
        %287 = vrot.lane.b32.xlu0 %v240, 126
        %v288 = vpop.permute.xlu0 %287
        %305 = vrot.lane.b32.xlu0 %v225, 124
        %v306 = vpop.permute.xlu0 %305
        %307 = vrot.lane.b32.xlu0 %v226, 124
        %v308 = vpop.permute.xlu0 %307
        %309 = vrot.lane.b32.xlu0 %v227, 124
        %v310 = vpop.permute.xlu0 %309
        %311 = vrot.lane.b32.xlu0 %v228, 124
        %v312 = vpop.permute.xlu0 %311
        %313 = vrot.lane.b32.xlu0 %v229, 124
        %v314 = vpop.permute.xlu0 %313
        %315 = vrot.lane.b32.xlu0 %v230, 124
        %v316 = vpop.permute.xlu0 %315
        %317 = vrot.lane.b32.xlu0 %v231, 124
        %v318 = vpop.permute.xlu0 %317
        %319 = vrot.lane.b32.xlu0 %v232, 124
        %v320 = vpop.permute.xlu0 %319
        %321 = vrot.lane.b32.xlu0 %v233, 124
        %v322 = vpop.permute.xlu0 %321
        %323 = vrot.lane.b32.xlu0 %v234, 124
        %v324 = vpop.permute.xlu0 %323
        %325 = vrot.lane.b32.xlu0 %v235, 124
        %v326 = vpop.permute.xlu0 %325
        %327 = vrot.lane.b32.xlu0 %v236, 124
        %v328 = vpop.permute.xlu0 %327
        %329 = vrot.lane.b32.xlu0 %v237, 124
        %v330 = vpop.permute.xlu0 %329
        %331 = vrot.lane.b32.xlu0 %v238, 124
        %v332 = vpop.permute.xlu0 %331
        %333 = vrot.lane.b32.xlu0 %v239, 124
        %v334 = vpop.permute.xlu0 %333
        %335 = vrot.lane.b32.xlu0 %v240, 124
        %v336 = vpop.permute.xlu0 %335
        %353 = vrot.lane.b32.xlu0 %v225, 122
        %v354 = vpop.permute.xlu0 %353
        %355 = vrot.lane.b32.xlu0 %v226, 122
        %v356 = vpop.permute.xlu0 %355
        %357 = vrot.lane.b32.xlu0 %v227, 122
        %v358 = vpop.permute.xlu0 %357
        %359 = vrot.lane.b32.xlu0 %v228, 122
        %v360 = vpop.permute.xlu0 %359
        %361 = vrot.lane.b32.xlu0 %v229, 122
        %v362 = vpop.permute.xlu0 %361
        %363 = vrot.lane.b32.xlu0 %v230, 122
        %v364 = vpop.permute.xlu0 %363
        %365 = vrot.lane.b32.xlu0 %v231, 122
        %v366 = vpop.permute.xlu0 %365
        %367 = vrot.lane.b32.xlu0 %v232, 122
        %v368 = vpop.permute.xlu0 %367
        %369 = vrot.lane.b32.xlu0 %v233, 122
        %v370 = vpop.permute.xlu0 %369
        %371 = vrot.lane.b32.xlu0 %v234, 122
        %v372 = vpop.permute.xlu0 %371
        %373 = vrot.lane.b32.xlu0 %v235, 122
        %v374 = vpop.permute.xlu0 %373
        %375 = vrot.lane.b32.xlu0 %v236, 122
        %v376 = vpop.permute.xlu0 %375
        %377 = vrot.lane.b32.xlu0 %v237, 122
        %v378 = vpop.permute.xlu0 %377
        %379 = vrot.lane.b32.xlu0 %v238, 122
        %v380 = vpop.permute.xlu0 %379
        %381 = vrot.lane.b32.xlu0 %v239, 122
        %v382 = vpop.permute.xlu0 %381
        %383 = vrot.lane.b32.xlu0 %v240, 122
        %v384 = vpop.permute.xlu0 %383
        %401 = vrot.lane.b32.xlu0 %v225, 120
        %v402 = vpop.permute.xlu0 %401
        %403 = vrot.lane.b32.xlu0 %v226, 120
        %v404 = vpop.permute.xlu0 %403
        %405 = vrot.lane.b32.xlu0 %v227, 120
        %v406 = vpop.permute.xlu0 %405
        %407 = vrot.lane.b32.xlu0 %v228, 120
        %v408 = vpop.permute.xlu0 %407
        %409 = vrot.lane.b32.xlu0 %v229, 120
        %v410 = vpop.permute.xlu0 %409
        %411 = vrot.lane.b32.xlu0 %v230, 120
        %v412 = vpop.permute.xlu0 %411
        %413 = vrot.lane.b32.xlu0 %v231, 120
        %v414 = vpop.permute.xlu0 %413
        %415 = vrot.lane.b32.xlu0 %v232, 120
        %v416 = vpop.permute.xlu0 %415
        %417 = vrot.lane.b32.xlu0 %v233, 120
        %v418 = vpop.permute.xlu0 %417
        %419 = vrot.lane.b32.xlu0 %v234, 120
        %v420 = vpop.permute.xlu0 %419
        %421 = vrot.lane.b32.xlu0 %v235, 120
        %v422 = vpop.permute.xlu0 %421
        %423 = vrot.lane.b32.xlu0 %v236, 120
        %v424 = vpop.permute.xlu0 %423
        %425 = vrot.lane.b32.xlu0 %v237, 120
        %v426 = vpop.permute.xlu0 %425
        %427 = vrot.lane.b32.xlu0 %v238, 120
        %v428 = vpop.permute.xlu0 %427
        %429 = vrot.lane.b32.xlu0 %v239, 120
        %v430 = vpop.permute.xlu0 %429
        %431 = vrot.lane.b32.xlu0 %v240, 120
        %v432 = vpop.permute.xlu0 %431
        %449 = vrot.lane.b32.xlu0 %v225, 118
        %v450 = vpop.permute.xlu0 %449
        %451 = vrot.lane.b32.xlu0 %v226, 118
        %v452 = vpop.permute.xlu0 %451
        %453 = vrot.lane.b32.xlu0 %v227, 118
        %v454 = vpop.permute.xlu0 %453
        %455 = vrot.lane.b32.xlu0 %v228, 118
        %v456 = vpop.permute.xlu0 %455
        %457 = vrot.lane.b32.xlu0 %v229, 118
        %v458 = vpop.permute.xlu0 %457
        %459 = vrot.lane.b32.xlu0 %v230, 118
        %v460 = vpop.permute.xlu0 %459
        %461 = vrot.lane.b32.xlu0 %v231, 118
        %v462 = vpop.permute.xlu0 %461
        %463 = vrot.lane.b32.xlu0 %v232, 118
        %v464 = vpop.permute.xlu0 %463
        %465 = vrot.lane.b32.xlu0 %v233, 118
        %v466 = vpop.permute.xlu0 %465
        %467 = vrot.lane.b32.xlu0 %v234, 118
        %v468 = vpop.permute.xlu0 %467
        %469 = vrot.lane.b32.xlu0 %v235, 118
        %v470 = vpop.permute.xlu0 %469
        %471 = vrot.lane.b32.xlu0 %v236, 118
        %v472 = vpop.permute.xlu0 %471
        %473 = vrot.lane.b32.xlu0 %v237, 118
        %v474 = vpop.permute.xlu0 %473
        %475 = vrot.lane.b32.xlu0 %v238, 118
        %v476 = vpop.permute.xlu0 %475
        %477 = vrot.lane.b32.xlu0 %v239, 118
        %v478 = vpop.permute.xlu0 %477
        %479 = vrot.lane.b32.xlu0 %v240, 118
        %v480 = vpop.permute.xlu0 %479
        %497 = vrot.lane.b32.xlu0 %v225, 116
        %v498 = vpop.permute.xlu0 %497
        %499 = vrot.lane.b32.xlu0 %v226, 116
        %v500 = vpop.permute.xlu0 %499
        %501 = vrot.lane.b32.xlu0 %v227, 116
        %v502 = vpop.permute.xlu0 %501
        %503 = vrot.lane.b32.xlu0 %v228, 116
        %v504 = vpop.permute.xlu0 %503
        %505 = vrot.lane.b32.xlu0 %v229, 116
        %v506 = vpop.permute.xlu0 %505
        %507 = vrot.lane.b32.xlu0 %v230, 116
        %v508 = vpop.permute.xlu0 %507
        %509 = vrot.lane.b32.xlu0 %v231, 116
        %v510 = vpop.permute.xlu0 %509
        %511 = vrot.lane.b32.xlu0 %v232, 116
        %v512 = vpop.permute.xlu0 %511
        %513 = vrot.lane.b32.xlu0 %v233, 116
        %v514 = vpop.permute.xlu0 %513
        %515 = vrot.lane.b32.xlu0 %v234, 116
        %v516 = vpop.permute.xlu0 %515
        %517 = vrot.lane.b32.xlu0 %v235, 116
        %v518 = vpop.permute.xlu0 %517
        %519 = vrot.lane.b32.xlu0 %v236, 116
        %v520 = vpop.permute.xlu0 %519
        %521 = vrot.lane.b32.xlu0 %v237, 116
        %v522 = vpop.permute.xlu0 %521
        %523 = vrot.lane.b32.xlu0 %v238, 116
        %v524 = vpop.permute.xlu0 %523
        %525 = vrot.lane.b32.xlu0 %v239, 116
        %v526 = vpop.permute.xlu0 %525
        %527 = vrot.lane.b32.xlu0 %v240, 116
        %v528 = vpop.permute.xlu0 %527
        %545 = vrot.lane.b32.xlu0 %v225, 114
        %v546 = vpop.permute.xlu0 %545
        %547 = vrot.lane.b32.xlu0 %v226, 114
        %v548 = vpop.permute.xlu0 %547
        %549 = vrot.lane.b32.xlu0 %v227, 114
        %v550 = vpop.permute.xlu0 %549
        %551 = vrot.lane.b32.xlu0 %v228, 114
        %v552 = vpop.permute.xlu0 %551
        %553 = vrot.lane.b32.xlu0 %v229, 114
        %v554 = vpop.permute.xlu0 %553
        %555 = vrot.lane.b32.xlu0 %v230, 114
        %v556 = vpop.permute.xlu0 %555
        %557 = vrot.lane.b32.xlu0 %v231, 114
        %v558 = vpop.permute.xlu0 %557
        %559 = vrot.lane.b32.xlu0 %v232, 114
        %v560 = vpop.permute.xlu0 %559
        %561 = vrot.lane.b32.xlu0 %v233, 114
        %v562 = vpop.permute.xlu0 %561
        %563 = vrot.lane.b32.xlu0 %v234, 114
        %v564 = vpop.permute.xlu0 %563
        %565 = vrot.lane.b32.xlu0 %v235, 114
        %v566 = vpop.permute.xlu0 %565
        %567 = vrot.lane.b32.xlu0 %v236, 114
        %v568 = vpop.permute.xlu0 %567
        %569 = vrot.lane.b32.xlu0 %v237, 114
        %v570 = vpop.permute.xlu0 %569
        %571 = vrot.lane.b32.xlu0 %v238, 114
        %v572 = vpop.permute.xlu0 %571
        %573 = vrot.lane.b32.xlu0 %v239, 114
        %v574 = vpop.permute.xlu0 %573
        %575 = vrot.lane.b32.xlu0 %v240, 114
        %v576 = vpop.permute.xlu0 %575
        %593 = vrot.lane.b32.xlu0 %v225, 112
        %v594 = vpop.permute.xlu0 %593
        %595 = vrot.lane.b32.xlu0 %v226, 112
        %v596 = vpop.permute.xlu0 %595
        %597 = vrot.lane.b32.xlu0 %v227, 112
        %v598 = vpop.permute.xlu0 %597
        %599 = vrot.lane.b32.xlu0 %v228, 112
        %v600 = vpop.permute.xlu0 %599
        %601 = vrot.lane.b32.xlu0 %v229, 112
        %v602 = vpop.permute.xlu0 %601
        %603 = vrot.lane.b32.xlu0 %v230, 112
        %v604 = vpop.permute.xlu0 %603
        %605 = vrot.lane.b32.xlu0 %v231, 112
        %v606 = vpop.permute.xlu0 %605
        %607 = vrot.lane.b32.xlu0 %v232, 112
        %v608 = vpop.permute.xlu0 %607
        %609 = vrot.lane.b32.xlu0 %v233, 112
        %v610 = vpop.permute.xlu0 %609
        %611 = vrot.lane.b32.xlu0 %v234, 112
        %v612 = vpop.permute.xlu0 %611
        %613 = vrot.lane.b32.xlu0 %v235, 112
        %v614 = vpop.permute.xlu0 %613
        %615 = vrot.lane.b32.xlu0 %v236, 112
        %v616 = vpop.permute.xlu0 %615
        %617 = vrot.lane.b32.xlu0 %v237, 112
        %v618 = vpop.permute.xlu0 %617
        %619 = vrot.lane.b32.xlu0 %v238, 112
        %v620 = vpop.permute.xlu0 %619
        %621 = vrot.lane.b32.xlu0 %v239, 112
        %v622 = vpop.permute.xlu0 %621
        %623 = vrot.lane.b32.xlu0 %v240, 112
        %v624 = vpop.permute.xlu0 %623
        %641 = vrot.lane.b32.xlu0 %v225, 110
        %v642 = vpop.permute.xlu0 %641
        %643 = vrot.lane.b32.xlu0 %v226, 110
        %v644 = vpop.permute.xlu0 %643
        %645 = vrot.lane.b32.xlu0 %v227, 110
        %v646 = vpop.permute.xlu0 %645
        %647 = vrot.lane.b32.xlu0 %v228, 110
        %v648 = vpop.permute.xlu0 %647
        %649 = vrot.lane.b32.xlu0 %v229, 110
        %v650 = vpop.permute.xlu0 %649
        %651 = vrot.lane.b32.xlu0 %v230, 110
        %v652 = vpop.permute.xlu0 %651
        %653 = vrot.lane.b32.xlu0 %v231, 110
        %v654 = vpop.permute.xlu0 %653
        %655 = vrot.lane.b32.xlu0 %v232, 110
        %v656 = vpop.permute.xlu0 %655
        %657 = vrot.lane.b32.xlu0 %v233, 110
        %v658 = vpop.permute.xlu0 %657
        %659 = vrot.lane.b32.xlu0 %v234, 110
        %v660 = vpop.permute.xlu0 %659
        %661 = vrot.lane.b32.xlu0 %v235, 110
        %v662 = vpop.permute.xlu0 %661
        %663 = vrot.lane.b32.xlu0 %v236, 110
        %v664 = vpop.permute.xlu0 %663
        %665 = vrot.lane.b32.xlu0 %v237, 110
        %v666 = vpop.permute.xlu0 %665
        %667 = vrot.lane.b32.xlu0 %v238, 110
        %v668 = vpop.permute.xlu0 %667
        %669 = vrot.lane.b32.xlu0 %v239, 110
        %v670 = vpop.permute.xlu0 %669
        %671 = vrot.lane.b32.xlu0 %v240, 110
        %v672 = vpop.permute.xlu0 %671
        %689 = vrot.lane.b32.xlu0 %v225, 108
        %v690 = vpop.permute.xlu0 %689
        %691 = vrot.lane.b32.xlu0 %v226, 108
        %v692 = vpop.permute.xlu0 %691
        %693 = vrot.lane.b32.xlu0 %v227, 108
        %v694 = vpop.permute.xlu0 %693
        %695 = vrot.lane.b32.xlu0 %v228, 108
        %v696 = vpop.permute.xlu0 %695
        %697 = vrot.lane.b32.xlu0 %v229, 108
        %v698 = vpop.permute.xlu0 %697
        %699 = vrot.lane.b32.xlu0 %v230, 108
        %v700 = vpop.permute.xlu0 %699
        %701 = vrot.lane.b32.xlu0 %v231, 108
        %v702 = vpop.permute.xlu0 %701
        %703 = vrot.lane.b32.xlu0 %v232, 108
        %v704 = vpop.permute.xlu0 %703
        %705 = vrot.lane.b32.xlu0 %v233, 108
        %v706 = vpop.permute.xlu0 %705
        %707 = vrot.lane.b32.xlu0 %v234, 108
        %v708 = vpop.permute.xlu0 %707
        %709 = vrot.lane.b32.xlu0 %v235, 108
        %v710 = vpop.permute.xlu0 %709
        %711 = vrot.lane.b32.xlu0 %v236, 108
        %v712 = vpop.permute.xlu0 %711
        %713 = vrot.lane.b32.xlu0 %v237, 108
        %v714 = vpop.permute.xlu0 %713
        %715 = vrot.lane.b32.xlu0 %v238, 108
        %v716 = vpop.permute.xlu0 %715
        %717 = vrot.lane.b32.xlu0 %v239, 108
        %v718 = vpop.permute.xlu0 %717
        %719 = vrot.lane.b32.xlu0 %v240, 108
        %v720 = vpop.permute.xlu0 %719
        %737 = vrot.lane.b32.xlu0 %v225, 106
        %v738 = vpop.permute.xlu0 %737
        %739 = vrot.lane.b32.xlu0 %v226, 106
        %v740 = vpop.permute.xlu0 %739
        %741 = vrot.lane.b32.xlu0 %v227, 106
        %v742 = vpop.permute.xlu0 %741
        %743 = vrot.lane.b32.xlu0 %v228, 106
        %v744 = vpop.permute.xlu0 %743
        %745 = vrot.lane.b32.xlu0 %v229, 106
        %v746 = vpop.permute.xlu0 %745
        %747 = vrot.lane.b32.xlu0 %v230, 106
        %v748 = vpop.permute.xlu0 %747
        %749 = vrot.lane.b32.xlu0 %v231, 106
        %v750 = vpop.permute.xlu0 %749
        %751 = vrot.lane.b32.xlu0 %v232, 106
        %v752 = vpop.permute.xlu0 %751
        %753 = vrot.lane.b32.xlu0 %v233, 106
        %v754 = vpop.permute.xlu0 %753
        %755 = vrot.lane.b32.xlu0 %v234, 106
        %v756 = vpop.permute.xlu0 %755
        %757 = vrot.lane.b32.xlu0 %v235, 106
        %v758 = vpop.permute.xlu0 %757
        %759 = vrot.lane.b32.xlu0 %v236, 106
        %v760 = vpop.permute.xlu0 %759
        %761 = vrot.lane.b32.xlu0 %v237, 106
        %v762 = vpop.permute.xlu0 %761
        %763 = vrot.lane.b32.xlu0 %v238, 106
        %v764 = vpop.permute.xlu0 %763
        %765 = vrot.lane.b32.xlu0 %v239, 106
        %v766 = vpop.permute.xlu0 %765
        %767 = vrot.lane.b32.xlu0 %v240, 106
        %v768 = vpop.permute.xlu0 %767
        %785 = vrot.lane.b32.xlu0 %v225, 104
        %v786 = vpop.permute.xlu0 %785
        %787 = vrot.lane.b32.xlu0 %v226, 104
        %v788 = vpop.permute.xlu0 %787
        %789 = vrot.lane.b32.xlu0 %v227, 104
        %v790 = vpop.permute.xlu0 %789
        %791 = vrot.lane.b32.xlu0 %v228, 104
        %v792 = vpop.permute.xlu0 %791
        %793 = vrot.lane.b32.xlu0 %v229, 104
        %v794 = vpop.permute.xlu0 %793
        %795 = vrot.lane.b32.xlu0 %v230, 104
        %v796 = vpop.permute.xlu0 %795
        %797 = vrot.lane.b32.xlu0 %v231, 104
        %v798 = vpop.permute.xlu0 %797
        %799 = vrot.lane.b32.xlu0 %v232, 104
        %v800 = vpop.permute.xlu0 %799
        %801 = vrot.lane.b32.xlu0 %v233, 104
        %v802 = vpop.permute.xlu0 %801
        %803 = vrot.lane.b32.xlu0 %v234, 104
        %v804 = vpop.permute.xlu0 %803
        %805 = vrot.lane.b32.xlu0 %v235, 104
        %v806 = vpop.permute.xlu0 %805
        %807 = vrot.lane.b32.xlu0 %v236, 104
        %v808 = vpop.permute.xlu0 %807
        %809 = vrot.lane.b32.xlu0 %v237, 104
        %v810 = vpop.permute.xlu0 %809
        %811 = vrot.lane.b32.xlu0 %v238, 104
        %v812 = vpop.permute.xlu0 %811
        %813 = vrot.lane.b32.xlu0 %v239, 104
        %v814 = vpop.permute.xlu0 %813
        %815 = vrot.lane.b32.xlu0 %v240, 104
        %v816 = vpop.permute.xlu0 %815
        %833 = vrot.lane.b32.xlu0 %v225, 102
        %v834 = vpop.permute.xlu0 %833
        %835 = vrot.lane.b32.xlu0 %v226, 102
        %v836 = vpop.permute.xlu0 %835
        %837 = vrot.lane.b32.xlu0 %v227, 102
        %v838 = vpop.permute.xlu0 %837
        %839 = vrot.lane.b32.xlu0 %v228, 102
        %v840 = vpop.permute.xlu0 %839
        %841 = vrot.lane.b32.xlu0 %v229, 102
        %v842 = vpop.permute.xlu0 %841
        %843 = vrot.lane.b32.xlu0 %v230, 102
        %v844 = vpop.permute.xlu0 %843
        %845 = vrot.lane.b32.xlu0 %v231, 102
        %v846 = vpop.permute.xlu0 %845
        %847 = vrot.lane.b32.xlu0 %v232, 102
        %v848 = vpop.permute.xlu0 %847
        %849 = vrot.lane.b32.xlu0 %v233, 102
        %v850 = vpop.permute.xlu0 %849
        %851 = vrot.lane.b32.xlu0 %v234, 102
        %v852 = vpop.permute.xlu0 %851
        %853 = vrot.lane.b32.xlu0 %v235, 102
        %v854 = vpop.permute.xlu0 %853
        %855 = vrot.lane.b32.xlu0 %v236, 102
        %v856 = vpop.permute.xlu0 %855
        %857 = vrot.lane.b32.xlu0 %v237, 102
        %v858 = vpop.permute.xlu0 %857
        %859 = vrot.lane.b32.xlu0 %v238, 102
        %v860 = vpop.permute.xlu0 %859
        %861 = vrot.lane.b32.xlu0 %v239, 102
        %v862 = vpop.permute.xlu0 %861
        %863 = vrot.lane.b32.xlu0 %v240, 102
        %v864 = vpop.permute.xlu0 %863
        %881 = vrot.lane.b32.xlu0 %v225, 100
        %v882 = vpop.permute.xlu0 %881
        %883 = vrot.lane.b32.xlu0 %v226, 100
        %v884 = vpop.permute.xlu0 %883
        %885 = vrot.lane.b32.xlu0 %v227, 100
        %v886 = vpop.permute.xlu0 %885
        %887 = vrot.lane.b32.xlu0 %v228, 100
        %v888 = vpop.permute.xlu0 %887
        %889 = vrot.lane.b32.xlu0 %v229, 100
        %v890 = vpop.permute.xlu0 %889
        %891 = vrot.lane.b32.xlu0 %v230, 100
        %v892 = vpop.permute.xlu0 %891
        %893 = vrot.lane.b32.xlu0 %v231, 100
        %v894 = vpop.permute.xlu0 %893
        %895 = vrot.lane.b32.xlu0 %v232, 100
        %v896 = vpop.permute.xlu0 %895
        %897 = vrot.lane.b32.xlu0 %v233, 100
        %v898 = vpop.permute.xlu0 %897
        %899 = vrot.lane.b32.xlu0 %v234, 100
        %v900 = vpop.permute.xlu0 %899
        %901 = vrot.lane.b32.xlu0 %v235, 100
        %v902 = vpop.permute.xlu0 %901
        %903 = vrot.lane.b32.xlu0 %v236, 100
        %v904 = vpop.permute.xlu0 %903
        %905 = vrot.lane.b32.xlu0 %v237, 100
        %v906 = vpop.permute.xlu0 %905
        %907 = vrot.lane.b32.xlu0 %v238, 100
        %v908 = vpop.permute.xlu0 %907
        %909 = vrot.lane.b32.xlu0 %v239, 100
        %v910 = vpop.permute.xlu0 %909
        %911 = vrot.lane.b32.xlu0 %v240, 100
        %v912 = vpop.permute.xlu0 %911
        %929 = vrot.lane.b32.xlu0 %v225, 98
        %v930 = vpop.permute.xlu0 %929
        %931 = vrot.lane.b32.xlu0 %v226, 98
        %v932 = vpop.permute.xlu0 %931
        %933 = vrot.lane.b32.xlu0 %v227, 98
        %v934 = vpop.permute.xlu0 %933
        %935 = vrot.lane.b32.xlu0 %v228, 98
        %v936 = vpop.permute.xlu0 %935
        %937 = vrot.lane.b32.xlu0 %v229, 98
        %v938 = vpop.permute.xlu0 %937
        %939 = vrot.lane.b32.xlu0 %v230, 98
        %v940 = vpop.permute.xlu0 %939
        %941 = vrot.lane.b32.xlu0 %v231, 98
        %v942 = vpop.permute.xlu0 %941
        %943 = vrot.lane.b32.xlu0 %v232, 98
        %v944 = vpop.permute.xlu0 %943
        %945 = vrot.lane.b32.xlu0 %v233, 98
        %v946 = vpop.permute.xlu0 %945
        %947 = vrot.lane.b32.xlu0 %v234, 98
        %v948 = vpop.permute.xlu0 %947
        %949 = vrot.lane.b32.xlu0 %v235, 98
        %v950 = vpop.permute.xlu0 %949
        %951 = vrot.lane.b32.xlu0 %v236, 98
        %v952 = vpop.permute.xlu0 %951
        %953 = vrot.lane.b32.xlu0 %v237, 98
        %v954 = vpop.permute.xlu0 %953
        %955 = vrot.lane.b32.xlu0 %v238, 98
        %v956 = vpop.permute.xlu0 %955
        %957 = vrot.lane.b32.xlu0 %v239, 98
        %v958 = vpop.permute.xlu0 %957
        %959 = vrot.lane.b32.xlu0 %v240, 98
        %v960 = vpop.permute.xlu0 %959
        %977 = vrot.lane.b32.xlu0 %v225, 96
        %v978 = vpop.permute.xlu0 %977
        %979 = vrot.lane.b32.xlu0 %v226, 96
        %v980 = vpop.permute.xlu0 %979
        %981 = vrot.lane.b32.xlu0 %v227, 96
        %v982 = vpop.permute.xlu0 %981
        %983 = vrot.lane.b32.xlu0 %v228, 96
        %v984 = vpop.permute.xlu0 %983
        %985 = vrot.lane.b32.xlu0 %v229, 96
        %v986 = vpop.permute.xlu0 %985
        %987 = vrot.lane.b32.xlu0 %v230, 96
        %v988 = vpop.permute.xlu0 %987
        %989 = vrot.lane.b32.xlu0 %v231, 96
        %v990 = vpop.permute.xlu0 %989
        %991 = vrot.lane.b32.xlu0 %v232, 96
        %v992 = vpop.permute.xlu0 %991
        %993 = vrot.lane.b32.xlu0 %v233, 96
        %v994 = vpop.permute.xlu0 %993
        %995 = vrot.lane.b32.xlu0 %v234, 96
        %v996 = vpop.permute.xlu0 %995
        %997 = vrot.lane.b32.xlu0 %v235, 96
        %v998 = vpop.permute.xlu0 %997
        %999 = vrot.lane.b32.xlu0 %v236, 96
        %v1000 = vpop.permute.xlu0 %999
        %1001 = vrot.lane.b32.xlu0 %v237, 96
        %v1002 = vpop.permute.xlu0 %1001
        %1003 = vrot.lane.b32.xlu0 %v238, 96
        %v1004 = vpop.permute.xlu0 %1003
        %1005 = vrot.lane.b32.xlu0 %v239, 96
        %v1006 = vpop.permute.xlu0 %1005
        %1007 = vrot.lane.b32.xlu0 %v240, 96
        %v1008 = vpop.permute.xlu0 %1007
        %1025 = vrot.lane.b32.xlu0 %v225, 94
        %v1026 = vpop.permute.xlu0 %1025
        %1027 = vrot.lane.b32.xlu0 %v226, 94
        %v1028 = vpop.permute.xlu0 %1027
        %1029 = vrot.lane.b32.xlu0 %v227, 94
        %v1030 = vpop.permute.xlu0 %1029
        %1031 = vrot.lane.b32.xlu0 %v228, 94
        %v1032 = vpop.permute.xlu0 %1031
        %1033 = vrot.lane.b32.xlu0 %v229, 94
        %v1034 = vpop.permute.xlu0 %1033
        %1035 = vrot.lane.b32.xlu0 %v230, 94
        %v1036 = vpop.permute.xlu0 %1035
        %1037 = vrot.lane.b32.xlu0 %v231, 94
        %v1038 = vpop.permute.xlu0 %1037
        %1039 = vrot.lane.b32.xlu0 %v232, 94
        %v1040 = vpop.permute.xlu0 %1039
        %1041 = vrot.lane.b32.xlu0 %v233, 94
        %v1042 = vpop.permute.xlu0 %1041
        %1043 = vrot.lane.b32.xlu0 %v234, 94
        %v1044 = vpop.permute.xlu0 %1043
        %1045 = vrot.lane.b32.xlu0 %v235, 94
        %v1046 = vpop.permute.xlu0 %1045
        %1047 = vrot.lane.b32.xlu0 %v236, 94
        %v1048 = vpop.permute.xlu0 %1047
        %1049 = vrot.lane.b32.xlu0 %v237, 94
        %v1050 = vpop.permute.xlu0 %1049
        %1051 = vrot.lane.b32.xlu0 %v238, 94
        %v1052 = vpop.permute.xlu0 %1051
        %1053 = vrot.lane.b32.xlu0 %v239, 94
        %v1054 = vpop.permute.xlu0 %1053
        %1055 = vrot.lane.b32.xlu0 %v240, 94
        %v1056 = vpop.permute.xlu0 %1055
        %1073 = vrot.lane.b32.xlu0 %v225, 92
        %v1074 = vpop.permute.xlu0 %1073
        %1075 = vrot.lane.b32.xlu0 %v226, 92
        %v1076 = vpop.permute.xlu0 %1075
        %1077 = vrot.lane.b32.xlu0 %v227, 92
        %v1078 = vpop.permute.xlu0 %1077
        %1079 = vrot.lane.b32.xlu0 %v228, 92
        %v1080 = vpop.permute.xlu0 %1079
        %1081 = vrot.lane.b32.xlu0 %v229, 92
        %v1082 = vpop.permute.xlu0 %1081
        %1083 = vrot.lane.b32.xlu0 %v230, 92
        %v1084 = vpop.permute.xlu0 %1083
        %1085 = vrot.lane.b32.xlu0 %v231, 92
        %v1086 = vpop.permute.xlu0 %1085
        %1087 = vrot.lane.b32.xlu0 %v232, 92
        %v1088 = vpop.permute.xlu0 %1087
        %1089 = vrot.lane.b32.xlu0 %v233, 92
        %v1090 = vpop.permute.xlu0 %1089
        %1091 = vrot.lane.b32.xlu0 %v234, 92
        %v1092 = vpop.permute.xlu0 %1091
        %1093 = vrot.lane.b32.xlu0 %v235, 92
        %v1094 = vpop.permute.xlu0 %1093
        %1095 = vrot.lane.b32.xlu0 %v236, 92
        %v1096 = vpop.permute.xlu0 %1095
        %1097 = vrot.lane.b32.xlu0 %v237, 92
        %v1098 = vpop.permute.xlu0 %1097
        %1099 = vrot.lane.b32.xlu0 %v238, 92
        %v1100 = vpop.permute.xlu0 %1099
        %1101 = vrot.lane.b32.xlu0 %v239, 92
        %v1102 = vpop.permute.xlu0 %1101
        %1103 = vrot.lane.b32.xlu0 %v240, 92
        %v1104 = vpop.permute.xlu0 %1103
        %1121 = vrot.lane.b32.xlu0 %v225, 90
        %v1122 = vpop.permute.xlu0 %1121
        %1123 = vrot.lane.b32.xlu0 %v226, 90
        %v1124 = vpop.permute.xlu0 %1123
        %1125 = vrot.lane.b32.xlu0 %v227, 90
        %v1126 = vpop.permute.xlu0 %1125
        %1127 = vrot.lane.b32.xlu0 %v228, 90
        %v1128 = vpop.permute.xlu0 %1127
        %1129 = vrot.lane.b32.xlu0 %v229, 90
        %v1130 = vpop.permute.xlu0 %1129
        %1131 = vrot.lane.b32.xlu0 %v230, 90
        %v1132 = vpop.permute.xlu0 %1131
        %1133 = vrot.lane.b32.xlu0 %v231, 90
        %v1134 = vpop.permute.xlu0 %1133
        %1135 = vrot.lane.b32.xlu0 %v232, 90
        %v1136 = vpop.permute.xlu0 %1135
        %1137 = vrot.lane.b32.xlu0 %v233, 90
        %v1138 = vpop.permute.xlu0 %1137
        %1139 = vrot.lane.b32.xlu0 %v234, 90
        %v1140 = vpop.permute.xlu0 %1139
        %1141 = vrot.lane.b32.xlu0 %v235, 90
        %v1142 = vpop.permute.xlu0 %1141
        %1143 = vrot.lane.b32.xlu0 %v236, 90
        %v1144 = vpop.permute.xlu0 %1143
        %1145 = vrot.lane.b32.xlu0 %v237, 90
        %v1146 = vpop.permute.xlu0 %1145
        %1147 = vrot.lane.b32.xlu0 %v238, 90
        %v1148 = vpop.permute.xlu0 %1147
        %1149 = vrot.lane.b32.xlu0 %v239, 90
        %v1150 = vpop.permute.xlu0 %1149
        %1151 = vrot.lane.b32.xlu0 %v240, 90
        %v1152 = vpop.permute.xlu0 %1151
        %1169 = vrot.lane.b32.xlu0 %v225, 88
        %v1170 = vpop.permute.xlu0 %1169
        %1171 = vrot.lane.b32.xlu0 %v226, 88
        %v1172 = vpop.permute.xlu0 %1171
        %1173 = vrot.lane.b32.xlu0 %v227, 88
        %v1174 = vpop.permute.xlu0 %1173
        %1175 = vrot.lane.b32.xlu0 %v228, 88
        %v1176 = vpop.permute.xlu0 %1175
        %1177 = vrot.lane.b32.xlu0 %v229, 88
        %v1178 = vpop.permute.xlu0 %1177
        %1179 = vrot.lane.b32.xlu0 %v230, 88
        %v1180 = vpop.permute.xlu0 %1179
        %1181 = vrot.lane.b32.xlu0 %v231, 88
        %v1182 = vpop.permute.xlu0 %1181
        %1183 = vrot.lane.b32.xlu0 %v232, 88
        %v1184 = vpop.permute.xlu0 %1183
        %1185 = vrot.lane.b32.xlu0 %v233, 88
        %v1186 = vpop.permute.xlu0 %1185
        %1187 = vrot.lane.b32.xlu0 %v234, 88
        %v1188 = vpop.permute.xlu0 %1187
        %1189 = vrot.lane.b32.xlu0 %v235, 88
        %v1190 = vpop.permute.xlu0 %1189
        %1191 = vrot.lane.b32.xlu0 %v236, 88
        %v1192 = vpop.permute.xlu0 %1191
        %1193 = vrot.lane.b32.xlu0 %v237, 88
        %v1194 = vpop.permute.xlu0 %1193
        %1195 = vrot.lane.b32.xlu0 %v238, 88
        %v1196 = vpop.permute.xlu0 %1195
        %1197 = vrot.lane.b32.xlu0 %v239, 88
        %v1198 = vpop.permute.xlu0 %1197
        %1199 = vrot.lane.b32.xlu0 %v240, 88
        %v1200 = vpop.permute.xlu0 %1199
        %1217 = vrot.lane.b32.xlu0 %v225, 86
        %v1218 = vpop.permute.xlu0 %1217
        %1219 = vrot.lane.b32.xlu0 %v226, 86
        %v1220 = vpop.permute.xlu0 %1219
        %1221 = vrot.lane.b32.xlu0 %v227, 86
        %v1222 = vpop.permute.xlu0 %1221
        %1223 = vrot.lane.b32.xlu0 %v228, 86
        %v1224 = vpop.permute.xlu0 %1223
        %1225 = vrot.lane.b32.xlu0 %v229, 86
        %v1226 = vpop.permute.xlu0 %1225
        %1227 = vrot.lane.b32.xlu0 %v230, 86
        %v1228 = vpop.permute.xlu0 %1227
        %1229 = vrot.lane.b32.xlu0 %v231, 86
        %v1230 = vpop.permute.xlu0 %1229
        %1231 = vrot.lane.b32.xlu0 %v232, 86
        %v1232 = vpop.permute.xlu0 %1231
        %1233 = vrot.lane.b32.xlu0 %v233, 86
        %v1234 = vpop.permute.xlu0 %1233
        %1235 = vrot.lane.b32.xlu0 %v234, 86
        %v1236 = vpop.permute.xlu0 %1235
        %1237 = vrot.lane.b32.xlu0 %v235, 86
        %v1238 = vpop.permute.xlu0 %1237
        %1239 = vrot.lane.b32.xlu0 %v236, 86
        %v1240 = vpop.permute.xlu0 %1239
        %1241 = vrot.lane.b32.xlu0 %v237, 86
        %v1242 = vpop.permute.xlu0 %1241
        %1243 = vrot.lane.b32.xlu0 %v238, 86
        %v1244 = vpop.permute.xlu0 %1243
        %1245 = vrot.lane.b32.xlu0 %v239, 86
        %v1246 = vpop.permute.xlu0 %1245
        %1247 = vrot.lane.b32.xlu0 %v240, 86
        %v1248 = vpop.permute.xlu0 %1247
        %1265 = vrot.lane.b32.xlu0 %v225, 84
        %v1266 = vpop.permute.xlu0 %1265
        %1267 = vrot.lane.b32.xlu0 %v226, 84
        %v1268 = vpop.permute.xlu0 %1267
        %1269 = vrot.lane.b32.xlu0 %v227, 84
        %v1270 = vpop.permute.xlu0 %1269
        %1271 = vrot.lane.b32.xlu0 %v228, 84
        %v1272 = vpop.permute.xlu0 %1271
        %1273 = vrot.lane.b32.xlu0 %v229, 84
        %v1274 = vpop.permute.xlu0 %1273
        %1275 = vrot.lane.b32.xlu0 %v230, 84
        %v1276 = vpop.permute.xlu0 %1275
        %1277 = vrot.lane.b32.xlu0 %v231, 84
        %v1278 = vpop.permute.xlu0 %1277
        %1279 = vrot.lane.b32.xlu0 %v232, 84
        %v1280 = vpop.permute.xlu0 %1279
        %1281 = vrot.lane.b32.xlu0 %v233, 84
        %v1282 = vpop.permute.xlu0 %1281
        %1283 = vrot.lane.b32.xlu0 %v234, 84
        %v1284 = vpop.permute.xlu0 %1283
        %1285 = vrot.lane.b32.xlu0 %v235, 84
        %v1286 = vpop.permute.xlu0 %1285
        %1287 = vrot.lane.b32.xlu0 %v236, 84
        %v1288 = vpop.permute.xlu0 %1287
        %1289 = vrot.lane.b32.xlu0 %v237, 84
        %v1290 = vpop.permute.xlu0 %1289
        %1291 = vrot.lane.b32.xlu0 %v238, 84
        %v1292 = vpop.permute.xlu0 %1291
        %1293 = vrot.lane.b32.xlu0 %v239, 84
        %v1294 = vpop.permute.xlu0 %1293
        %1295 = vrot.lane.b32.xlu0 %v240, 84
        %v1296 = vpop.permute.xlu0 %1295
        %1313 = vrot.lane.b32.xlu0 %v225, 82
        %v1314 = vpop.permute.xlu0 %1313
        %1315 = vrot.lane.b32.xlu0 %v226, 82
        %v1316 = vpop.permute.xlu0 %1315
        %1317 = vrot.lane.b32.xlu0 %v227, 82
        %v1318 = vpop.permute.xlu0 %1317
        %1319 = vrot.lane.b32.xlu0 %v228, 82
        %v1320 = vpop.permute.xlu0 %1319
        %1321 = vrot.lane.b32.xlu0 %v229, 82
        %v1322 = vpop.permute.xlu0 %1321
        %1323 = vrot.lane.b32.xlu0 %v230, 82
        %v1324 = vpop.permute.xlu0 %1323
        %1325 = vrot.lane.b32.xlu0 %v231, 82
        %v1326 = vpop.permute.xlu0 %1325
        %1327 = vrot.lane.b32.xlu0 %v232, 82
        %v1328 = vpop.permute.xlu0 %1327
        %1329 = vrot.lane.b32.xlu0 %v233, 82
        %v1330 = vpop.permute.xlu0 %1329
        %1331 = vrot.lane.b32.xlu0 %v234, 82
        %v1332 = vpop.permute.xlu0 %1331
        %1333 = vrot.lane.b32.xlu0 %v235, 82
        %v1334 = vpop.permute.xlu0 %1333
        %1335 = vrot.lane.b32.xlu0 %v236, 82
        %v1336 = vpop.permute.xlu0 %1335
        %1337 = vrot.lane.b32.xlu0 %v237, 82
        %v1338 = vpop.permute.xlu0 %1337
        %1339 = vrot.lane.b32.xlu0 %v238, 82
        %v1340 = vpop.permute.xlu0 %1339
        %1341 = vrot.lane.b32.xlu0 %v239, 82
        %v1342 = vpop.permute.xlu0 %1341
        %1343 = vrot.lane.b32.xlu0 %v240, 82
        %v1344 = vpop.permute.xlu0 %1343
        %1361 = vrot.lane.b32.xlu0 %v225, 80
        %v1362 = vpop.permute.xlu0 %1361
        %1363 = vrot.lane.b32.xlu0 %v226, 80
        %v1364 = vpop.permute.xlu0 %1363
        %1365 = vrot.lane.b32.xlu0 %v227, 80
        %v1366 = vpop.permute.xlu0 %1365
        %1367 = vrot.lane.b32.xlu0 %v228, 80
        %v1368 = vpop.permute.xlu0 %1367
        %1369 = vrot.lane.b32.xlu0 %v229, 80
        %v1370 = vpop.permute.xlu0 %1369
        %1371 = vrot.lane.b32.xlu0 %v230, 80
        %v1372 = vpop.permute.xlu0 %1371
        %1373 = vrot.lane.b32.xlu0 %v231, 80
        %v1374 = vpop.permute.xlu0 %1373
        %1375 = vrot.lane.b32.xlu0 %v232, 80
        %v1376 = vpop.permute.xlu0 %1375
        %1377 = vrot.lane.b32.xlu0 %v233, 80
        %v1378 = vpop.permute.xlu0 %1377
        %1379 = vrot.lane.b32.xlu0 %v234, 80
        %v1380 = vpop.permute.xlu0 %1379
        %1381 = vrot.lane.b32.xlu0 %v235, 80
        %v1382 = vpop.permute.xlu0 %1381
        %1383 = vrot.lane.b32.xlu0 %v236, 80
        %v1384 = vpop.permute.xlu0 %1383
        %1385 = vrot.lane.b32.xlu0 %v237, 80
        %v1386 = vpop.permute.xlu0 %1385
        %1387 = vrot.lane.b32.xlu0 %v238, 80
        %v1388 = vpop.permute.xlu0 %1387
        %1389 = vrot.lane.b32.xlu0 %v239, 80
        %v1390 = vpop.permute.xlu0 %1389
        %1391 = vrot.lane.b32.xlu0 %v240, 80
        %v1392 = vpop.permute.xlu0 %1391
        %1409 = vrot.lane.b32.xlu0 %v225, 78
        %v1410 = vpop.permute.xlu0 %1409
        %1411 = vrot.lane.b32.xlu0 %v226, 78
        %v1412 = vpop.permute.xlu0 %1411
        %1413 = vrot.lane.b32.xlu0 %v227, 78
        %v1414 = vpop.permute.xlu0 %1413
        %1415 = vrot.lane.b32.xlu0 %v228, 78
        %v1416 = vpop.permute.xlu0 %1415
        %1417 = vrot.lane.b32.xlu0 %v229, 78
        %v1418 = vpop.permute.xlu0 %1417
        %1419 = vrot.lane.b32.xlu0 %v230, 78
        %v1420 = vpop.permute.xlu0 %1419
        %1421 = vrot.lane.b32.xlu0 %v231, 78
        %v1422 = vpop.permute.xlu0 %1421
        %1423 = vrot.lane.b32.xlu0 %v232, 78
        %v1424 = vpop.permute.xlu0 %1423
        %1425 = vrot.lane.b32.xlu0 %v233, 78
        %v1426 = vpop.permute.xlu0 %1425
        %1427 = vrot.lane.b32.xlu0 %v234, 78
        %v1428 = vpop.permute.xlu0 %1427
        %1429 = vrot.lane.b32.xlu0 %v235, 78
        %v1430 = vpop.permute.xlu0 %1429
        %1431 = vrot.lane.b32.xlu0 %v236, 78
        %v1432 = vpop.permute.xlu0 %1431
        %1433 = vrot.lane.b32.xlu0 %v237, 78
        %v1434 = vpop.permute.xlu0 %1433
        %1435 = vrot.lane.b32.xlu0 %v238, 78
        %v1436 = vpop.permute.xlu0 %1435
        %1437 = vrot.lane.b32.xlu0 %v239, 78
        %v1438 = vpop.permute.xlu0 %1437
        %1439 = vrot.lane.b32.xlu0 %v240, 78
        %v1440 = vpop.permute.xlu0 %1439
        %1457 = vrot.lane.b32.xlu0 %v225, 76
        %v1458 = vpop.permute.xlu0 %1457
        %1459 = vrot.lane.b32.xlu0 %v226, 76
        %v1460 = vpop.permute.xlu0 %1459
        %1461 = vrot.lane.b32.xlu0 %v227, 76
        %v1462 = vpop.permute.xlu0 %1461
        %1463 = vrot.lane.b32.xlu0 %v228, 76
        %v1464 = vpop.permute.xlu0 %1463
        %1465 = vrot.lane.b32.xlu0 %v229, 76
        %v1466 = vpop.permute.xlu0 %1465
        %1467 = vrot.lane.b32.xlu0 %v230, 76
        %v1468 = vpop.permute.xlu0 %1467
        %1469 = vrot.lane.b32.xlu0 %v231, 76
        %v1470 = vpop.permute.xlu0 %1469
        %1471 = vrot.lane.b32.xlu0 %v232, 76
        %v1472 = vpop.permute.xlu0 %1471
        %1473 = vrot.lane.b32.xlu0 %v233, 76
        %v1474 = vpop.permute.xlu0 %1473
        %1475 = vrot.lane.b32.xlu0 %v234, 76
        %v1476 = vpop.permute.xlu0 %1475
        %1477 = vrot.lane.b32.xlu0 %v235, 76
        %v1478 = vpop.permute.xlu0 %1477
        %1479 = vrot.lane.b32.xlu0 %v236, 76
        %v1480 = vpop.permute.xlu0 %1479
        %1481 = vrot.lane.b32.xlu0 %v237, 76
        %v1482 = vpop.permute.xlu0 %1481
        %1483 = vrot.lane.b32.xlu0 %v238, 76
        %v1484 = vpop.permute.xlu0 %1483
        %1485 = vrot.lane.b32.xlu0 %v239, 76
        %v1486 = vpop.permute.xlu0 %1485
        %1487 = vrot.lane.b32.xlu0 %v240, 76
        %v1488 = vpop.permute.xlu0 %1487
        %1505 = vrot.lane.b32.xlu0 %v225, 74
        %v1506 = vpop.permute.xlu0 %1505
        %1507 = vrot.lane.b32.xlu0 %v226, 74
        %v1508 = vpop.permute.xlu0 %1507
        %1509 = vrot.lane.b32.xlu0 %v227, 74
        %v1510 = vpop.permute.xlu0 %1509
        %1511 = vrot.lane.b32.xlu0 %v228, 74
        %v1512 = vpop.permute.xlu0 %1511
        %1513 = vrot.lane.b32.xlu0 %v229, 74
        %v1514 = vpop.permute.xlu0 %1513
        %1515 = vrot.lane.b32.xlu0 %v230, 74
        %v1516 = vpop.permute.xlu0 %1515
        %1517 = vrot.lane.b32.xlu0 %v231, 74
        %v1518 = vpop.permute.xlu0 %1517
        %1519 = vrot.lane.b32.xlu0 %v232, 74
        %v1520 = vpop.permute.xlu0 %1519
        %1521 = vrot.lane.b32.xlu0 %v233, 74
        %v1522 = vpop.permute.xlu0 %1521
        %1523 = vrot.lane.b32.xlu0 %v234, 74
        %v1524 = vpop.permute.xlu0 %1523
        %1525 = vrot.lane.b32.xlu0 %v235, 74
        %v1526 = vpop.permute.xlu0 %1525
        %1527 = vrot.lane.b32.xlu0 %v236, 74
        %v1528 = vpop.permute.xlu0 %1527
        %1529 = vrot.lane.b32.xlu0 %v237, 74
        %v1530 = vpop.permute.xlu0 %1529
        %1531 = vrot.lane.b32.xlu0 %v238, 74
        %v1532 = vpop.permute.xlu0 %1531
        %1533 = vrot.lane.b32.xlu0 %v239, 74
        %v1534 = vpop.permute.xlu0 %1533
        %1535 = vrot.lane.b32.xlu0 %v240, 74
        %v1536 = vpop.permute.xlu0 %1535
        %1553 = vrot.lane.b32.xlu0 %v225, 72
        %v1554 = vpop.permute.xlu0 %1553
        %1555 = vrot.lane.b32.xlu0 %v226, 72
        %v1556 = vpop.permute.xlu0 %1555
        %1557 = vrot.lane.b32.xlu0 %v227, 72
        %v1558 = vpop.permute.xlu0 %1557
        %1559 = vrot.lane.b32.xlu0 %v228, 72
        %v1560 = vpop.permute.xlu0 %1559
        %1561 = vrot.lane.b32.xlu0 %v229, 72
        %v1562 = vpop.permute.xlu0 %1561
        %1563 = vrot.lane.b32.xlu0 %v230, 72
        %v1564 = vpop.permute.xlu0 %1563
        %1565 = vrot.lane.b32.xlu0 %v231, 72
        %v1566 = vpop.permute.xlu0 %1565
        %1567 = vrot.lane.b32.xlu0 %v232, 72
        %v1568 = vpop.permute.xlu0 %1567
        %1569 = vrot.lane.b32.xlu0 %v233, 72
        %v1570 = vpop.permute.xlu0 %1569
        %1571 = vrot.lane.b32.xlu0 %v234, 72
        %v1572 = vpop.permute.xlu0 %1571
        %1573 = vrot.lane.b32.xlu0 %v235, 72
        %v1574 = vpop.permute.xlu0 %1573
        %1575 = vrot.lane.b32.xlu0 %v236, 72
        %v1576 = vpop.permute.xlu0 %1575
        %1577 = vrot.lane.b32.xlu0 %v237, 72
        %v1578 = vpop.permute.xlu0 %1577
        %1579 = vrot.lane.b32.xlu0 %v238, 72
        %v1580 = vpop.permute.xlu0 %1579
        %1581 = vrot.lane.b32.xlu0 %v239, 72
        %v1582 = vpop.permute.xlu0 %1581
        %1583 = vrot.lane.b32.xlu0 %v240, 72
        %v1584 = vpop.permute.xlu0 %1583
        %1601 = vrot.lane.b32.xlu0 %v225, 70
        %v1602 = vpop.permute.xlu0 %1601
        %1603 = vrot.lane.b32.xlu0 %v226, 70
        %v1604 = vpop.permute.xlu0 %1603
        %1605 = vrot.lane.b32.xlu0 %v227, 70
        %v1606 = vpop.permute.xlu0 %1605
        %1607 = vrot.lane.b32.xlu0 %v228, 70
        %v1608 = vpop.permute.xlu0 %1607
        %1609 = vrot.lane.b32.xlu0 %v229, 70
        %v1610 = vpop.permute.xlu0 %1609
        %1611 = vrot.lane.b32.xlu0 %v230, 70
        %v1612 = vpop.permute.xlu0 %1611
        %1613 = vrot.lane.b32.xlu0 %v231, 70
        %v1614 = vpop.permute.xlu0 %1613
        %1615 = vrot.lane.b32.xlu0 %v232, 70
        %v1616 = vpop.permute.xlu0 %1615
        %1617 = vrot.lane.b32.xlu0 %v233, 70
        %v1618 = vpop.permute.xlu0 %1617
        %1619 = vrot.lane.b32.xlu0 %v234, 70
        %v1620 = vpop.permute.xlu0 %1619
        %1621 = vrot.lane.b32.xlu0 %v235, 70
        %v1622 = vpop.permute.xlu0 %1621
        %1623 = vrot.lane.b32.xlu0 %v236, 70
        %v1624 = vpop.permute.xlu0 %1623
        %1625 = vrot.lane.b32.xlu0 %v237, 70
        %v1626 = vpop.permute.xlu0 %1625
        %1627 = vrot.lane.b32.xlu0 %v238, 70
        %v1628 = vpop.permute.xlu0 %1627
        %1629 = vrot.lane.b32.xlu0 %v239, 70
        %v1630 = vpop.permute.xlu0 %1629
        %1631 = vrot.lane.b32.xlu0 %v240, 70
        %v1632 = vpop.permute.xlu0 %1631
        %1649 = vrot.lane.b32.xlu0 %v225, 68
        %v1650 = vpop.permute.xlu0 %1649
        %1651 = vrot.lane.b32.xlu0 %v226, 68
        %v1652 = vpop.permute.xlu0 %1651
        %1653 = vrot.lane.b32.xlu0 %v227, 68
        %v1654 = vpop.permute.xlu0 %1653
        %1655 = vrot.lane.b32.xlu0 %v228, 68
        %v1656 = vpop.permute.xlu0 %1655
        %1657 = vrot.lane.b32.xlu0 %v229, 68
        %v1658 = vpop.permute.xlu0 %1657
        %1659 = vrot.lane.b32.xlu0 %v230, 68
        %v1660 = vpop.permute.xlu0 %1659
        %1661 = vrot.lane.b32.xlu0 %v231, 68
        %v1662 = vpop.permute.xlu0 %1661
        %1663 = vrot.lane.b32.xlu0 %v232, 68
        %v1664 = vpop.permute.xlu0 %1663
        %1665 = vrot.lane.b32.xlu0 %v233, 68
        %v1666 = vpop.permute.xlu0 %1665
        %1667 = vrot.lane.b32.xlu0 %v234, 68
        %v1668 = vpop.permute.xlu0 %1667
        %1669 = vrot.lane.b32.xlu0 %v235, 68
        %v1670 = vpop.permute.xlu0 %1669
        %1671 = vrot.lane.b32.xlu0 %v236, 68
        %v1672 = vpop.permute.xlu0 %1671
        %1673 = vrot.lane.b32.xlu0 %v237, 68
        %v1674 = vpop.permute.xlu0 %1673
        %1675 = vrot.lane.b32.xlu0 %v238, 68
        %v1676 = vpop.permute.xlu0 %1675
        %1677 = vrot.lane.b32.xlu0 %v239, 68
        %v1678 = vpop.permute.xlu0 %1677
        %1679 = vrot.lane.b32.xlu0 %v240, 68
        %v1680 = vpop.permute.xlu0 %1679
        %1697 = vrot.lane.b32.xlu0 %v225, 66
        %v1698 = vpop.permute.xlu0 %1697
        %1699 = vrot.lane.b32.xlu0 %v226, 66
        %v1700 = vpop.permute.xlu0 %1699
        %1701 = vrot.lane.b32.xlu0 %v227, 66
        %v1702 = vpop.permute.xlu0 %1701
        %1703 = vrot.lane.b32.xlu0 %v228, 66
        %v1704 = vpop.permute.xlu0 %1703
        %1705 = vrot.lane.b32.xlu0 %v229, 66
        %v1706 = vpop.permute.xlu0 %1705
        %1707 = vrot.lane.b32.xlu0 %v230, 66
        %v1708 = vpop.permute.xlu0 %1707
        %1709 = vrot.lane.b32.xlu0 %v231, 66
        %v1710 = vpop.permute.xlu0 %1709
        %1711 = vrot.lane.b32.xlu0 %v232, 66
        %v1712 = vpop.permute.xlu0 %1711
        %1713 = vrot.lane.b32.xlu0 %v233, 66
        %v1714 = vpop.permute.xlu0 %1713
        %1715 = vrot.lane.b32.xlu0 %v234, 66
        %v1716 = vpop.permute.xlu0 %1715
        %1717 = vrot.lane.b32.xlu0 %v235, 66
        %v1718 = vpop.permute.xlu0 %1717
        %1719 = vrot.lane.b32.xlu0 %v236, 66
        %v1720 = vpop.permute.xlu0 %1719
        %1721 = vrot.lane.b32.xlu0 %v237, 66
        %v1722 = vpop.permute.xlu0 %1721
        %1723 = vrot.lane.b32.xlu0 %v238, 66
        %v1724 = vpop.permute.xlu0 %1723
        %1725 = vrot.lane.b32.xlu0 %v239, 66
        %v1726 = vpop.permute.xlu0 %1725
        %1727 = vrot.lane.b32.xlu0 %v240, 66
        %v1728 = vpop.permute.xlu0 %1727
        %v1745 = vrot.slane %v306, 4
        %vm1746 = vcmask 1047556
        %v1747 = vsel %vm1746, %v1745, %v225
        %v1748 = vrot.slane %v225, 4
        %v1749 = vsel %vm1746, %v306, %v1748
        %v1751 = vunpack.c.l.s4 1983009808
        %v1752 = vunpack.c.0.s8 %v1751
        %v1753 = vperm.slane %v1747, %v1752
        %v1755 = vunpack.c.l.s4 1983009808
        %v1756 = vunpack.c.0.s8 %v1755
        %v1757 = vperm.slane %v1749, %v1756
        %v1758 = vrot.slane %v354, 4
        %v1759 = vsel %vm1746, %v1758, %v258
        %v1760 = vrot.slane %v258, 4
        %v1761 = vsel %vm1746, %v354, %v1760
        %v1763 = vunpack.c.l.s4 1983009808
        %v1764 = vunpack.c.0.s8 %v1763
        %v1765 = vperm.slane %v1759, %v1764
        %v1767 = vunpack.c.l.s4 1983009808
        %v1768 = vunpack.c.0.s8 %v1767
        %v1769 = vperm.slane %v1761, %v1768
        %v1770 = vrot.slane %v498, 4
        %v1771 = vsel %vm1746, %v1770, %v402
        %v1772 = vrot.slane %v402, 4
        %v1773 = vsel %vm1746, %v498, %v1772
        %v1775 = vunpack.c.l.s4 1983009808
        %v1776 = vunpack.c.0.s8 %v1775
        %v1777 = vperm.slane %v1771, %v1776
        %v1779 = vunpack.c.l.s4 1983009808
        %v1780 = vunpack.c.0.s8 %v1779
        %v1781 = vperm.slane %v1773, %v1780
        %v1782 = vrot.slane %v546, 4
        %v1783 = vsel %vm1746, %v1782, %v450
        %v1784 = vrot.slane %v450, 4
        %v1785 = vsel %vm1746, %v546, %v1784
        %v1787 = vunpack.c.l.s4 1983009808
        %v1788 = vunpack.c.0.s8 %v1787
        %v1789 = vperm.slane %v1783, %v1788
        %v1791 = vunpack.c.l.s4 1983009808
        %v1792 = vunpack.c.0.s8 %v1791
        %v1793 = vperm.slane %v1785, %v1792
        %v1794 = vrot.slane %v1765, 4
        %v1795 = vsel %vm1746, %v1794, %v1753
        %v1796 = vrot.slane %v1753, 4
        %v1797 = vsel %vm1746, %v1765, %v1796
        %v1799 = vunpack.c.l.s4 1934713408
        %v1800 = vunpack.c.0.s8 %v1799
        %v1801 = vperm.slane %v1795, %v1800
        %v1803 = vunpack.c.l.s4 1934713408
        %v1804 = vunpack.c.0.s8 %v1803
        %v1805 = vperm.slane %v1797, %v1804
        %v1806 = vrot.slane %v1769, 4
        %v1807 = vsel %vm1746, %v1806, %v1757
        %v1808 = vrot.slane %v1757, 4
        %v1809 = vsel %vm1746, %v1769, %v1808
        %v1811 = vunpack.c.l.s4 1934713408
        %v1812 = vunpack.c.0.s8 %v1811
        %v1813 = vperm.slane %v1807, %v1812
        %v1815 = vunpack.c.l.s4 1934713408
        %v1816 = vunpack.c.0.s8 %v1815
        %v1817 = vperm.slane %v1809, %v1816
        %v1818 = vrot.slane %v1789, 4
        %v1819 = vsel %vm1746, %v1818, %v1777
        %v1820 = vrot.slane %v1777, 4
        %v1821 = vsel %vm1746, %v1789, %v1820
        %v1823 = vunpack.c.l.s4 1934713408
        %v1824 = vunpack.c.0.s8 %v1823
        %v1825 = vperm.slane %v1819, %v1824
        %v1827 = vunpack.c.l.s4 1934713408
        %v1828 = vunpack.c.0.s8 %v1827
        %v1829 = vperm.slane %v1821, %v1828
        %v1830 = vrot.slane %v1793, 4
        %v1831 = vsel %vm1746, %v1830, %v1781
        %v1832 = vrot.slane %v1781, 4
        %v1833 = vsel %vm1746, %v1793, %v1832
        %v1835 = vunpack.c.l.s4 1934713408
        %v1836 = vunpack.c.0.s8 %v1835
        %v1837 = vperm.slane %v1831, %v1836
        %v1839 = vunpack.c.l.s4 1934713408
        %v1840 = vunpack.c.0.s8 %v1839
        %v1841 = vperm.slane %v1833, %v1840
        %v1842 = vrot.slane %v1825, 4
        %v1843 = vsel %vm1746, %v1842, %v1801
        %v1844 = vrot.slane %v1801, 4
        %v1845 = vsel %vm1746, %v1825, %v1844
        %v1846 = vrot.slane %v1829, 4
        %v1847 = vsel %vm1746, %v1846, %v1805
        %v1848 = vrot.slane %v1805, 4
        %v1849 = vsel %vm1746, %v1829, %v1848
        %v1850 = vrot.slane %v1837, 4
        %v1851 = vsel %vm1746, %v1850, %v1813
        %v1852 = vrot.slane %v1813, 4
        %v1853 = vsel %vm1746, %v1837, %v1852
        %v1854 = vrot.slane %v1841, 4
        %v1855 = vsel %vm1746, %v1854, %v1817
        %v1856 = vrot.slane %v1817, 4
        %v1857 = vsel %vm1746, %v1841, %v1856
        %v1858 = vrot.slane %v690, 4
        %v1859 = vsel %vm1746, %v1858, %v594
        %v1860 = vrot.slane %v594, 4
        %v1861 = vsel %vm1746, %v690, %v1860
        %v1863 = vunpack.c.l.s4 1983009808
        %v1864 = vunpack.c.0.s8 %v1863
        %v1865 = vperm.slane %v1859, %v1864
        %v1867 = vunpack.c.l.s4 1983009808
        %v1868 = vunpack.c.0.s8 %v1867
        %v1869 = vperm.slane %v1861, %v1868
        %v1870 = vrot.slane %v738, 4
        %v1871 = vsel %vm1746, %v1870, %v642
        %v1872 = vrot.slane %v642, 4
        %v1873 = vsel %vm1746, %v738, %v1872
        %v1875 = vunpack.c.l.s4 1983009808
        %v1876 = vunpack.c.0.s8 %v1875
        %v1877 = vperm.slane %v1871, %v1876
        %v1879 = vunpack.c.l.s4 1983009808
        %v1880 = vunpack.c.0.s8 %v1879
        %v1881 = vperm.slane %v1873, %v1880
        %v1882 = vrot.slane %v882, 4
        %v1883 = vsel %vm1746, %v1882, %v786
        %v1884 = vrot.slane %v786, 4
        %v1885 = vsel %vm1746, %v882, %v1884
        %v1887 = vunpack.c.l.s4 1983009808
        %v1888 = vunpack.c.0.s8 %v1887
        %v1889 = vperm.slane %v1883, %v1888
        %v1891 = vunpack.c.l.s4 1983009808
        %v1892 = vunpack.c.0.s8 %v1891
        %v1893 = vperm.slane %v1885, %v1892
        %v1894 = vrot.slane %v930, 4
        %v1895 = vsel %vm1746, %v1894, %v834
        %v1896 = vrot.slane %v834, 4
        %v1897 = vsel %vm1746, %v930, %v1896
        %v1899 = vunpack.c.l.s4 1983009808
        %v1900 = vunpack.c.0.s8 %v1899
        %v1901 = vperm.slane %v1895, %v1900
        %v1903 = vunpack.c.l.s4 1983009808
        %v1904 = vunpack.c.0.s8 %v1903
        %v1905 = vperm.slane %v1897, %v1904
        %v1906 = vrot.slane %v1877, 4
        %v1907 = vsel %vm1746, %v1906, %v1865
        %v1908 = vrot.slane %v1865, 4
        %v1909 = vsel %vm1746, %v1877, %v1908
        %v1911 = vunpack.c.l.s4 1934713408
        %v1912 = vunpack.c.0.s8 %v1911
        %v1913 = vperm.slane %v1907, %v1912
        %v1915 = vunpack.c.l.s4 1934713408
        %v1916 = vunpack.c.0.s8 %v1915
        %v1917 = vperm.slane %v1909, %v1916
        %v1918 = vrot.slane %v1881, 4
        %v1919 = vsel %vm1746, %v1918, %v1869
        %v1920 = vrot.slane %v1869, 4
        %v1921 = vsel %vm1746, %v1881, %v1920
        %v1923 = vunpack.c.l.s4 1934713408
        %v1924 = vunpack.c.0.s8 %v1923
        %v1925 = vperm.slane %v1919, %v1924
        %v1927 = vunpack.c.l.s4 1934713408
        %v1928 = vunpack.c.0.s8 %v1927
        %v1929 = vperm.slane %v1921, %v1928
        %v1930 = vrot.slane %v1901, 4
        %v1931 = vsel %vm1746, %v1930, %v1889
        %v1932 = vrot.slane %v1889, 4
        %v1933 = vsel %vm1746, %v1901, %v1932
        %v1935 = vunpack.c.l.s4 1934713408
        %v1936 = vunpack.c.0.s8 %v1935
        %v1937 = vperm.slane %v1931, %v1936
        %v1939 = vunpack.c.l.s4 1934713408
        %v1940 = vunpack.c.0.s8 %v1939
        %v1941 = vperm.slane %v1933, %v1940
        %v1942 = vrot.slane %v1905, 4
        %v1943 = vsel %vm1746, %v1942, %v1893
        %v1944 = vrot.slane %v1893, 4
        %v1945 = vsel %vm1746, %v1905, %v1944
        %v1947 = vunpack.c.l.s4 1934713408
        %v1948 = vunpack.c.0.s8 %v1947
        %v1949 = vperm.slane %v1943, %v1948
        %v1951 = vunpack.c.l.s4 1934713408
        %v1952 = vunpack.c.0.s8 %v1951
        %v1953 = vperm.slane %v1945, %v1952
        %v1954 = vrot.slane %v1937, 4
        %v1955 = vsel %vm1746, %v1954, %v1913
        %v1956 = vrot.slane %v1913, 4
        %v1957 = vsel %vm1746, %v1937, %v1956
        %v1958 = vrot.slane %v1941, 4
        %v1959 = vsel %vm1746, %v1958, %v1917
        %v1960 = vrot.slane %v1917, 4
        %v1961 = vsel %vm1746, %v1941, %v1960
        %v1962 = vrot.slane %v1949, 4
        %v1963 = vsel %vm1746, %v1962, %v1925
        %v1964 = vrot.slane %v1925, 4
        %v1965 = vsel %vm1746, %v1949, %v1964
        %v1966 = vrot.slane %v1953, 4
        %v1967 = vsel %vm1746, %v1966, %v1929
        %v1968 = vrot.slane %v1929, 4
        %v1969 = vsel %vm1746, %v1953, %v1968
        %v1970 = vrot.slane %v1074, 4
        %v1971 = vsel %vm1746, %v1970, %v978
        %v1972 = vrot.slane %v978, 4
        %v1973 = vsel %vm1746, %v1074, %v1972
        %v1975 = vunpack.c.l.s4 1983009808
        %v1976 = vunpack.c.0.s8 %v1975
        %v1977 = vperm.slane %v1971, %v1976
        %v1979 = vunpack.c.l.s4 1983009808
        %v1980 = vunpack.c.0.s8 %v1979
        %v1981 = vperm.slane %v1973, %v1980
        %v1982 = vrot.slane %v1122, 4
        %v1983 = vsel %vm1746, %v1982, %v1026
        %v1984 = vrot.slane %v1026, 4
        %v1985 = vsel %vm1746, %v1122, %v1984
        %v1987 = vunpack.c.l.s4 1983009808
        %v1988 = vunpack.c.0.s8 %v1987
        %v1989 = vperm.slane %v1983, %v1988
        %v1991 = vunpack.c.l.s4 1983009808
        %v1992 = vunpack.c.0.s8 %v1991
        %v1993 = vperm.slane %v1985, %v1992
        %v1994 = vrot.slane %v1266, 4
        %v1995 = vsel %vm1746, %v1994, %v1170
        %v1996 = vrot.slane %v1170, 4
        %v1997 = vsel %vm1746, %v1266, %v1996
        %v1999 = vunpack.c.l.s4 1983009808
        %v2000 = vunpack.c.0.s8 %v1999
        %v2001 = vperm.slane %v1995, %v2000
        %v2003 = vunpack.c.l.s4 1983009808
        %v2004 = vunpack.c.0.s8 %v2003
        %v2005 = vperm.slane %v1997, %v2004
        %v2006 = vrot.slane %v1314, 4
        %v2007 = vsel %vm1746, %v2006, %v1218
        %v2008 = vrot.slane %v1218, 4
        %v2009 = vsel %vm1746, %v1314, %v2008
        %v2011 = vunpack.c.l.s4 1983009808
        %v2012 = vunpack.c.0.s8 %v2011
        %v2013 = vperm.slane %v2007, %v2012
        %v2015 = vunpack.c.l.s4 1983009808
        %v2016 = vunpack.c.0.s8 %v2015
        %v2017 = vperm.slane %v2009, %v2016
        %v2018 = vrot.slane %v1989, 4
        %v2019 = vsel %vm1746, %v2018, %v1977
        %v2020 = vrot.slane %v1977, 4
        %v2021 = vsel %vm1746, %v1989, %v2020
        %v2023 = vunpack.c.l.s4 1934713408
        %v2024 = vunpack.c.0.s8 %v2023
        %v2025 = vperm.slane %v2019, %v2024
        %v2027 = vunpack.c.l.s4 1934713408
        %v2028 = vunpack.c.0.s8 %v2027
        %v2029 = vperm.slane %v2021, %v2028
        %v2030 = vrot.slane %v1993, 4
        %v2031 = vsel %vm1746, %v2030, %v1981
        %v2032 = vrot.slane %v1981, 4
        %v2033 = vsel %vm1746, %v1993, %v2032
        %v2035 = vunpack.c.l.s4 1934713408
        %v2036 = vunpack.c.0.s8 %v2035
        %v2037 = vperm.slane %v2031, %v2036
        %v2039 = vunpack.c.l.s4 1934713408
        %v2040 = vunpack.c.0.s8 %v2039
        %v2041 = vperm.slane %v2033, %v2040
        %v2042 = vrot.slane %v2013, 4
        %v2043 = vsel %vm1746, %v2042, %v2001
        %v2044 = vrot.slane %v2001, 4
        %v2045 = vsel %vm1746, %v2013, %v2044
        %v2047 = vunpack.c.l.s4 1934713408
        %v2048 = vunpack.c.0.s8 %v2047
        %v2049 = vperm.slane %v2043, %v2048
        %v2051 = vunpack.c.l.s4 1934713408
        %v2052 = vunpack.c.0.s8 %v2051
        %v2053 = vperm.slane %v2045, %v2052
        %v2054 = vrot.slane %v2017, 4
        %v2055 = vsel %vm1746, %v2054, %v2005
        %v2056 = vrot.slane %v2005, 4
        %v2057 = vsel %vm1746, %v2017, %v2056
        %v2059 = vunpack.c.l.s4 1934713408
        %v2060 = vunpack.c.0.s8 %v2059
        %v2061 = vperm.slane %v2055, %v2060
        %v2063 = vunpack.c.l.s4 1934713408
        %v2064 = vunpack.c.0.s8 %v2063
        %v2065 = vperm.slane %v2057, %v2064
        %v2066 = vrot.slane %v2049, 4
        %v2067 = vsel %vm1746, %v2066, %v2025
        %v2068 = vrot.slane %v2025, 4
        %v2069 = vsel %vm1746, %v2049, %v2068
        %v2070 = vrot.slane %v2053, 4
        %v2071 = vsel %vm1746, %v2070, %v2029
        %v2072 = vrot.slane %v2029, 4
        %v2073 = vsel %vm1746, %v2053, %v2072
        %v2074 = vrot.slane %v2061, 4
        %v2075 = vsel %vm1746, %v2074, %v2037
        %v2076 = vrot.slane %v2037, 4
        %v2077 = vsel %vm1746, %v2061, %v2076
        %v2078 = vrot.slane %v2065, 4
        %v2079 = vsel %vm1746, %v2078, %v2041
        %v2080 = vrot.slane %v2041, 4
        %v2081 = vsel %vm1746, %v2065, %v2080
        %v2082 = vrot.slane %v1458, 4
        %v2083 = vsel %vm1746, %v2082, %v1362
        %v2084 = vrot.slane %v1362, 4
        %v2085 = vsel %vm1746, %v1458, %v2084
        %v2087 = vunpack.c.l.s4 1983009808
        %v2088 = vunpack.c.0.s8 %v2087
        %v2089 = vperm.slane %v2083, %v2088
        %v2091 = vunpack.c.l.s4 1983009808
        %v2092 = vunpack.c.0.s8 %v2091
        %v2093 = vperm.slane %v2085, %v2092
        %v2094 = vrot.slane %v1506, 4
        %v2095 = vsel %vm1746, %v2094, %v1410
        %v2096 = vrot.slane %v1410, 4
        %v2097 = vsel %vm1746, %v1506, %v2096
        %v2099 = vunpack.c.l.s4 1983009808
        %v2100 = vunpack.c.0.s8 %v2099
        %v2101 = vperm.slane %v2095, %v2100
        %v2103 = vunpack.c.l.s4 1983009808
        %v2104 = vunpack.c.0.s8 %v2103
        %v2105 = vperm.slane %v2097, %v2104
        %v2106 = vrot.slane %v1650, 4
        %v2107 = vsel %vm1746, %v2106, %v1554
        %v2108 = vrot.slane %v1554, 4
        %v2109 = vsel %vm1746, %v1650, %v2108
        %v2111 = vunpack.c.l.s4 1983009808
        %v2112 = vunpack.c.0.s8 %v2111
        %v2113 = vperm.slane %v2107, %v2112
        %v2115 = vunpack.c.l.s4 1983009808
        %v2116 = vunpack.c.0.s8 %v2115
        %v2117 = vperm.slane %v2109, %v2116
        %v2118 = vrot.slane %v1698, 4
        %v2119 = vsel %vm1746, %v2118, %v1602
        %v2120 = vrot.slane %v1602, 4
        %v2121 = vsel %vm1746, %v1698, %v2120
        %v2123 = vunpack.c.l.s4 1983009808
        %v2124 = vunpack.c.0.s8 %v2123
        %v2125 = vperm.slane %v2119, %v2124
        %v2127 = vunpack.c.l.s4 1983009808
        %v2128 = vunpack.c.0.s8 %v2127
        %v2129 = vperm.slane %v2121, %v2128
        %v2130 = vrot.slane %v2101, 4
        %v2131 = vsel %vm1746, %v2130, %v2089
        %v2132 = vrot.slane %v2089, 4
        %v2133 = vsel %vm1746, %v2101, %v2132
        %v2135 = vunpack.c.l.s4 1934713408
        %v2136 = vunpack.c.0.s8 %v2135
        %v2137 = vperm.slane %v2131, %v2136
        %v2139 = vunpack.c.l.s4 1934713408
        %v2140 = vunpack.c.0.s8 %v2139
        %v2141 = vperm.slane %v2133, %v2140
        %v2142 = vrot.slane %v2105, 4
        %v2143 = vsel %vm1746, %v2142, %v2093
        %v2144 = vrot.slane %v2093, 4
        %v2145 = vsel %vm1746, %v2105, %v2144
        %v2147 = vunpack.c.l.s4 1934713408
        %v2148 = vunpack.c.0.s8 %v2147
        %v2149 = vperm.slane %v2143, %v2148
        %v2151 = vunpack.c.l.s4 1934713408
        %v2152 = vunpack.c.0.s8 %v2151
        %v2153 = vperm.slane %v2145, %v2152
        %v2154 = vrot.slane %v2125, 4
        %v2155 = vsel %vm1746, %v2154, %v2113
        %v2156 = vrot.slane %v2113, 4
        %v2157 = vsel %vm1746, %v2125, %v2156
        %v2159 = vunpack.c.l.s4 1934713408
        %v2160 = vunpack.c.0.s8 %v2159
        %v2161 = vperm.slane %v2155, %v2160
        %v2163 = vunpack.c.l.s4 1934713408
        %v2164 = vunpack.c.0.s8 %v2163
        %v2165 = vperm.slane %v2157, %v2164
        %v2166 = vrot.slane %v2129, 4
        %v2167 = vsel %vm1746, %v2166, %v2117
        %v2168 = vrot.slane %v2117, 4
        %v2169 = vsel %vm1746, %v2129, %v2168
        %v2171 = vunpack.c.l.s4 1934713408
        %v2172 = vunpack.c.0.s8 %v2171
        %v2173 = vperm.slane %v2167, %v2172
        %v2175 = vunpack.c.l.s4 1934713408
        %v2176 = vunpack.c.0.s8 %v2175
        %v2177 = vperm.slane %v2169, %v2176
        %v2178 = vrot.slane %v2161, 4
        %v2179 = vsel %vm1746, %v2178, %v2137
        %v2180 = vrot.slane %v2137, 4
        %v2181 = vsel %vm1746, %v2161, %v2180
        %v2182 = vrot.slane %v2165, 4
        %v2183 = vsel %vm1746, %v2182, %v2141
        %v2184 = vrot.slane %v2141, 4
        %v2185 = vsel %vm1746, %v2165, %v2184
        %v2186 = vrot.slane %v2173, 4
        %v2187 = vsel %vm1746, %v2186, %v2149
        %v2188 = vrot.slane %v2149, 4
        %v2189 = vsel %vm1746, %v2173, %v2188
        %v2190 = vrot.slane %v2177, 4
        %v2191 = vsel %vm1746, %v2190, %v2153
        %v2192 = vrot.slane %v2153, 4
        %v2193 = vsel %vm1746, %v2177, %v2192
        %v2194 = vrot.slane %v308, 4
        %v2195 = vsel %vm1746, %v2194, %v226
        %v2196 = vrot.slane %v226, 4
        %v2197 = vsel %vm1746, %v308, %v2196
        %v2199 = vunpack.c.l.s4 1983009808
        %v2200 = vunpack.c.0.s8 %v2199
        %v2201 = vperm.slane %v2195, %v2200
        %v2203 = vunpack.c.l.s4 1983009808
        %v2204 = vunpack.c.0.s8 %v2203
        %v2205 = vperm.slane %v2197, %v2204
        %v2206 = vrot.slane %v356, 4
        %v2207 = vsel %vm1746, %v2206, %v260
        %v2208 = vrot.slane %v260, 4
        %v2209 = vsel %vm1746, %v356, %v2208
        %v2211 = vunpack.c.l.s4 1983009808
        %v2212 = vunpack.c.0.s8 %v2211
        %v2213 = vperm.slane %v2207, %v2212
        %v2215 = vunpack.c.l.s4 1983009808
        %v2216 = vunpack.c.0.s8 %v2215
        %v2217 = vperm.slane %v2209, %v2216
        %v2218 = vrot.slane %v500, 4
        %v2219 = vsel %vm1746, %v2218, %v404
        %v2220 = vrot.slane %v404, 4
        %v2221 = vsel %vm1746, %v500, %v2220
        %v2223 = vunpack.c.l.s4 1983009808
        %v2224 = vunpack.c.0.s8 %v2223
        %v2225 = vperm.slane %v2219, %v2224
        %v2227 = vunpack.c.l.s4 1983009808
        %v2228 = vunpack.c.0.s8 %v2227
        %v2229 = vperm.slane %v2221, %v2228
        %v2230 = vrot.slane %v548, 4
        %v2231 = vsel %vm1746, %v2230, %v452
        %v2232 = vrot.slane %v452, 4
        %v2233 = vsel %vm1746, %v548, %v2232
        %v2235 = vunpack.c.l.s4 1983009808
        %v2236 = vunpack.c.0.s8 %v2235
        %v2237 = vperm.slane %v2231, %v2236
        %v2239 = vunpack.c.l.s4 1983009808
        %v2240 = vunpack.c.0.s8 %v2239
        %v2241 = vperm.slane %v2233, %v2240
        %v2242 = vrot.slane %v2213, 4
        %v2243 = vsel %vm1746, %v2242, %v2201
        %v2244 = vrot.slane %v2201, 4
        %v2245 = vsel %vm1746, %v2213, %v2244
        %v2247 = vunpack.c.l.s4 1934713408
        %v2248 = vunpack.c.0.s8 %v2247
        %v2249 = vperm.slane %v2243, %v2248
        %v2251 = vunpack.c.l.s4 1934713408
        %v2252 = vunpack.c.0.s8 %v2251
        %v2253 = vperm.slane %v2245, %v2252
        %v2254 = vrot.slane %v2217, 4
        %v2255 = vsel %vm1746, %v2254, %v2205
        %v2256 = vrot.slane %v2205, 4
        %v2257 = vsel %vm1746, %v2217, %v2256
        %v2259 = vunpack.c.l.s4 1934713408
        %v2260 = vunpack.c.0.s8 %v2259
        %v2261 = vperm.slane %v2255, %v2260
        %v2263 = vunpack.c.l.s4 1934713408
        %v2264 = vunpack.c.0.s8 %v2263
        %v2265 = vperm.slane %v2257, %v2264
        %v2266 = vrot.slane %v2237, 4
        %v2267 = vsel %vm1746, %v2266, %v2225
        %v2268 = vrot.slane %v2225, 4
        %v2269 = vsel %vm1746, %v2237, %v2268
        %v2271 = vunpack.c.l.s4 1934713408
        %v2272 = vunpack.c.0.s8 %v2271
        %v2273 = vperm.slane %v2267, %v2272
        %v2275 = vunpack.c.l.s4 1934713408
        %v2276 = vunpack.c.0.s8 %v2275
        %v2277 = vperm.slane %v2269, %v2276
        %v2278 = vrot.slane %v2241, 4
        %v2279 = vsel %vm1746, %v2278, %v2229
        %v2280 = vrot.slane %v2229, 4
        %v2281 = vsel %vm1746, %v2241, %v2280
        %v2283 = vunpack.c.l.s4 1934713408
        %v2284 = vunpack.c.0.s8 %v2283
        %v2285 = vperm.slane %v2279, %v2284
        %v2287 = vunpack.c.l.s4 1934713408
        %v2288 = vunpack.c.0.s8 %v2287
        %v2289 = vperm.slane %v2281, %v2288
        %v2290 = vrot.slane %v2273, 4
        %v2291 = vsel %vm1746, %v2290, %v2249
        %v2292 = vrot.slane %v2249, 4
        %v2293 = vsel %vm1746, %v2273, %v2292
        %v2294 = vrot.slane %v2277, 4
        %v2295 = vsel %vm1746, %v2294, %v2253
        %v2296 = vrot.slane %v2253, 4
        %v2297 = vsel %vm1746, %v2277, %v2296
        %v2298 = vrot.slane %v2285, 4
        %v2299 = vsel %vm1746, %v2298, %v2261
        %v2300 = vrot.slane %v2261, 4
        %v2301 = vsel %vm1746, %v2285, %v2300
        %v2302 = vrot.slane %v2289, 4
        %v2303 = vsel %vm1746, %v2302, %v2265
        %v2304 = vrot.slane %v2265, 4
        %v2305 = vsel %vm1746, %v2289, %v2304
        %v2306 = vrot.slane %v692, 4
        %v2307 = vsel %vm1746, %v2306, %v596
        %v2308 = vrot.slane %v596, 4
        %v2309 = vsel %vm1746, %v692, %v2308
        %v2311 = vunpack.c.l.s4 1983009808
        %v2312 = vunpack.c.0.s8 %v2311
        %v2313 = vperm.slane %v2307, %v2312
        %v2315 = vunpack.c.l.s4 1983009808
        %v2316 = vunpack.c.0.s8 %v2315
        %v2317 = vperm.slane %v2309, %v2316
        %v2318 = vrot.slane %v740, 4
        %v2319 = vsel %vm1746, %v2318, %v644
        %v2320 = vrot.slane %v644, 4
        %v2321 = vsel %vm1746, %v740, %v2320
        %v2323 = vunpack.c.l.s4 1983009808
        %v2324 = vunpack.c.0.s8 %v2323
        %v2325 = vperm.slane %v2319, %v2324
        %v2327 = vunpack.c.l.s4 1983009808
        %v2328 = vunpack.c.0.s8 %v2327
        %v2329 = vperm.slane %v2321, %v2328
        %v2330 = vrot.slane %v884, 4
        %v2331 = vsel %vm1746, %v2330, %v788
        %v2332 = vrot.slane %v788, 4
        %v2333 = vsel %vm1746, %v884, %v2332
        %v2335 = vunpack.c.l.s4 1983009808
        %v2336 = vunpack.c.0.s8 %v2335
        %v2337 = vperm.slane %v2331, %v2336
        %v2339 = vunpack.c.l.s4 1983009808
        %v2340 = vunpack.c.0.s8 %v2339
        %v2341 = vperm.slane %v2333, %v2340
        %v2342 = vrot.slane %v932, 4
        %v2343 = vsel %vm1746, %v2342, %v836
        %v2344 = vrot.slane %v836, 4
        %v2345 = vsel %vm1746, %v932, %v2344
        %v2347 = vunpack.c.l.s4 1983009808
        %v2348 = vunpack.c.0.s8 %v2347
        %v2349 = vperm.slane %v2343, %v2348
        %v2351 = vunpack.c.l.s4 1983009808
        %v2352 = vunpack.c.0.s8 %v2351
        %v2353 = vperm.slane %v2345, %v2352
        %v2354 = vrot.slane %v2325, 4
        %v2355 = vsel %vm1746, %v2354, %v2313
        %v2356 = vrot.slane %v2313, 4
        %v2357 = vsel %vm1746, %v2325, %v2356
        %v2359 = vunpack.c.l.s4 1934713408
        %v2360 = vunpack.c.0.s8 %v2359
        %v2361 = vperm.slane %v2355, %v2360
        %v2363 = vunpack.c.l.s4 1934713408
        %v2364 = vunpack.c.0.s8 %v2363
        %v2365 = vperm.slane %v2357, %v2364
        %v2366 = vrot.slane %v2329, 4
        %v2367 = vsel %vm1746, %v2366, %v2317
        %v2368 = vrot.slane %v2317, 4
        %v2369 = vsel %vm1746, %v2329, %v2368
        %v2371 = vunpack.c.l.s4 1934713408
        %v2372 = vunpack.c.0.s8 %v2371
        %v2373 = vperm.slane %v2367, %v2372
        %v2375 = vunpack.c.l.s4 1934713408
        %v2376 = vunpack.c.0.s8 %v2375
        %v2377 = vperm.slane %v2369, %v2376
        %v2378 = vrot.slane %v2349, 4
        %v2379 = vsel %vm1746, %v2378, %v2337
        %v2380 = vrot.slane %v2337, 4
        %v2381 = vsel %vm1746, %v2349, %v2380
        %v2383 = vunpack.c.l.s4 1934713408
        %v2384 = vunpack.c.0.s8 %v2383
        %v2385 = vperm.slane %v2379, %v2384
        %v2387 = vunpack.c.l.s4 1934713408
        %v2388 = vunpack.c.0.s8 %v2387
        %v2389 = vperm.slane %v2381, %v2388
        %v2390 = vrot.slane %v2353, 4
        %v2391 = vsel %vm1746, %v2390, %v2341
        %v2392 = vrot.slane %v2341, 4
        %v2393 = vsel %vm1746, %v2353, %v2392
        %v2395 = vunpack.c.l.s4 1934713408
        %v2396 = vunpack.c.0.s8 %v2395
        %v2397 = vperm.slane %v2391, %v2396
        %v2399 = vunpack.c.l.s4 1934713408
        %v2400 = vunpack.c.0.s8 %v2399
        %v2401 = vperm.slane %v2393, %v2400
        %v2402 = vrot.slane %v2385, 4
        %v2403 = vsel %vm1746, %v2402, %v2361
        %v2404 = vrot.slane %v2361, 4
        %v2405 = vsel %vm1746, %v2385, %v2404
        %v2406 = vrot.slane %v2389, 4
        %v2407 = vsel %vm1746, %v2406, %v2365
        %v2408 = vrot.slane %v2365, 4
        %v2409 = vsel %vm1746, %v2389, %v2408
        %v2410 = vrot.slane %v2397, 4
        %v2411 = vsel %vm1746, %v2410, %v2373
        %v2412 = vrot.slane %v2373, 4
        %v2413 = vsel %vm1746, %v2397, %v2412
        %v2414 = vrot.slane %v2401, 4
        %v2415 = vsel %vm1746, %v2414, %v2377
        %v2416 = vrot.slane %v2377, 4
        %v2417 = vsel %vm1746, %v2401, %v2416
        %v2418 = vrot.slane %v1076, 4
        %v2419 = vsel %vm1746, %v2418, %v980
        %v2420 = vrot.slane %v980, 4
        %v2421 = vsel %vm1746, %v1076, %v2420
        %v2423 = vunpack.c.l.s4 1983009808
        %v2424 = vunpack.c.0.s8 %v2423
        %v2425 = vperm.slane %v2419, %v2424
        %v2427 = vunpack.c.l.s4 1983009808
        %v2428 = vunpack.c.0.s8 %v2427
        %v2429 = vperm.slane %v2421, %v2428
        %v2430 = vrot.slane %v1124, 4
        %v2431 = vsel %vm1746, %v2430, %v1028
        %v2432 = vrot.slane %v1028, 4
        %v2433 = vsel %vm1746, %v1124, %v2432
        %v2435 = vunpack.c.l.s4 1983009808
        %v2436 = vunpack.c.0.s8 %v2435
        %v2437 = vperm.slane %v2431, %v2436
        %v2439 = vunpack.c.l.s4 1983009808
        %v2440 = vunpack.c.0.s8 %v2439
        %v2441 = vperm.slane %v2433, %v2440
        %v2442 = vrot.slane %v1268, 4
        %v2443 = vsel %vm1746, %v2442, %v1172
        %v2444 = vrot.slane %v1172, 4
        %v2445 = vsel %vm1746, %v1268, %v2444
        %v2447 = vunpack.c.l.s4 1983009808
        %v2448 = vunpack.c.0.s8 %v2447
        %v2449 = vperm.slane %v2443, %v2448
        %v2451 = vunpack.c.l.s4 1983009808
        %v2452 = vunpack.c.0.s8 %v2451
        %v2453 = vperm.slane %v2445, %v2452
        %v2454 = vrot.slane %v1316, 4
        %v2455 = vsel %vm1746, %v2454, %v1220
        %v2456 = vrot.slane %v1220, 4
        %v2457 = vsel %vm1746, %v1316, %v2456
        %v2459 = vunpack.c.l.s4 1983009808
        %v2460 = vunpack.c.0.s8 %v2459
        %v2461 = vperm.slane %v2455, %v2460
        %v2463 = vunpack.c.l.s4 1983009808
        %v2464 = vunpack.c.0.s8 %v2463
        %v2465 = vperm.slane %v2457, %v2464
        %v2466 = vrot.slane %v2437, 4
        %v2467 = vsel %vm1746, %v2466, %v2425
        %v2468 = vrot.slane %v2425, 4
        %v2469 = vsel %vm1746, %v2437, %v2468
        %v2471 = vunpack.c.l.s4 1934713408
        %v2472 = vunpack.c.0.s8 %v2471
        %v2473 = vperm.slane %v2467, %v2472
        %v2475 = vunpack.c.l.s4 1934713408
        %v2476 = vunpack.c.0.s8 %v2475
        %v2477 = vperm.slane %v2469, %v2476
        %v2478 = vrot.slane %v2441, 4
        %v2479 = vsel %vm1746, %v2478, %v2429
        %v2480 = vrot.slane %v2429, 4
        %v2481 = vsel %vm1746, %v2441, %v2480
        %v2483 = vunpack.c.l.s4 1934713408
        %v2484 = vunpack.c.0.s8 %v2483
        %v2485 = vperm.slane %v2479, %v2484
        %v2487 = vunpack.c.l.s4 1934713408
        %v2488 = vunpack.c.0.s8 %v2487
        %v2489 = vperm.slane %v2481, %v2488
        %v2490 = vrot.slane %v2461, 4
        %v2491 = vsel %vm1746, %v2490, %v2449
        %v2492 = vrot.slane %v2449, 4
        %v2493 = vsel %vm1746, %v2461, %v2492
        %v2495 = vunpack.c.l.s4 1934713408
        %v2496 = vunpack.c.0.s8 %v2495
        %v2497 = vperm.slane %v2491, %v2496
        %v2499 = vunpack.c.l.s4 1934713408
        %v2500 = vunpack.c.0.s8 %v2499
        %v2501 = vperm.slane %v2493, %v2500
        %v2502 = vrot.slane %v2465, 4
        %v2503 = vsel %vm1746, %v2502, %v2453
        %v2504 = vrot.slane %v2453, 4
        %v2505 = vsel %vm1746, %v2465, %v2504
        %v2507 = vunpack.c.l.s4 1934713408
        %v2508 = vunpack.c.0.s8 %v2507
        %v2509 = vperm.slane %v2503, %v2508
        %v2511 = vunpack.c.l.s4 1934713408
        %v2512 = vunpack.c.0.s8 %v2511
        %v2513 = vperm.slane %v2505, %v2512
        %v2514 = vrot.slane %v2497, 4
        %v2515 = vsel %vm1746, %v2514, %v2473
        %v2516 = vrot.slane %v2473, 4
        %v2517 = vsel %vm1746, %v2497, %v2516
        %v2518 = vrot.slane %v2501, 4
        %v2519 = vsel %vm1746, %v2518, %v2477
        %v2520 = vrot.slane %v2477, 4
        %v2521 = vsel %vm1746, %v2501, %v2520
        %v2522 = vrot.slane %v2509, 4
        %v2523 = vsel %vm1746, %v2522, %v2485
        %v2524 = vrot.slane %v2485, 4
        %v2525 = vsel %vm1746, %v2509, %v2524
        %v2526 = vrot.slane %v2513, 4
        %v2527 = vsel %vm1746, %v2526, %v2489
        %v2528 = vrot.slane %v2489, 4
        %v2529 = vsel %vm1746, %v2513, %v2528
        %v2530 = vrot.slane %v1460, 4
        %v2531 = vsel %vm1746, %v2530, %v1364
        %v2532 = vrot.slane %v1364, 4
        %v2533 = vsel %vm1746, %v1460, %v2532
        %v2535 = vunpack.c.l.s4 1983009808
        %v2536 = vunpack.c.0.s8 %v2535
        %v2537 = vperm.slane %v2531, %v2536
        %v2539 = vunpack.c.l.s4 1983009808
        %v2540 = vunpack.c.0.s8 %v2539
        %v2541 = vperm.slane %v2533, %v2540
        %v2542 = vrot.slane %v1508, 4
        %v2543 = vsel %vm1746, %v2542, %v1412
        %v2544 = vrot.slane %v1412, 4
        %v2545 = vsel %vm1746, %v1508, %v2544
        %v2547 = vunpack.c.l.s4 1983009808
        %v2548 = vunpack.c.0.s8 %v2547
        %v2549 = vperm.slane %v2543, %v2548
        %v2551 = vunpack.c.l.s4 1983009808
        %v2552 = vunpack.c.0.s8 %v2551
        %v2553 = vperm.slane %v2545, %v2552
        %v2554 = vrot.slane %v1652, 4
        %v2555 = vsel %vm1746, %v2554, %v1556
        %v2556 = vrot.slane %v1556, 4
        %v2557 = vsel %vm1746, %v1652, %v2556
        %v2559 = vunpack.c.l.s4 1983009808
        %v2560 = vunpack.c.0.s8 %v2559
        %v2561 = vperm.slane %v2555, %v2560
        %v2563 = vunpack.c.l.s4 1983009808
        %v2564 = vunpack.c.0.s8 %v2563
        %v2565 = vperm.slane %v2557, %v2564
        %v2566 = vrot.slane %v1700, 4
        %v2567 = vsel %vm1746, %v2566, %v1604
        %v2568 = vrot.slane %v1604, 4
        %v2569 = vsel %vm1746, %v1700, %v2568
        %v2571 = vunpack.c.l.s4 1983009808
        %v2572 = vunpack.c.0.s8 %v2571
        %v2573 = vperm.slane %v2567, %v2572
        %v2575 = vunpack.c.l.s4 1983009808
        %v2576 = vunpack.c.0.s8 %v2575
        %v2577 = vperm.slane %v2569, %v2576
        %v2578 = vrot.slane %v2549, 4
        %v2579 = vsel %vm1746, %v2578, %v2537
        %v2580 = vrot.slane %v2537, 4
        %v2581 = vsel %vm1746, %v2549, %v2580
        %v2583 = vunpack.c.l.s4 1934713408
        %v2584 = vunpack.c.0.s8 %v2583
        %v2585 = vperm.slane %v2579, %v2584
        %v2587 = vunpack.c.l.s4 1934713408
        %v2588 = vunpack.c.0.s8 %v2587
        %v2589 = vperm.slane %v2581, %v2588
        %v2590 = vrot.slane %v2553, 4
        %v2591 = vsel %vm1746, %v2590, %v2541
        %v2592 = vrot.slane %v2541, 4
        %v2593 = vsel %vm1746, %v2553, %v2592
        %v2595 = vunpack.c.l.s4 1934713408
        %v2596 = vunpack.c.0.s8 %v2595
        %v2597 = vperm.slane %v2591, %v2596
        %v2599 = vunpack.c.l.s4 1934713408
        %v2600 = vunpack.c.0.s8 %v2599
        %v2601 = vperm.slane %v2593, %v2600
        %v2602 = vrot.slane %v2573, 4
        %v2603 = vsel %vm1746, %v2602, %v2561
        %v2604 = vrot.slane %v2561, 4
        %v2605 = vsel %vm1746, %v2573, %v2604
        %v2607 = vunpack.c.l.s4 1934713408
        %v2608 = vunpack.c.0.s8 %v2607
        %v2609 = vperm.slane %v2603, %v2608
        %v2611 = vunpack.c.l.s4 1934713408
        %v2612 = vunpack.c.0.s8 %v2611
        %v2613 = vperm.slane %v2605, %v2612
        %v2614 = vrot.slane %v2577, 4
        %v2615 = vsel %vm1746, %v2614, %v2565
        %v2616 = vrot.slane %v2565, 4
        %v2617 = vsel %vm1746, %v2577, %v2616
        %v2619 = vunpack.c.l.s4 1934713408
        %v2620 = vunpack.c.0.s8 %v2619
        %v2621 = vperm.slane %v2615, %v2620
        %v2623 = vunpack.c.l.s4 1934713408
        %v2624 = vunpack.c.0.s8 %v2623
        %v2625 = vperm.slane %v2617, %v2624
        %v2626 = vrot.slane %v2609, 4
        %v2627 = vsel %vm1746, %v2626, %v2585
        %v2628 = vrot.slane %v2585, 4
        %v2629 = vsel %vm1746, %v2609, %v2628
        %v2630 = vrot.slane %v2613, 4
        %v2631 = vsel %vm1746, %v2630, %v2589
        %v2632 = vrot.slane %v2589, 4
        %v2633 = vsel %vm1746, %v2613, %v2632
        %v2634 = vrot.slane %v2621, 4
        %v2635 = vsel %vm1746, %v2634, %v2597
        %v2636 = vrot.slane %v2597, 4
        %v2637 = vsel %vm1746, %v2621, %v2636
        %v2638 = vrot.slane %v2625, 4
        %v2639 = vsel %vm1746, %v2638, %v2601
        %v2640 = vrot.slane %v2601, 4
        %v2641 = vsel %vm1746, %v2625, %v2640
        %v2642 = vrot.slane %v310, 4
        %v2643 = vsel %vm1746, %v2642, %v227
        %v2644 = vrot.slane %v227, 4
        %v2645 = vsel %vm1746, %v310, %v2644
        %v2647 = vunpack.c.l.s4 1983009808
        %v2648 = vunpack.c.0.s8 %v2647
        %v2649 = vperm.slane %v2643, %v2648
        %v2651 = vunpack.c.l.s4 1983009808
        %v2652 = vunpack.c.0.s8 %v2651
        %v2653 = vperm.slane %v2645, %v2652
        %v2654 = vrot.slane %v358, 4
        %v2655 = vsel %vm1746, %v2654, %v262
        %v2656 = vrot.slane %v262, 4
        %v2657 = vsel %vm1746, %v358, %v2656
        %v2659 = vunpack.c.l.s4 1983009808
        %v2660 = vunpack.c.0.s8 %v2659
        %v2661 = vperm.slane %v2655, %v2660
        %v2663 = vunpack.c.l.s4 1983009808
        %v2664 = vunpack.c.0.s8 %v2663
        %v2665 = vperm.slane %v2657, %v2664
        %v2666 = vrot.slane %v502, 4
        %v2667 = vsel %vm1746, %v2666, %v406
        %v2668 = vrot.slane %v406, 4
        %v2669 = vsel %vm1746, %v502, %v2668
        %v2671 = vunpack.c.l.s4 1983009808
        %v2672 = vunpack.c.0.s8 %v2671
        %v2673 = vperm.slane %v2667, %v2672
        %v2675 = vunpack.c.l.s4 1983009808
        %v2676 = vunpack.c.0.s8 %v2675
        %v2677 = vperm.slane %v2669, %v2676
        %v2678 = vrot.slane %v550, 4
        %v2679 = vsel %vm1746, %v2678, %v454
        %v2680 = vrot.slane %v454, 4
        %v2681 = vsel %vm1746, %v550, %v2680
        %v2683 = vunpack.c.l.s4 1983009808
        %v2684 = vunpack.c.0.s8 %v2683
        %v2685 = vperm.slane %v2679, %v2684
        %v2687 = vunpack.c.l.s4 1983009808
        %v2688 = vunpack.c.0.s8 %v2687
        %v2689 = vperm.slane %v2681, %v2688
        %v2690 = vrot.slane %v2661, 4
        %v2691 = vsel %vm1746, %v2690, %v2649
        %v2692 = vrot.slane %v2649, 4
        %v2693 = vsel %vm1746, %v2661, %v2692
        %v2695 = vunpack.c.l.s4 1934713408
        %v2696 = vunpack.c.0.s8 %v2695
        %v2697 = vperm.slane %v2691, %v2696
        %v2699 = vunpack.c.l.s4 1934713408
        %v2700 = vunpack.c.0.s8 %v2699
        %v2701 = vperm.slane %v2693, %v2700
        %v2702 = vrot.slane %v2665, 4
        %v2703 = vsel %vm1746, %v2702, %v2653
        %v2704 = vrot.slane %v2653, 4
        %v2705 = vsel %vm1746, %v2665, %v2704
        %v2707 = vunpack.c.l.s4 1934713408
        %v2708 = vunpack.c.0.s8 %v2707
        %v2709 = vperm.slane %v2703, %v2708
        %v2711 = vunpack.c.l.s4 1934713408
        %v2712 = vunpack.c.0.s8 %v2711
        %v2713 = vperm.slane %v2705, %v2712
        %v2714 = vrot.slane %v2685, 4
        %v2715 = vsel %vm1746, %v2714, %v2673
        %v2716 = vrot.slane %v2673, 4
        %v2717 = vsel %vm1746, %v2685, %v2716
        %v2719 = vunpack.c.l.s4 1934713408
        %v2720 = vunpack.c.0.s8 %v2719
        %v2721 = vperm.slane %v2715, %v2720
        %v2723 = vunpack.c.l.s4 1934713408
        %v2724 = vunpack.c.0.s8 %v2723
        %v2725 = vperm.slane %v2717, %v2724
        %v2726 = vrot.slane %v2689, 4
        %v2727 = vsel %vm1746, %v2726, %v2677
        %v2728 = vrot.slane %v2677, 4
        %v2729 = vsel %vm1746, %v2689, %v2728
        %v2731 = vunpack.c.l.s4 1934713408
        %v2732 = vunpack.c.0.s8 %v2731
        %v2733 = vperm.slane %v2727, %v2732
        %v2735 = vunpack.c.l.s4 1934713408
        %v2736 = vunpack.c.0.s8 %v2735
        %v2737 = vperm.slane %v2729, %v2736
        %v2738 = vrot.slane %v2721, 4
        %v2739 = vsel %vm1746, %v2738, %v2697
        %v2740 = vrot.slane %v2697, 4
        %v2741 = vsel %vm1746, %v2721, %v2740
        %v2742 = vrot.slane %v2725, 4
        %v2743 = vsel %vm1746, %v2742, %v2701
        %v2744 = vrot.slane %v2701, 4
        %v2745 = vsel %vm1746, %v2725, %v2744
        %v2746 = vrot.slane %v2733, 4
        %v2747 = vsel %vm1746, %v2746, %v2709
        %v2748 = vrot.slane %v2709, 4
        %v2749 = vsel %vm1746, %v2733, %v2748
        %v2750 = vrot.slane %v2737, 4
        %v2751 = vsel %vm1746, %v2750, %v2713
        %v2752 = vrot.slane %v2713, 4
        %v2753 = vsel %vm1746, %v2737, %v2752
        %v2754 = vrot.slane %v694, 4
        %v2755 = vsel %vm1746, %v2754, %v598
        %v2756 = vrot.slane %v598, 4
        %v2757 = vsel %vm1746, %v694, %v2756
        %v2759 = vunpack.c.l.s4 1983009808
        %v2760 = vunpack.c.0.s8 %v2759
        %v2761 = vperm.slane %v2755, %v2760
        %v2763 = vunpack.c.l.s4 1983009808
        %v2764 = vunpack.c.0.s8 %v2763
        %v2765 = vperm.slane %v2757, %v2764
        %v2766 = vrot.slane %v742, 4
        %v2767 = vsel %vm1746, %v2766, %v646
        %v2768 = vrot.slane %v646, 4
        %v2769 = vsel %vm1746, %v742, %v2768
        %v2771 = vunpack.c.l.s4 1983009808
        %v2772 = vunpack.c.0.s8 %v2771
        %v2773 = vperm.slane %v2767, %v2772
        %v2775 = vunpack.c.l.s4 1983009808
        %v2776 = vunpack.c.0.s8 %v2775
        %v2777 = vperm.slane %v2769, %v2776
        %v2778 = vrot.slane %v886, 4
        %v2779 = vsel %vm1746, %v2778, %v790
        %v2780 = vrot.slane %v790, 4
        %v2781 = vsel %vm1746, %v886, %v2780
        %v2783 = vunpack.c.l.s4 1983009808
        %v2784 = vunpack.c.0.s8 %v2783
        %v2785 = vperm.slane %v2779, %v2784
        %v2787 = vunpack.c.l.s4 1983009808
        %v2788 = vunpack.c.0.s8 %v2787
        %v2789 = vperm.slane %v2781, %v2788
        %v2790 = vrot.slane %v934, 4
        %v2791 = vsel %vm1746, %v2790, %v838
        %v2792 = vrot.slane %v838, 4
        %v2793 = vsel %vm1746, %v934, %v2792
        %v2795 = vunpack.c.l.s4 1983009808
        %v2796 = vunpack.c.0.s8 %v2795
        %v2797 = vperm.slane %v2791, %v2796
        %v2799 = vunpack.c.l.s4 1983009808
        %v2800 = vunpack.c.0.s8 %v2799
        %v2801 = vperm.slane %v2793, %v2800
        %v2802 = vrot.slane %v2773, 4
        %v2803 = vsel %vm1746, %v2802, %v2761
        %v2804 = vrot.slane %v2761, 4
        %v2805 = vsel %vm1746, %v2773, %v2804
        %v2807 = vunpack.c.l.s4 1934713408
        %v2808 = vunpack.c.0.s8 %v2807
        %v2809 = vperm.slane %v2803, %v2808
        %v2811 = vunpack.c.l.s4 1934713408
        %v2812 = vunpack.c.0.s8 %v2811
        %v2813 = vperm.slane %v2805, %v2812
        %v2814 = vrot.slane %v2777, 4
        %v2815 = vsel %vm1746, %v2814, %v2765
        %v2816 = vrot.slane %v2765, 4
        %v2817 = vsel %vm1746, %v2777, %v2816
        %v2819 = vunpack.c.l.s4 1934713408
        %v2820 = vunpack.c.0.s8 %v2819
        %v2821 = vperm.slane %v2815, %v2820
        %v2823 = vunpack.c.l.s4 1934713408
        %v2824 = vunpack.c.0.s8 %v2823
        %v2825 = vperm.slane %v2817, %v2824
        %v2826 = vrot.slane %v2797, 4
        %v2827 = vsel %vm1746, %v2826, %v2785
        %v2828 = vrot.slane %v2785, 4
        %v2829 = vsel %vm1746, %v2797, %v2828
        %v2831 = vunpack.c.l.s4 1934713408
        %v2832 = vunpack.c.0.s8 %v2831
        %v2833 = vperm.slane %v2827, %v2832
        %v2835 = vunpack.c.l.s4 1934713408
        %v2836 = vunpack.c.0.s8 %v2835
        %v2837 = vperm.slane %v2829, %v2836
        %v2838 = vrot.slane %v2801, 4
        %v2839 = vsel %vm1746, %v2838, %v2789
        %v2840 = vrot.slane %v2789, 4
        %v2841 = vsel %vm1746, %v2801, %v2840
        %v2843 = vunpack.c.l.s4 1934713408
        %v2844 = vunpack.c.0.s8 %v2843
        %v2845 = vperm.slane %v2839, %v2844
        %v2847 = vunpack.c.l.s4 1934713408
        %v2848 = vunpack.c.0.s8 %v2847
        %v2849 = vperm.slane %v2841, %v2848
        %v2850 = vrot.slane %v2833, 4
        %v2851 = vsel %vm1746, %v2850, %v2809
        %v2852 = vrot.slane %v2809, 4
        %v2853 = vsel %vm1746, %v2833, %v2852
        %v2854 = vrot.slane %v2837, 4
        %v2855 = vsel %vm1746, %v2854, %v2813
        %v2856 = vrot.slane %v2813, 4
        %v2857 = vsel %vm1746, %v2837, %v2856
        %v2858 = vrot.slane %v2845, 4
        %v2859 = vsel %vm1746, %v2858, %v2821
        %v2860 = vrot.slane %v2821, 4
        %v2861 = vsel %vm1746, %v2845, %v2860
        %v2862 = vrot.slane %v2849, 4
        %v2863 = vsel %vm1746, %v2862, %v2825
        %v2864 = vrot.slane %v2825, 4
        %v2865 = vsel %vm1746, %v2849, %v2864
        %v2866 = vrot.slane %v1078, 4
        %v2867 = vsel %vm1746, %v2866, %v982
        %v2868 = vrot.slane %v982, 4
        %v2869 = vsel %vm1746, %v1078, %v2868
        %v2871 = vunpack.c.l.s4 1983009808
        %v2872 = vunpack.c.0.s8 %v2871
        %v2873 = vperm.slane %v2867, %v2872
        %v2875 = vunpack.c.l.s4 1983009808
        %v2876 = vunpack.c.0.s8 %v2875
        %v2877 = vperm.slane %v2869, %v2876
        %v2878 = vrot.slane %v1126, 4
        %v2879 = vsel %vm1746, %v2878, %v1030
        %v2880 = vrot.slane %v1030, 4
        %v2881 = vsel %vm1746, %v1126, %v2880
        %v2883 = vunpack.c.l.s4 1983009808
        %v2884 = vunpack.c.0.s8 %v2883
        %v2885 = vperm.slane %v2879, %v2884
        %v2887 = vunpack.c.l.s4 1983009808
        %v2888 = vunpack.c.0.s8 %v2887
        %v2889 = vperm.slane %v2881, %v2888
        %v2890 = vrot.slane %v1270, 4
        %v2891 = vsel %vm1746, %v2890, %v1174
        %v2892 = vrot.slane %v1174, 4
        %v2893 = vsel %vm1746, %v1270, %v2892
        %v2895 = vunpack.c.l.s4 1983009808
        %v2896 = vunpack.c.0.s8 %v2895
        %v2897 = vperm.slane %v2891, %v2896
        %v2899 = vunpack.c.l.s4 1983009808
        %v2900 = vunpack.c.0.s8 %v2899
        %v2901 = vperm.slane %v2893, %v2900
        %v2902 = vrot.slane %v1318, 4
        %v2903 = vsel %vm1746, %v2902, %v1222
        %v2904 = vrot.slane %v1222, 4
        %v2905 = vsel %vm1746, %v1318, %v2904
        %v2907 = vunpack.c.l.s4 1983009808
        %v2908 = vunpack.c.0.s8 %v2907
        %v2909 = vperm.slane %v2903, %v2908
        %v2911 = vunpack.c.l.s4 1983009808
        %v2912 = vunpack.c.0.s8 %v2911
        %v2913 = vperm.slane %v2905, %v2912
        %v2914 = vrot.slane %v2885, 4
        %v2915 = vsel %vm1746, %v2914, %v2873
        %v2916 = vrot.slane %v2873, 4
        %v2917 = vsel %vm1746, %v2885, %v2916
        %v2919 = vunpack.c.l.s4 1934713408
        %v2920 = vunpack.c.0.s8 %v2919
        %v2921 = vperm.slane %v2915, %v2920
        %v2923 = vunpack.c.l.s4 1934713408
        %v2924 = vunpack.c.0.s8 %v2923
        %v2925 = vperm.slane %v2917, %v2924
        %v2926 = vrot.slane %v2889, 4
        %v2927 = vsel %vm1746, %v2926, %v2877
        %v2928 = vrot.slane %v2877, 4
        %v2929 = vsel %vm1746, %v2889, %v2928
        %v2931 = vunpack.c.l.s4 1934713408
        %v2932 = vunpack.c.0.s8 %v2931
        %v2933 = vperm.slane %v2927, %v2932
        %v2935 = vunpack.c.l.s4 1934713408
        %v2936 = vunpack.c.0.s8 %v2935
        %v2937 = vperm.slane %v2929, %v2936
        %v2938 = vrot.slane %v2909, 4
        %v2939 = vsel %vm1746, %v2938, %v2897
        %v2940 = vrot.slane %v2897, 4
        %v2941 = vsel %vm1746, %v2909, %v2940
        %v2943 = vunpack.c.l.s4 1934713408
        %v2944 = vunpack.c.0.s8 %v2943
        %v2945 = vperm.slane %v2939, %v2944
        %v2947 = vunpack.c.l.s4 1934713408
        %v2948 = vunpack.c.0.s8 %v2947
        %v2949 = vperm.slane %v2941, %v2948
        %v2950 = vrot.slane %v2913, 4
        %v2951 = vsel %vm1746, %v2950, %v2901
        %v2952 = vrot.slane %v2901, 4
        %v2953 = vsel %vm1746, %v2913, %v2952
        %v2955 = vunpack.c.l.s4 1934713408
        %v2956 = vunpack.c.0.s8 %v2955
        %v2957 = vperm.slane %v2951, %v2956
        %v2959 = vunpack.c.l.s4 1934713408
        %v2960 = vunpack.c.0.s8 %v2959
        %v2961 = vperm.slane %v2953, %v2960
        %v2962 = vrot.slane %v2945, 4
        %v2963 = vsel %vm1746, %v2962, %v2921
        %v2964 = vrot.slane %v2921, 4
        %v2965 = vsel %vm1746, %v2945, %v2964
        %v2966 = vrot.slane %v2949, 4
        %v2967 = vsel %vm1746, %v2966, %v2925
        %v2968 = vrot.slane %v2925, 4
        %v2969 = vsel %vm1746, %v2949, %v2968
        %v2970 = vrot.slane %v2957, 4
        %v2971 = vsel %vm1746, %v2970, %v2933
        %v2972 = vrot.slane %v2933, 4
        %v2973 = vsel %vm1746, %v2957, %v2972
        %v2974 = vrot.slane %v2961, 4
        %v2975 = vsel %vm1746, %v2974, %v2937
        %v2976 = vrot.slane %v2937, 4
        %v2977 = vsel %vm1746, %v2961, %v2976
        %v2978 = vrot.slane %v1462, 4
        %v2979 = vsel %vm1746, %v2978, %v1366
        %v2980 = vrot.slane %v1366, 4
        %v2981 = vsel %vm1746, %v1462, %v2980
        %v2983 = vunpack.c.l.s4 1983009808
        %v2984 = vunpack.c.0.s8 %v2983
        %v2985 = vperm.slane %v2979, %v2984
        %v2987 = vunpack.c.l.s4 1983009808
        %v2988 = vunpack.c.0.s8 %v2987
        %v2989 = vperm.slane %v2981, %v2988
        %v2990 = vrot.slane %v1510, 4
        %v2991 = vsel %vm1746, %v2990, %v1414
        %v2992 = vrot.slane %v1414, 4
        %v2993 = vsel %vm1746, %v1510, %v2992
        %v2995 = vunpack.c.l.s4 1983009808
        %v2996 = vunpack.c.0.s8 %v2995
        %v2997 = vperm.slane %v2991, %v2996
        %v2999 = vunpack.c.l.s4 1983009808
        %v3000 = vunpack.c.0.s8 %v2999
        %v3001 = vperm.slane %v2993, %v3000
        %v3002 = vrot.slane %v1654, 4
        %v3003 = vsel %vm1746, %v3002, %v1558
        %v3004 = vrot.slane %v1558, 4
        %v3005 = vsel %vm1746, %v1654, %v3004
        %v3007 = vunpack.c.l.s4 1983009808
        %v3008 = vunpack.c.0.s8 %v3007
        %v3009 = vperm.slane %v3003, %v3008
        %v3011 = vunpack.c.l.s4 1983009808
        %v3012 = vunpack.c.0.s8 %v3011
        %v3013 = vperm.slane %v3005, %v3012
        %v3014 = vrot.slane %v1702, 4
        %v3015 = vsel %vm1746, %v3014, %v1606
        %v3016 = vrot.slane %v1606, 4
        %v3017 = vsel %vm1746, %v1702, %v3016
        %v3019 = vunpack.c.l.s4 1983009808
        %v3020 = vunpack.c.0.s8 %v3019
        %v3021 = vperm.slane %v3015, %v3020
        %v3023 = vunpack.c.l.s4 1983009808
        %v3024 = vunpack.c.0.s8 %v3023
        %v3025 = vperm.slane %v3017, %v3024
        %v3026 = vrot.slane %v2997, 4
        %v3027 = vsel %vm1746, %v3026, %v2985
        %v3028 = vrot.slane %v2985, 4
        %v3029 = vsel %vm1746, %v2997, %v3028
        %v3031 = vunpack.c.l.s4 1934713408
        %v3032 = vunpack.c.0.s8 %v3031
        %v3033 = vperm.slane %v3027, %v3032
        %v3035 = vunpack.c.l.s4 1934713408
        %v3036 = vunpack.c.0.s8 %v3035
        %v3037 = vperm.slane %v3029, %v3036
        %v3038 = vrot.slane %v3001, 4
        %v3039 = vsel %vm1746, %v3038, %v2989
        %v3040 = vrot.slane %v2989, 4
        %v3041 = vsel %vm1746, %v3001, %v3040
        %v3043 = vunpack.c.l.s4 1934713408
        %v3044 = vunpack.c.0.s8 %v3043
        %v3045 = vperm.slane %v3039, %v3044
        %v3047 = vunpack.c.l.s4 1934713408
        %v3048 = vunpack.c.0.s8 %v3047
        %v3049 = vperm.slane %v3041, %v3048
        %v3050 = vrot.slane %v3021, 4
        %v3051 = vsel %vm1746, %v3050, %v3009
        %v3052 = vrot.slane %v3009, 4
        %v3053 = vsel %vm1746, %v3021, %v3052
        %v3055 = vunpack.c.l.s4 1934713408
        %v3056 = vunpack.c.0.s8 %v3055
        %v3057 = vperm.slane %v3051, %v3056
        %v3059 = vunpack.c.l.s4 1934713408
        %v3060 = vunpack.c.0.s8 %v3059
        %v3061 = vperm.slane %v3053, %v3060
        %v3062 = vrot.slane %v3025, 4
        %v3063 = vsel %vm1746, %v3062, %v3013
        %v3064 = vrot.slane %v3013, 4
        %v3065 = vsel %vm1746, %v3025, %v3064
        %v3067 = vunpack.c.l.s4 1934713408
        %v3068 = vunpack.c.0.s8 %v3067
        %v3069 = vperm.slane %v3063, %v3068
        %v3071 = vunpack.c.l.s4 1934713408
        %v3072 = vunpack.c.0.s8 %v3071
        %v3073 = vperm.slane %v3065, %v3072
        %v3074 = vrot.slane %v3057, 4
        %v3075 = vsel %vm1746, %v3074, %v3033
        %v3076 = vrot.slane %v3033, 4
        %v3077 = vsel %vm1746, %v3057, %v3076
        %v3078 = vrot.slane %v3061, 4
        %v3079 = vsel %vm1746, %v3078, %v3037
        %v3080 = vrot.slane %v3037, 4
        %v3081 = vsel %vm1746, %v3061, %v3080
        %v3082 = vrot.slane %v3069, 4
        %v3083 = vsel %vm1746, %v3082, %v3045
        %v3084 = vrot.slane %v3045, 4
        %v3085 = vsel %vm1746, %v3069, %v3084
        %v3086 = vrot.slane %v3073, 4
        %v3087 = vsel %vm1746, %v3086, %v3049
        %v3088 = vrot.slane %v3049, 4
        %v3089 = vsel %vm1746, %v3073, %v3088
        %v3090 = vrot.slane %v312, 4
        %v3091 = vsel %vm1746, %v3090, %v228
        %v3092 = vrot.slane %v228, 4
        %v3093 = vsel %vm1746, %v312, %v3092
        %v3095 = vunpack.c.l.s4 1983009808
        %v3096 = vunpack.c.0.s8 %v3095
        %v3097 = vperm.slane %v3091, %v3096
        %v3099 = vunpack.c.l.s4 1983009808
        %v3100 = vunpack.c.0.s8 %v3099
        %v3101 = vperm.slane %v3093, %v3100
        %v3102 = vrot.slane %v360, 4
        %v3103 = vsel %vm1746, %v3102, %v264
        %v3104 = vrot.slane %v264, 4
        %v3105 = vsel %vm1746, %v360, %v3104
        %v3107 = vunpack.c.l.s4 1983009808
        %v3108 = vunpack.c.0.s8 %v3107
        %v3109 = vperm.slane %v3103, %v3108
        %v3111 = vunpack.c.l.s4 1983009808
        %v3112 = vunpack.c.0.s8 %v3111
        %v3113 = vperm.slane %v3105, %v3112
        %v3114 = vrot.slane %v504, 4
        %v3115 = vsel %vm1746, %v3114, %v408
        %v3116 = vrot.slane %v408, 4
        %v3117 = vsel %vm1746, %v504, %v3116
        %v3119 = vunpack.c.l.s4 1983009808
        %v3120 = vunpack.c.0.s8 %v3119
        %v3121 = vperm.slane %v3115, %v3120
        %v3123 = vunpack.c.l.s4 1983009808
        %v3124 = vunpack.c.0.s8 %v3123
        %v3125 = vperm.slane %v3117, %v3124
        %v3126 = vrot.slane %v552, 4
        %v3127 = vsel %vm1746, %v3126, %v456
        %v3128 = vrot.slane %v456, 4
        %v3129 = vsel %vm1746, %v552, %v3128
        %v3131 = vunpack.c.l.s4 1983009808
        %v3132 = vunpack.c.0.s8 %v3131
        %v3133 = vperm.slane %v3127, %v3132
        %v3135 = vunpack.c.l.s4 1983009808
        %v3136 = vunpack.c.0.s8 %v3135
        %v3137 = vperm.slane %v3129, %v3136
        %v3138 = vrot.slane %v3109, 4
        %v3139 = vsel %vm1746, %v3138, %v3097
        %v3140 = vrot.slane %v3097, 4
        %v3141 = vsel %vm1746, %v3109, %v3140
        %v3143 = vunpack.c.l.s4 1934713408
        %v3144 = vunpack.c.0.s8 %v3143
        %v3145 = vperm.slane %v3139, %v3144
        %v3147 = vunpack.c.l.s4 1934713408
        %v3148 = vunpack.c.0.s8 %v3147
        %v3149 = vperm.slane %v3141, %v3148
        %v3150 = vrot.slane %v3113, 4
        %v3151 = vsel %vm1746, %v3150, %v3101
        %v3152 = vrot.slane %v3101, 4
        %v3153 = vsel %vm1746, %v3113, %v3152
        %v3155 = vunpack.c.l.s4 1934713408
        %v3156 = vunpack.c.0.s8 %v3155
        %v3157 = vperm.slane %v3151, %v3156
        %v3159 = vunpack.c.l.s4 1934713408
        %v3160 = vunpack.c.0.s8 %v3159
        %v3161 = vperm.slane %v3153, %v3160
        %v3162 = vrot.slane %v3133, 4
        %v3163 = vsel %vm1746, %v3162, %v3121
        %v3164 = vrot.slane %v3121, 4
        %v3165 = vsel %vm1746, %v3133, %v3164
        %v3167 = vunpack.c.l.s4 1934713408
        %v3168 = vunpack.c.0.s8 %v3167
        %v3169 = vperm.slane %v3163, %v3168
        %v3171 = vunpack.c.l.s4 1934713408
        %v3172 = vunpack.c.0.s8 %v3171
        %v3173 = vperm.slane %v3165, %v3172
        %v3174 = vrot.slane %v3137, 4
        %v3175 = vsel %vm1746, %v3174, %v3125
        %v3176 = vrot.slane %v3125, 4
        %v3177 = vsel %vm1746, %v3137, %v3176
        %v3179 = vunpack.c.l.s4 1934713408
        %v3180 = vunpack.c.0.s8 %v3179
        %v3181 = vperm.slane %v3175, %v3180
        %v3183 = vunpack.c.l.s4 1934713408
        %v3184 = vunpack.c.0.s8 %v3183
        %v3185 = vperm.slane %v3177, %v3184
        %v3186 = vrot.slane %v3169, 4
        %v3187 = vsel %vm1746, %v3186, %v3145
        %v3188 = vrot.slane %v3145, 4
        %v3189 = vsel %vm1746, %v3169, %v3188
        %v3190 = vrot.slane %v3173, 4
        %v3191 = vsel %vm1746, %v3190, %v3149
        %v3192 = vrot.slane %v3149, 4
        %v3193 = vsel %vm1746, %v3173, %v3192
        %v3194 = vrot.slane %v3181, 4
        %v3195 = vsel %vm1746, %v3194, %v3157
        %v3196 = vrot.slane %v3157, 4
        %v3197 = vsel %vm1746, %v3181, %v3196
        %v3198 = vrot.slane %v3185, 4
        %v3199 = vsel %vm1746, %v3198, %v3161
        %v3200 = vrot.slane %v3161, 4
        %v3201 = vsel %vm1746, %v3185, %v3200
        %v3202 = vrot.slane %v696, 4
        %v3203 = vsel %vm1746, %v3202, %v600
        %v3204 = vrot.slane %v600, 4
        %v3205 = vsel %vm1746, %v696, %v3204
        %v3207 = vunpack.c.l.s4 1983009808
        %v3208 = vunpack.c.0.s8 %v3207
        %v3209 = vperm.slane %v3203, %v3208
        %v3211 = vunpack.c.l.s4 1983009808
        %v3212 = vunpack.c.0.s8 %v3211
        %v3213 = vperm.slane %v3205, %v3212
        %v3214 = vrot.slane %v744, 4
        %v3215 = vsel %vm1746, %v3214, %v648
        %v3216 = vrot.slane %v648, 4
        %v3217 = vsel %vm1746, %v744, %v3216
        %v3219 = vunpack.c.l.s4 1983009808
        %v3220 = vunpack.c.0.s8 %v3219
        %v3221 = vperm.slane %v3215, %v3220
        %v3223 = vunpack.c.l.s4 1983009808
        %v3224 = vunpack.c.0.s8 %v3223
        %v3225 = vperm.slane %v3217, %v3224
        %v3226 = vrot.slane %v888, 4
        %v3227 = vsel %vm1746, %v3226, %v792
        %v3228 = vrot.slane %v792, 4
        %v3229 = vsel %vm1746, %v888, %v3228
        %v3231 = vunpack.c.l.s4 1983009808
        %v3232 = vunpack.c.0.s8 %v3231
        %v3233 = vperm.slane %v3227, %v3232
        %v3235 = vunpack.c.l.s4 1983009808
        %v3236 = vunpack.c.0.s8 %v3235
        %v3237 = vperm.slane %v3229, %v3236
        %v3238 = vrot.slane %v936, 4
        %v3239 = vsel %vm1746, %v3238, %v840
        %v3240 = vrot.slane %v840, 4
        %v3241 = vsel %vm1746, %v936, %v3240
        %v3243 = vunpack.c.l.s4 1983009808
        %v3244 = vunpack.c.0.s8 %v3243
        %v3245 = vperm.slane %v3239, %v3244
        %v3247 = vunpack.c.l.s4 1983009808
        %v3248 = vunpack.c.0.s8 %v3247
        %v3249 = vperm.slane %v3241, %v3248
        %v3250 = vrot.slane %v3221, 4
        %v3251 = vsel %vm1746, %v3250, %v3209
        %v3252 = vrot.slane %v3209, 4
        %v3253 = vsel %vm1746, %v3221, %v3252
        %v3255 = vunpack.c.l.s4 1934713408
        %v3256 = vunpack.c.0.s8 %v3255
        %v3257 = vperm.slane %v3251, %v3256
        %v3259 = vunpack.c.l.s4 1934713408
        %v3260 = vunpack.c.0.s8 %v3259
        %v3261 = vperm.slane %v3253, %v3260
        %v3262 = vrot.slane %v3225, 4
        %v3263 = vsel %vm1746, %v3262, %v3213
        %v3264 = vrot.slane %v3213, 4
        %v3265 = vsel %vm1746, %v3225, %v3264
        %v3267 = vunpack.c.l.s4 1934713408
        %v3268 = vunpack.c.0.s8 %v3267
        %v3269 = vperm.slane %v3263, %v3268
        %v3271 = vunpack.c.l.s4 1934713408
        %v3272 = vunpack.c.0.s8 %v3271
        %v3273 = vperm.slane %v3265, %v3272
        %v3274 = vrot.slane %v3245, 4
        %v3275 = vsel %vm1746, %v3274, %v3233
        %v3276 = vrot.slane %v3233, 4
        %v3277 = vsel %vm1746, %v3245, %v3276
        %v3279 = vunpack.c.l.s4 1934713408
        %v3280 = vunpack.c.0.s8 %v3279
        %v3281 = vperm.slane %v3275, %v3280
        %v3283 = vunpack.c.l.s4 1934713408
        %v3284 = vunpack.c.0.s8 %v3283
        %v3285 = vperm.slane %v3277, %v3284
        %v3286 = vrot.slane %v3249, 4
        %v3287 = vsel %vm1746, %v3286, %v3237
        %v3288 = vrot.slane %v3237, 4
        %v3289 = vsel %vm1746, %v3249, %v3288
        %v3291 = vunpack.c.l.s4 1934713408
        %v3292 = vunpack.c.0.s8 %v3291
        %v3293 = vperm.slane %v3287, %v3292
        %v3295 = vunpack.c.l.s4 1934713408
        %v3296 = vunpack.c.0.s8 %v3295
        %v3297 = vperm.slane %v3289, %v3296
        %v3298 = vrot.slane %v3281, 4
        %v3299 = vsel %vm1746, %v3298, %v3257
        %v3300 = vrot.slane %v3257, 4
        %v3301 = vsel %vm1746, %v3281, %v3300
        %v3302 = vrot.slane %v3285, 4
        %v3303 = vsel %vm1746, %v3302, %v3261
        %v3304 = vrot.slane %v3261, 4
        %v3305 = vsel %vm1746, %v3285, %v3304
        %v3306 = vrot.slane %v3293, 4
        %v3307 = vsel %vm1746, %v3306, %v3269
        %v3308 = vrot.slane %v3269, 4
        %v3309 = vsel %vm1746, %v3293, %v3308
        %v3310 = vrot.slane %v3297, 4
        %v3311 = vsel %vm1746, %v3310, %v3273
        %v3312 = vrot.slane %v3273, 4
        %v3313 = vsel %vm1746, %v3297, %v3312
        %v3314 = vrot.slane %v1080, 4
        %v3315 = vsel %vm1746, %v3314, %v984
        %v3316 = vrot.slane %v984, 4
        %v3317 = vsel %vm1746, %v1080, %v3316
        %v3319 = vunpack.c.l.s4 1983009808
        %v3320 = vunpack.c.0.s8 %v3319
        %v3321 = vperm.slane %v3315, %v3320
        %v3323 = vunpack.c.l.s4 1983009808
        %v3324 = vunpack.c.0.s8 %v3323
        %v3325 = vperm.slane %v3317, %v3324
        %v3326 = vrot.slane %v1128, 4
        %v3327 = vsel %vm1746, %v3326, %v1032
        %v3328 = vrot.slane %v1032, 4
        %v3329 = vsel %vm1746, %v1128, %v3328
        %v3331 = vunpack.c.l.s4 1983009808
        %v3332 = vunpack.c.0.s8 %v3331
        %v3333 = vperm.slane %v3327, %v3332
        %v3335 = vunpack.c.l.s4 1983009808
        %v3336 = vunpack.c.0.s8 %v3335
        %v3337 = vperm.slane %v3329, %v3336
        %v3338 = vrot.slane %v1272, 4
        %v3339 = vsel %vm1746, %v3338, %v1176
        %v3340 = vrot.slane %v1176, 4
        %v3341 = vsel %vm1746, %v1272, %v3340
        %v3343 = vunpack.c.l.s4 1983009808
        %v3344 = vunpack.c.0.s8 %v3343
        %v3345 = vperm.slane %v3339, %v3344
        %v3347 = vunpack.c.l.s4 1983009808
        %v3348 = vunpack.c.0.s8 %v3347
        %v3349 = vperm.slane %v3341, %v3348
        %v3350 = vrot.slane %v1320, 4
        %v3351 = vsel %vm1746, %v3350, %v1224
        %v3352 = vrot.slane %v1224, 4
        %v3353 = vsel %vm1746, %v1320, %v3352
        %v3355 = vunpack.c.l.s4 1983009808
        %v3356 = vunpack.c.0.s8 %v3355
        %v3357 = vperm.slane %v3351, %v3356
        %v3359 = vunpack.c.l.s4 1983009808
        %v3360 = vunpack.c.0.s8 %v3359
        %v3361 = vperm.slane %v3353, %v3360
        %v3362 = vrot.slane %v3333, 4
        %v3363 = vsel %vm1746, %v3362, %v3321
        %v3364 = vrot.slane %v3321, 4
        %v3365 = vsel %vm1746, %v3333, %v3364
        %v3367 = vunpack.c.l.s4 1934713408
        %v3368 = vunpack.c.0.s8 %v3367
        %v3369 = vperm.slane %v3363, %v3368
        %v3371 = vunpack.c.l.s4 1934713408
        %v3372 = vunpack.c.0.s8 %v3371
        %v3373 = vperm.slane %v3365, %v3372
        %v3374 = vrot.slane %v3337, 4
        %v3375 = vsel %vm1746, %v3374, %v3325
        %v3376 = vrot.slane %v3325, 4
        %v3377 = vsel %vm1746, %v3337, %v3376
        %v3379 = vunpack.c.l.s4 1934713408
        %v3380 = vunpack.c.0.s8 %v3379
        %v3381 = vperm.slane %v3375, %v3380
        %v3383 = vunpack.c.l.s4 1934713408
        %v3384 = vunpack.c.0.s8 %v3383
        %v3385 = vperm.slane %v3377, %v3384
        %v3386 = vrot.slane %v3357, 4
        %v3387 = vsel %vm1746, %v3386, %v3345
        %v3388 = vrot.slane %v3345, 4
        %v3389 = vsel %vm1746, %v3357, %v3388
        %v3391 = vunpack.c.l.s4 1934713408
        %v3392 = vunpack.c.0.s8 %v3391
        %v3393 = vperm.slane %v3387, %v3392
        %v3395 = vunpack.c.l.s4 1934713408
        %v3396 = vunpack.c.0.s8 %v3395
        %v3397 = vperm.slane %v3389, %v3396
        %v3398 = vrot.slane %v3361, 4
        %v3399 = vsel %vm1746, %v3398, %v3349
        %v3400 = vrot.slane %v3349, 4
        %v3401 = vsel %vm1746, %v3361, %v3400
        %v3403 = vunpack.c.l.s4 1934713408
        %v3404 = vunpack.c.0.s8 %v3403
        %v3405 = vperm.slane %v3399, %v3404
        %v3407 = vunpack.c.l.s4 1934713408
        %v3408 = vunpack.c.0.s8 %v3407
        %v3409 = vperm.slane %v3401, %v3408
        %v3410 = vrot.slane %v3393, 4
        %v3411 = vsel %vm1746, %v3410, %v3369
        %v3412 = vrot.slane %v3369, 4
        %v3413 = vsel %vm1746, %v3393, %v3412
        %v3414 = vrot.slane %v3397, 4
        %v3415 = vsel %vm1746, %v3414, %v3373
        %v3416 = vrot.slane %v3373, 4
        %v3417 = vsel %vm1746, %v3397, %v3416
        %v3418 = vrot.slane %v3405, 4
        %v3419 = vsel %vm1746, %v3418, %v3381
        %v3420 = vrot.slane %v3381, 4
        %v3421 = vsel %vm1746, %v3405, %v3420
        %v3422 = vrot.slane %v3409, 4
        %v3423 = vsel %vm1746, %v3422, %v3385
        %v3424 = vrot.slane %v3385, 4
        %v3425 = vsel %vm1746, %v3409, %v3424
        %v3426 = vrot.slane %v1464, 4
        %v3427 = vsel %vm1746, %v3426, %v1368
        %v3428 = vrot.slane %v1368, 4
        %v3429 = vsel %vm1746, %v1464, %v3428
        %v3431 = vunpack.c.l.s4 1983009808
        %v3432 = vunpack.c.0.s8 %v3431
        %v3433 = vperm.slane %v3427, %v3432
        %v3435 = vunpack.c.l.s4 1983009808
        %v3436 = vunpack.c.0.s8 %v3435
        %v3437 = vperm.slane %v3429, %v3436
        %v3438 = vrot.slane %v1512, 4
        %v3439 = vsel %vm1746, %v3438, %v1416
        %v3440 = vrot.slane %v1416, 4
        %v3441 = vsel %vm1746, %v1512, %v3440
        %v3443 = vunpack.c.l.s4 1983009808
        %v3444 = vunpack.c.0.s8 %v3443
        %v3445 = vperm.slane %v3439, %v3444
        %v3447 = vunpack.c.l.s4 1983009808
        %v3448 = vunpack.c.0.s8 %v3447
        %v3449 = vperm.slane %v3441, %v3448
        %v3450 = vrot.slane %v1656, 4
        %v3451 = vsel %vm1746, %v3450, %v1560
        %v3452 = vrot.slane %v1560, 4
        %v3453 = vsel %vm1746, %v1656, %v3452
        %v3455 = vunpack.c.l.s4 1983009808
        %v3456 = vunpack.c.0.s8 %v3455
        %v3457 = vperm.slane %v3451, %v3456
        %v3459 = vunpack.c.l.s4 1983009808
        %v3460 = vunpack.c.0.s8 %v3459
        %v3461 = vperm.slane %v3453, %v3460
        %v3462 = vrot.slane %v1704, 4
        %v3463 = vsel %vm1746, %v3462, %v1608
        %v3464 = vrot.slane %v1608, 4
        %v3465 = vsel %vm1746, %v1704, %v3464
        %v3467 = vunpack.c.l.s4 1983009808
        %v3468 = vunpack.c.0.s8 %v3467
        %v3469 = vperm.slane %v3463, %v3468
        %v3471 = vunpack.c.l.s4 1983009808
        %v3472 = vunpack.c.0.s8 %v3471
        %v3473 = vperm.slane %v3465, %v3472
        %v3474 = vrot.slane %v3445, 4
        %v3475 = vsel %vm1746, %v3474, %v3433
        %v3476 = vrot.slane %v3433, 4
        %v3477 = vsel %vm1746, %v3445, %v3476
        %v3479 = vunpack.c.l.s4 1934713408
        %v3480 = vunpack.c.0.s8 %v3479
        %v3481 = vperm.slane %v3475, %v3480
        %v3483 = vunpack.c.l.s4 1934713408
        %v3484 = vunpack.c.0.s8 %v3483
        %v3485 = vperm.slane %v3477, %v3484
        %v3486 = vrot.slane %v3449, 4
        %v3487 = vsel %vm1746, %v3486, %v3437
        %v3488 = vrot.slane %v3437, 4
        %v3489 = vsel %vm1746, %v3449, %v3488
        %v3491 = vunpack.c.l.s4 1934713408
        %v3492 = vunpack.c.0.s8 %v3491
        %v3493 = vperm.slane %v3487, %v3492
        %v3495 = vunpack.c.l.s4 1934713408
        %v3496 = vunpack.c.0.s8 %v3495
        %v3497 = vperm.slane %v3489, %v3496
        %v3498 = vrot.slane %v3469, 4
        %v3499 = vsel %vm1746, %v3498, %v3457
        %v3500 = vrot.slane %v3457, 4
        %v3501 = vsel %vm1746, %v3469, %v3500
        %v3503 = vunpack.c.l.s4 1934713408
        %v3504 = vunpack.c.0.s8 %v3503
        %v3505 = vperm.slane %v3499, %v3504
        %v3507 = vunpack.c.l.s4 1934713408
        %v3508 = vunpack.c.0.s8 %v3507
        %v3509 = vperm.slane %v3501, %v3508
        %v3510 = vrot.slane %v3473, 4
        %v3511 = vsel %vm1746, %v3510, %v3461
        %v3512 = vrot.slane %v3461, 4
        %v3513 = vsel %vm1746, %v3473, %v3512
        %v3515 = vunpack.c.l.s4 1934713408
        %v3516 = vunpack.c.0.s8 %v3515
        %v3517 = vperm.slane %v3511, %v3516
        %v3519 = vunpack.c.l.s4 1934713408
        %v3520 = vunpack.c.0.s8 %v3519
        %v3521 = vperm.slane %v3513, %v3520
        %v3522 = vrot.slane %v3505, 4
        %v3523 = vsel %vm1746, %v3522, %v3481
        %v3524 = vrot.slane %v3481, 4
        %v3525 = vsel %vm1746, %v3505, %v3524
        %v3526 = vrot.slane %v3509, 4
        %v3527 = vsel %vm1746, %v3526, %v3485
        %v3528 = vrot.slane %v3485, 4
        %v3529 = vsel %vm1746, %v3509, %v3528
        %v3530 = vrot.slane %v3517, 4
        %v3531 = vsel %vm1746, %v3530, %v3493
        %v3532 = vrot.slane %v3493, 4
        %v3533 = vsel %vm1746, %v3517, %v3532
        %v3534 = vrot.slane %v3521, 4
        %v3535 = vsel %vm1746, %v3534, %v3497
        %v3536 = vrot.slane %v3497, 4
        %v3537 = vsel %vm1746, %v3521, %v3536
        %v3538 = vrot.slane %v314, 4
        %v3539 = vsel %vm1746, %v3538, %v229
        %v3540 = vrot.slane %v229, 4
        %v3541 = vsel %vm1746, %v314, %v3540
        %v3543 = vunpack.c.l.s4 1983009808
        %v3544 = vunpack.c.0.s8 %v3543
        %v3545 = vperm.slane %v3539, %v3544
        %v3547 = vunpack.c.l.s4 1983009808
        %v3548 = vunpack.c.0.s8 %v3547
        %v3549 = vperm.slane %v3541, %v3548
        %v3550 = vrot.slane %v362, 4
        %v3551 = vsel %vm1746, %v3550, %v266
        %v3552 = vrot.slane %v266, 4
        %v3553 = vsel %vm1746, %v362, %v3552
        %v3555 = vunpack.c.l.s4 1983009808
        %v3556 = vunpack.c.0.s8 %v3555
        %v3557 = vperm.slane %v3551, %v3556
        %v3559 = vunpack.c.l.s4 1983009808
        %v3560 = vunpack.c.0.s8 %v3559
        %v3561 = vperm.slane %v3553, %v3560
        %v3562 = vrot.slane %v506, 4
        %v3563 = vsel %vm1746, %v3562, %v410
        %v3564 = vrot.slane %v410, 4
        %v3565 = vsel %vm1746, %v506, %v3564
        %v3567 = vunpack.c.l.s4 1983009808
        %v3568 = vunpack.c.0.s8 %v3567
        %v3569 = vperm.slane %v3563, %v3568
        %v3571 = vunpack.c.l.s4 1983009808
        %v3572 = vunpack.c.0.s8 %v3571
        %v3573 = vperm.slane %v3565, %v3572
        %v3574 = vrot.slane %v554, 4
        %v3575 = vsel %vm1746, %v3574, %v458
        %v3576 = vrot.slane %v458, 4
        %v3577 = vsel %vm1746, %v554, %v3576
        %v3579 = vunpack.c.l.s4 1983009808
        %v3580 = vunpack.c.0.s8 %v3579
        %v3581 = vperm.slane %v3575, %v3580
        %v3583 = vunpack.c.l.s4 1983009808
        %v3584 = vunpack.c.0.s8 %v3583
        %v3585 = vperm.slane %v3577, %v3584
        %v3586 = vrot.slane %v3557, 4
        %v3587 = vsel %vm1746, %v3586, %v3545
        %v3588 = vrot.slane %v3545, 4
        %v3589 = vsel %vm1746, %v3557, %v3588
        %v3591 = vunpack.c.l.s4 1934713408
        %v3592 = vunpack.c.0.s8 %v3591
        %v3593 = vperm.slane %v3587, %v3592
        %v3595 = vunpack.c.l.s4 1934713408
        %v3596 = vunpack.c.0.s8 %v3595
        %v3597 = vperm.slane %v3589, %v3596
        %v3598 = vrot.slane %v3561, 4
        %v3599 = vsel %vm1746, %v3598, %v3549
        %v3600 = vrot.slane %v3549, 4
        %v3601 = vsel %vm1746, %v3561, %v3600
        %v3603 = vunpack.c.l.s4 1934713408
        %v3604 = vunpack.c.0.s8 %v3603
        %v3605 = vperm.slane %v3599, %v3604
        %v3607 = vunpack.c.l.s4 1934713408
        %v3608 = vunpack.c.0.s8 %v3607
        %v3609 = vperm.slane %v3601, %v3608
        %v3610 = vrot.slane %v3581, 4
        %v3611 = vsel %vm1746, %v3610, %v3569
        %v3612 = vrot.slane %v3569, 4
        %v3613 = vsel %vm1746, %v3581, %v3612
        %v3615 = vunpack.c.l.s4 1934713408
        %v3616 = vunpack.c.0.s8 %v3615
        %v3617 = vperm.slane %v3611, %v3616
        %v3619 = vunpack.c.l.s4 1934713408
        %v3620 = vunpack.c.0.s8 %v3619
        %v3621 = vperm.slane %v3613, %v3620
        %v3622 = vrot.slane %v3585, 4
        %v3623 = vsel %vm1746, %v3622, %v3573
        %v3624 = vrot.slane %v3573, 4
        %v3625 = vsel %vm1746, %v3585, %v3624
        %v3627 = vunpack.c.l.s4 1934713408
        %v3628 = vunpack.c.0.s8 %v3627
        %v3629 = vperm.slane %v3623, %v3628
        %v3631 = vunpack.c.l.s4 1934713408
        %v3632 = vunpack.c.0.s8 %v3631
        %v3633 = vperm.slane %v3625, %v3632
        %v3634 = vrot.slane %v3617, 4
        %v3635 = vsel %vm1746, %v3634, %v3593
        %v3636 = vrot.slane %v3593, 4
        %v3637 = vsel %vm1746, %v3617, %v3636
        %v3638 = vrot.slane %v3621, 4
        %v3639 = vsel %vm1746, %v3638, %v3597
        %v3640 = vrot.slane %v3597, 4
        %v3641 = vsel %vm1746, %v3621, %v3640
        %v3642 = vrot.slane %v3629, 4
        %v3643 = vsel %vm1746, %v3642, %v3605
        %v3644 = vrot.slane %v3605, 4
        %v3645 = vsel %vm1746, %v3629, %v3644
        %v3646 = vrot.slane %v3633, 4
        %v3647 = vsel %vm1746, %v3646, %v3609
        %v3648 = vrot.slane %v3609, 4
        %v3649 = vsel %vm1746, %v3633, %v3648
        %v3650 = vrot.slane %v698, 4
        %v3651 = vsel %vm1746, %v3650, %v602
        %v3652 = vrot.slane %v602, 4
        %v3653 = vsel %vm1746, %v698, %v3652
        %v3655 = vunpack.c.l.s4 1983009808
        %v3656 = vunpack.c.0.s8 %v3655
        %v3657 = vperm.slane %v3651, %v3656
        %v3659 = vunpack.c.l.s4 1983009808
        %v3660 = vunpack.c.0.s8 %v3659
        %v3661 = vperm.slane %v3653, %v3660
        %v3662 = vrot.slane %v746, 4
        %v3663 = vsel %vm1746, %v3662, %v650
        %v3664 = vrot.slane %v650, 4
        %v3665 = vsel %vm1746, %v746, %v3664
        %v3667 = vunpack.c.l.s4 1983009808
        %v3668 = vunpack.c.0.s8 %v3667
        %v3669 = vperm.slane %v3663, %v3668
        %v3671 = vunpack.c.l.s4 1983009808
        %v3672 = vunpack.c.0.s8 %v3671
        %v3673 = vperm.slane %v3665, %v3672
        %v3674 = vrot.slane %v890, 4
        %v3675 = vsel %vm1746, %v3674, %v794
        %v3676 = vrot.slane %v794, 4
        %v3677 = vsel %vm1746, %v890, %v3676
        %v3679 = vunpack.c.l.s4 1983009808
        %v3680 = vunpack.c.0.s8 %v3679
        %v3681 = vperm.slane %v3675, %v3680
        %v3683 = vunpack.c.l.s4 1983009808
        %v3684 = vunpack.c.0.s8 %v3683
        %v3685 = vperm.slane %v3677, %v3684
        %v3686 = vrot.slane %v938, 4
        %v3687 = vsel %vm1746, %v3686, %v842
        %v3688 = vrot.slane %v842, 4
        %v3689 = vsel %vm1746, %v938, %v3688
        %v3691 = vunpack.c.l.s4 1983009808
        %v3692 = vunpack.c.0.s8 %v3691
        %v3693 = vperm.slane %v3687, %v3692
        %v3695 = vunpack.c.l.s4 1983009808
        %v3696 = vunpack.c.0.s8 %v3695
        %v3697 = vperm.slane %v3689, %v3696
        %v3698 = vrot.slane %v3669, 4
        %v3699 = vsel %vm1746, %v3698, %v3657
        %v3700 = vrot.slane %v3657, 4
        %v3701 = vsel %vm1746, %v3669, %v3700
        %v3703 = vunpack.c.l.s4 1934713408
        %v3704 = vunpack.c.0.s8 %v3703
        %v3705 = vperm.slane %v3699, %v3704
        %v3707 = vunpack.c.l.s4 1934713408
        %v3708 = vunpack.c.0.s8 %v3707
        %v3709 = vperm.slane %v3701, %v3708
        %v3710 = vrot.slane %v3673, 4
        %v3711 = vsel %vm1746, %v3710, %v3661
        %v3712 = vrot.slane %v3661, 4
        %v3713 = vsel %vm1746, %v3673, %v3712
        %v3715 = vunpack.c.l.s4 1934713408
        %v3716 = vunpack.c.0.s8 %v3715
        %v3717 = vperm.slane %v3711, %v3716
        %v3719 = vunpack.c.l.s4 1934713408
        %v3720 = vunpack.c.0.s8 %v3719
        %v3721 = vperm.slane %v3713, %v3720
        %v3722 = vrot.slane %v3693, 4
        %v3723 = vsel %vm1746, %v3722, %v3681
        %v3724 = vrot.slane %v3681, 4
        %v3725 = vsel %vm1746, %v3693, %v3724
        %v3727 = vunpack.c.l.s4 1934713408
        %v3728 = vunpack.c.0.s8 %v3727
        %v3729 = vperm.slane %v3723, %v3728
        %v3731 = vunpack.c.l.s4 1934713408
        %v3732 = vunpack.c.0.s8 %v3731
        %v3733 = vperm.slane %v3725, %v3732
        %v3734 = vrot.slane %v3697, 4
        %v3735 = vsel %vm1746, %v3734, %v3685
        %v3736 = vrot.slane %v3685, 4
        %v3737 = vsel %vm1746, %v3697, %v3736
        %v3739 = vunpack.c.l.s4 1934713408
        %v3740 = vunpack.c.0.s8 %v3739
        %v3741 = vperm.slane %v3735, %v3740
        %v3743 = vunpack.c.l.s4 1934713408
        %v3744 = vunpack.c.0.s8 %v3743
        %v3745 = vperm.slane %v3737, %v3744
        %v3746 = vrot.slane %v3729, 4
        %v3747 = vsel %vm1746, %v3746, %v3705
        %v3748 = vrot.slane %v3705, 4
        %v3749 = vsel %vm1746, %v3729, %v3748
        %v3750 = vrot.slane %v3733, 4
        %v3751 = vsel %vm1746, %v3750, %v3709
        %v3752 = vrot.slane %v3709, 4
        %v3753 = vsel %vm1746, %v3733, %v3752
        %v3754 = vrot.slane %v3741, 4
        %v3755 = vsel %vm1746, %v3754, %v3717
        %v3756 = vrot.slane %v3717, 4
        %v3757 = vsel %vm1746, %v3741, %v3756
        %v3758 = vrot.slane %v3745, 4
        %v3759 = vsel %vm1746, %v3758, %v3721
        %v3760 = vrot.slane %v3721, 4
        %v3761 = vsel %vm1746, %v3745, %v3760
        %v3762 = vrot.slane %v1082, 4
        %v3763 = vsel %vm1746, %v3762, %v986
        %v3764 = vrot.slane %v986, 4
        %v3765 = vsel %vm1746, %v1082, %v3764
        %v3767 = vunpack.c.l.s4 1983009808
        %v3768 = vunpack.c.0.s8 %v3767
        %v3769 = vperm.slane %v3763, %v3768
        %v3771 = vunpack.c.l.s4 1983009808
        %v3772 = vunpack.c.0.s8 %v3771
        %v3773 = vperm.slane %v3765, %v3772
        %v3774 = vrot.slane %v1130, 4
        %v3775 = vsel %vm1746, %v3774, %v1034
        %v3776 = vrot.slane %v1034, 4
        %v3777 = vsel %vm1746, %v1130, %v3776
        %v3779 = vunpack.c.l.s4 1983009808
        %v3780 = vunpack.c.0.s8 %v3779
        %v3781 = vperm.slane %v3775, %v3780
        %v3783 = vunpack.c.l.s4 1983009808
        %v3784 = vunpack.c.0.s8 %v3783
        %v3785 = vperm.slane %v3777, %v3784
        %v3786 = vrot.slane %v1274, 4
        %v3787 = vsel %vm1746, %v3786, %v1178
        %v3788 = vrot.slane %v1178, 4
        %v3789 = vsel %vm1746, %v1274, %v3788
        %v3791 = vunpack.c.l.s4 1983009808
        %v3792 = vunpack.c.0.s8 %v3791
        %v3793 = vperm.slane %v3787, %v3792
        %v3795 = vunpack.c.l.s4 1983009808
        %v3796 = vunpack.c.0.s8 %v3795
        %v3797 = vperm.slane %v3789, %v3796
        %v3798 = vrot.slane %v1322, 4
        %v3799 = vsel %vm1746, %v3798, %v1226
        %v3800 = vrot.slane %v1226, 4
        %v3801 = vsel %vm1746, %v1322, %v3800
        %v3803 = vunpack.c.l.s4 1983009808
        %v3804 = vunpack.c.0.s8 %v3803
        %v3805 = vperm.slane %v3799, %v3804
        %v3807 = vunpack.c.l.s4 1983009808
        %v3808 = vunpack.c.0.s8 %v3807
        %v3809 = vperm.slane %v3801, %v3808
        %v3810 = vrot.slane %v3781, 4
        %v3811 = vsel %vm1746, %v3810, %v3769
        %v3812 = vrot.slane %v3769, 4
        %v3813 = vsel %vm1746, %v3781, %v3812
        %v3815 = vunpack.c.l.s4 1934713408
        %v3816 = vunpack.c.0.s8 %v3815
        %v3817 = vperm.slane %v3811, %v3816
        %v3819 = vunpack.c.l.s4 1934713408
        %v3820 = vunpack.c.0.s8 %v3819
        %v3821 = vperm.slane %v3813, %v3820
        %v3822 = vrot.slane %v3785, 4
        %v3823 = vsel %vm1746, %v3822, %v3773
        %v3824 = vrot.slane %v3773, 4
        %v3825 = vsel %vm1746, %v3785, %v3824
        %v3827 = vunpack.c.l.s4 1934713408
        %v3828 = vunpack.c.0.s8 %v3827
        %v3829 = vperm.slane %v3823, %v3828
        %v3831 = vunpack.c.l.s4 1934713408
        %v3832 = vunpack.c.0.s8 %v3831
        %v3833 = vperm.slane %v3825, %v3832
        %v3834 = vrot.slane %v3805, 4
        %v3835 = vsel %vm1746, %v3834, %v3793
        %v3836 = vrot.slane %v3793, 4
        %v3837 = vsel %vm1746, %v3805, %v3836
        %v3839 = vunpack.c.l.s4 1934713408
        %v3840 = vunpack.c.0.s8 %v3839
        %v3841 = vperm.slane %v3835, %v3840
        %v3843 = vunpack.c.l.s4 1934713408
        %v3844 = vunpack.c.0.s8 %v3843
        %v3845 = vperm.slane %v3837, %v3844
        %v3846 = vrot.slane %v3809, 4
        %v3847 = vsel %vm1746, %v3846, %v3797
        %v3848 = vrot.slane %v3797, 4
        %v3849 = vsel %vm1746, %v3809, %v3848
        %v3851 = vunpack.c.l.s4 1934713408
        %v3852 = vunpack.c.0.s8 %v3851
        %v3853 = vperm.slane %v3847, %v3852
        %v3855 = vunpack.c.l.s4 1934713408
        %v3856 = vunpack.c.0.s8 %v3855
        %v3857 = vperm.slane %v3849, %v3856
        %v3858 = vrot.slane %v3841, 4
        %v3859 = vsel %vm1746, %v3858, %v3817
        %v3860 = vrot.slane %v3817, 4
        %v3861 = vsel %vm1746, %v3841, %v3860
        %v3862 = vrot.slane %v3845, 4
        %v3863 = vsel %vm1746, %v3862, %v3821
        %v3864 = vrot.slane %v3821, 4
        %v3865 = vsel %vm1746, %v3845, %v3864
        %v3866 = vrot.slane %v3853, 4
        %v3867 = vsel %vm1746, %v3866, %v3829
        %v3868 = vrot.slane %v3829, 4
        %v3869 = vsel %vm1746, %v3853, %v3868
        %v3870 = vrot.slane %v3857, 4
        %v3871 = vsel %vm1746, %v3870, %v3833
        %v3872 = vrot.slane %v3833, 4
        %v3873 = vsel %vm1746, %v3857, %v3872
        %v3874 = vrot.slane %v1466, 4
        %v3875 = vsel %vm1746, %v3874, %v1370
        %v3876 = vrot.slane %v1370, 4
        %v3877 = vsel %vm1746, %v1466, %v3876
        %v3879 = vunpack.c.l.s4 1983009808
        %v3880 = vunpack.c.0.s8 %v3879
        %v3881 = vperm.slane %v3875, %v3880
        %v3883 = vunpack.c.l.s4 1983009808
        %v3884 = vunpack.c.0.s8 %v3883
        %v3885 = vperm.slane %v3877, %v3884
        %v3886 = vrot.slane %v1514, 4
        %v3887 = vsel %vm1746, %v3886, %v1418
        %v3888 = vrot.slane %v1418, 4
        %v3889 = vsel %vm1746, %v1514, %v3888
        %v3891 = vunpack.c.l.s4 1983009808
        %v3892 = vunpack.c.0.s8 %v3891
        %v3893 = vperm.slane %v3887, %v3892
        %v3895 = vunpack.c.l.s4 1983009808
        %v3896 = vunpack.c.0.s8 %v3895
        %v3897 = vperm.slane %v3889, %v3896
        %v3898 = vrot.slane %v1658, 4
        %v3899 = vsel %vm1746, %v3898, %v1562
        %v3900 = vrot.slane %v1562, 4
        %v3901 = vsel %vm1746, %v1658, %v3900
        %v3903 = vunpack.c.l.s4 1983009808
        %v3904 = vunpack.c.0.s8 %v3903
        %v3905 = vperm.slane %v3899, %v3904
        %v3907 = vunpack.c.l.s4 1983009808
        %v3908 = vunpack.c.0.s8 %v3907
        %v3909 = vperm.slane %v3901, %v3908
        %v3910 = vrot.slane %v1706, 4
        %v3911 = vsel %vm1746, %v3910, %v1610
        %v3912 = vrot.slane %v1610, 4
        %v3913 = vsel %vm1746, %v1706, %v3912
        %v3915 = vunpack.c.l.s4 1983009808
        %v3916 = vunpack.c.0.s8 %v3915
        %v3917 = vperm.slane %v3911, %v3916
        %v3919 = vunpack.c.l.s4 1983009808
        %v3920 = vunpack.c.0.s8 %v3919
        %v3921 = vperm.slane %v3913, %v3920
        %v3922 = vrot.slane %v3893, 4
        %v3923 = vsel %vm1746, %v3922, %v3881
        %v3924 = vrot.slane %v3881, 4
        %v3925 = vsel %vm1746, %v3893, %v3924
        %v3927 = vunpack.c.l.s4 1934713408
        %v3928 = vunpack.c.0.s8 %v3927
        %v3929 = vperm.slane %v3923, %v3928
        %v3931 = vunpack.c.l.s4 1934713408
        %v3932 = vunpack.c.0.s8 %v3931
        %v3933 = vperm.slane %v3925, %v3932
        %v3934 = vrot.slane %v3897, 4
        %v3935 = vsel %vm1746, %v3934, %v3885
        %v3936 = vrot.slane %v3885, 4
        %v3937 = vsel %vm1746, %v3897, %v3936
        %v3939 = vunpack.c.l.s4 1934713408
        %v3940 = vunpack.c.0.s8 %v3939
        %v3941 = vperm.slane %v3935, %v3940
        %v3943 = vunpack.c.l.s4 1934713408
        %v3944 = vunpack.c.0.s8 %v3943
        %v3945 = vperm.slane %v3937, %v3944
        %v3946 = vrot.slane %v3917, 4
        %v3947 = vsel %vm1746, %v3946, %v3905
        %v3948 = vrot.slane %v3905, 4
        %v3949 = vsel %vm1746, %v3917, %v3948
        %v3951 = vunpack.c.l.s4 1934713408
        %v3952 = vunpack.c.0.s8 %v3951
        %v3953 = vperm.slane %v3947, %v3952
        %v3955 = vunpack.c.l.s4 1934713408
        %v3956 = vunpack.c.0.s8 %v3955
        %v3957 = vperm.slane %v3949, %v3956
        %v3958 = vrot.slane %v3921, 4
        %v3959 = vsel %vm1746, %v3958, %v3909
        %v3960 = vrot.slane %v3909, 4
        %v3961 = vsel %vm1746, %v3921, %v3960
        %v3963 = vunpack.c.l.s4 1934713408
        %v3964 = vunpack.c.0.s8 %v3963
        %v3965 = vperm.slane %v3959, %v3964
        %v3967 = vunpack.c.l.s4 1934713408
        %v3968 = vunpack.c.0.s8 %v3967
        %v3969 = vperm.slane %v3961, %v3968
        %v3970 = vrot.slane %v3953, 4
        %v3971 = vsel %vm1746, %v3970, %v3929
        %v3972 = vrot.slane %v3929, 4
        %v3973 = vsel %vm1746, %v3953, %v3972
        %v3974 = vrot.slane %v3957, 4
        %v3975 = vsel %vm1746, %v3974, %v3933
        %v3976 = vrot.slane %v3933, 4
        %v3977 = vsel %vm1746, %v3957, %v3976
        %v3978 = vrot.slane %v3965, 4
        %v3979 = vsel %vm1746, %v3978, %v3941
        %v3980 = vrot.slane %v3941, 4
        %v3981 = vsel %vm1746, %v3965, %v3980
        %v3982 = vrot.slane %v3969, 4
        %v3983 = vsel %vm1746, %v3982, %v3945
        %v3984 = vrot.slane %v3945, 4
        %v3985 = vsel %vm1746, %v3969, %v3984
        %v3986 = vrot.slane %v316, 4
        %v3987 = vsel %vm1746, %v3986, %v230
        %v3988 = vrot.slane %v230, 4
        %v3989 = vsel %vm1746, %v316, %v3988
        %v3991 = vunpack.c.l.s4 1983009808
        %v3992 = vunpack.c.0.s8 %v3991
        %v3993 = vperm.slane %v3987, %v3992
        %v3995 = vunpack.c.l.s4 1983009808
        %v3996 = vunpack.c.0.s8 %v3995
        %v3997 = vperm.slane %v3989, %v3996
        %v3998 = vrot.slane %v364, 4
        %v3999 = vsel %vm1746, %v3998, %v268
        %v4000 = vrot.slane %v268, 4
        %v4001 = vsel %vm1746, %v364, %v4000
        %v4003 = vunpack.c.l.s4 1983009808
        %v4004 = vunpack.c.0.s8 %v4003
        %v4005 = vperm.slane %v3999, %v4004
        %v4007 = vunpack.c.l.s4 1983009808
        %v4008 = vunpack.c.0.s8 %v4007
        %v4009 = vperm.slane %v4001, %v4008
        %v4010 = vrot.slane %v508, 4
        %v4011 = vsel %vm1746, %v4010, %v412
        %v4012 = vrot.slane %v412, 4
        %v4013 = vsel %vm1746, %v508, %v4012
        %v4015 = vunpack.c.l.s4 1983009808
        %v4016 = vunpack.c.0.s8 %v4015
        %v4017 = vperm.slane %v4011, %v4016
        %v4019 = vunpack.c.l.s4 1983009808
        %v4020 = vunpack.c.0.s8 %v4019
        %v4021 = vperm.slane %v4013, %v4020
        %v4022 = vrot.slane %v556, 4
        %v4023 = vsel %vm1746, %v4022, %v460
        %v4024 = vrot.slane %v460, 4
        %v4025 = vsel %vm1746, %v556, %v4024
        %v4027 = vunpack.c.l.s4 1983009808
        %v4028 = vunpack.c.0.s8 %v4027
        %v4029 = vperm.slane %v4023, %v4028
        %v4031 = vunpack.c.l.s4 1983009808
        %v4032 = vunpack.c.0.s8 %v4031
        %v4033 = vperm.slane %v4025, %v4032
        %v4034 = vrot.slane %v4005, 4
        %v4035 = vsel %vm1746, %v4034, %v3993
        %v4036 = vrot.slane %v3993, 4
        %v4037 = vsel %vm1746, %v4005, %v4036
        %v4039 = vunpack.c.l.s4 1934713408
        %v4040 = vunpack.c.0.s8 %v4039
        %v4041 = vperm.slane %v4035, %v4040
        %v4043 = vunpack.c.l.s4 1934713408
        %v4044 = vunpack.c.0.s8 %v4043
        %v4045 = vperm.slane %v4037, %v4044
        %v4046 = vrot.slane %v4009, 4
        %v4047 = vsel %vm1746, %v4046, %v3997
        %v4048 = vrot.slane %v3997, 4
        %v4049 = vsel %vm1746, %v4009, %v4048
        %v4051 = vunpack.c.l.s4 1934713408
        %v4052 = vunpack.c.0.s8 %v4051
        %v4053 = vperm.slane %v4047, %v4052
        %v4055 = vunpack.c.l.s4 1934713408
        %v4056 = vunpack.c.0.s8 %v4055
        %v4057 = vperm.slane %v4049, %v4056
        %v4058 = vrot.slane %v4029, 4
        %v4059 = vsel %vm1746, %v4058, %v4017
        %v4060 = vrot.slane %v4017, 4
        %v4061 = vsel %vm1746, %v4029, %v4060
        %v4063 = vunpack.c.l.s4 1934713408
        %v4064 = vunpack.c.0.s8 %v4063
        %v4065 = vperm.slane %v4059, %v4064
        %v4067 = vunpack.c.l.s4 1934713408
        %v4068 = vunpack.c.0.s8 %v4067
        %v4069 = vperm.slane %v4061, %v4068
        %v4070 = vrot.slane %v4033, 4
        %v4071 = vsel %vm1746, %v4070, %v4021
        %v4072 = vrot.slane %v4021, 4
        %v4073 = vsel %vm1746, %v4033, %v4072
        %v4075 = vunpack.c.l.s4 1934713408
        %v4076 = vunpack.c.0.s8 %v4075
        %v4077 = vperm.slane %v4071, %v4076
        %v4079 = vunpack.c.l.s4 1934713408
        %v4080 = vunpack.c.0.s8 %v4079
        %v4081 = vperm.slane %v4073, %v4080
        %v4082 = vrot.slane %v4065, 4
        %v4083 = vsel %vm1746, %v4082, %v4041
        %v4084 = vrot.slane %v4041, 4
        %v4085 = vsel %vm1746, %v4065, %v4084
        %v4086 = vrot.slane %v4069, 4
        %v4087 = vsel %vm1746, %v4086, %v4045
        %v4088 = vrot.slane %v4045, 4
        %v4089 = vsel %vm1746, %v4069, %v4088
        %v4090 = vrot.slane %v4077, 4
        %v4091 = vsel %vm1746, %v4090, %v4053
        %v4092 = vrot.slane %v4053, 4
        %v4093 = vsel %vm1746, %v4077, %v4092
        %v4094 = vrot.slane %v4081, 4
        %v4095 = vsel %vm1746, %v4094, %v4057
        %v4096 = vrot.slane %v4057, 4
        %v4097 = vsel %vm1746, %v4081, %v4096
        %v4098 = vrot.slane %v700, 4
        %v4099 = vsel %vm1746, %v4098, %v604
        %v4100 = vrot.slane %v604, 4
        %v4101 = vsel %vm1746, %v700, %v4100
        %v4103 = vunpack.c.l.s4 1983009808
        %v4104 = vunpack.c.0.s8 %v4103
        %v4105 = vperm.slane %v4099, %v4104
        %v4107 = vunpack.c.l.s4 1983009808
        %v4108 = vunpack.c.0.s8 %v4107
        %v4109 = vperm.slane %v4101, %v4108
        %v4110 = vrot.slane %v748, 4
        %v4111 = vsel %vm1746, %v4110, %v652
        %v4112 = vrot.slane %v652, 4
        %v4113 = vsel %vm1746, %v748, %v4112
        %v4115 = vunpack.c.l.s4 1983009808
        %v4116 = vunpack.c.0.s8 %v4115
        %v4117 = vperm.slane %v4111, %v4116
        %v4119 = vunpack.c.l.s4 1983009808
        %v4120 = vunpack.c.0.s8 %v4119
        %v4121 = vperm.slane %v4113, %v4120
        %v4122 = vrot.slane %v892, 4
        %v4123 = vsel %vm1746, %v4122, %v796
        %v4124 = vrot.slane %v796, 4
        %v4125 = vsel %vm1746, %v892, %v4124
        %v4127 = vunpack.c.l.s4 1983009808
        %v4128 = vunpack.c.0.s8 %v4127
        %v4129 = vperm.slane %v4123, %v4128
        %v4131 = vunpack.c.l.s4 1983009808
        %v4132 = vunpack.c.0.s8 %v4131
        %v4133 = vperm.slane %v4125, %v4132
        %v4134 = vrot.slane %v940, 4
        %v4135 = vsel %vm1746, %v4134, %v844
        %v4136 = vrot.slane %v844, 4
        %v4137 = vsel %vm1746, %v940, %v4136
        %v4139 = vunpack.c.l.s4 1983009808
        %v4140 = vunpack.c.0.s8 %v4139
        %v4141 = vperm.slane %v4135, %v4140
        %v4143 = vunpack.c.l.s4 1983009808
        %v4144 = vunpack.c.0.s8 %v4143
        %v4145 = vperm.slane %v4137, %v4144
        %v4146 = vrot.slane %v4117, 4
        %v4147 = vsel %vm1746, %v4146, %v4105
        %v4148 = vrot.slane %v4105, 4
        %v4149 = vsel %vm1746, %v4117, %v4148
        %v4151 = vunpack.c.l.s4 1934713408
        %v4152 = vunpack.c.0.s8 %v4151
        %v4153 = vperm.slane %v4147, %v4152
        %v4155 = vunpack.c.l.s4 1934713408
        %v4156 = vunpack.c.0.s8 %v4155
        %v4157 = vperm.slane %v4149, %v4156
        %v4158 = vrot.slane %v4121, 4
        %v4159 = vsel %vm1746, %v4158, %v4109
        %v4160 = vrot.slane %v4109, 4
        %v4161 = vsel %vm1746, %v4121, %v4160
        %v4163 = vunpack.c.l.s4 1934713408
        %v4164 = vunpack.c.0.s8 %v4163
        %v4165 = vperm.slane %v4159, %v4164
        %v4167 = vunpack.c.l.s4 1934713408
        %v4168 = vunpack.c.0.s8 %v4167
        %v4169 = vperm.slane %v4161, %v4168
        %v4170 = vrot.slane %v4141, 4
        %v4171 = vsel %vm1746, %v4170, %v4129
        %v4172 = vrot.slane %v4129, 4
        %v4173 = vsel %vm1746, %v4141, %v4172
        %v4175 = vunpack.c.l.s4 1934713408
        %v4176 = vunpack.c.0.s8 %v4175
        %v4177 = vperm.slane %v4171, %v4176
        %v4179 = vunpack.c.l.s4 1934713408
        %v4180 = vunpack.c.0.s8 %v4179
        %v4181 = vperm.slane %v4173, %v4180
        %v4182 = vrot.slane %v4145, 4
        %v4183 = vsel %vm1746, %v4182, %v4133
        %v4184 = vrot.slane %v4133, 4
        %v4185 = vsel %vm1746, %v4145, %v4184
        %v4187 = vunpack.c.l.s4 1934713408
        %v4188 = vunpack.c.0.s8 %v4187
        %v4189 = vperm.slane %v4183, %v4188
        %v4191 = vunpack.c.l.s4 1934713408
        %v4192 = vunpack.c.0.s8 %v4191
        %v4193 = vperm.slane %v4185, %v4192
        %v4194 = vrot.slane %v4177, 4
        %v4195 = vsel %vm1746, %v4194, %v4153
        %v4196 = vrot.slane %v4153, 4
        %v4197 = vsel %vm1746, %v4177, %v4196
        %v4198 = vrot.slane %v4181, 4
        %v4199 = vsel %vm1746, %v4198, %v4157
        %v4200 = vrot.slane %v4157, 4
        %v4201 = vsel %vm1746, %v4181, %v4200
        %v4202 = vrot.slane %v4189, 4
        %v4203 = vsel %vm1746, %v4202, %v4165
        %v4204 = vrot.slane %v4165, 4
        %v4205 = vsel %vm1746, %v4189, %v4204
        %v4206 = vrot.slane %v4193, 4
        %v4207 = vsel %vm1746, %v4206, %v4169
        %v4208 = vrot.slane %v4169, 4
        %v4209 = vsel %vm1746, %v4193, %v4208
        %v4210 = vrot.slane %v1084, 4
        %v4211 = vsel %vm1746, %v4210, %v988
        %v4212 = vrot.slane %v988, 4
        %v4213 = vsel %vm1746, %v1084, %v4212
        %v4215 = vunpack.c.l.s4 1983009808
        %v4216 = vunpack.c.0.s8 %v4215
        %v4217 = vperm.slane %v4211, %v4216
        %v4219 = vunpack.c.l.s4 1983009808
        %v4220 = vunpack.c.0.s8 %v4219
        %v4221 = vperm.slane %v4213, %v4220
        %v4222 = vrot.slane %v1132, 4
        %v4223 = vsel %vm1746, %v4222, %v1036
        %v4224 = vrot.slane %v1036, 4
        %v4225 = vsel %vm1746, %v1132, %v4224
        %v4227 = vunpack.c.l.s4 1983009808
        %v4228 = vunpack.c.0.s8 %v4227
        %v4229 = vperm.slane %v4223, %v4228
        %v4231 = vunpack.c.l.s4 1983009808
        %v4232 = vunpack.c.0.s8 %v4231
        %v4233 = vperm.slane %v4225, %v4232
        %v4234 = vrot.slane %v1276, 4
        %v4235 = vsel %vm1746, %v4234, %v1180
        %v4236 = vrot.slane %v1180, 4
        %v4237 = vsel %vm1746, %v1276, %v4236
        %v4239 = vunpack.c.l.s4 1983009808
        %v4240 = vunpack.c.0.s8 %v4239
        %v4241 = vperm.slane %v4235, %v4240
        %v4243 = vunpack.c.l.s4 1983009808
        %v4244 = vunpack.c.0.s8 %v4243
        %v4245 = vperm.slane %v4237, %v4244
        %v4246 = vrot.slane %v1324, 4
        %v4247 = vsel %vm1746, %v4246, %v1228
        %v4248 = vrot.slane %v1228, 4
        %v4249 = vsel %vm1746, %v1324, %v4248
        %v4251 = vunpack.c.l.s4 1983009808
        %v4252 = vunpack.c.0.s8 %v4251
        %v4253 = vperm.slane %v4247, %v4252
        %v4255 = vunpack.c.l.s4 1983009808
        %v4256 = vunpack.c.0.s8 %v4255
        %v4257 = vperm.slane %v4249, %v4256
        %v4258 = vrot.slane %v4229, 4
        %v4259 = vsel %vm1746, %v4258, %v4217
        %v4260 = vrot.slane %v4217, 4
        %v4261 = vsel %vm1746, %v4229, %v4260
        %v4263 = vunpack.c.l.s4 1934713408
        %v4264 = vunpack.c.0.s8 %v4263
        %v4265 = vperm.slane %v4259, %v4264
        %v4267 = vunpack.c.l.s4 1934713408
        %v4268 = vunpack.c.0.s8 %v4267
        %v4269 = vperm.slane %v4261, %v4268
        %v4270 = vrot.slane %v4233, 4
        %v4271 = vsel %vm1746, %v4270, %v4221
        %v4272 = vrot.slane %v4221, 4
        %v4273 = vsel %vm1746, %v4233, %v4272
        %v4275 = vunpack.c.l.s4 1934713408
        %v4276 = vunpack.c.0.s8 %v4275
        %v4277 = vperm.slane %v4271, %v4276
        %v4279 = vunpack.c.l.s4 1934713408
        %v4280 = vunpack.c.0.s8 %v4279
        %v4281 = vperm.slane %v4273, %v4280
        %v4282 = vrot.slane %v4253, 4
        %v4283 = vsel %vm1746, %v4282, %v4241
        %v4284 = vrot.slane %v4241, 4
        %v4285 = vsel %vm1746, %v4253, %v4284
        %v4287 = vunpack.c.l.s4 1934713408
        %v4288 = vunpack.c.0.s8 %v4287
        %v4289 = vperm.slane %v4283, %v4288
        %v4291 = vunpack.c.l.s4 1934713408
        %v4292 = vunpack.c.0.s8 %v4291
        %v4293 = vperm.slane %v4285, %v4292
        %v4294 = vrot.slane %v4257, 4
        %v4295 = vsel %vm1746, %v4294, %v4245
        %v4296 = vrot.slane %v4245, 4
        %v4297 = vsel %vm1746, %v4257, %v4296
        %v4299 = vunpack.c.l.s4 1934713408
        %v4300 = vunpack.c.0.s8 %v4299
        %v4301 = vperm.slane %v4295, %v4300
        %v4303 = vunpack.c.l.s4 1934713408
        %v4304 = vunpack.c.0.s8 %v4303
        %v4305 = vperm.slane %v4297, %v4304
        %v4306 = vrot.slane %v4289, 4
        %v4307 = vsel %vm1746, %v4306, %v4265
        %v4308 = vrot.slane %v4265, 4
        %v4309 = vsel %vm1746, %v4289, %v4308
        %v4310 = vrot.slane %v4293, 4
        %v4311 = vsel %vm1746, %v4310, %v4269
        %v4312 = vrot.slane %v4269, 4
        %v4313 = vsel %vm1746, %v4293, %v4312
        %v4314 = vrot.slane %v4301, 4
        %v4315 = vsel %vm1746, %v4314, %v4277
        %v4316 = vrot.slane %v4277, 4
        %v4317 = vsel %vm1746, %v4301, %v4316
        %v4318 = vrot.slane %v4305, 4
        %v4319 = vsel %vm1746, %v4318, %v4281
        %v4320 = vrot.slane %v4281, 4
        %v4321 = vsel %vm1746, %v4305, %v4320
        %v4322 = vrot.slane %v1468, 4
        %v4323 = vsel %vm1746, %v4322, %v1372
        %v4324 = vrot.slane %v1372, 4
        %v4325 = vsel %vm1746, %v1468, %v4324
        %v4327 = vunpack.c.l.s4 1983009808
        %v4328 = vunpack.c.0.s8 %v4327
        %v4329 = vperm.slane %v4323, %v4328
        %v4331 = vunpack.c.l.s4 1983009808
        %v4332 = vunpack.c.0.s8 %v4331
        %v4333 = vperm.slane %v4325, %v4332
        %v4334 = vrot.slane %v1516, 4
        %v4335 = vsel %vm1746, %v4334, %v1420
        %v4336 = vrot.slane %v1420, 4
        %v4337 = vsel %vm1746, %v1516, %v4336
        %v4339 = vunpack.c.l.s4 1983009808
        %v4340 = vunpack.c.0.s8 %v4339
        %v4341 = vperm.slane %v4335, %v4340
        %v4343 = vunpack.c.l.s4 1983009808
        %v4344 = vunpack.c.0.s8 %v4343
        %v4345 = vperm.slane %v4337, %v4344
        %v4346 = vrot.slane %v1660, 4
        %v4347 = vsel %vm1746, %v4346, %v1564
        %v4348 = vrot.slane %v1564, 4
        %v4349 = vsel %vm1746, %v1660, %v4348
        %v4351 = vunpack.c.l.s4 1983009808
        %v4352 = vunpack.c.0.s8 %v4351
        %v4353 = vperm.slane %v4347, %v4352
        %v4355 = vunpack.c.l.s4 1983009808
        %v4356 = vunpack.c.0.s8 %v4355
        %v4357 = vperm.slane %v4349, %v4356
        %v4358 = vrot.slane %v1708, 4
        %v4359 = vsel %vm1746, %v4358, %v1612
        %v4360 = vrot.slane %v1612, 4
        %v4361 = vsel %vm1746, %v1708, %v4360
        %v4363 = vunpack.c.l.s4 1983009808
        %v4364 = vunpack.c.0.s8 %v4363
        %v4365 = vperm.slane %v4359, %v4364
        %v4367 = vunpack.c.l.s4 1983009808
        %v4368 = vunpack.c.0.s8 %v4367
        %v4369 = vperm.slane %v4361, %v4368
        %v4370 = vrot.slane %v4341, 4
        %v4371 = vsel %vm1746, %v4370, %v4329
        %v4372 = vrot.slane %v4329, 4
        %v4373 = vsel %vm1746, %v4341, %v4372
        %v4375 = vunpack.c.l.s4 1934713408
        %v4376 = vunpack.c.0.s8 %v4375
        %v4377 = vperm.slane %v4371, %v4376
        %v4379 = vunpack.c.l.s4 1934713408
        %v4380 = vunpack.c.0.s8 %v4379
        %v4381 = vperm.slane %v4373, %v4380
        %v4382 = vrot.slane %v4345, 4
        %v4383 = vsel %vm1746, %v4382, %v4333
        %v4384 = vrot.slane %v4333, 4
        %v4385 = vsel %vm1746, %v4345, %v4384
        %v4387 = vunpack.c.l.s4 1934713408
        %v4388 = vunpack.c.0.s8 %v4387
        %v4389 = vperm.slane %v4383, %v4388
        %v4391 = vunpack.c.l.s4 1934713408
        %v4392 = vunpack.c.0.s8 %v4391
        %v4393 = vperm.slane %v4385, %v4392
        %v4394 = vrot.slane %v4365, 4
        %v4395 = vsel %vm1746, %v4394, %v4353
        %v4396 = vrot.slane %v4353, 4
        %v4397 = vsel %vm1746, %v4365, %v4396
        %v4399 = vunpack.c.l.s4 1934713408
        %v4400 = vunpack.c.0.s8 %v4399
        %v4401 = vperm.slane %v4395, %v4400
        %v4403 = vunpack.c.l.s4 1934713408
        %v4404 = vunpack.c.0.s8 %v4403
        %v4405 = vperm.slane %v4397, %v4404
        %v4406 = vrot.slane %v4369, 4
        %v4407 = vsel %vm1746, %v4406, %v4357
        %v4408 = vrot.slane %v4357, 4
        %v4409 = vsel %vm1746, %v4369, %v4408
        %v4411 = vunpack.c.l.s4 1934713408
        %v4412 = vunpack.c.0.s8 %v4411
        %v4413 = vperm.slane %v4407, %v4412
        %v4415 = vunpack.c.l.s4 1934713408
        %v4416 = vunpack.c.0.s8 %v4415
        %v4417 = vperm.slane %v4409, %v4416
        %v4418 = vrot.slane %v4401, 4
        %v4419 = vsel %vm1746, %v4418, %v4377
        %v4420 = vrot.slane %v4377, 4
        %v4421 = vsel %vm1746, %v4401, %v4420
        %v4422 = vrot.slane %v4405, 4
        %v4423 = vsel %vm1746, %v4422, %v4381
        %v4424 = vrot.slane %v4381, 4
        %v4425 = vsel %vm1746, %v4405, %v4424
        %v4426 = vrot.slane %v4413, 4
        %v4427 = vsel %vm1746, %v4426, %v4389
        %v4428 = vrot.slane %v4389, 4
        %v4429 = vsel %vm1746, %v4413, %v4428
        %v4430 = vrot.slane %v4417, 4
        %v4431 = vsel %vm1746, %v4430, %v4393
        %v4432 = vrot.slane %v4393, 4
        %v4433 = vsel %vm1746, %v4417, %v4432
        %v4434 = vrot.slane %v318, 4
        %v4435 = vsel %vm1746, %v4434, %v231
        %v4436 = vrot.slane %v231, 4
        %v4437 = vsel %vm1746, %v318, %v4436
        %v4439 = vunpack.c.l.s4 1983009808
        %v4440 = vunpack.c.0.s8 %v4439
        %v4441 = vperm.slane %v4435, %v4440
        %v4443 = vunpack.c.l.s4 1983009808
        %v4444 = vunpack.c.0.s8 %v4443
        %v4445 = vperm.slane %v4437, %v4444
        %v4446 = vrot.slane %v366, 4
        %v4447 = vsel %vm1746, %v4446, %v270
        %v4448 = vrot.slane %v270, 4
        %v4449 = vsel %vm1746, %v366, %v4448
        %v4451 = vunpack.c.l.s4 1983009808
        %v4452 = vunpack.c.0.s8 %v4451
        %v4453 = vperm.slane %v4447, %v4452
        %v4455 = vunpack.c.l.s4 1983009808
        %v4456 = vunpack.c.0.s8 %v4455
        %v4457 = vperm.slane %v4449, %v4456
        %v4458 = vrot.slane %v510, 4
        %v4459 = vsel %vm1746, %v4458, %v414
        %v4460 = vrot.slane %v414, 4
        %v4461 = vsel %vm1746, %v510, %v4460
        %v4463 = vunpack.c.l.s4 1983009808
        %v4464 = vunpack.c.0.s8 %v4463
        %v4465 = vperm.slane %v4459, %v4464
        %v4467 = vunpack.c.l.s4 1983009808
        %v4468 = vunpack.c.0.s8 %v4467
        %v4469 = vperm.slane %v4461, %v4468
        %v4470 = vrot.slane %v558, 4
        %v4471 = vsel %vm1746, %v4470, %v462
        %v4472 = vrot.slane %v462, 4
        %v4473 = vsel %vm1746, %v558, %v4472
        %v4475 = vunpack.c.l.s4 1983009808
        %v4476 = vunpack.c.0.s8 %v4475
        %v4477 = vperm.slane %v4471, %v4476
        %v4479 = vunpack.c.l.s4 1983009808
        %v4480 = vunpack.c.0.s8 %v4479
        %v4481 = vperm.slane %v4473, %v4480
        %v4482 = vrot.slane %v4453, 4
        %v4483 = vsel %vm1746, %v4482, %v4441
        %v4484 = vrot.slane %v4441, 4
        %v4485 = vsel %vm1746, %v4453, %v4484
        %v4487 = vunpack.c.l.s4 1934713408
        %v4488 = vunpack.c.0.s8 %v4487
        %v4489 = vperm.slane %v4483, %v4488
        %v4491 = vunpack.c.l.s4 1934713408
        %v4492 = vunpack.c.0.s8 %v4491
        %v4493 = vperm.slane %v4485, %v4492
        %v4494 = vrot.slane %v4457, 4
        %v4495 = vsel %vm1746, %v4494, %v4445
        %v4496 = vrot.slane %v4445, 4
        %v4497 = vsel %vm1746, %v4457, %v4496
        %v4499 = vunpack.c.l.s4 1934713408
        %v4500 = vunpack.c.0.s8 %v4499
        %v4501 = vperm.slane %v4495, %v4500
        %v4503 = vunpack.c.l.s4 1934713408
        %v4504 = vunpack.c.0.s8 %v4503
        %v4505 = vperm.slane %v4497, %v4504
        %v4506 = vrot.slane %v4477, 4
        %v4507 = vsel %vm1746, %v4506, %v4465
        %v4508 = vrot.slane %v4465, 4
        %v4509 = vsel %vm1746, %v4477, %v4508
        %v4511 = vunpack.c.l.s4 1934713408
        %v4512 = vunpack.c.0.s8 %v4511
        %v4513 = vperm.slane %v4507, %v4512
        %v4515 = vunpack.c.l.s4 1934713408
        %v4516 = vunpack.c.0.s8 %v4515
        %v4517 = vperm.slane %v4509, %v4516
        %v4518 = vrot.slane %v4481, 4
        %v4519 = vsel %vm1746, %v4518, %v4469
        %v4520 = vrot.slane %v4469, 4
        %v4521 = vsel %vm1746, %v4481, %v4520
        %v4523 = vunpack.c.l.s4 1934713408
        %v4524 = vunpack.c.0.s8 %v4523
        %v4525 = vperm.slane %v4519, %v4524
        %v4527 = vunpack.c.l.s4 1934713408
        %v4528 = vunpack.c.0.s8 %v4527
        %v4529 = vperm.slane %v4521, %v4528
        %v4530 = vrot.slane %v4513, 4
        %v4531 = vsel %vm1746, %v4530, %v4489
        %v4532 = vrot.slane %v4489, 4
        %v4533 = vsel %vm1746, %v4513, %v4532
        %v4534 = vrot.slane %v4517, 4
        %v4535 = vsel %vm1746, %v4534, %v4493
        %v4536 = vrot.slane %v4493, 4
        %v4537 = vsel %vm1746, %v4517, %v4536
        %v4538 = vrot.slane %v4525, 4
        %v4539 = vsel %vm1746, %v4538, %v4501
        %v4540 = vrot.slane %v4501, 4
        %v4541 = vsel %vm1746, %v4525, %v4540
        %v4542 = vrot.slane %v4529, 4
        %v4543 = vsel %vm1746, %v4542, %v4505
        %v4544 = vrot.slane %v4505, 4
        %v4545 = vsel %vm1746, %v4529, %v4544
        %v4546 = vrot.slane %v702, 4
        %v4547 = vsel %vm1746, %v4546, %v606
        %v4548 = vrot.slane %v606, 4
        %v4549 = vsel %vm1746, %v702, %v4548
        %v4551 = vunpack.c.l.s4 1983009808
        %v4552 = vunpack.c.0.s8 %v4551
        %v4553 = vperm.slane %v4547, %v4552
        %v4555 = vunpack.c.l.s4 1983009808
        %v4556 = vunpack.c.0.s8 %v4555
        %v4557 = vperm.slane %v4549, %v4556
        %v4558 = vrot.slane %v750, 4
        %v4559 = vsel %vm1746, %v4558, %v654
        %v4560 = vrot.slane %v654, 4
        %v4561 = vsel %vm1746, %v750, %v4560
        %v4563 = vunpack.c.l.s4 1983009808
        %v4564 = vunpack.c.0.s8 %v4563
        %v4565 = vperm.slane %v4559, %v4564
        %v4567 = vunpack.c.l.s4 1983009808
        %v4568 = vunpack.c.0.s8 %v4567
        %v4569 = vperm.slane %v4561, %v4568
        %v4570 = vrot.slane %v894, 4
        %v4571 = vsel %vm1746, %v4570, %v798
        %v4572 = vrot.slane %v798, 4
        %v4573 = vsel %vm1746, %v894, %v4572
        %v4575 = vunpack.c.l.s4 1983009808
        %v4576 = vunpack.c.0.s8 %v4575
        %v4577 = vperm.slane %v4571, %v4576
        %v4579 = vunpack.c.l.s4 1983009808
        %v4580 = vunpack.c.0.s8 %v4579
        %v4581 = vperm.slane %v4573, %v4580
        %v4582 = vrot.slane %v942, 4
        %v4583 = vsel %vm1746, %v4582, %v846
        %v4584 = vrot.slane %v846, 4
        %v4585 = vsel %vm1746, %v942, %v4584
        %v4587 = vunpack.c.l.s4 1983009808
        %v4588 = vunpack.c.0.s8 %v4587
        %v4589 = vperm.slane %v4583, %v4588
        %v4591 = vunpack.c.l.s4 1983009808
        %v4592 = vunpack.c.0.s8 %v4591
        %v4593 = vperm.slane %v4585, %v4592
        %v4594 = vrot.slane %v4565, 4
        %v4595 = vsel %vm1746, %v4594, %v4553
        %v4596 = vrot.slane %v4553, 4
        %v4597 = vsel %vm1746, %v4565, %v4596
        %v4599 = vunpack.c.l.s4 1934713408
        %v4600 = vunpack.c.0.s8 %v4599
        %v4601 = vperm.slane %v4595, %v4600
        %v4603 = vunpack.c.l.s4 1934713408
        %v4604 = vunpack.c.0.s8 %v4603
        %v4605 = vperm.slane %v4597, %v4604
        %v4606 = vrot.slane %v4569, 4
        %v4607 = vsel %vm1746, %v4606, %v4557
        %v4608 = vrot.slane %v4557, 4
        %v4609 = vsel %vm1746, %v4569, %v4608
        %v4611 = vunpack.c.l.s4 1934713408
        %v4612 = vunpack.c.0.s8 %v4611
        %v4613 = vperm.slane %v4607, %v4612
        %v4615 = vunpack.c.l.s4 1934713408
        %v4616 = vunpack.c.0.s8 %v4615
        %v4617 = vperm.slane %v4609, %v4616
        %v4618 = vrot.slane %v4589, 4
        %v4619 = vsel %vm1746, %v4618, %v4577
        %v4620 = vrot.slane %v4577, 4
        %v4621 = vsel %vm1746, %v4589, %v4620
        %v4623 = vunpack.c.l.s4 1934713408
        %v4624 = vunpack.c.0.s8 %v4623
        %v4625 = vperm.slane %v4619, %v4624
        %v4627 = vunpack.c.l.s4 1934713408
        %v4628 = vunpack.c.0.s8 %v4627
        %v4629 = vperm.slane %v4621, %v4628
        %v4630 = vrot.slane %v4593, 4
        %v4631 = vsel %vm1746, %v4630, %v4581
        %v4632 = vrot.slane %v4581, 4
        %v4633 = vsel %vm1746, %v4593, %v4632
        %v4635 = vunpack.c.l.s4 1934713408
        %v4636 = vunpack.c.0.s8 %v4635
        %v4637 = vperm.slane %v4631, %v4636
        %v4639 = vunpack.c.l.s4 1934713408
        %v4640 = vunpack.c.0.s8 %v4639
        %v4641 = vperm.slane %v4633, %v4640
        %v4642 = vrot.slane %v4625, 4
        %v4643 = vsel %vm1746, %v4642, %v4601
        %v4644 = vrot.slane %v4601, 4
        %v4645 = vsel %vm1746, %v4625, %v4644
        %v4646 = vrot.slane %v4629, 4
        %v4647 = vsel %vm1746, %v4646, %v4605
        %v4648 = vrot.slane %v4605, 4
        %v4649 = vsel %vm1746, %v4629, %v4648
        %v4650 = vrot.slane %v4637, 4
        %v4651 = vsel %vm1746, %v4650, %v4613
        %v4652 = vrot.slane %v4613, 4
        %v4653 = vsel %vm1746, %v4637, %v4652
        %v4654 = vrot.slane %v4641, 4
        %v4655 = vsel %vm1746, %v4654, %v4617
        %v4656 = vrot.slane %v4617, 4
        %v4657 = vsel %vm1746, %v4641, %v4656
        %v4658 = vrot.slane %v1086, 4
        %v4659 = vsel %vm1746, %v4658, %v990
        %v4660 = vrot.slane %v990, 4
        %v4661 = vsel %vm1746, %v1086, %v4660
        %v4663 = vunpack.c.l.s4 1983009808
        %v4664 = vunpack.c.0.s8 %v4663
        %v4665 = vperm.slane %v4659, %v4664
        %v4667 = vunpack.c.l.s4 1983009808
        %v4668 = vunpack.c.0.s8 %v4667
        %v4669 = vperm.slane %v4661, %v4668
        %v4670 = vrot.slane %v1134, 4
        %v4671 = vsel %vm1746, %v4670, %v1038
        %v4672 = vrot.slane %v1038, 4
        %v4673 = vsel %vm1746, %v1134, %v4672
        %v4675 = vunpack.c.l.s4 1983009808
        %v4676 = vunpack.c.0.s8 %v4675
        %v4677 = vperm.slane %v4671, %v4676
        %v4679 = vunpack.c.l.s4 1983009808
        %v4680 = vunpack.c.0.s8 %v4679
        %v4681 = vperm.slane %v4673, %v4680
        %v4682 = vrot.slane %v1278, 4
        %v4683 = vsel %vm1746, %v4682, %v1182
        %v4684 = vrot.slane %v1182, 4
        %v4685 = vsel %vm1746, %v1278, %v4684
        %v4687 = vunpack.c.l.s4 1983009808
        %v4688 = vunpack.c.0.s8 %v4687
        %v4689 = vperm.slane %v4683, %v4688
        %v4691 = vunpack.c.l.s4 1983009808
        %v4692 = vunpack.c.0.s8 %v4691
        %v4693 = vperm.slane %v4685, %v4692
        %v4694 = vrot.slane %v1326, 4
        %v4695 = vsel %vm1746, %v4694, %v1230
        %v4696 = vrot.slane %v1230, 4
        %v4697 = vsel %vm1746, %v1326, %v4696
        %v4699 = vunpack.c.l.s4 1983009808
        %v4700 = vunpack.c.0.s8 %v4699
        %v4701 = vperm.slane %v4695, %v4700
        %v4703 = vunpack.c.l.s4 1983009808
        %v4704 = vunpack.c.0.s8 %v4703
        %v4705 = vperm.slane %v4697, %v4704
        %v4706 = vrot.slane %v4677, 4
        %v4707 = vsel %vm1746, %v4706, %v4665
        %v4708 = vrot.slane %v4665, 4
        %v4709 = vsel %vm1746, %v4677, %v4708
        %v4711 = vunpack.c.l.s4 1934713408
        %v4712 = vunpack.c.0.s8 %v4711
        %v4713 = vperm.slane %v4707, %v4712
        %v4715 = vunpack.c.l.s4 1934713408
        %v4716 = vunpack.c.0.s8 %v4715
        %v4717 = vperm.slane %v4709, %v4716
        %v4718 = vrot.slane %v4681, 4
        %v4719 = vsel %vm1746, %v4718, %v4669
        %v4720 = vrot.slane %v4669, 4
        %v4721 = vsel %vm1746, %v4681, %v4720
        %v4723 = vunpack.c.l.s4 1934713408
        %v4724 = vunpack.c.0.s8 %v4723
        %v4725 = vperm.slane %v4719, %v4724
        %v4727 = vunpack.c.l.s4 1934713408
        %v4728 = vunpack.c.0.s8 %v4727
        %v4729 = vperm.slane %v4721, %v4728
        %v4730 = vrot.slane %v4701, 4
        %v4731 = vsel %vm1746, %v4730, %v4689
        %v4732 = vrot.slane %v4689, 4
        %v4733 = vsel %vm1746, %v4701, %v4732
        %v4735 = vunpack.c.l.s4 1934713408
        %v4736 = vunpack.c.0.s8 %v4735
        %v4737 = vperm.slane %v4731, %v4736
        %v4739 = vunpack.c.l.s4 1934713408
        %v4740 = vunpack.c.0.s8 %v4739
        %v4741 = vperm.slane %v4733, %v4740
        %v4742 = vrot.slane %v4705, 4
        %v4743 = vsel %vm1746, %v4742, %v4693
        %v4744 = vrot.slane %v4693, 4
        %v4745 = vsel %vm1746, %v4705, %v4744
        %v4747 = vunpack.c.l.s4 1934713408
        %v4748 = vunpack.c.0.s8 %v4747
        %v4749 = vperm.slane %v4743, %v4748
        %v4751 = vunpack.c.l.s4 1934713408
        %v4752 = vunpack.c.0.s8 %v4751
        %v4753 = vperm.slane %v4745, %v4752
        %v4754 = vrot.slane %v4737, 4
        %v4755 = vsel %vm1746, %v4754, %v4713
        %v4756 = vrot.slane %v4713, 4
        %v4757 = vsel %vm1746, %v4737, %v4756
        %v4758 = vrot.slane %v4741, 4
        %v4759 = vsel %vm1746, %v4758, %v4717
        %v4760 = vrot.slane %v4717, 4
        %v4761 = vsel %vm1746, %v4741, %v4760
        %v4762 = vrot.slane %v4749, 4
        %v4763 = vsel %vm1746, %v4762, %v4725
        %v4764 = vrot.slane %v4725, 4
        %v4765 = vsel %vm1746, %v4749, %v4764
        %v4766 = vrot.slane %v4753, 4
        %v4767 = vsel %vm1746, %v4766, %v4729
        %v4768 = vrot.slane %v4729, 4
        %v4769 = vsel %vm1746, %v4753, %v4768
        %v4770 = vrot.slane %v1470, 4
        %v4771 = vsel %vm1746, %v4770, %v1374
        %v4772 = vrot.slane %v1374, 4
        %v4773 = vsel %vm1746, %v1470, %v4772
        %v4775 = vunpack.c.l.s4 1983009808
        %v4776 = vunpack.c.0.s8 %v4775
        %v4777 = vperm.slane %v4771, %v4776
        %v4779 = vunpack.c.l.s4 1983009808
        %v4780 = vunpack.c.0.s8 %v4779
        %v4781 = vperm.slane %v4773, %v4780
        %v4782 = vrot.slane %v1518, 4
        %v4783 = vsel %vm1746, %v4782, %v1422
        %v4784 = vrot.slane %v1422, 4
        %v4785 = vsel %vm1746, %v1518, %v4784
        %v4787 = vunpack.c.l.s4 1983009808
        %v4788 = vunpack.c.0.s8 %v4787
        %v4789 = vperm.slane %v4783, %v4788
        %v4791 = vunpack.c.l.s4 1983009808
        %v4792 = vunpack.c.0.s8 %v4791
        %v4793 = vperm.slane %v4785, %v4792
        %v4794 = vrot.slane %v1662, 4
        %v4795 = vsel %vm1746, %v4794, %v1566
        %v4796 = vrot.slane %v1566, 4
        %v4797 = vsel %vm1746, %v1662, %v4796
        %v4799 = vunpack.c.l.s4 1983009808
        %v4800 = vunpack.c.0.s8 %v4799
        %v4801 = vperm.slane %v4795, %v4800
        %v4803 = vunpack.c.l.s4 1983009808
        %v4804 = vunpack.c.0.s8 %v4803
        %v4805 = vperm.slane %v4797, %v4804
        %v4806 = vrot.slane %v1710, 4
        %v4807 = vsel %vm1746, %v4806, %v1614
        %v4808 = vrot.slane %v1614, 4
        %v4809 = vsel %vm1746, %v1710, %v4808
        %v4811 = vunpack.c.l.s4 1983009808
        %v4812 = vunpack.c.0.s8 %v4811
        %v4813 = vperm.slane %v4807, %v4812
        %v4815 = vunpack.c.l.s4 1983009808
        %v4816 = vunpack.c.0.s8 %v4815
        %v4817 = vperm.slane %v4809, %v4816
        %v4818 = vrot.slane %v4789, 4
        %v4819 = vsel %vm1746, %v4818, %v4777
        %v4820 = vrot.slane %v4777, 4
        %v4821 = vsel %vm1746, %v4789, %v4820
        %v4823 = vunpack.c.l.s4 1934713408
        %v4824 = vunpack.c.0.s8 %v4823
        %v4825 = vperm.slane %v4819, %v4824
        %v4827 = vunpack.c.l.s4 1934713408
        %v4828 = vunpack.c.0.s8 %v4827
        %v4829 = vperm.slane %v4821, %v4828
        %v4830 = vrot.slane %v4793, 4
        %v4831 = vsel %vm1746, %v4830, %v4781
        %v4832 = vrot.slane %v4781, 4
        %v4833 = vsel %vm1746, %v4793, %v4832
        %v4835 = vunpack.c.l.s4 1934713408
        %v4836 = vunpack.c.0.s8 %v4835
        %v4837 = vperm.slane %v4831, %v4836
        %v4839 = vunpack.c.l.s4 1934713408
        %v4840 = vunpack.c.0.s8 %v4839
        %v4841 = vperm.slane %v4833, %v4840
        %v4842 = vrot.slane %v4813, 4
        %v4843 = vsel %vm1746, %v4842, %v4801
        %v4844 = vrot.slane %v4801, 4
        %v4845 = vsel %vm1746, %v4813, %v4844
        %v4847 = vunpack.c.l.s4 1934713408
        %v4848 = vunpack.c.0.s8 %v4847
        %v4849 = vperm.slane %v4843, %v4848
        %v4851 = vunpack.c.l.s4 1934713408
        %v4852 = vunpack.c.0.s8 %v4851
        %v4853 = vperm.slane %v4845, %v4852
        %v4854 = vrot.slane %v4817, 4
        %v4855 = vsel %vm1746, %v4854, %v4805
        %v4856 = vrot.slane %v4805, 4
        %v4857 = vsel %vm1746, %v4817, %v4856
        %v4859 = vunpack.c.l.s4 1934713408
        %v4860 = vunpack.c.0.s8 %v4859
        %v4861 = vperm.slane %v4855, %v4860
        %v4863 = vunpack.c.l.s4 1934713408
        %v4864 = vunpack.c.0.s8 %v4863
        %v4865 = vperm.slane %v4857, %v4864
        %v4866 = vrot.slane %v4849, 4
        %v4867 = vsel %vm1746, %v4866, %v4825
        %v4868 = vrot.slane %v4825, 4
        %v4869 = vsel %vm1746, %v4849, %v4868
        %v4870 = vrot.slane %v4853, 4
        %v4871 = vsel %vm1746, %v4870, %v4829
        %v4872 = vrot.slane %v4829, 4
        %v4873 = vsel %vm1746, %v4853, %v4872
        %v4874 = vrot.slane %v4861, 4
        %v4875 = vsel %vm1746, %v4874, %v4837
        %v4876 = vrot.slane %v4837, 4
        %v4877 = vsel %vm1746, %v4861, %v4876
        %v4878 = vrot.slane %v4865, 4
        %v4879 = vsel %vm1746, %v4878, %v4841
        %v4880 = vrot.slane %v4841, 4
        %v4881 = vsel %vm1746, %v4865, %v4880
        %v4882 = vrot.slane %v320, 4
        %v4883 = vsel %vm1746, %v4882, %v232
        %v4884 = vrot.slane %v232, 4
        %v4885 = vsel %vm1746, %v320, %v4884
        %v4887 = vunpack.c.l.s4 1983009808
        %v4888 = vunpack.c.0.s8 %v4887
        %v4889 = vperm.slane %v4883, %v4888
        %v4891 = vunpack.c.l.s4 1983009808
        %v4892 = vunpack.c.0.s8 %v4891
        %v4893 = vperm.slane %v4885, %v4892
        %v4894 = vrot.slane %v368, 4
        %v4895 = vsel %vm1746, %v4894, %v272
        %v4896 = vrot.slane %v272, 4
        %v4897 = vsel %vm1746, %v368, %v4896
        %v4899 = vunpack.c.l.s4 1983009808
        %v4900 = vunpack.c.0.s8 %v4899
        %v4901 = vperm.slane %v4895, %v4900
        %v4903 = vunpack.c.l.s4 1983009808
        %v4904 = vunpack.c.0.s8 %v4903
        %v4905 = vperm.slane %v4897, %v4904
        %v4906 = vrot.slane %v512, 4
        %v4907 = vsel %vm1746, %v4906, %v416
        %v4908 = vrot.slane %v416, 4
        %v4909 = vsel %vm1746, %v512, %v4908
        %v4911 = vunpack.c.l.s4 1983009808
        %v4912 = vunpack.c.0.s8 %v4911
        %v4913 = vperm.slane %v4907, %v4912
        %v4915 = vunpack.c.l.s4 1983009808
        %v4916 = vunpack.c.0.s8 %v4915
        %v4917 = vperm.slane %v4909, %v4916
        %v4918 = vrot.slane %v560, 4
        %v4919 = vsel %vm1746, %v4918, %v464
        %v4920 = vrot.slane %v464, 4
        %v4921 = vsel %vm1746, %v560, %v4920
        %v4923 = vunpack.c.l.s4 1983009808
        %v4924 = vunpack.c.0.s8 %v4923
        %v4925 = vperm.slane %v4919, %v4924
        %v4927 = vunpack.c.l.s4 1983009808
        %v4928 = vunpack.c.0.s8 %v4927
        %v4929 = vperm.slane %v4921, %v4928
        %v4930 = vrot.slane %v4901, 4
        %v4931 = vsel %vm1746, %v4930, %v4889
        %v4932 = vrot.slane %v4889, 4
        %v4933 = vsel %vm1746, %v4901, %v4932
        %v4935 = vunpack.c.l.s4 1934713408
        %v4936 = vunpack.c.0.s8 %v4935
        %v4937 = vperm.slane %v4931, %v4936
        %v4939 = vunpack.c.l.s4 1934713408
        %v4940 = vunpack.c.0.s8 %v4939
        %v4941 = vperm.slane %v4933, %v4940
        %v4942 = vrot.slane %v4905, 4
        %v4943 = vsel %vm1746, %v4942, %v4893
        %v4944 = vrot.slane %v4893, 4
        %v4945 = vsel %vm1746, %v4905, %v4944
        %v4947 = vunpack.c.l.s4 1934713408
        %v4948 = vunpack.c.0.s8 %v4947
        %v4949 = vperm.slane %v4943, %v4948
        %v4951 = vunpack.c.l.s4 1934713408
        %v4952 = vunpack.c.0.s8 %v4951
        %v4953 = vperm.slane %v4945, %v4952
        %v4954 = vrot.slane %v4925, 4
        %v4955 = vsel %vm1746, %v4954, %v4913
        %v4956 = vrot.slane %v4913, 4
        %v4957 = vsel %vm1746, %v4925, %v4956
        %v4959 = vunpack.c.l.s4 1934713408
        %v4960 = vunpack.c.0.s8 %v4959
        %v4961 = vperm.slane %v4955, %v4960
        %v4963 = vunpack.c.l.s4 1934713408
        %v4964 = vunpack.c.0.s8 %v4963
        %v4965 = vperm.slane %v4957, %v4964
        %v4966 = vrot.slane %v4929, 4
        %v4967 = vsel %vm1746, %v4966, %v4917
        %v4968 = vrot.slane %v4917, 4
        %v4969 = vsel %vm1746, %v4929, %v4968
        %v4971 = vunpack.c.l.s4 1934713408
        %v4972 = vunpack.c.0.s8 %v4971
        %v4973 = vperm.slane %v4967, %v4972
        %v4975 = vunpack.c.l.s4 1934713408
        %v4976 = vunpack.c.0.s8 %v4975
        %v4977 = vperm.slane %v4969, %v4976
        %v4978 = vrot.slane %v4961, 4
        %v4979 = vsel %vm1746, %v4978, %v4937
        %v4980 = vrot.slane %v4937, 4
        %v4981 = vsel %vm1746, %v4961, %v4980
        %v4982 = vrot.slane %v4965, 4
        %v4983 = vsel %vm1746, %v4982, %v4941
        %v4984 = vrot.slane %v4941, 4
        %v4985 = vsel %vm1746, %v4965, %v4984
        %v4986 = vrot.slane %v4973, 4
        %v4987 = vsel %vm1746, %v4986, %v4949
        %v4988 = vrot.slane %v4949, 4
        %v4989 = vsel %vm1746, %v4973, %v4988
        %v4990 = vrot.slane %v4977, 4
        %v4991 = vsel %vm1746, %v4990, %v4953
        %v4992 = vrot.slane %v4953, 4
        %v4993 = vsel %vm1746, %v4977, %v4992
        %v4994 = vrot.slane %v704, 4
        %v4995 = vsel %vm1746, %v4994, %v608
        %v4996 = vrot.slane %v608, 4
        %v4997 = vsel %vm1746, %v704, %v4996
        %v4999 = vunpack.c.l.s4 1983009808
        %v5000 = vunpack.c.0.s8 %v4999
        %v5001 = vperm.slane %v4995, %v5000
        %v5003 = vunpack.c.l.s4 1983009808
        %v5004 = vunpack.c.0.s8 %v5003
        %v5005 = vperm.slane %v4997, %v5004
        %v5006 = vrot.slane %v752, 4
        %v5007 = vsel %vm1746, %v5006, %v656
        %v5008 = vrot.slane %v656, 4
        %v5009 = vsel %vm1746, %v752, %v5008
        %v5011 = vunpack.c.l.s4 1983009808
        %v5012 = vunpack.c.0.s8 %v5011
        %v5013 = vperm.slane %v5007, %v5012
        %v5015 = vunpack.c.l.s4 1983009808
        %v5016 = vunpack.c.0.s8 %v5015
        %v5017 = vperm.slane %v5009, %v5016
        %v5018 = vrot.slane %v896, 4
        %v5019 = vsel %vm1746, %v5018, %v800
        %v5020 = vrot.slane %v800, 4
        %v5021 = vsel %vm1746, %v896, %v5020
        %v5023 = vunpack.c.l.s4 1983009808
        %v5024 = vunpack.c.0.s8 %v5023
        %v5025 = vperm.slane %v5019, %v5024
        %v5027 = vunpack.c.l.s4 1983009808
        %v5028 = vunpack.c.0.s8 %v5027
        %v5029 = vperm.slane %v5021, %v5028
        %v5030 = vrot.slane %v944, 4
        %v5031 = vsel %vm1746, %v5030, %v848
        %v5032 = vrot.slane %v848, 4
        %v5033 = vsel %vm1746, %v944, %v5032
        %v5035 = vunpack.c.l.s4 1983009808
        %v5036 = vunpack.c.0.s8 %v5035
        %v5037 = vperm.slane %v5031, %v5036
        %v5039 = vunpack.c.l.s4 1983009808
        %v5040 = vunpack.c.0.s8 %v5039
        %v5041 = vperm.slane %v5033, %v5040
        %v5042 = vrot.slane %v5013, 4
        %v5043 = vsel %vm1746, %v5042, %v5001
        %v5044 = vrot.slane %v5001, 4
        %v5045 = vsel %vm1746, %v5013, %v5044
        %v5047 = vunpack.c.l.s4 1934713408
        %v5048 = vunpack.c.0.s8 %v5047
        %v5049 = vperm.slane %v5043, %v5048
        %v5051 = vunpack.c.l.s4 1934713408
        %v5052 = vunpack.c.0.s8 %v5051
        %v5053 = vperm.slane %v5045, %v5052
        %v5054 = vrot.slane %v5017, 4
        %v5055 = vsel %vm1746, %v5054, %v5005
        %v5056 = vrot.slane %v5005, 4
        %v5057 = vsel %vm1746, %v5017, %v5056
        %v5059 = vunpack.c.l.s4 1934713408
        %v5060 = vunpack.c.0.s8 %v5059
        %v5061 = vperm.slane %v5055, %v5060
        %v5063 = vunpack.c.l.s4 1934713408
        %v5064 = vunpack.c.0.s8 %v5063
        %v5065 = vperm.slane %v5057, %v5064
        %v5066 = vrot.slane %v5037, 4
        %v5067 = vsel %vm1746, %v5066, %v5025
        %v5068 = vrot.slane %v5025, 4
        %v5069 = vsel %vm1746, %v5037, %v5068
        %v5071 = vunpack.c.l.s4 1934713408
        %v5072 = vunpack.c.0.s8 %v5071
        %v5073 = vperm.slane %v5067, %v5072
        %v5075 = vunpack.c.l.s4 1934713408
        %v5076 = vunpack.c.0.s8 %v5075
        %v5077 = vperm.slane %v5069, %v5076
        %v5078 = vrot.slane %v5041, 4
        %v5079 = vsel %vm1746, %v5078, %v5029
        %v5080 = vrot.slane %v5029, 4
        %v5081 = vsel %vm1746, %v5041, %v5080
        %v5083 = vunpack.c.l.s4 1934713408
        %v5084 = vunpack.c.0.s8 %v5083
        %v5085 = vperm.slane %v5079, %v5084
        %v5087 = vunpack.c.l.s4 1934713408
        %v5088 = vunpack.c.0.s8 %v5087
        %v5089 = vperm.slane %v5081, %v5088
        %v5090 = vrot.slane %v5073, 4
        %v5091 = vsel %vm1746, %v5090, %v5049
        %v5092 = vrot.slane %v5049, 4
        %v5093 = vsel %vm1746, %v5073, %v5092
        %v5094 = vrot.slane %v5077, 4
        %v5095 = vsel %vm1746, %v5094, %v5053
        %v5096 = vrot.slane %v5053, 4
        %v5097 = vsel %vm1746, %v5077, %v5096
        %v5098 = vrot.slane %v5085, 4
        %v5099 = vsel %vm1746, %v5098, %v5061
        %v5100 = vrot.slane %v5061, 4
        %v5101 = vsel %vm1746, %v5085, %v5100
        %v5102 = vrot.slane %v5089, 4
        %v5103 = vsel %vm1746, %v5102, %v5065
        %v5104 = vrot.slane %v5065, 4
        %v5105 = vsel %vm1746, %v5089, %v5104
        %v5106 = vrot.slane %v1088, 4
        %v5107 = vsel %vm1746, %v5106, %v992
        %v5108 = vrot.slane %v992, 4
        %v5109 = vsel %vm1746, %v1088, %v5108
        %v5111 = vunpack.c.l.s4 1983009808
        %v5112 = vunpack.c.0.s8 %v5111
        %v5113 = vperm.slane %v5107, %v5112
        %v5115 = vunpack.c.l.s4 1983009808
        %v5116 = vunpack.c.0.s8 %v5115
        %v5117 = vperm.slane %v5109, %v5116
        %v5118 = vrot.slane %v1136, 4
        %v5119 = vsel %vm1746, %v5118, %v1040
        %v5120 = vrot.slane %v1040, 4
        %v5121 = vsel %vm1746, %v1136, %v5120
        %v5123 = vunpack.c.l.s4 1983009808
        %v5124 = vunpack.c.0.s8 %v5123
        %v5125 = vperm.slane %v5119, %v5124
        %v5127 = vunpack.c.l.s4 1983009808
        %v5128 = vunpack.c.0.s8 %v5127
        %v5129 = vperm.slane %v5121, %v5128
        %v5130 = vrot.slane %v1280, 4
        %v5131 = vsel %vm1746, %v5130, %v1184
        %v5132 = vrot.slane %v1184, 4
        %v5133 = vsel %vm1746, %v1280, %v5132
        %v5135 = vunpack.c.l.s4 1983009808
        %v5136 = vunpack.c.0.s8 %v5135
        %v5137 = vperm.slane %v5131, %v5136
        %v5139 = vunpack.c.l.s4 1983009808
        %v5140 = vunpack.c.0.s8 %v5139
        %v5141 = vperm.slane %v5133, %v5140
        %v5142 = vrot.slane %v1328, 4
        %v5143 = vsel %vm1746, %v5142, %v1232
        %v5144 = vrot.slane %v1232, 4
        %v5145 = vsel %vm1746, %v1328, %v5144
        %v5147 = vunpack.c.l.s4 1983009808
        %v5148 = vunpack.c.0.s8 %v5147
        %v5149 = vperm.slane %v5143, %v5148
        %v5151 = vunpack.c.l.s4 1983009808
        %v5152 = vunpack.c.0.s8 %v5151
        %v5153 = vperm.slane %v5145, %v5152
        %v5154 = vrot.slane %v5125, 4
        %v5155 = vsel %vm1746, %v5154, %v5113
        %v5156 = vrot.slane %v5113, 4
        %v5157 = vsel %vm1746, %v5125, %v5156
        %v5159 = vunpack.c.l.s4 1934713408
        %v5160 = vunpack.c.0.s8 %v5159
        %v5161 = vperm.slane %v5155, %v5160
        %v5163 = vunpack.c.l.s4 1934713408
        %v5164 = vunpack.c.0.s8 %v5163
        %v5165 = vperm.slane %v5157, %v5164
        %v5166 = vrot.slane %v5129, 4
        %v5167 = vsel %vm1746, %v5166, %v5117
        %v5168 = vrot.slane %v5117, 4
        %v5169 = vsel %vm1746, %v5129, %v5168
        %v5171 = vunpack.c.l.s4 1934713408
        %v5172 = vunpack.c.0.s8 %v5171
        %v5173 = vperm.slane %v5167, %v5172
        %v5175 = vunpack.c.l.s4 1934713408
        %v5176 = vunpack.c.0.s8 %v5175
        %v5177 = vperm.slane %v5169, %v5176
        %v5178 = vrot.slane %v5149, 4
        %v5179 = vsel %vm1746, %v5178, %v5137
        %v5180 = vrot.slane %v5137, 4
        %v5181 = vsel %vm1746, %v5149, %v5180
        %v5183 = vunpack.c.l.s4 1934713408
        %v5184 = vunpack.c.0.s8 %v5183
        %v5185 = vperm.slane %v5179, %v5184
        %v5187 = vunpack.c.l.s4 1934713408
        %v5188 = vunpack.c.0.s8 %v5187
        %v5189 = vperm.slane %v5181, %v5188
        %v5190 = vrot.slane %v5153, 4
        %v5191 = vsel %vm1746, %v5190, %v5141
        %v5192 = vrot.slane %v5141, 4
        %v5193 = vsel %vm1746, %v5153, %v5192
        %v5195 = vunpack.c.l.s4 1934713408
        %v5196 = vunpack.c.0.s8 %v5195
        %v5197 = vperm.slane %v5191, %v5196
        %v5199 = vunpack.c.l.s4 1934713408
        %v5200 = vunpack.c.0.s8 %v5199
        %v5201 = vperm.slane %v5193, %v5200
        %v5202 = vrot.slane %v5185, 4
        %v5203 = vsel %vm1746, %v5202, %v5161
        %v5204 = vrot.slane %v5161, 4
        %v5205 = vsel %vm1746, %v5185, %v5204
        %v5206 = vrot.slane %v5189, 4
        %v5207 = vsel %vm1746, %v5206, %v5165
        %v5208 = vrot.slane %v5165, 4
        %v5209 = vsel %vm1746, %v5189, %v5208
        %v5210 = vrot.slane %v5197, 4
        %v5211 = vsel %vm1746, %v5210, %v5173
        %v5212 = vrot.slane %v5173, 4
        %v5213 = vsel %vm1746, %v5197, %v5212
        %v5214 = vrot.slane %v5201, 4
        %v5215 = vsel %vm1746, %v5214, %v5177
        %v5216 = vrot.slane %v5177, 4
        %v5217 = vsel %vm1746, %v5201, %v5216
        %v5218 = vrot.slane %v1472, 4
        %v5219 = vsel %vm1746, %v5218, %v1376
        %v5220 = vrot.slane %v1376, 4
        %v5221 = vsel %vm1746, %v1472, %v5220
        %v5223 = vunpack.c.l.s4 1983009808
        %v5224 = vunpack.c.0.s8 %v5223
        %v5225 = vperm.slane %v5219, %v5224
        %v5227 = vunpack.c.l.s4 1983009808
        %v5228 = vunpack.c.0.s8 %v5227
        %v5229 = vperm.slane %v5221, %v5228
        %v5230 = vrot.slane %v1520, 4
        %v5231 = vsel %vm1746, %v5230, %v1424
        %v5232 = vrot.slane %v1424, 4
        %v5233 = vsel %vm1746, %v1520, %v5232
        %v5235 = vunpack.c.l.s4 1983009808
        %v5236 = vunpack.c.0.s8 %v5235
        %v5237 = vperm.slane %v5231, %v5236
        %v5239 = vunpack.c.l.s4 1983009808
        %v5240 = vunpack.c.0.s8 %v5239
        %v5241 = vperm.slane %v5233, %v5240
        %v5242 = vrot.slane %v1664, 4
        %v5243 = vsel %vm1746, %v5242, %v1568
        %v5244 = vrot.slane %v1568, 4
        %v5245 = vsel %vm1746, %v1664, %v5244
        %v5247 = vunpack.c.l.s4 1983009808
        %v5248 = vunpack.c.0.s8 %v5247
        %v5249 = vperm.slane %v5243, %v5248
        %v5251 = vunpack.c.l.s4 1983009808
        %v5252 = vunpack.c.0.s8 %v5251
        %v5253 = vperm.slane %v5245, %v5252
        %v5254 = vrot.slane %v1712, 4
        %v5255 = vsel %vm1746, %v5254, %v1616
        %v5256 = vrot.slane %v1616, 4
        %v5257 = vsel %vm1746, %v1712, %v5256
        %v5259 = vunpack.c.l.s4 1983009808
        %v5260 = vunpack.c.0.s8 %v5259
        %v5261 = vperm.slane %v5255, %v5260
        %v5263 = vunpack.c.l.s4 1983009808
        %v5264 = vunpack.c.0.s8 %v5263
        %v5265 = vperm.slane %v5257, %v5264
        %v5266 = vrot.slane %v5237, 4
        %v5267 = vsel %vm1746, %v5266, %v5225
        %v5268 = vrot.slane %v5225, 4
        %v5269 = vsel %vm1746, %v5237, %v5268
        %v5271 = vunpack.c.l.s4 1934713408
        %v5272 = vunpack.c.0.s8 %v5271
        %v5273 = vperm.slane %v5267, %v5272
        %v5275 = vunpack.c.l.s4 1934713408
        %v5276 = vunpack.c.0.s8 %v5275
        %v5277 = vperm.slane %v5269, %v5276
        %v5278 = vrot.slane %v5241, 4
        %v5279 = vsel %vm1746, %v5278, %v5229
        %v5280 = vrot.slane %v5229, 4
        %v5281 = vsel %vm1746, %v5241, %v5280
        %v5283 = vunpack.c.l.s4 1934713408
        %v5284 = vunpack.c.0.s8 %v5283
        %v5285 = vperm.slane %v5279, %v5284
        %v5287 = vunpack.c.l.s4 1934713408
        %v5288 = vunpack.c.0.s8 %v5287
        %v5289 = vperm.slane %v5281, %v5288
        %v5290 = vrot.slane %v5261, 4
        %v5291 = vsel %vm1746, %v5290, %v5249
        %v5292 = vrot.slane %v5249, 4
        %v5293 = vsel %vm1746, %v5261, %v5292
        %v5295 = vunpack.c.l.s4 1934713408
        %v5296 = vunpack.c.0.s8 %v5295
        %v5297 = vperm.slane %v5291, %v5296
        %v5299 = vunpack.c.l.s4 1934713408
        %v5300 = vunpack.c.0.s8 %v5299
        %v5301 = vperm.slane %v5293, %v5300
        %v5302 = vrot.slane %v5265, 4
        %v5303 = vsel %vm1746, %v5302, %v5253
        %v5304 = vrot.slane %v5253, 4
        %v5305 = vsel %vm1746, %v5265, %v5304
        %v5307 = vunpack.c.l.s4 1934713408
        %v5308 = vunpack.c.0.s8 %v5307
        %v5309 = vperm.slane %v5303, %v5308
        %v5311 = vunpack.c.l.s4 1934713408
        %v5312 = vunpack.c.0.s8 %v5311
        %v5313 = vperm.slane %v5305, %v5312
        %v5314 = vrot.slane %v5297, 4
        %v5315 = vsel %vm1746, %v5314, %v5273
        %v5316 = vrot.slane %v5273, 4
        %v5317 = vsel %vm1746, %v5297, %v5316
        %v5318 = vrot.slane %v5301, 4
        %v5319 = vsel %vm1746, %v5318, %v5277
        %v5320 = vrot.slane %v5277, 4
        %v5321 = vsel %vm1746, %v5301, %v5320
        %v5322 = vrot.slane %v5309, 4
        %v5323 = vsel %vm1746, %v5322, %v5285
        %v5324 = vrot.slane %v5285, 4
        %v5325 = vsel %vm1746, %v5309, %v5324
        %v5326 = vrot.slane %v5313, 4
        %v5327 = vsel %vm1746, %v5326, %v5289
        %v5328 = vrot.slane %v5289, 4
        %v5329 = vsel %vm1746, %v5313, %v5328
        %v5330 = vrot.slane %v322, 4
        %v5331 = vsel %vm1746, %v5330, %v233
        %v5332 = vrot.slane %v233, 4
        %v5333 = vsel %vm1746, %v322, %v5332
        %v5335 = vunpack.c.l.s4 1983009808
        %v5336 = vunpack.c.0.s8 %v5335
        %v5337 = vperm.slane %v5331, %v5336
        %v5339 = vunpack.c.l.s4 1983009808
        %v5340 = vunpack.c.0.s8 %v5339
        %v5341 = vperm.slane %v5333, %v5340
        %v5342 = vrot.slane %v370, 4
        %v5343 = vsel %vm1746, %v5342, %v274
        %v5344 = vrot.slane %v274, 4
        %v5345 = vsel %vm1746, %v370, %v5344
        %v5347 = vunpack.c.l.s4 1983009808
        %v5348 = vunpack.c.0.s8 %v5347
        %v5349 = vperm.slane %v5343, %v5348
        %v5351 = vunpack.c.l.s4 1983009808
        %v5352 = vunpack.c.0.s8 %v5351
        %v5353 = vperm.slane %v5345, %v5352
        %v5354 = vrot.slane %v514, 4
        %v5355 = vsel %vm1746, %v5354, %v418
        %v5356 = vrot.slane %v418, 4
        %v5357 = vsel %vm1746, %v514, %v5356
        %v5359 = vunpack.c.l.s4 1983009808
        %v5360 = vunpack.c.0.s8 %v5359
        %v5361 = vperm.slane %v5355, %v5360
        %v5363 = vunpack.c.l.s4 1983009808
        %v5364 = vunpack.c.0.s8 %v5363
        %v5365 = vperm.slane %v5357, %v5364
        %v5366 = vrot.slane %v562, 4
        %v5367 = vsel %vm1746, %v5366, %v466
        %v5368 = vrot.slane %v466, 4
        %v5369 = vsel %vm1746, %v562, %v5368
        %v5371 = vunpack.c.l.s4 1983009808
        %v5372 = vunpack.c.0.s8 %v5371
        %v5373 = vperm.slane %v5367, %v5372
        %v5375 = vunpack.c.l.s4 1983009808
        %v5376 = vunpack.c.0.s8 %v5375
        %v5377 = vperm.slane %v5369, %v5376
        %v5378 = vrot.slane %v5349, 4
        %v5379 = vsel %vm1746, %v5378, %v5337
        %v5380 = vrot.slane %v5337, 4
        %v5381 = vsel %vm1746, %v5349, %v5380
        %v5383 = vunpack.c.l.s4 1934713408
        %v5384 = vunpack.c.0.s8 %v5383
        %v5385 = vperm.slane %v5379, %v5384
        %v5387 = vunpack.c.l.s4 1934713408
        %v5388 = vunpack.c.0.s8 %v5387
        %v5389 = vperm.slane %v5381, %v5388
        %v5390 = vrot.slane %v5353, 4
        %v5391 = vsel %vm1746, %v5390, %v5341
        %v5392 = vrot.slane %v5341, 4
        %v5393 = vsel %vm1746, %v5353, %v5392
        %v5395 = vunpack.c.l.s4 1934713408
        %v5396 = vunpack.c.0.s8 %v5395
        %v5397 = vperm.slane %v5391, %v5396
        %v5399 = vunpack.c.l.s4 1934713408
        %v5400 = vunpack.c.0.s8 %v5399
        %v5401 = vperm.slane %v5393, %v5400
        %v5402 = vrot.slane %v5373, 4
        %v5403 = vsel %vm1746, %v5402, %v5361
        %v5404 = vrot.slane %v5361, 4
        %v5405 = vsel %vm1746, %v5373, %v5404
        %v5407 = vunpack.c.l.s4 1934713408
        %v5408 = vunpack.c.0.s8 %v5407
        %v5409 = vperm.slane %v5403, %v5408
        %v5411 = vunpack.c.l.s4 1934713408
        %v5412 = vunpack.c.0.s8 %v5411
        %v5413 = vperm.slane %v5405, %v5412
        %v5414 = vrot.slane %v5377, 4
        %v5415 = vsel %vm1746, %v5414, %v5365
        %v5416 = vrot.slane %v5365, 4
        %v5417 = vsel %vm1746, %v5377, %v5416
        %v5419 = vunpack.c.l.s4 1934713408
        %v5420 = vunpack.c.0.s8 %v5419
        %v5421 = vperm.slane %v5415, %v5420
        %v5423 = vunpack.c.l.s4 1934713408
        %v5424 = vunpack.c.0.s8 %v5423
        %v5425 = vperm.slane %v5417, %v5424
        %v5426 = vrot.slane %v5409, 4
        %v5427 = vsel %vm1746, %v5426, %v5385
        %v5428 = vrot.slane %v5385, 4
        %v5429 = vsel %vm1746, %v5409, %v5428
        %v5430 = vrot.slane %v5413, 4
        %v5431 = vsel %vm1746, %v5430, %v5389
        %v5432 = vrot.slane %v5389, 4
        %v5433 = vsel %vm1746, %v5413, %v5432
        %v5434 = vrot.slane %v5421, 4
        %v5435 = vsel %vm1746, %v5434, %v5397
        %v5436 = vrot.slane %v5397, 4
        %v5437 = vsel %vm1746, %v5421, %v5436
        %v5438 = vrot.slane %v5425, 4
        %v5439 = vsel %vm1746, %v5438, %v5401
        %v5440 = vrot.slane %v5401, 4
        %v5441 = vsel %vm1746, %v5425, %v5440
        %v5442 = vrot.slane %v706, 4
        %v5443 = vsel %vm1746, %v5442, %v610
        %v5444 = vrot.slane %v610, 4
        %v5445 = vsel %vm1746, %v706, %v5444
        %v5447 = vunpack.c.l.s4 1983009808
        %v5448 = vunpack.c.0.s8 %v5447
        %v5449 = vperm.slane %v5443, %v5448
        %v5451 = vunpack.c.l.s4 1983009808
        %v5452 = vunpack.c.0.s8 %v5451
        %v5453 = vperm.slane %v5445, %v5452
        %v5454 = vrot.slane %v754, 4
        %v5455 = vsel %vm1746, %v5454, %v658
        %v5456 = vrot.slane %v658, 4
        %v5457 = vsel %vm1746, %v754, %v5456
        %v5459 = vunpack.c.l.s4 1983009808
        %v5460 = vunpack.c.0.s8 %v5459
        %v5461 = vperm.slane %v5455, %v5460
        %v5463 = vunpack.c.l.s4 1983009808
        %v5464 = vunpack.c.0.s8 %v5463
        %v5465 = vperm.slane %v5457, %v5464
        %v5466 = vrot.slane %v898, 4
        %v5467 = vsel %vm1746, %v5466, %v802
        %v5468 = vrot.slane %v802, 4
        %v5469 = vsel %vm1746, %v898, %v5468
        %v5471 = vunpack.c.l.s4 1983009808
        %v5472 = vunpack.c.0.s8 %v5471
        %v5473 = vperm.slane %v5467, %v5472
        %v5475 = vunpack.c.l.s4 1983009808
        %v5476 = vunpack.c.0.s8 %v5475
        %v5477 = vperm.slane %v5469, %v5476
        %v5478 = vrot.slane %v946, 4
        %v5479 = vsel %vm1746, %v5478, %v850
        %v5480 = vrot.slane %v850, 4
        %v5481 = vsel %vm1746, %v946, %v5480
        %v5483 = vunpack.c.l.s4 1983009808
        %v5484 = vunpack.c.0.s8 %v5483
        %v5485 = vperm.slane %v5479, %v5484
        %v5487 = vunpack.c.l.s4 1983009808
        %v5488 = vunpack.c.0.s8 %v5487
        %v5489 = vperm.slane %v5481, %v5488
        %v5490 = vrot.slane %v5461, 4
        %v5491 = vsel %vm1746, %v5490, %v5449
        %v5492 = vrot.slane %v5449, 4
        %v5493 = vsel %vm1746, %v5461, %v5492
        %v5495 = vunpack.c.l.s4 1934713408
        %v5496 = vunpack.c.0.s8 %v5495
        %v5497 = vperm.slane %v5491, %v5496
        %v5499 = vunpack.c.l.s4 1934713408
        %v5500 = vunpack.c.0.s8 %v5499
        %v5501 = vperm.slane %v5493, %v5500
        %v5502 = vrot.slane %v5465, 4
        %v5503 = vsel %vm1746, %v5502, %v5453
        %v5504 = vrot.slane %v5453, 4
        %v5505 = vsel %vm1746, %v5465, %v5504
        %v5507 = vunpack.c.l.s4 1934713408
        %v5508 = vunpack.c.0.s8 %v5507
        %v5509 = vperm.slane %v5503, %v5508
        %v5511 = vunpack.c.l.s4 1934713408
        %v5512 = vunpack.c.0.s8 %v5511
        %v5513 = vperm.slane %v5505, %v5512
        %v5514 = vrot.slane %v5485, 4
        %v5515 = vsel %vm1746, %v5514, %v5473
        %v5516 = vrot.slane %v5473, 4
        %v5517 = vsel %vm1746, %v5485, %v5516
        %v5519 = vunpack.c.l.s4 1934713408
        %v5520 = vunpack.c.0.s8 %v5519
        %v5521 = vperm.slane %v5515, %v5520
        %v5523 = vunpack.c.l.s4 1934713408
        %v5524 = vunpack.c.0.s8 %v5523
        %v5525 = vperm.slane %v5517, %v5524
        %v5526 = vrot.slane %v5489, 4
        %v5527 = vsel %vm1746, %v5526, %v5477
        %v5528 = vrot.slane %v5477, 4
        %v5529 = vsel %vm1746, %v5489, %v5528
        %v5531 = vunpack.c.l.s4 1934713408
        %v5532 = vunpack.c.0.s8 %v5531
        %v5533 = vperm.slane %v5527, %v5532
        %v5535 = vunpack.c.l.s4 1934713408
        %v5536 = vunpack.c.0.s8 %v5535
        %v5537 = vperm.slane %v5529, %v5536
        %v5538 = vrot.slane %v5521, 4
        %v5539 = vsel %vm1746, %v5538, %v5497
        %v5540 = vrot.slane %v5497, 4
        %v5541 = vsel %vm1746, %v5521, %v5540
        %v5542 = vrot.slane %v5525, 4
        %v5543 = vsel %vm1746, %v5542, %v5501
        %v5544 = vrot.slane %v5501, 4
        %v5545 = vsel %vm1746, %v5525, %v5544
        %v5546 = vrot.slane %v5533, 4
        %v5547 = vsel %vm1746, %v5546, %v5509
        %v5548 = vrot.slane %v5509, 4
        %v5549 = vsel %vm1746, %v5533, %v5548
        %v5550 = vrot.slane %v5537, 4
        %v5551 = vsel %vm1746, %v5550, %v5513
        %v5552 = vrot.slane %v5513, 4
        %v5553 = vsel %vm1746, %v5537, %v5552
        %v5554 = vrot.slane %v1090, 4
        %v5555 = vsel %vm1746, %v5554, %v994
        %v5556 = vrot.slane %v994, 4
        %v5557 = vsel %vm1746, %v1090, %v5556
        %v5559 = vunpack.c.l.s4 1983009808
        %v5560 = vunpack.c.0.s8 %v5559
        %v5561 = vperm.slane %v5555, %v5560
        %v5563 = vunpack.c.l.s4 1983009808
        %v5564 = vunpack.c.0.s8 %v5563
        %v5565 = vperm.slane %v5557, %v5564
        %v5566 = vrot.slane %v1138, 4
        %v5567 = vsel %vm1746, %v5566, %v1042
        %v5568 = vrot.slane %v1042, 4
        %v5569 = vsel %vm1746, %v1138, %v5568
        %v5571 = vunpack.c.l.s4 1983009808
        %v5572 = vunpack.c.0.s8 %v5571
        %v5573 = vperm.slane %v5567, %v5572
        %v5575 = vunpack.c.l.s4 1983009808
        %v5576 = vunpack.c.0.s8 %v5575
        %v5577 = vperm.slane %v5569, %v5576
        %v5578 = vrot.slane %v1282, 4
        %v5579 = vsel %vm1746, %v5578, %v1186
        %v5580 = vrot.slane %v1186, 4
        %v5581 = vsel %vm1746, %v1282, %v5580
        %v5583 = vunpack.c.l.s4 1983009808
        %v5584 = vunpack.c.0.s8 %v5583
        %v5585 = vperm.slane %v5579, %v5584
        %v5587 = vunpack.c.l.s4 1983009808
        %v5588 = vunpack.c.0.s8 %v5587
        %v5589 = vperm.slane %v5581, %v5588
        %v5590 = vrot.slane %v1330, 4
        %v5591 = vsel %vm1746, %v5590, %v1234
        %v5592 = vrot.slane %v1234, 4
        %v5593 = vsel %vm1746, %v1330, %v5592
        %v5595 = vunpack.c.l.s4 1983009808
        %v5596 = vunpack.c.0.s8 %v5595
        %v5597 = vperm.slane %v5591, %v5596
        %v5599 = vunpack.c.l.s4 1983009808
        %v5600 = vunpack.c.0.s8 %v5599
        %v5601 = vperm.slane %v5593, %v5600
        %v5602 = vrot.slane %v5573, 4
        %v5603 = vsel %vm1746, %v5602, %v5561
        %v5604 = vrot.slane %v5561, 4
        %v5605 = vsel %vm1746, %v5573, %v5604
        %v5607 = vunpack.c.l.s4 1934713408
        %v5608 = vunpack.c.0.s8 %v5607
        %v5609 = vperm.slane %v5603, %v5608
        %v5611 = vunpack.c.l.s4 1934713408
        %v5612 = vunpack.c.0.s8 %v5611
        %v5613 = vperm.slane %v5605, %v5612
        %v5614 = vrot.slane %v5577, 4
        %v5615 = vsel %vm1746, %v5614, %v5565
        %v5616 = vrot.slane %v5565, 4
        %v5617 = vsel %vm1746, %v5577, %v5616
        %v5619 = vunpack.c.l.s4 1934713408
        %v5620 = vunpack.c.0.s8 %v5619
        %v5621 = vperm.slane %v5615, %v5620
        %v5623 = vunpack.c.l.s4 1934713408
        %v5624 = vunpack.c.0.s8 %v5623
        %v5625 = vperm.slane %v5617, %v5624
        %v5626 = vrot.slane %v5597, 4
        %v5627 = vsel %vm1746, %v5626, %v5585
        %v5628 = vrot.slane %v5585, 4
        %v5629 = vsel %vm1746, %v5597, %v5628
        %v5631 = vunpack.c.l.s4 1934713408
        %v5632 = vunpack.c.0.s8 %v5631
        %v5633 = vperm.slane %v5627, %v5632
        %v5635 = vunpack.c.l.s4 1934713408
        %v5636 = vunpack.c.0.s8 %v5635
        %v5637 = vperm.slane %v5629, %v5636
        %v5638 = vrot.slane %v5601, 4
        %v5639 = vsel %vm1746, %v5638, %v5589
        %v5640 = vrot.slane %v5589, 4
        %v5641 = vsel %vm1746, %v5601, %v5640
        %v5643 = vunpack.c.l.s4 1934713408
        %v5644 = vunpack.c.0.s8 %v5643
        %v5645 = vperm.slane %v5639, %v5644
        %v5647 = vunpack.c.l.s4 1934713408
        %v5648 = vunpack.c.0.s8 %v5647
        %v5649 = vperm.slane %v5641, %v5648
        %v5650 = vrot.slane %v5633, 4
        %v5651 = vsel %vm1746, %v5650, %v5609
        %v5652 = vrot.slane %v5609, 4
        %v5653 = vsel %vm1746, %v5633, %v5652
        %v5654 = vrot.slane %v5637, 4
        %v5655 = vsel %vm1746, %v5654, %v5613
        %v5656 = vrot.slane %v5613, 4
        %v5657 = vsel %vm1746, %v5637, %v5656
        %v5658 = vrot.slane %v5645, 4
        %v5659 = vsel %vm1746, %v5658, %v5621
        %v5660 = vrot.slane %v5621, 4
        %v5661 = vsel %vm1746, %v5645, %v5660
        %v5662 = vrot.slane %v5649, 4
        %v5663 = vsel %vm1746, %v5662, %v5625
        %v5664 = vrot.slane %v5625, 4
        %v5665 = vsel %vm1746, %v5649, %v5664
        %v5666 = vrot.slane %v1474, 4
        %v5667 = vsel %vm1746, %v5666, %v1378
        %v5668 = vrot.slane %v1378, 4
        %v5669 = vsel %vm1746, %v1474, %v5668
        %v5671 = vunpack.c.l.s4 1983009808
        %v5672 = vunpack.c.0.s8 %v5671
        %v5673 = vperm.slane %v5667, %v5672
        %v5675 = vunpack.c.l.s4 1983009808
        %v5676 = vunpack.c.0.s8 %v5675
        %v5677 = vperm.slane %v5669, %v5676
        %v5678 = vrot.slane %v1522, 4
        %v5679 = vsel %vm1746, %v5678, %v1426
        %v5680 = vrot.slane %v1426, 4
        %v5681 = vsel %vm1746, %v1522, %v5680
        %v5683 = vunpack.c.l.s4 1983009808
        %v5684 = vunpack.c.0.s8 %v5683
        %v5685 = vperm.slane %v5679, %v5684
        %v5687 = vunpack.c.l.s4 1983009808
        %v5688 = vunpack.c.0.s8 %v5687
        %v5689 = vperm.slane %v5681, %v5688
        %v5690 = vrot.slane %v1666, 4
        %v5691 = vsel %vm1746, %v5690, %v1570
        %v5692 = vrot.slane %v1570, 4
        %v5693 = vsel %vm1746, %v1666, %v5692
        %v5695 = vunpack.c.l.s4 1983009808
        %v5696 = vunpack.c.0.s8 %v5695
        %v5697 = vperm.slane %v5691, %v5696
        %v5699 = vunpack.c.l.s4 1983009808
        %v5700 = vunpack.c.0.s8 %v5699
        %v5701 = vperm.slane %v5693, %v5700
        %v5702 = vrot.slane %v1714, 4
        %v5703 = vsel %vm1746, %v5702, %v1618
        %v5704 = vrot.slane %v1618, 4
        %v5705 = vsel %vm1746, %v1714, %v5704
        %v5707 = vunpack.c.l.s4 1983009808
        %v5708 = vunpack.c.0.s8 %v5707
        %v5709 = vperm.slane %v5703, %v5708
        %v5711 = vunpack.c.l.s4 1983009808
        %v5712 = vunpack.c.0.s8 %v5711
        %v5713 = vperm.slane %v5705, %v5712
        %v5714 = vrot.slane %v5685, 4
        %v5715 = vsel %vm1746, %v5714, %v5673
        %v5716 = vrot.slane %v5673, 4
        %v5717 = vsel %vm1746, %v5685, %v5716
        %v5719 = vunpack.c.l.s4 1934713408
        %v5720 = vunpack.c.0.s8 %v5719
        %v5721 = vperm.slane %v5715, %v5720
        %v5723 = vunpack.c.l.s4 1934713408
        %v5724 = vunpack.c.0.s8 %v5723
        %v5725 = vperm.slane %v5717, %v5724
        %v5726 = vrot.slane %v5689, 4
        %v5727 = vsel %vm1746, %v5726, %v5677
        %v5728 = vrot.slane %v5677, 4
        %v5729 = vsel %vm1746, %v5689, %v5728
        %v5731 = vunpack.c.l.s4 1934713408
        %v5732 = vunpack.c.0.s8 %v5731
        %v5733 = vperm.slane %v5727, %v5732
        %v5735 = vunpack.c.l.s4 1934713408
        %v5736 = vunpack.c.0.s8 %v5735
        %v5737 = vperm.slane %v5729, %v5736
        %v5738 = vrot.slane %v5709, 4
        %v5739 = vsel %vm1746, %v5738, %v5697
        %v5740 = vrot.slane %v5697, 4
        %v5741 = vsel %vm1746, %v5709, %v5740
        %v5743 = vunpack.c.l.s4 1934713408
        %v5744 = vunpack.c.0.s8 %v5743
        %v5745 = vperm.slane %v5739, %v5744
        %v5747 = vunpack.c.l.s4 1934713408
        %v5748 = vunpack.c.0.s8 %v5747
        %v5749 = vperm.slane %v5741, %v5748
        %v5750 = vrot.slane %v5713, 4
        %v5751 = vsel %vm1746, %v5750, %v5701
        %v5752 = vrot.slane %v5701, 4
        %v5753 = vsel %vm1746, %v5713, %v5752
        %v5755 = vunpack.c.l.s4 1934713408
        %v5756 = vunpack.c.0.s8 %v5755
        %v5757 = vperm.slane %v5751, %v5756
        %v5759 = vunpack.c.l.s4 1934713408
        %v5760 = vunpack.c.0.s8 %v5759
        %v5761 = vperm.slane %v5753, %v5760
        %v5762 = vrot.slane %v5745, 4
        %v5763 = vsel %vm1746, %v5762, %v5721
        %v5764 = vrot.slane %v5721, 4
        %v5765 = vsel %vm1746, %v5745, %v5764
        %v5766 = vrot.slane %v5749, 4
        %v5767 = vsel %vm1746, %v5766, %v5725
        %v5768 = vrot.slane %v5725, 4
        %v5769 = vsel %vm1746, %v5749, %v5768
        %v5770 = vrot.slane %v5757, 4
        %v5771 = vsel %vm1746, %v5770, %v5733
        %v5772 = vrot.slane %v5733, 4
        %v5773 = vsel %vm1746, %v5757, %v5772
        %v5774 = vrot.slane %v5761, 4
        %v5775 = vsel %vm1746, %v5774, %v5737
        %v5776 = vrot.slane %v5737, 4
        %v5777 = vsel %vm1746, %v5761, %v5776
        %v5778 = vrot.slane %v324, 4
        %v5779 = vsel %vm1746, %v5778, %v234
        %v5780 = vrot.slane %v234, 4
        %v5781 = vsel %vm1746, %v324, %v5780
        %v5783 = vunpack.c.l.s4 1983009808
        %v5784 = vunpack.c.0.s8 %v5783
        %v5785 = vperm.slane %v5779, %v5784
        %v5787 = vunpack.c.l.s4 1983009808
        %v5788 = vunpack.c.0.s8 %v5787
        %v5789 = vperm.slane %v5781, %v5788
        %v5790 = vrot.slane %v372, 4
        %v5791 = vsel %vm1746, %v5790, %v276
        %v5792 = vrot.slane %v276, 4
        %v5793 = vsel %vm1746, %v372, %v5792
        %v5795 = vunpack.c.l.s4 1983009808
        %v5796 = vunpack.c.0.s8 %v5795
        %v5797 = vperm.slane %v5791, %v5796
        %v5799 = vunpack.c.l.s4 1983009808
        %v5800 = vunpack.c.0.s8 %v5799
        %v5801 = vperm.slane %v5793, %v5800
        %v5802 = vrot.slane %v516, 4
        %v5803 = vsel %vm1746, %v5802, %v420
        %v5804 = vrot.slane %v420, 4
        %v5805 = vsel %vm1746, %v516, %v5804
        %v5807 = vunpack.c.l.s4 1983009808
        %v5808 = vunpack.c.0.s8 %v5807
        %v5809 = vperm.slane %v5803, %v5808
        %v5811 = vunpack.c.l.s4 1983009808
        %v5812 = vunpack.c.0.s8 %v5811
        %v5813 = vperm.slane %v5805, %v5812
        %v5814 = vrot.slane %v564, 4
        %v5815 = vsel %vm1746, %v5814, %v468
        %v5816 = vrot.slane %v468, 4
        %v5817 = vsel %vm1746, %v564, %v5816
        %v5819 = vunpack.c.l.s4 1983009808
        %v5820 = vunpack.c.0.s8 %v5819
        %v5821 = vperm.slane %v5815, %v5820
        %v5823 = vunpack.c.l.s4 1983009808
        %v5824 = vunpack.c.0.s8 %v5823
        %v5825 = vperm.slane %v5817, %v5824
        %v5826 = vrot.slane %v5797, 4
        %v5827 = vsel %vm1746, %v5826, %v5785
        %v5828 = vrot.slane %v5785, 4
        %v5829 = vsel %vm1746, %v5797, %v5828
        %v5831 = vunpack.c.l.s4 1934713408
        %v5832 = vunpack.c.0.s8 %v5831
        %v5833 = vperm.slane %v5827, %v5832
        %v5835 = vunpack.c.l.s4 1934713408
        %v5836 = vunpack.c.0.s8 %v5835
        %v5837 = vperm.slane %v5829, %v5836
        %v5838 = vrot.slane %v5801, 4
        %v5839 = vsel %vm1746, %v5838, %v5789
        %v5840 = vrot.slane %v5789, 4
        %v5841 = vsel %vm1746, %v5801, %v5840
        %v5843 = vunpack.c.l.s4 1934713408
        %v5844 = vunpack.c.0.s8 %v5843
        %v5845 = vperm.slane %v5839, %v5844
        %v5847 = vunpack.c.l.s4 1934713408
        %v5848 = vunpack.c.0.s8 %v5847
        %v5849 = vperm.slane %v5841, %v5848
        %v5850 = vrot.slane %v5821, 4
        %v5851 = vsel %vm1746, %v5850, %v5809
        %v5852 = vrot.slane %v5809, 4
        %v5853 = vsel %vm1746, %v5821, %v5852
        %v5855 = vunpack.c.l.s4 1934713408
        %v5856 = vunpack.c.0.s8 %v5855
        %v5857 = vperm.slane %v5851, %v5856
        %v5859 = vunpack.c.l.s4 1934713408
        %v5860 = vunpack.c.0.s8 %v5859
        %v5861 = vperm.slane %v5853, %v5860
        %v5862 = vrot.slane %v5825, 4
        %v5863 = vsel %vm1746, %v5862, %v5813
        %v5864 = vrot.slane %v5813, 4
        %v5865 = vsel %vm1746, %v5825, %v5864
        %v5867 = vunpack.c.l.s4 1934713408
        %v5868 = vunpack.c.0.s8 %v5867
        %v5869 = vperm.slane %v5863, %v5868
        %v5871 = vunpack.c.l.s4 1934713408
        %v5872 = vunpack.c.0.s8 %v5871
        %v5873 = vperm.slane %v5865, %v5872
        %v5874 = vrot.slane %v5857, 4
        %v5875 = vsel %vm1746, %v5874, %v5833
        %v5876 = vrot.slane %v5833, 4
        %v5877 = vsel %vm1746, %v5857, %v5876
        %v5878 = vrot.slane %v5861, 4
        %v5879 = vsel %vm1746, %v5878, %v5837
        %v5880 = vrot.slane %v5837, 4
        %v5881 = vsel %vm1746, %v5861, %v5880
        %v5882 = vrot.slane %v5869, 4
        %v5883 = vsel %vm1746, %v5882, %v5845
        %v5884 = vrot.slane %v5845, 4
        %v5885 = vsel %vm1746, %v5869, %v5884
        %v5886 = vrot.slane %v5873, 4
        %v5887 = vsel %vm1746, %v5886, %v5849
        %v5888 = vrot.slane %v5849, 4
        %v5889 = vsel %vm1746, %v5873, %v5888
        %v5890 = vrot.slane %v708, 4
        %v5891 = vsel %vm1746, %v5890, %v612
        %v5892 = vrot.slane %v612, 4
        %v5893 = vsel %vm1746, %v708, %v5892
        %v5895 = vunpack.c.l.s4 1983009808
        %v5896 = vunpack.c.0.s8 %v5895
        %v5897 = vperm.slane %v5891, %v5896
        %v5899 = vunpack.c.l.s4 1983009808
        %v5900 = vunpack.c.0.s8 %v5899
        %v5901 = vperm.slane %v5893, %v5900
        %v5902 = vrot.slane %v756, 4
        %v5903 = vsel %vm1746, %v5902, %v660
        %v5904 = vrot.slane %v660, 4
        %v5905 = vsel %vm1746, %v756, %v5904
        %v5907 = vunpack.c.l.s4 1983009808
        %v5908 = vunpack.c.0.s8 %v5907
        %v5909 = vperm.slane %v5903, %v5908
        %v5911 = vunpack.c.l.s4 1983009808
        %v5912 = vunpack.c.0.s8 %v5911
        %v5913 = vperm.slane %v5905, %v5912
        %v5914 = vrot.slane %v900, 4
        %v5915 = vsel %vm1746, %v5914, %v804
        %v5916 = vrot.slane %v804, 4
        %v5917 = vsel %vm1746, %v900, %v5916
        %v5919 = vunpack.c.l.s4 1983009808
        %v5920 = vunpack.c.0.s8 %v5919
        %v5921 = vperm.slane %v5915, %v5920
        %v5923 = vunpack.c.l.s4 1983009808
        %v5924 = vunpack.c.0.s8 %v5923
        %v5925 = vperm.slane %v5917, %v5924
        %v5926 = vrot.slane %v948, 4
        %v5927 = vsel %vm1746, %v5926, %v852
        %v5928 = vrot.slane %v852, 4
        %v5929 = vsel %vm1746, %v948, %v5928
        %v5931 = vunpack.c.l.s4 1983009808
        %v5932 = vunpack.c.0.s8 %v5931
        %v5933 = vperm.slane %v5927, %v5932
        %v5935 = vunpack.c.l.s4 1983009808
        %v5936 = vunpack.c.0.s8 %v5935
        %v5937 = vperm.slane %v5929, %v5936
        %v5938 = vrot.slane %v5909, 4
        %v5939 = vsel %vm1746, %v5938, %v5897
        %v5940 = vrot.slane %v5897, 4
        %v5941 = vsel %vm1746, %v5909, %v5940
        %v5943 = vunpack.c.l.s4 1934713408
        %v5944 = vunpack.c.0.s8 %v5943
        %v5945 = vperm.slane %v5939, %v5944
        %v5947 = vunpack.c.l.s4 1934713408
        %v5948 = vunpack.c.0.s8 %v5947
        %v5949 = vperm.slane %v5941, %v5948
        %v5950 = vrot.slane %v5913, 4
        %v5951 = vsel %vm1746, %v5950, %v5901
        %v5952 = vrot.slane %v5901, 4
        %v5953 = vsel %vm1746, %v5913, %v5952
        %v5955 = vunpack.c.l.s4 1934713408
        %v5956 = vunpack.c.0.s8 %v5955
        %v5957 = vperm.slane %v5951, %v5956
        %v5959 = vunpack.c.l.s4 1934713408
        %v5960 = vunpack.c.0.s8 %v5959
        %v5961 = vperm.slane %v5953, %v5960
        %v5962 = vrot.slane %v5933, 4
        %v5963 = vsel %vm1746, %v5962, %v5921
        %v5964 = vrot.slane %v5921, 4
        %v5965 = vsel %vm1746, %v5933, %v5964
        %v5967 = vunpack.c.l.s4 1934713408
        %v5968 = vunpack.c.0.s8 %v5967
        %v5969 = vperm.slane %v5963, %v5968
        %v5971 = vunpack.c.l.s4 1934713408
        %v5972 = vunpack.c.0.s8 %v5971
        %v5973 = vperm.slane %v5965, %v5972
        %v5974 = vrot.slane %v5937, 4
        %v5975 = vsel %vm1746, %v5974, %v5925
        %v5976 = vrot.slane %v5925, 4
        %v5977 = vsel %vm1746, %v5937, %v5976
        %v5979 = vunpack.c.l.s4 1934713408
        %v5980 = vunpack.c.0.s8 %v5979
        %v5981 = vperm.slane %v5975, %v5980
        %v5983 = vunpack.c.l.s4 1934713408
        %v5984 = vunpack.c.0.s8 %v5983
        %v5985 = vperm.slane %v5977, %v5984
        %v5986 = vrot.slane %v5969, 4
        %v5987 = vsel %vm1746, %v5986, %v5945
        %v5988 = vrot.slane %v5945, 4
        %v5989 = vsel %vm1746, %v5969, %v5988
        %v5990 = vrot.slane %v5973, 4
        %v5991 = vsel %vm1746, %v5990, %v5949
        %v5992 = vrot.slane %v5949, 4
        %v5993 = vsel %vm1746, %v5973, %v5992
        %v5994 = vrot.slane %v5981, 4
        %v5995 = vsel %vm1746, %v5994, %v5957
        %v5996 = vrot.slane %v5957, 4
        %v5997 = vsel %vm1746, %v5981, %v5996
        %v5998 = vrot.slane %v5985, 4
        %v5999 = vsel %vm1746, %v5998, %v5961
        %v6000 = vrot.slane %v5961, 4
        %v6001 = vsel %vm1746, %v5985, %v6000
        %v6002 = vrot.slane %v1092, 4
        %v6003 = vsel %vm1746, %v6002, %v996
        %v6004 = vrot.slane %v996, 4
        %v6005 = vsel %vm1746, %v1092, %v6004
        %v6007 = vunpack.c.l.s4 1983009808
        %v6008 = vunpack.c.0.s8 %v6007
        %v6009 = vperm.slane %v6003, %v6008
        %v6011 = vunpack.c.l.s4 1983009808
        %v6012 = vunpack.c.0.s8 %v6011
        %v6013 = vperm.slane %v6005, %v6012
        %v6014 = vrot.slane %v1140, 4
        %v6015 = vsel %vm1746, %v6014, %v1044
        %v6016 = vrot.slane %v1044, 4
        %v6017 = vsel %vm1746, %v1140, %v6016
        %v6019 = vunpack.c.l.s4 1983009808
        %v6020 = vunpack.c.0.s8 %v6019
        %v6021 = vperm.slane %v6015, %v6020
        %v6023 = vunpack.c.l.s4 1983009808
        %v6024 = vunpack.c.0.s8 %v6023
        %v6025 = vperm.slane %v6017, %v6024
        %v6026 = vrot.slane %v1284, 4
        %v6027 = vsel %vm1746, %v6026, %v1188
        %v6028 = vrot.slane %v1188, 4
        %v6029 = vsel %vm1746, %v1284, %v6028
        %v6031 = vunpack.c.l.s4 1983009808
        %v6032 = vunpack.c.0.s8 %v6031
        %v6033 = vperm.slane %v6027, %v6032
        %v6035 = vunpack.c.l.s4 1983009808
        %v6036 = vunpack.c.0.s8 %v6035
        %v6037 = vperm.slane %v6029, %v6036
        %v6038 = vrot.slane %v1332, 4
        %v6039 = vsel %vm1746, %v6038, %v1236
        %v6040 = vrot.slane %v1236, 4
        %v6041 = vsel %vm1746, %v1332, %v6040
        %v6043 = vunpack.c.l.s4 1983009808
        %v6044 = vunpack.c.0.s8 %v6043
        %v6045 = vperm.slane %v6039, %v6044
        %v6047 = vunpack.c.l.s4 1983009808
        %v6048 = vunpack.c.0.s8 %v6047
        %v6049 = vperm.slane %v6041, %v6048
        %v6050 = vrot.slane %v6021, 4
        %v6051 = vsel %vm1746, %v6050, %v6009
        %v6052 = vrot.slane %v6009, 4
        %v6053 = vsel %vm1746, %v6021, %v6052
        %v6055 = vunpack.c.l.s4 1934713408
        %v6056 = vunpack.c.0.s8 %v6055
        %v6057 = vperm.slane %v6051, %v6056
        %v6059 = vunpack.c.l.s4 1934713408
        %v6060 = vunpack.c.0.s8 %v6059
        %v6061 = vperm.slane %v6053, %v6060
        %v6062 = vrot.slane %v6025, 4
        %v6063 = vsel %vm1746, %v6062, %v6013
        %v6064 = vrot.slane %v6013, 4
        %v6065 = vsel %vm1746, %v6025, %v6064
        %v6067 = vunpack.c.l.s4 1934713408
        %v6068 = vunpack.c.0.s8 %v6067
        %v6069 = vperm.slane %v6063, %v6068
        %v6071 = vunpack.c.l.s4 1934713408
        %v6072 = vunpack.c.0.s8 %v6071
        %v6073 = vperm.slane %v6065, %v6072
        %v6074 = vrot.slane %v6045, 4
        %v6075 = vsel %vm1746, %v6074, %v6033
        %v6076 = vrot.slane %v6033, 4
        %v6077 = vsel %vm1746, %v6045, %v6076
        %v6079 = vunpack.c.l.s4 1934713408
        %v6080 = vunpack.c.0.s8 %v6079
        %v6081 = vperm.slane %v6075, %v6080
        %v6083 = vunpack.c.l.s4 1934713408
        %v6084 = vunpack.c.0.s8 %v6083
        %v6085 = vperm.slane %v6077, %v6084
        %v6086 = vrot.slane %v6049, 4
        %v6087 = vsel %vm1746, %v6086, %v6037
        %v6088 = vrot.slane %v6037, 4
        %v6089 = vsel %vm1746, %v6049, %v6088
        %v6091 = vunpack.c.l.s4 1934713408
        %v6092 = vunpack.c.0.s8 %v6091
        %v6093 = vperm.slane %v6087, %v6092
        %v6095 = vunpack.c.l.s4 1934713408
        %v6096 = vunpack.c.0.s8 %v6095
        %v6097 = vperm.slane %v6089, %v6096
        %v6098 = vrot.slane %v6081, 4
        %v6099 = vsel %vm1746, %v6098, %v6057
        %v6100 = vrot.slane %v6057, 4
        %v6101 = vsel %vm1746, %v6081, %v6100
        %v6102 = vrot.slane %v6085, 4
        %v6103 = vsel %vm1746, %v6102, %v6061
        %v6104 = vrot.slane %v6061, 4
        %v6105 = vsel %vm1746, %v6085, %v6104
        %v6106 = vrot.slane %v6093, 4
        %v6107 = vsel %vm1746, %v6106, %v6069
        %v6108 = vrot.slane %v6069, 4
        %v6109 = vsel %vm1746, %v6093, %v6108
        %v6110 = vrot.slane %v6097, 4
        %v6111 = vsel %vm1746, %v6110, %v6073
        %v6112 = vrot.slane %v6073, 4
        %v6113 = vsel %vm1746, %v6097, %v6112
        %v6114 = vrot.slane %v1476, 4
        %v6115 = vsel %vm1746, %v6114, %v1380
        %v6116 = vrot.slane %v1380, 4
        %v6117 = vsel %vm1746, %v1476, %v6116
        %v6119 = vunpack.c.l.s4 1983009808
        %v6120 = vunpack.c.0.s8 %v6119
        %v6121 = vperm.slane %v6115, %v6120
        %v6123 = vunpack.c.l.s4 1983009808
        %v6124 = vunpack.c.0.s8 %v6123
        %v6125 = vperm.slane %v6117, %v6124
        %v6126 = vrot.slane %v1524, 4
        %v6127 = vsel %vm1746, %v6126, %v1428
        %v6128 = vrot.slane %v1428, 4
        %v6129 = vsel %vm1746, %v1524, %v6128
        %v6131 = vunpack.c.l.s4 1983009808
        %v6132 = vunpack.c.0.s8 %v6131
        %v6133 = vperm.slane %v6127, %v6132
        %v6135 = vunpack.c.l.s4 1983009808
        %v6136 = vunpack.c.0.s8 %v6135
        %v6137 = vperm.slane %v6129, %v6136
        %v6138 = vrot.slane %v1668, 4
        %v6139 = vsel %vm1746, %v6138, %v1572
        %v6140 = vrot.slane %v1572, 4
        %v6141 = vsel %vm1746, %v1668, %v6140
        %v6143 = vunpack.c.l.s4 1983009808
        %v6144 = vunpack.c.0.s8 %v6143
        %v6145 = vperm.slane %v6139, %v6144
        %v6147 = vunpack.c.l.s4 1983009808
        %v6148 = vunpack.c.0.s8 %v6147
        %v6149 = vperm.slane %v6141, %v6148
        %v6150 = vrot.slane %v1716, 4
        %v6151 = vsel %vm1746, %v6150, %v1620
        %v6152 = vrot.slane %v1620, 4
        %v6153 = vsel %vm1746, %v1716, %v6152
        %v6155 = vunpack.c.l.s4 1983009808
        %v6156 = vunpack.c.0.s8 %v6155
        %v6157 = vperm.slane %v6151, %v6156
        %v6159 = vunpack.c.l.s4 1983009808
        %v6160 = vunpack.c.0.s8 %v6159
        %v6161 = vperm.slane %v6153, %v6160
        %v6162 = vrot.slane %v6133, 4
        %v6163 = vsel %vm1746, %v6162, %v6121
        %v6164 = vrot.slane %v6121, 4
        %v6165 = vsel %vm1746, %v6133, %v6164
        %v6167 = vunpack.c.l.s4 1934713408
        %v6168 = vunpack.c.0.s8 %v6167
        %v6169 = vperm.slane %v6163, %v6168
        %v6171 = vunpack.c.l.s4 1934713408
        %v6172 = vunpack.c.0.s8 %v6171
        %v6173 = vperm.slane %v6165, %v6172
        %v6174 = vrot.slane %v6137, 4
        %v6175 = vsel %vm1746, %v6174, %v6125
        %v6176 = vrot.slane %v6125, 4
        %v6177 = vsel %vm1746, %v6137, %v6176
        %v6179 = vunpack.c.l.s4 1934713408
        %v6180 = vunpack.c.0.s8 %v6179
        %v6181 = vperm.slane %v6175, %v6180
        %v6183 = vunpack.c.l.s4 1934713408
        %v6184 = vunpack.c.0.s8 %v6183
        %v6185 = vperm.slane %v6177, %v6184
        %v6186 = vrot.slane %v6157, 4
        %v6187 = vsel %vm1746, %v6186, %v6145
        %v6188 = vrot.slane %v6145, 4
        %v6189 = vsel %vm1746, %v6157, %v6188
        %v6191 = vunpack.c.l.s4 1934713408
        %v6192 = vunpack.c.0.s8 %v6191
        %v6193 = vperm.slane %v6187, %v6192
        %v6195 = vunpack.c.l.s4 1934713408
        %v6196 = vunpack.c.0.s8 %v6195
        %v6197 = vperm.slane %v6189, %v6196
        %v6198 = vrot.slane %v6161, 4
        %v6199 = vsel %vm1746, %v6198, %v6149
        %v6200 = vrot.slane %v6149, 4
        %v6201 = vsel %vm1746, %v6161, %v6200
        %v6203 = vunpack.c.l.s4 1934713408
        %v6204 = vunpack.c.0.s8 %v6203
        %v6205 = vperm.slane %v6199, %v6204
        %v6207 = vunpack.c.l.s4 1934713408
        %v6208 = vunpack.c.0.s8 %v6207
        %v6209 = vperm.slane %v6201, %v6208
        %v6210 = vrot.slane %v6193, 4
        %v6211 = vsel %vm1746, %v6210, %v6169
        %v6212 = vrot.slane %v6169, 4
        %v6213 = vsel %vm1746, %v6193, %v6212
        %v6214 = vrot.slane %v6197, 4
        %v6215 = vsel %vm1746, %v6214, %v6173
        %v6216 = vrot.slane %v6173, 4
        %v6217 = vsel %vm1746, %v6197, %v6216
        %v6218 = vrot.slane %v6205, 4
        %v6219 = vsel %vm1746, %v6218, %v6181
        %v6220 = vrot.slane %v6181, 4
        %v6221 = vsel %vm1746, %v6205, %v6220
        %v6222 = vrot.slane %v6209, 4
        %v6223 = vsel %vm1746, %v6222, %v6185
        %v6224 = vrot.slane %v6185, 4
        %v6225 = vsel %vm1746, %v6209, %v6224
        %v6226 = vrot.slane %v326, 4
        %v6227 = vsel %vm1746, %v6226, %v235
        %v6228 = vrot.slane %v235, 4
        %v6229 = vsel %vm1746, %v326, %v6228
        %v6231 = vunpack.c.l.s4 1983009808
        %v6232 = vunpack.c.0.s8 %v6231
        %v6233 = vperm.slane %v6227, %v6232
        %v6235 = vunpack.c.l.s4 1983009808
        %v6236 = vunpack.c.0.s8 %v6235
        %v6237 = vperm.slane %v6229, %v6236
        %v6238 = vrot.slane %v374, 4
        %v6239 = vsel %vm1746, %v6238, %v278
        %v6240 = vrot.slane %v278, 4
        %v6241 = vsel %vm1746, %v374, %v6240
        %v6243 = vunpack.c.l.s4 1983009808
        %v6244 = vunpack.c.0.s8 %v6243
        %v6245 = vperm.slane %v6239, %v6244
        %v6247 = vunpack.c.l.s4 1983009808
        %v6248 = vunpack.c.0.s8 %v6247
        %v6249 = vperm.slane %v6241, %v6248
        %v6250 = vrot.slane %v518, 4
        %v6251 = vsel %vm1746, %v6250, %v422
        %v6252 = vrot.slane %v422, 4
        %v6253 = vsel %vm1746, %v518, %v6252
        %v6255 = vunpack.c.l.s4 1983009808
        %v6256 = vunpack.c.0.s8 %v6255
        %v6257 = vperm.slane %v6251, %v6256
        %v6259 = vunpack.c.l.s4 1983009808
        %v6260 = vunpack.c.0.s8 %v6259
        %v6261 = vperm.slane %v6253, %v6260
        %v6262 = vrot.slane %v566, 4
        %v6263 = vsel %vm1746, %v6262, %v470
        %v6264 = vrot.slane %v470, 4
        %v6265 = vsel %vm1746, %v566, %v6264
        %v6267 = vunpack.c.l.s4 1983009808
        %v6268 = vunpack.c.0.s8 %v6267
        %v6269 = vperm.slane %v6263, %v6268
        %v6271 = vunpack.c.l.s4 1983009808
        %v6272 = vunpack.c.0.s8 %v6271
        %v6273 = vperm.slane %v6265, %v6272
        %v6274 = vrot.slane %v6245, 4
        %v6275 = vsel %vm1746, %v6274, %v6233
        %v6276 = vrot.slane %v6233, 4
        %v6277 = vsel %vm1746, %v6245, %v6276
        %v6279 = vunpack.c.l.s4 1934713408
        %v6280 = vunpack.c.0.s8 %v6279
        %v6281 = vperm.slane %v6275, %v6280
        %v6283 = vunpack.c.l.s4 1934713408
        %v6284 = vunpack.c.0.s8 %v6283
        %v6285 = vperm.slane %v6277, %v6284
        %v6286 = vrot.slane %v6249, 4
        %v6287 = vsel %vm1746, %v6286, %v6237
        %v6288 = vrot.slane %v6237, 4
        %v6289 = vsel %vm1746, %v6249, %v6288
        %v6291 = vunpack.c.l.s4 1934713408
        %v6292 = vunpack.c.0.s8 %v6291
        %v6293 = vperm.slane %v6287, %v6292
        %v6295 = vunpack.c.l.s4 1934713408
        %v6296 = vunpack.c.0.s8 %v6295
        %v6297 = vperm.slane %v6289, %v6296
        %v6298 = vrot.slane %v6269, 4
        %v6299 = vsel %vm1746, %v6298, %v6257
        %v6300 = vrot.slane %v6257, 4
        %v6301 = vsel %vm1746, %v6269, %v6300
        %v6303 = vunpack.c.l.s4 1934713408
        %v6304 = vunpack.c.0.s8 %v6303
        %v6305 = vperm.slane %v6299, %v6304
        %v6307 = vunpack.c.l.s4 1934713408
        %v6308 = vunpack.c.0.s8 %v6307
        %v6309 = vperm.slane %v6301, %v6308
        %v6310 = vrot.slane %v6273, 4
        %v6311 = vsel %vm1746, %v6310, %v6261
        %v6312 = vrot.slane %v6261, 4
        %v6313 = vsel %vm1746, %v6273, %v6312
        %v6315 = vunpack.c.l.s4 1934713408
        %v6316 = vunpack.c.0.s8 %v6315
        %v6317 = vperm.slane %v6311, %v6316
        %v6319 = vunpack.c.l.s4 1934713408
        %v6320 = vunpack.c.0.s8 %v6319
        %v6321 = vperm.slane %v6313, %v6320
        %v6322 = vrot.slane %v6305, 4
        %v6323 = vsel %vm1746, %v6322, %v6281
        %v6324 = vrot.slane %v6281, 4
        %v6325 = vsel %vm1746, %v6305, %v6324
        %v6326 = vrot.slane %v6309, 4
        %v6327 = vsel %vm1746, %v6326, %v6285
        %v6328 = vrot.slane %v6285, 4
        %v6329 = vsel %vm1746, %v6309, %v6328
        %v6330 = vrot.slane %v6317, 4
        %v6331 = vsel %vm1746, %v6330, %v6293
        %v6332 = vrot.slane %v6293, 4
        %v6333 = vsel %vm1746, %v6317, %v6332
        %v6334 = vrot.slane %v6321, 4
        %v6335 = vsel %vm1746, %v6334, %v6297
        %v6336 = vrot.slane %v6297, 4
        %v6337 = vsel %vm1746, %v6321, %v6336
        %v6338 = vrot.slane %v710, 4
        %v6339 = vsel %vm1746, %v6338, %v614
        %v6340 = vrot.slane %v614, 4
        %v6341 = vsel %vm1746, %v710, %v6340
        %v6343 = vunpack.c.l.s4 1983009808
        %v6344 = vunpack.c.0.s8 %v6343
        %v6345 = vperm.slane %v6339, %v6344
        %v6347 = vunpack.c.l.s4 1983009808
        %v6348 = vunpack.c.0.s8 %v6347
        %v6349 = vperm.slane %v6341, %v6348
        %v6350 = vrot.slane %v758, 4
        %v6351 = vsel %vm1746, %v6350, %v662
        %v6352 = vrot.slane %v662, 4
        %v6353 = vsel %vm1746, %v758, %v6352
        %v6355 = vunpack.c.l.s4 1983009808
        %v6356 = vunpack.c.0.s8 %v6355
        %v6357 = vperm.slane %v6351, %v6356
        %v6359 = vunpack.c.l.s4 1983009808
        %v6360 = vunpack.c.0.s8 %v6359
        %v6361 = vperm.slane %v6353, %v6360
        %v6362 = vrot.slane %v902, 4
        %v6363 = vsel %vm1746, %v6362, %v806
        %v6364 = vrot.slane %v806, 4
        %v6365 = vsel %vm1746, %v902, %v6364
        %v6367 = vunpack.c.l.s4 1983009808
        %v6368 = vunpack.c.0.s8 %v6367
        %v6369 = vperm.slane %v6363, %v6368
        %v6371 = vunpack.c.l.s4 1983009808
        %v6372 = vunpack.c.0.s8 %v6371
        %v6373 = vperm.slane %v6365, %v6372
        %v6374 = vrot.slane %v950, 4
        %v6375 = vsel %vm1746, %v6374, %v854
        %v6376 = vrot.slane %v854, 4
        %v6377 = vsel %vm1746, %v950, %v6376
        %v6379 = vunpack.c.l.s4 1983009808
        %v6380 = vunpack.c.0.s8 %v6379
        %v6381 = vperm.slane %v6375, %v6380
        %v6383 = vunpack.c.l.s4 1983009808
        %v6384 = vunpack.c.0.s8 %v6383
        %v6385 = vperm.slane %v6377, %v6384
        %v6386 = vrot.slane %v6357, 4
        %v6387 = vsel %vm1746, %v6386, %v6345
        %v6388 = vrot.slane %v6345, 4
        %v6389 = vsel %vm1746, %v6357, %v6388
        %v6391 = vunpack.c.l.s4 1934713408
        %v6392 = vunpack.c.0.s8 %v6391
        %v6393 = vperm.slane %v6387, %v6392
        %v6395 = vunpack.c.l.s4 1934713408
        %v6396 = vunpack.c.0.s8 %v6395
        %v6397 = vperm.slane %v6389, %v6396
        %v6398 = vrot.slane %v6361, 4
        %v6399 = vsel %vm1746, %v6398, %v6349
        %v6400 = vrot.slane %v6349, 4
        %v6401 = vsel %vm1746, %v6361, %v6400
        %v6403 = vunpack.c.l.s4 1934713408
        %v6404 = vunpack.c.0.s8 %v6403
        %v6405 = vperm.slane %v6399, %v6404
        %v6407 = vunpack.c.l.s4 1934713408
        %v6408 = vunpack.c.0.s8 %v6407
        %v6409 = vperm.slane %v6401, %v6408
        %v6410 = vrot.slane %v6381, 4
        %v6411 = vsel %vm1746, %v6410, %v6369
        %v6412 = vrot.slane %v6369, 4
        %v6413 = vsel %vm1746, %v6381, %v6412
        %v6415 = vunpack.c.l.s4 1934713408
        %v6416 = vunpack.c.0.s8 %v6415
        %v6417 = vperm.slane %v6411, %v6416
        %v6419 = vunpack.c.l.s4 1934713408
        %v6420 = vunpack.c.0.s8 %v6419
        %v6421 = vperm.slane %v6413, %v6420
        %v6422 = vrot.slane %v6385, 4
        %v6423 = vsel %vm1746, %v6422, %v6373
        %v6424 = vrot.slane %v6373, 4
        %v6425 = vsel %vm1746, %v6385, %v6424
        %v6427 = vunpack.c.l.s4 1934713408
        %v6428 = vunpack.c.0.s8 %v6427
        %v6429 = vperm.slane %v6423, %v6428
        %v6431 = vunpack.c.l.s4 1934713408
        %v6432 = vunpack.c.0.s8 %v6431
        %v6433 = vperm.slane %v6425, %v6432
        %v6434 = vrot.slane %v6417, 4
        %v6435 = vsel %vm1746, %v6434, %v6393
        %v6436 = vrot.slane %v6393, 4
        %v6437 = vsel %vm1746, %v6417, %v6436
        %v6438 = vrot.slane %v6421, 4
        %v6439 = vsel %vm1746, %v6438, %v6397
        %v6440 = vrot.slane %v6397, 4
        %v6441 = vsel %vm1746, %v6421, %v6440
        %v6442 = vrot.slane %v6429, 4
        %v6443 = vsel %vm1746, %v6442, %v6405
        %v6444 = vrot.slane %v6405, 4
        %v6445 = vsel %vm1746, %v6429, %v6444
        %v6446 = vrot.slane %v6433, 4
        %v6447 = vsel %vm1746, %v6446, %v6409
        %v6448 = vrot.slane %v6409, 4
        %v6449 = vsel %vm1746, %v6433, %v6448
        %v6450 = vrot.slane %v1094, 4
        %v6451 = vsel %vm1746, %v6450, %v998
        %v6452 = vrot.slane %v998, 4
        %v6453 = vsel %vm1746, %v1094, %v6452
        %v6455 = vunpack.c.l.s4 1983009808
        %v6456 = vunpack.c.0.s8 %v6455
        %v6457 = vperm.slane %v6451, %v6456
        %v6459 = vunpack.c.l.s4 1983009808
        %v6460 = vunpack.c.0.s8 %v6459
        %v6461 = vperm.slane %v6453, %v6460
        %v6462 = vrot.slane %v1142, 4
        %v6463 = vsel %vm1746, %v6462, %v1046
        %v6464 = vrot.slane %v1046, 4
        %v6465 = vsel %vm1746, %v1142, %v6464
        %v6467 = vunpack.c.l.s4 1983009808
        %v6468 = vunpack.c.0.s8 %v6467
        %v6469 = vperm.slane %v6463, %v6468
        %v6471 = vunpack.c.l.s4 1983009808
        %v6472 = vunpack.c.0.s8 %v6471
        %v6473 = vperm.slane %v6465, %v6472
        %v6474 = vrot.slane %v1286, 4
        %v6475 = vsel %vm1746, %v6474, %v1190
        %v6476 = vrot.slane %v1190, 4
        %v6477 = vsel %vm1746, %v1286, %v6476
        %v6479 = vunpack.c.l.s4 1983009808
        %v6480 = vunpack.c.0.s8 %v6479
        %v6481 = vperm.slane %v6475, %v6480
        %v6483 = vunpack.c.l.s4 1983009808
        %v6484 = vunpack.c.0.s8 %v6483
        %v6485 = vperm.slane %v6477, %v6484
        %v6486 = vrot.slane %v1334, 4
        %v6487 = vsel %vm1746, %v6486, %v1238
        %v6488 = vrot.slane %v1238, 4
        %v6489 = vsel %vm1746, %v1334, %v6488
        %v6491 = vunpack.c.l.s4 1983009808
        %v6492 = vunpack.c.0.s8 %v6491
        %v6493 = vperm.slane %v6487, %v6492
        %v6495 = vunpack.c.l.s4 1983009808
        %v6496 = vunpack.c.0.s8 %v6495
        %v6497 = vperm.slane %v6489, %v6496
        %v6498 = vrot.slane %v6469, 4
        %v6499 = vsel %vm1746, %v6498, %v6457
        %v6500 = vrot.slane %v6457, 4
        %v6501 = vsel %vm1746, %v6469, %v6500
        %v6503 = vunpack.c.l.s4 1934713408
        %v6504 = vunpack.c.0.s8 %v6503
        %v6505 = vperm.slane %v6499, %v6504
        %v6507 = vunpack.c.l.s4 1934713408
        %v6508 = vunpack.c.0.s8 %v6507
        %v6509 = vperm.slane %v6501, %v6508
        %v6510 = vrot.slane %v6473, 4
        %v6511 = vsel %vm1746, %v6510, %v6461
        %v6512 = vrot.slane %v6461, 4
        %v6513 = vsel %vm1746, %v6473, %v6512
        %v6515 = vunpack.c.l.s4 1934713408
        %v6516 = vunpack.c.0.s8 %v6515
        %v6517 = vperm.slane %v6511, %v6516
        %v6519 = vunpack.c.l.s4 1934713408
        %v6520 = vunpack.c.0.s8 %v6519
        %v6521 = vperm.slane %v6513, %v6520
        %v6522 = vrot.slane %v6493, 4
        %v6523 = vsel %vm1746, %v6522, %v6481
        %v6524 = vrot.slane %v6481, 4
        %v6525 = vsel %vm1746, %v6493, %v6524
        %v6527 = vunpack.c.l.s4 1934713408
        %v6528 = vunpack.c.0.s8 %v6527
        %v6529 = vperm.slane %v6523, %v6528
        %v6531 = vunpack.c.l.s4 1934713408
        %v6532 = vunpack.c.0.s8 %v6531
        %v6533 = vperm.slane %v6525, %v6532
        %v6534 = vrot.slane %v6497, 4
        %v6535 = vsel %vm1746, %v6534, %v6485
        %v6536 = vrot.slane %v6485, 4
        %v6537 = vsel %vm1746, %v6497, %v6536
        %v6539 = vunpack.c.l.s4 1934713408
        %v6540 = vunpack.c.0.s8 %v6539
        %v6541 = vperm.slane %v6535, %v6540
        %v6543 = vunpack.c.l.s4 1934713408
        %v6544 = vunpack.c.0.s8 %v6543
        %v6545 = vperm.slane %v6537, %v6544
        %v6546 = vrot.slane %v6529, 4
        %v6547 = vsel %vm1746, %v6546, %v6505
        %v6548 = vrot.slane %v6505, 4
        %v6549 = vsel %vm1746, %v6529, %v6548
        %v6550 = vrot.slane %v6533, 4
        %v6551 = vsel %vm1746, %v6550, %v6509
        %v6552 = vrot.slane %v6509, 4
        %v6553 = vsel %vm1746, %v6533, %v6552
        %v6554 = vrot.slane %v6541, 4
        %v6555 = vsel %vm1746, %v6554, %v6517
        %v6556 = vrot.slane %v6517, 4
        %v6557 = vsel %vm1746, %v6541, %v6556
        %v6558 = vrot.slane %v6545, 4
        %v6559 = vsel %vm1746, %v6558, %v6521
        %v6560 = vrot.slane %v6521, 4
        %v6561 = vsel %vm1746, %v6545, %v6560
        %v6562 = vrot.slane %v1478, 4
        %v6563 = vsel %vm1746, %v6562, %v1382
        %v6564 = vrot.slane %v1382, 4
        %v6565 = vsel %vm1746, %v1478, %v6564
        %v6567 = vunpack.c.l.s4 1983009808
        %v6568 = vunpack.c.0.s8 %v6567
        %v6569 = vperm.slane %v6563, %v6568
        %v6571 = vunpack.c.l.s4 1983009808
        %v6572 = vunpack.c.0.s8 %v6571
        %v6573 = vperm.slane %v6565, %v6572
        %v6574 = vrot.slane %v1526, 4
        %v6575 = vsel %vm1746, %v6574, %v1430
        %v6576 = vrot.slane %v1430, 4
        %v6577 = vsel %vm1746, %v1526, %v6576
        %v6579 = vunpack.c.l.s4 1983009808
        %v6580 = vunpack.c.0.s8 %v6579
        %v6581 = vperm.slane %v6575, %v6580
        %v6583 = vunpack.c.l.s4 1983009808
        %v6584 = vunpack.c.0.s8 %v6583
        %v6585 = vperm.slane %v6577, %v6584
        %v6586 = vrot.slane %v1670, 4
        %v6587 = vsel %vm1746, %v6586, %v1574
        %v6588 = vrot.slane %v1574, 4
        %v6589 = vsel %vm1746, %v1670, %v6588
        %v6591 = vunpack.c.l.s4 1983009808
        %v6592 = vunpack.c.0.s8 %v6591
        %v6593 = vperm.slane %v6587, %v6592
        %v6595 = vunpack.c.l.s4 1983009808
        %v6596 = vunpack.c.0.s8 %v6595
        %v6597 = vperm.slane %v6589, %v6596
        %v6598 = vrot.slane %v1718, 4
        %v6599 = vsel %vm1746, %v6598, %v1622
        %v6600 = vrot.slane %v1622, 4
        %v6601 = vsel %vm1746, %v1718, %v6600
        %v6603 = vunpack.c.l.s4 1983009808
        %v6604 = vunpack.c.0.s8 %v6603
        %v6605 = vperm.slane %v6599, %v6604
        %v6607 = vunpack.c.l.s4 1983009808
        %v6608 = vunpack.c.0.s8 %v6607
        %v6609 = vperm.slane %v6601, %v6608
        %v6610 = vrot.slane %v6581, 4
        %v6611 = vsel %vm1746, %v6610, %v6569
        %v6612 = vrot.slane %v6569, 4
        %v6613 = vsel %vm1746, %v6581, %v6612
        %v6615 = vunpack.c.l.s4 1934713408
        %v6616 = vunpack.c.0.s8 %v6615
        %v6617 = vperm.slane %v6611, %v6616
        %v6619 = vunpack.c.l.s4 1934713408
        %v6620 = vunpack.c.0.s8 %v6619
        %v6621 = vperm.slane %v6613, %v6620
        %v6622 = vrot.slane %v6585, 4
        %v6623 = vsel %vm1746, %v6622, %v6573
        %v6624 = vrot.slane %v6573, 4
        %v6625 = vsel %vm1746, %v6585, %v6624
        %v6627 = vunpack.c.l.s4 1934713408
        %v6628 = vunpack.c.0.s8 %v6627
        %v6629 = vperm.slane %v6623, %v6628
        %v6631 = vunpack.c.l.s4 1934713408
        %v6632 = vunpack.c.0.s8 %v6631
        %v6633 = vperm.slane %v6625, %v6632
        %v6634 = vrot.slane %v6605, 4
        %v6635 = vsel %vm1746, %v6634, %v6593
        %v6636 = vrot.slane %v6593, 4
        %v6637 = vsel %vm1746, %v6605, %v6636
        %v6639 = vunpack.c.l.s4 1934713408
        %v6640 = vunpack.c.0.s8 %v6639
        %v6641 = vperm.slane %v6635, %v6640
        %v6643 = vunpack.c.l.s4 1934713408
        %v6644 = vunpack.c.0.s8 %v6643
        %v6645 = vperm.slane %v6637, %v6644
        %v6646 = vrot.slane %v6609, 4
        %v6647 = vsel %vm1746, %v6646, %v6597
        %v6648 = vrot.slane %v6597, 4
        %v6649 = vsel %vm1746, %v6609, %v6648
        %v6651 = vunpack.c.l.s4 1934713408
        %v6652 = vunpack.c.0.s8 %v6651
        %v6653 = vperm.slane %v6647, %v6652
        %v6655 = vunpack.c.l.s4 1934713408
        %v6656 = vunpack.c.0.s8 %v6655
        %v6657 = vperm.slane %v6649, %v6656
        %v6658 = vrot.slane %v6641, 4
        %v6659 = vsel %vm1746, %v6658, %v6617
        %v6660 = vrot.slane %v6617, 4
        %v6661 = vsel %vm1746, %v6641, %v6660
        %v6662 = vrot.slane %v6645, 4
        %v6663 = vsel %vm1746, %v6662, %v6621
        %v6664 = vrot.slane %v6621, 4
        %v6665 = vsel %vm1746, %v6645, %v6664
        %v6666 = vrot.slane %v6653, 4
        %v6667 = vsel %vm1746, %v6666, %v6629
        %v6668 = vrot.slane %v6629, 4
        %v6669 = vsel %vm1746, %v6653, %v6668
        %v6670 = vrot.slane %v6657, 4
        %v6671 = vsel %vm1746, %v6670, %v6633
        %v6672 = vrot.slane %v6633, 4
        %v6673 = vsel %vm1746, %v6657, %v6672
        %v6674 = vrot.slane %v328, 4
        %v6675 = vsel %vm1746, %v6674, %v236
        %v6676 = vrot.slane %v236, 4
        %v6677 = vsel %vm1746, %v328, %v6676
        %v6679 = vunpack.c.l.s4 1983009808
        %v6680 = vunpack.c.0.s8 %v6679
        %v6681 = vperm.slane %v6675, %v6680
        %v6683 = vunpack.c.l.s4 1983009808
        %v6684 = vunpack.c.0.s8 %v6683
        %v6685 = vperm.slane %v6677, %v6684
        %v6686 = vrot.slane %v376, 4
        %v6687 = vsel %vm1746, %v6686, %v280
        %v6688 = vrot.slane %v280, 4
        %v6689 = vsel %vm1746, %v376, %v6688
        %v6691 = vunpack.c.l.s4 1983009808
        %v6692 = vunpack.c.0.s8 %v6691
        %v6693 = vperm.slane %v6687, %v6692
        %v6695 = vunpack.c.l.s4 1983009808
        %v6696 = vunpack.c.0.s8 %v6695
        %v6697 = vperm.slane %v6689, %v6696
        %v6698 = vrot.slane %v520, 4
        %v6699 = vsel %vm1746, %v6698, %v424
        %v6700 = vrot.slane %v424, 4
        %v6701 = vsel %vm1746, %v520, %v6700
        %v6703 = vunpack.c.l.s4 1983009808
        %v6704 = vunpack.c.0.s8 %v6703
        %v6705 = vperm.slane %v6699, %v6704
        %v6707 = vunpack.c.l.s4 1983009808
        %v6708 = vunpack.c.0.s8 %v6707
        %v6709 = vperm.slane %v6701, %v6708
        %v6710 = vrot.slane %v568, 4
        %v6711 = vsel %vm1746, %v6710, %v472
        %v6712 = vrot.slane %v472, 4
        %v6713 = vsel %vm1746, %v568, %v6712
        %v6715 = vunpack.c.l.s4 1983009808
        %v6716 = vunpack.c.0.s8 %v6715
        %v6717 = vperm.slane %v6711, %v6716
        %v6719 = vunpack.c.l.s4 1983009808
        %v6720 = vunpack.c.0.s8 %v6719
        %v6721 = vperm.slane %v6713, %v6720
        %v6722 = vrot.slane %v6693, 4
        %v6723 = vsel %vm1746, %v6722, %v6681
        %v6724 = vrot.slane %v6681, 4
        %v6725 = vsel %vm1746, %v6693, %v6724
        %v6727 = vunpack.c.l.s4 1934713408
        %v6728 = vunpack.c.0.s8 %v6727
        %v6729 = vperm.slane %v6723, %v6728
        %v6731 = vunpack.c.l.s4 1934713408
        %v6732 = vunpack.c.0.s8 %v6731
        %v6733 = vperm.slane %v6725, %v6732
        %v6734 = vrot.slane %v6697, 4
        %v6735 = vsel %vm1746, %v6734, %v6685
        %v6736 = vrot.slane %v6685, 4
        %v6737 = vsel %vm1746, %v6697, %v6736
        %v6739 = vunpack.c.l.s4 1934713408
        %v6740 = vunpack.c.0.s8 %v6739
        %v6741 = vperm.slane %v6735, %v6740
        %v6743 = vunpack.c.l.s4 1934713408
        %v6744 = vunpack.c.0.s8 %v6743
        %v6745 = vperm.slane %v6737, %v6744
        %v6746 = vrot.slane %v6717, 4
        %v6747 = vsel %vm1746, %v6746, %v6705
        %v6748 = vrot.slane %v6705, 4
        %v6749 = vsel %vm1746, %v6717, %v6748
        %v6751 = vunpack.c.l.s4 1934713408
        %v6752 = vunpack.c.0.s8 %v6751
        %v6753 = vperm.slane %v6747, %v6752
        %v6755 = vunpack.c.l.s4 1934713408
        %v6756 = vunpack.c.0.s8 %v6755
        %v6757 = vperm.slane %v6749, %v6756
        %v6758 = vrot.slane %v6721, 4
        %v6759 = vsel %vm1746, %v6758, %v6709
        %v6760 = vrot.slane %v6709, 4
        %v6761 = vsel %vm1746, %v6721, %v6760
        %v6763 = vunpack.c.l.s4 1934713408
        %v6764 = vunpack.c.0.s8 %v6763
        %v6765 = vperm.slane %v6759, %v6764
        %v6767 = vunpack.c.l.s4 1934713408
        %v6768 = vunpack.c.0.s8 %v6767
        %v6769 = vperm.slane %v6761, %v6768
        %v6770 = vrot.slane %v6753, 4
        %v6771 = vsel %vm1746, %v6770, %v6729
        %v6772 = vrot.slane %v6729, 4
        %v6773 = vsel %vm1746, %v6753, %v6772
        %v6774 = vrot.slane %v6757, 4
        %v6775 = vsel %vm1746, %v6774, %v6733
        %v6776 = vrot.slane %v6733, 4
        %v6777 = vsel %vm1746, %v6757, %v6776
        %v6778 = vrot.slane %v6765, 4
        %v6779 = vsel %vm1746, %v6778, %v6741
        %v6780 = vrot.slane %v6741, 4
        %v6781 = vsel %vm1746, %v6765, %v6780
        %v6782 = vrot.slane %v6769, 4
        %v6783 = vsel %vm1746, %v6782, %v6745
        %v6784 = vrot.slane %v6745, 4
        %v6785 = vsel %vm1746, %v6769, %v6784
        %v6786 = vrot.slane %v712, 4
        %v6787 = vsel %vm1746, %v6786, %v616
        %v6788 = vrot.slane %v616, 4
        %v6789 = vsel %vm1746, %v712, %v6788
        %v6791 = vunpack.c.l.s4 1983009808
        %v6792 = vunpack.c.0.s8 %v6791
        %v6793 = vperm.slane %v6787, %v6792
        %v6795 = vunpack.c.l.s4 1983009808
        %v6796 = vunpack.c.0.s8 %v6795
        %v6797 = vperm.slane %v6789, %v6796
        %v6798 = vrot.slane %v760, 4
        %v6799 = vsel %vm1746, %v6798, %v664
        %v6800 = vrot.slane %v664, 4
        %v6801 = vsel %vm1746, %v760, %v6800
        %v6803 = vunpack.c.l.s4 1983009808
        %v6804 = vunpack.c.0.s8 %v6803
        %v6805 = vperm.slane %v6799, %v6804
        %v6807 = vunpack.c.l.s4 1983009808
        %v6808 = vunpack.c.0.s8 %v6807
        %v6809 = vperm.slane %v6801, %v6808
        %v6810 = vrot.slane %v904, 4
        %v6811 = vsel %vm1746, %v6810, %v808
        %v6812 = vrot.slane %v808, 4
        %v6813 = vsel %vm1746, %v904, %v6812
        %v6815 = vunpack.c.l.s4 1983009808
        %v6816 = vunpack.c.0.s8 %v6815
        %v6817 = vperm.slane %v6811, %v6816
        %v6819 = vunpack.c.l.s4 1983009808
        %v6820 = vunpack.c.0.s8 %v6819
        %v6821 = vperm.slane %v6813, %v6820
        %v6822 = vrot.slane %v952, 4
        %v6823 = vsel %vm1746, %v6822, %v856
        %v6824 = vrot.slane %v856, 4
        %v6825 = vsel %vm1746, %v952, %v6824
        %v6827 = vunpack.c.l.s4 1983009808
        %v6828 = vunpack.c.0.s8 %v6827
        %v6829 = vperm.slane %v6823, %v6828
        %v6831 = vunpack.c.l.s4 1983009808
        %v6832 = vunpack.c.0.s8 %v6831
        %v6833 = vperm.slane %v6825, %v6832
        %v6834 = vrot.slane %v6805, 4
        %v6835 = vsel %vm1746, %v6834, %v6793
        %v6836 = vrot.slane %v6793, 4
        %v6837 = vsel %vm1746, %v6805, %v6836
        %v6839 = vunpack.c.l.s4 1934713408
        %v6840 = vunpack.c.0.s8 %v6839
        %v6841 = vperm.slane %v6835, %v6840
        %v6843 = vunpack.c.l.s4 1934713408
        %v6844 = vunpack.c.0.s8 %v6843
        %v6845 = vperm.slane %v6837, %v6844
        %v6846 = vrot.slane %v6809, 4
        %v6847 = vsel %vm1746, %v6846, %v6797
        %v6848 = vrot.slane %v6797, 4
        %v6849 = vsel %vm1746, %v6809, %v6848
        %v6851 = vunpack.c.l.s4 1934713408
        %v6852 = vunpack.c.0.s8 %v6851
        %v6853 = vperm.slane %v6847, %v6852
        %v6855 = vunpack.c.l.s4 1934713408
        %v6856 = vunpack.c.0.s8 %v6855
        %v6857 = vperm.slane %v6849, %v6856
        %v6858 = vrot.slane %v6829, 4
        %v6859 = vsel %vm1746, %v6858, %v6817
        %v6860 = vrot.slane %v6817, 4
        %v6861 = vsel %vm1746, %v6829, %v6860
        %v6863 = vunpack.c.l.s4 1934713408
        %v6864 = vunpack.c.0.s8 %v6863
        %v6865 = vperm.slane %v6859, %v6864
        %v6867 = vunpack.c.l.s4 1934713408
        %v6868 = vunpack.c.0.s8 %v6867
        %v6869 = vperm.slane %v6861, %v6868
        %v6870 = vrot.slane %v6833, 4
        %v6871 = vsel %vm1746, %v6870, %v6821
        %v6872 = vrot.slane %v6821, 4
        %v6873 = vsel %vm1746, %v6833, %v6872
        %v6875 = vunpack.c.l.s4 1934713408
        %v6876 = vunpack.c.0.s8 %v6875
        %v6877 = vperm.slane %v6871, %v6876
        %v6879 = vunpack.c.l.s4 1934713408
        %v6880 = vunpack.c.0.s8 %v6879
        %v6881 = vperm.slane %v6873, %v6880
        %v6882 = vrot.slane %v6865, 4
        %v6883 = vsel %vm1746, %v6882, %v6841
        %v6884 = vrot.slane %v6841, 4
        %v6885 = vsel %vm1746, %v6865, %v6884
        %v6886 = vrot.slane %v6869, 4
        %v6887 = vsel %vm1746, %v6886, %v6845
        %v6888 = vrot.slane %v6845, 4
        %v6889 = vsel %vm1746, %v6869, %v6888
        %v6890 = vrot.slane %v6877, 4
        %v6891 = vsel %vm1746, %v6890, %v6853
        %v6892 = vrot.slane %v6853, 4
        %v6893 = vsel %vm1746, %v6877, %v6892
        %v6894 = vrot.slane %v6881, 4
        %v6895 = vsel %vm1746, %v6894, %v6857
        %v6896 = vrot.slane %v6857, 4
        %v6897 = vsel %vm1746, %v6881, %v6896
        %v6898 = vrot.slane %v1096, 4
        %v6899 = vsel %vm1746, %v6898, %v1000
        %v6900 = vrot.slane %v1000, 4
        %v6901 = vsel %vm1746, %v1096, %v6900
        %v6903 = vunpack.c.l.s4 1983009808
        %v6904 = vunpack.c.0.s8 %v6903
        %v6905 = vperm.slane %v6899, %v6904
        %v6907 = vunpack.c.l.s4 1983009808
        %v6908 = vunpack.c.0.s8 %v6907
        %v6909 = vperm.slane %v6901, %v6908
        %v6910 = vrot.slane %v1144, 4
        %v6911 = vsel %vm1746, %v6910, %v1048
        %v6912 = vrot.slane %v1048, 4
        %v6913 = vsel %vm1746, %v1144, %v6912
        %v6915 = vunpack.c.l.s4 1983009808
        %v6916 = vunpack.c.0.s8 %v6915
        %v6917 = vperm.slane %v6911, %v6916
        %v6919 = vunpack.c.l.s4 1983009808
        %v6920 = vunpack.c.0.s8 %v6919
        %v6921 = vperm.slane %v6913, %v6920
        %v6922 = vrot.slane %v1288, 4
        %v6923 = vsel %vm1746, %v6922, %v1192
        %v6924 = vrot.slane %v1192, 4
        %v6925 = vsel %vm1746, %v1288, %v6924
        %v6927 = vunpack.c.l.s4 1983009808
        %v6928 = vunpack.c.0.s8 %v6927
        %v6929 = vperm.slane %v6923, %v6928
        %v6931 = vunpack.c.l.s4 1983009808
        %v6932 = vunpack.c.0.s8 %v6931
        %v6933 = vperm.slane %v6925, %v6932
        %v6934 = vrot.slane %v1336, 4
        %v6935 = vsel %vm1746, %v6934, %v1240
        %v6936 = vrot.slane %v1240, 4
        %v6937 = vsel %vm1746, %v1336, %v6936
        %v6939 = vunpack.c.l.s4 1983009808
        %v6940 = vunpack.c.0.s8 %v6939
        %v6941 = vperm.slane %v6935, %v6940
        %v6943 = vunpack.c.l.s4 1983009808
        %v6944 = vunpack.c.0.s8 %v6943
        %v6945 = vperm.slane %v6937, %v6944
        %v6946 = vrot.slane %v6917, 4
        %v6947 = vsel %vm1746, %v6946, %v6905
        %v6948 = vrot.slane %v6905, 4
        %v6949 = vsel %vm1746, %v6917, %v6948
        %v6951 = vunpack.c.l.s4 1934713408
        %v6952 = vunpack.c.0.s8 %v6951
        %v6953 = vperm.slane %v6947, %v6952
        %v6955 = vunpack.c.l.s4 1934713408
        %v6956 = vunpack.c.0.s8 %v6955
        %v6957 = vperm.slane %v6949, %v6956
        %v6958 = vrot.slane %v6921, 4
        %v6959 = vsel %vm1746, %v6958, %v6909
        %v6960 = vrot.slane %v6909, 4
        %v6961 = vsel %vm1746, %v6921, %v6960
        %v6963 = vunpack.c.l.s4 1934713408
        %v6964 = vunpack.c.0.s8 %v6963
        %v6965 = vperm.slane %v6959, %v6964
        %v6967 = vunpack.c.l.s4 1934713408
        %v6968 = vunpack.c.0.s8 %v6967
        %v6969 = vperm.slane %v6961, %v6968
        %v6970 = vrot.slane %v6941, 4
        %v6971 = vsel %vm1746, %v6970, %v6929
        %v6972 = vrot.slane %v6929, 4
        %v6973 = vsel %vm1746, %v6941, %v6972
        %v6975 = vunpack.c.l.s4 1934713408
        %v6976 = vunpack.c.0.s8 %v6975
        %v6977 = vperm.slane %v6971, %v6976
        %v6979 = vunpack.c.l.s4 1934713408
        %v6980 = vunpack.c.0.s8 %v6979
        %v6981 = vperm.slane %v6973, %v6980
        %v6982 = vrot.slane %v6945, 4
        %v6983 = vsel %vm1746, %v6982, %v6933
        %v6984 = vrot.slane %v6933, 4
        %v6985 = vsel %vm1746, %v6945, %v6984
        %v6987 = vunpack.c.l.s4 1934713408
        %v6988 = vunpack.c.0.s8 %v6987
        %v6989 = vperm.slane %v6983, %v6988
        %v6991 = vunpack.c.l.s4 1934713408
        %v6992 = vunpack.c.0.s8 %v6991
        %v6993 = vperm.slane %v6985, %v6992
        %v6994 = vrot.slane %v6977, 4
        %v6995 = vsel %vm1746, %v6994, %v6953
        %v6996 = vrot.slane %v6953, 4
        %v6997 = vsel %vm1746, %v6977, %v6996
        %v6998 = vrot.slane %v6981, 4
        %v6999 = vsel %vm1746, %v6998, %v6957
        %v7000 = vrot.slane %v6957, 4
        %v7001 = vsel %vm1746, %v6981, %v7000
        %v7002 = vrot.slane %v6989, 4
        %v7003 = vsel %vm1746, %v7002, %v6965
        %v7004 = vrot.slane %v6965, 4
        %v7005 = vsel %vm1746, %v6989, %v7004
        %v7006 = vrot.slane %v6993, 4
        %v7007 = vsel %vm1746, %v7006, %v6969
        %v7008 = vrot.slane %v6969, 4
        %v7009 = vsel %vm1746, %v6993, %v7008
        %v7010 = vrot.slane %v1480, 4
        %v7011 = vsel %vm1746, %v7010, %v1384
        %v7012 = vrot.slane %v1384, 4
        %v7013 = vsel %vm1746, %v1480, %v7012
        %v7015 = vunpack.c.l.s4 1983009808
        %v7016 = vunpack.c.0.s8 %v7015
        %v7017 = vperm.slane %v7011, %v7016
        %v7019 = vunpack.c.l.s4 1983009808
        %v7020 = vunpack.c.0.s8 %v7019
        %v7021 = vperm.slane %v7013, %v7020
        %v7022 = vrot.slane %v1528, 4
        %v7023 = vsel %vm1746, %v7022, %v1432
        %v7024 = vrot.slane %v1432, 4
        %v7025 = vsel %vm1746, %v1528, %v7024
        %v7027 = vunpack.c.l.s4 1983009808
        %v7028 = vunpack.c.0.s8 %v7027
        %v7029 = vperm.slane %v7023, %v7028
        %v7031 = vunpack.c.l.s4 1983009808
        %v7032 = vunpack.c.0.s8 %v7031
        %v7033 = vperm.slane %v7025, %v7032
        %v7034 = vrot.slane %v1672, 4
        %v7035 = vsel %vm1746, %v7034, %v1576
        %v7036 = vrot.slane %v1576, 4
        %v7037 = vsel %vm1746, %v1672, %v7036
        %v7039 = vunpack.c.l.s4 1983009808
        %v7040 = vunpack.c.0.s8 %v7039
        %v7041 = vperm.slane %v7035, %v7040
        %v7043 = vunpack.c.l.s4 1983009808
        %v7044 = vunpack.c.0.s8 %v7043
        %v7045 = vperm.slane %v7037, %v7044
        %v7046 = vrot.slane %v1720, 4
        %v7047 = vsel %vm1746, %v7046, %v1624
        %v7048 = vrot.slane %v1624, 4
        %v7049 = vsel %vm1746, %v1720, %v7048
        %v7051 = vunpack.c.l.s4 1983009808
        %v7052 = vunpack.c.0.s8 %v7051
        %v7053 = vperm.slane %v7047, %v7052
        %v7055 = vunpack.c.l.s4 1983009808
        %v7056 = vunpack.c.0.s8 %v7055
        %v7057 = vperm.slane %v7049, %v7056
        %v7058 = vrot.slane %v7029, 4
        %v7059 = vsel %vm1746, %v7058, %v7017
        %v7060 = vrot.slane %v7017, 4
        %v7061 = vsel %vm1746, %v7029, %v7060
        %v7063 = vunpack.c.l.s4 1934713408
        %v7064 = vunpack.c.0.s8 %v7063
        %v7065 = vperm.slane %v7059, %v7064
        %v7067 = vunpack.c.l.s4 1934713408
        %v7068 = vunpack.c.0.s8 %v7067
        %v7069 = vperm.slane %v7061, %v7068
        %v7070 = vrot.slane %v7033, 4
        %v7071 = vsel %vm1746, %v7070, %v7021
        %v7072 = vrot.slane %v7021, 4
        %v7073 = vsel %vm1746, %v7033, %v7072
        %v7075 = vunpack.c.l.s4 1934713408
        %v7076 = vunpack.c.0.s8 %v7075
        %v7077 = vperm.slane %v7071, %v7076
        %v7079 = vunpack.c.l.s4 1934713408
        %v7080 = vunpack.c.0.s8 %v7079
        %v7081 = vperm.slane %v7073, %v7080
        %v7082 = vrot.slane %v7053, 4
        %v7083 = vsel %vm1746, %v7082, %v7041
        %v7084 = vrot.slane %v7041, 4
        %v7085 = vsel %vm1746, %v7053, %v7084
        %v7087 = vunpack.c.l.s4 1934713408
        %v7088 = vunpack.c.0.s8 %v7087
        %v7089 = vperm.slane %v7083, %v7088
        %v7091 = vunpack.c.l.s4 1934713408
        %v7092 = vunpack.c.0.s8 %v7091
        %v7093 = vperm.slane %v7085, %v7092
        %v7094 = vrot.slane %v7057, 4
        %v7095 = vsel %vm1746, %v7094, %v7045
        %v7096 = vrot.slane %v7045, 4
        %v7097 = vsel %vm1746, %v7057, %v7096
        %v7099 = vunpack.c.l.s4 1934713408
        %v7100 = vunpack.c.0.s8 %v7099
        %v7101 = vperm.slane %v7095, %v7100
        %v7103 = vunpack.c.l.s4 1934713408
        %v7104 = vunpack.c.0.s8 %v7103
        %v7105 = vperm.slane %v7097, %v7104
        %v7106 = vrot.slane %v7089, 4
        %v7107 = vsel %vm1746, %v7106, %v7065
        %v7108 = vrot.slane %v7065, 4
        %v7109 = vsel %vm1746, %v7089, %v7108
        %v7110 = vrot.slane %v7093, 4
        %v7111 = vsel %vm1746, %v7110, %v7069
        %v7112 = vrot.slane %v7069, 4
        %v7113 = vsel %vm1746, %v7093, %v7112
        %v7114 = vrot.slane %v7101, 4
        %v7115 = vsel %vm1746, %v7114, %v7077
        %v7116 = vrot.slane %v7077, 4
        %v7117 = vsel %vm1746, %v7101, %v7116
        %v7118 = vrot.slane %v7105, 4
        %v7119 = vsel %vm1746, %v7118, %v7081
        %v7120 = vrot.slane %v7081, 4
        %v7121 = vsel %vm1746, %v7105, %v7120
        %v7122 = vrot.slane %v330, 4
        %v7123 = vsel %vm1746, %v7122, %v237
        %v7124 = vrot.slane %v237, 4
        %v7125 = vsel %vm1746, %v330, %v7124
        %v7127 = vunpack.c.l.s4 1983009808
        %v7128 = vunpack.c.0.s8 %v7127
        %v7129 = vperm.slane %v7123, %v7128
        %v7131 = vunpack.c.l.s4 1983009808
        %v7132 = vunpack.c.0.s8 %v7131
        %v7133 = vperm.slane %v7125, %v7132
        %v7134 = vrot.slane %v378, 4
        %v7135 = vsel %vm1746, %v7134, %v282
        %v7136 = vrot.slane %v282, 4
        %v7137 = vsel %vm1746, %v378, %v7136
        %v7139 = vunpack.c.l.s4 1983009808
        %v7140 = vunpack.c.0.s8 %v7139
        %v7141 = vperm.slane %v7135, %v7140
        %v7143 = vunpack.c.l.s4 1983009808
        %v7144 = vunpack.c.0.s8 %v7143
        %v7145 = vperm.slane %v7137, %v7144
        %v7146 = vrot.slane %v522, 4
        %v7147 = vsel %vm1746, %v7146, %v426
        %v7148 = vrot.slane %v426, 4
        %v7149 = vsel %vm1746, %v522, %v7148
        %v7151 = vunpack.c.l.s4 1983009808
        %v7152 = vunpack.c.0.s8 %v7151
        %v7153 = vperm.slane %v7147, %v7152
        %v7155 = vunpack.c.l.s4 1983009808
        %v7156 = vunpack.c.0.s8 %v7155
        %v7157 = vperm.slane %v7149, %v7156
        %v7158 = vrot.slane %v570, 4
        %v7159 = vsel %vm1746, %v7158, %v474
        %v7160 = vrot.slane %v474, 4
        %v7161 = vsel %vm1746, %v570, %v7160
        %v7163 = vunpack.c.l.s4 1983009808
        %v7164 = vunpack.c.0.s8 %v7163
        %v7165 = vperm.slane %v7159, %v7164
        %v7167 = vunpack.c.l.s4 1983009808
        %v7168 = vunpack.c.0.s8 %v7167
        %v7169 = vperm.slane %v7161, %v7168
        %v7170 = vrot.slane %v7141, 4
        %v7171 = vsel %vm1746, %v7170, %v7129
        %v7172 = vrot.slane %v7129, 4
        %v7173 = vsel %vm1746, %v7141, %v7172
        %v7175 = vunpack.c.l.s4 1934713408
        %v7176 = vunpack.c.0.s8 %v7175
        %v7177 = vperm.slane %v7171, %v7176
        %v7179 = vunpack.c.l.s4 1934713408
        %v7180 = vunpack.c.0.s8 %v7179
        %v7181 = vperm.slane %v7173, %v7180
        %v7182 = vrot.slane %v7145, 4
        %v7183 = vsel %vm1746, %v7182, %v7133
        %v7184 = vrot.slane %v7133, 4
        %v7185 = vsel %vm1746, %v7145, %v7184
        %v7187 = vunpack.c.l.s4 1934713408
        %v7188 = vunpack.c.0.s8 %v7187
        %v7189 = vperm.slane %v7183, %v7188
        %v7191 = vunpack.c.l.s4 1934713408
        %v7192 = vunpack.c.0.s8 %v7191
        %v7193 = vperm.slane %v7185, %v7192
        %v7194 = vrot.slane %v7165, 4
        %v7195 = vsel %vm1746, %v7194, %v7153
        %v7196 = vrot.slane %v7153, 4
        %v7197 = vsel %vm1746, %v7165, %v7196
        %v7199 = vunpack.c.l.s4 1934713408
        %v7200 = vunpack.c.0.s8 %v7199
        %v7201 = vperm.slane %v7195, %v7200
        %v7203 = vunpack.c.l.s4 1934713408
        %v7204 = vunpack.c.0.s8 %v7203
        %v7205 = vperm.slane %v7197, %v7204
        %v7206 = vrot.slane %v7169, 4
        %v7207 = vsel %vm1746, %v7206, %v7157
        %v7208 = vrot.slane %v7157, 4
        %v7209 = vsel %vm1746, %v7169, %v7208
        %v7211 = vunpack.c.l.s4 1934713408
        %v7212 = vunpack.c.0.s8 %v7211
        %v7213 = vperm.slane %v7207, %v7212
        %v7215 = vunpack.c.l.s4 1934713408
        %v7216 = vunpack.c.0.s8 %v7215
        %v7217 = vperm.slane %v7209, %v7216
        %v7218 = vrot.slane %v7201, 4
        %v7219 = vsel %vm1746, %v7218, %v7177
        %v7220 = vrot.slane %v7177, 4
        %v7221 = vsel %vm1746, %v7201, %v7220
        %v7222 = vrot.slane %v7205, 4
        %v7223 = vsel %vm1746, %v7222, %v7181
        %v7224 = vrot.slane %v7181, 4
        %v7225 = vsel %vm1746, %v7205, %v7224
        %v7226 = vrot.slane %v7213, 4
        %v7227 = vsel %vm1746, %v7226, %v7189
        %v7228 = vrot.slane %v7189, 4
        %v7229 = vsel %vm1746, %v7213, %v7228
        %v7230 = vrot.slane %v7217, 4
        %v7231 = vsel %vm1746, %v7230, %v7193
        %v7232 = vrot.slane %v7193, 4
        %v7233 = vsel %vm1746, %v7217, %v7232
        %v7234 = vrot.slane %v714, 4
        %v7235 = vsel %vm1746, %v7234, %v618
        %v7236 = vrot.slane %v618, 4
        %v7237 = vsel %vm1746, %v714, %v7236
        %v7239 = vunpack.c.l.s4 1983009808
        %v7240 = vunpack.c.0.s8 %v7239
        %v7241 = vperm.slane %v7235, %v7240
        %v7243 = vunpack.c.l.s4 1983009808
        %v7244 = vunpack.c.0.s8 %v7243
        %v7245 = vperm.slane %v7237, %v7244
        %v7246 = vrot.slane %v762, 4
        %v7247 = vsel %vm1746, %v7246, %v666
        %v7248 = vrot.slane %v666, 4
        %v7249 = vsel %vm1746, %v762, %v7248
        %v7251 = vunpack.c.l.s4 1983009808
        %v7252 = vunpack.c.0.s8 %v7251
        %v7253 = vperm.slane %v7247, %v7252
        %v7255 = vunpack.c.l.s4 1983009808
        %v7256 = vunpack.c.0.s8 %v7255
        %v7257 = vperm.slane %v7249, %v7256
        %v7258 = vrot.slane %v906, 4
        %v7259 = vsel %vm1746, %v7258, %v810
        %v7260 = vrot.slane %v810, 4
        %v7261 = vsel %vm1746, %v906, %v7260
        %v7263 = vunpack.c.l.s4 1983009808
        %v7264 = vunpack.c.0.s8 %v7263
        %v7265 = vperm.slane %v7259, %v7264
        %v7267 = vunpack.c.l.s4 1983009808
        %v7268 = vunpack.c.0.s8 %v7267
        %v7269 = vperm.slane %v7261, %v7268
        %v7270 = vrot.slane %v954, 4
        %v7271 = vsel %vm1746, %v7270, %v858
        %v7272 = vrot.slane %v858, 4
        %v7273 = vsel %vm1746, %v954, %v7272
        %v7275 = vunpack.c.l.s4 1983009808
        %v7276 = vunpack.c.0.s8 %v7275
        %v7277 = vperm.slane %v7271, %v7276
        %v7279 = vunpack.c.l.s4 1983009808
        %v7280 = vunpack.c.0.s8 %v7279
        %v7281 = vperm.slane %v7273, %v7280
        %v7282 = vrot.slane %v7253, 4
        %v7283 = vsel %vm1746, %v7282, %v7241
        %v7284 = vrot.slane %v7241, 4
        %v7285 = vsel %vm1746, %v7253, %v7284
        %v7287 = vunpack.c.l.s4 1934713408
        %v7288 = vunpack.c.0.s8 %v7287
        %v7289 = vperm.slane %v7283, %v7288
        %v7291 = vunpack.c.l.s4 1934713408
        %v7292 = vunpack.c.0.s8 %v7291
        %v7293 = vperm.slane %v7285, %v7292
        %v7294 = vrot.slane %v7257, 4
        %v7295 = vsel %vm1746, %v7294, %v7245
        %v7296 = vrot.slane %v7245, 4
        %v7297 = vsel %vm1746, %v7257, %v7296
        %v7299 = vunpack.c.l.s4 1934713408
        %v7300 = vunpack.c.0.s8 %v7299
        %v7301 = vperm.slane %v7295, %v7300
        %v7303 = vunpack.c.l.s4 1934713408
        %v7304 = vunpack.c.0.s8 %v7303
        %v7305 = vperm.slane %v7297, %v7304
        %v7306 = vrot.slane %v7277, 4
        %v7307 = vsel %vm1746, %v7306, %v7265
        %v7308 = vrot.slane %v7265, 4
        %v7309 = vsel %vm1746, %v7277, %v7308
        %v7311 = vunpack.c.l.s4 1934713408
        %v7312 = vunpack.c.0.s8 %v7311
        %v7313 = vperm.slane %v7307, %v7312
        %v7315 = vunpack.c.l.s4 1934713408
        %v7316 = vunpack.c.0.s8 %v7315
        %v7317 = vperm.slane %v7309, %v7316
        %v7318 = vrot.slane %v7281, 4
        %v7319 = vsel %vm1746, %v7318, %v7269
        %v7320 = vrot.slane %v7269, 4
        %v7321 = vsel %vm1746, %v7281, %v7320
        %v7323 = vunpack.c.l.s4 1934713408
        %v7324 = vunpack.c.0.s8 %v7323
        %v7325 = vperm.slane %v7319, %v7324
        %v7327 = vunpack.c.l.s4 1934713408
        %v7328 = vunpack.c.0.s8 %v7327
        %v7329 = vperm.slane %v7321, %v7328
        %v7330 = vrot.slane %v7313, 4
        %v7331 = vsel %vm1746, %v7330, %v7289
        %v7332 = vrot.slane %v7289, 4
        %v7333 = vsel %vm1746, %v7313, %v7332
        %v7334 = vrot.slane %v7317, 4
        %v7335 = vsel %vm1746, %v7334, %v7293
        %v7336 = vrot.slane %v7293, 4
        %v7337 = vsel %vm1746, %v7317, %v7336
        %v7338 = vrot.slane %v7325, 4
        %v7339 = vsel %vm1746, %v7338, %v7301
        %v7340 = vrot.slane %v7301, 4
        %v7341 = vsel %vm1746, %v7325, %v7340
        %v7342 = vrot.slane %v7329, 4
        %v7343 = vsel %vm1746, %v7342, %v7305
        %v7344 = vrot.slane %v7305, 4
        %v7345 = vsel %vm1746, %v7329, %v7344
        %v7346 = vrot.slane %v1098, 4
        %v7347 = vsel %vm1746, %v7346, %v1002
        %v7348 = vrot.slane %v1002, 4
        %v7349 = vsel %vm1746, %v1098, %v7348
        %v7351 = vunpack.c.l.s4 1983009808
        %v7352 = vunpack.c.0.s8 %v7351
        %v7353 = vperm.slane %v7347, %v7352
        %v7355 = vunpack.c.l.s4 1983009808
        %v7356 = vunpack.c.0.s8 %v7355
        %v7357 = vperm.slane %v7349, %v7356
        %v7358 = vrot.slane %v1146, 4
        %v7359 = vsel %vm1746, %v7358, %v1050
        %v7360 = vrot.slane %v1050, 4
        %v7361 = vsel %vm1746, %v1146, %v7360
        %v7363 = vunpack.c.l.s4 1983009808
        %v7364 = vunpack.c.0.s8 %v7363
        %v7365 = vperm.slane %v7359, %v7364
        %v7367 = vunpack.c.l.s4 1983009808
        %v7368 = vunpack.c.0.s8 %v7367
        %v7369 = vperm.slane %v7361, %v7368
        %v7370 = vrot.slane %v1290, 4
        %v7371 = vsel %vm1746, %v7370, %v1194
        %v7372 = vrot.slane %v1194, 4
        %v7373 = vsel %vm1746, %v1290, %v7372
        %v7375 = vunpack.c.l.s4 1983009808
        %v7376 = vunpack.c.0.s8 %v7375
        %v7377 = vperm.slane %v7371, %v7376
        %v7379 = vunpack.c.l.s4 1983009808
        %v7380 = vunpack.c.0.s8 %v7379
        %v7381 = vperm.slane %v7373, %v7380
        %v7382 = vrot.slane %v1338, 4
        %v7383 = vsel %vm1746, %v7382, %v1242
        %v7384 = vrot.slane %v1242, 4
        %v7385 = vsel %vm1746, %v1338, %v7384
        %v7387 = vunpack.c.l.s4 1983009808
        %v7388 = vunpack.c.0.s8 %v7387
        %v7389 = vperm.slane %v7383, %v7388
        %v7391 = vunpack.c.l.s4 1983009808
        %v7392 = vunpack.c.0.s8 %v7391
        %v7393 = vperm.slane %v7385, %v7392
        %v7394 = vrot.slane %v7365, 4
        %v7395 = vsel %vm1746, %v7394, %v7353
        %v7396 = vrot.slane %v7353, 4
        %v7397 = vsel %vm1746, %v7365, %v7396
        %v7399 = vunpack.c.l.s4 1934713408
        %v7400 = vunpack.c.0.s8 %v7399
        %v7401 = vperm.slane %v7395, %v7400
        %v7403 = vunpack.c.l.s4 1934713408
        %v7404 = vunpack.c.0.s8 %v7403
        %v7405 = vperm.slane %v7397, %v7404
        %v7406 = vrot.slane %v7369, 4
        %v7407 = vsel %vm1746, %v7406, %v7357
        %v7408 = vrot.slane %v7357, 4
        %v7409 = vsel %vm1746, %v7369, %v7408
        %v7411 = vunpack.c.l.s4 1934713408
        %v7412 = vunpack.c.0.s8 %v7411
        %v7413 = vperm.slane %v7407, %v7412
        %v7415 = vunpack.c.l.s4 1934713408
        %v7416 = vunpack.c.0.s8 %v7415
        %v7417 = vperm.slane %v7409, %v7416
        %v7418 = vrot.slane %v7389, 4
        %v7419 = vsel %vm1746, %v7418, %v7377
        %v7420 = vrot.slane %v7377, 4
        %v7421 = vsel %vm1746, %v7389, %v7420
        %v7423 = vunpack.c.l.s4 1934713408
        %v7424 = vunpack.c.0.s8 %v7423
        %v7425 = vperm.slane %v7419, %v7424
        %v7427 = vunpack.c.l.s4 1934713408
        %v7428 = vunpack.c.0.s8 %v7427
        %v7429 = vperm.slane %v7421, %v7428
        %v7430 = vrot.slane %v7393, 4
        %v7431 = vsel %vm1746, %v7430, %v7381
        %v7432 = vrot.slane %v7381, 4
        %v7433 = vsel %vm1746, %v7393, %v7432
        %v7435 = vunpack.c.l.s4 1934713408
        %v7436 = vunpack.c.0.s8 %v7435
        %v7437 = vperm.slane %v7431, %v7436
        %v7439 = vunpack.c.l.s4 1934713408
        %v7440 = vunpack.c.0.s8 %v7439
        %v7441 = vperm.slane %v7433, %v7440
        %v7442 = vrot.slane %v7425, 4
        %v7443 = vsel %vm1746, %v7442, %v7401
        %v7444 = vrot.slane %v7401, 4
        %v7445 = vsel %vm1746, %v7425, %v7444
        %v7446 = vrot.slane %v7429, 4
        %v7447 = vsel %vm1746, %v7446, %v7405
        %v7448 = vrot.slane %v7405, 4
        %v7449 = vsel %vm1746, %v7429, %v7448
        %v7450 = vrot.slane %v7437, 4
        %v7451 = vsel %vm1746, %v7450, %v7413
        %v7452 = vrot.slane %v7413, 4
        %v7453 = vsel %vm1746, %v7437, %v7452
        %v7454 = vrot.slane %v7441, 4
        %v7455 = vsel %vm1746, %v7454, %v7417
        %v7456 = vrot.slane %v7417, 4
        %v7457 = vsel %vm1746, %v7441, %v7456
        %v7458 = vrot.slane %v1482, 4
        %v7459 = vsel %vm1746, %v7458, %v1386
        %v7460 = vrot.slane %v1386, 4
        %v7461 = vsel %vm1746, %v1482, %v7460
        %v7463 = vunpack.c.l.s4 1983009808
        %v7464 = vunpack.c.0.s8 %v7463
        %v7465 = vperm.slane %v7459, %v7464
        %v7467 = vunpack.c.l.s4 1983009808
        %v7468 = vunpack.c.0.s8 %v7467
        %v7469 = vperm.slane %v7461, %v7468
        %v7470 = vrot.slane %v1530, 4
        %v7471 = vsel %vm1746, %v7470, %v1434
        %v7472 = vrot.slane %v1434, 4
        %v7473 = vsel %vm1746, %v1530, %v7472
        %v7475 = vunpack.c.l.s4 1983009808
        %v7476 = vunpack.c.0.s8 %v7475
        %v7477 = vperm.slane %v7471, %v7476
        %v7479 = vunpack.c.l.s4 1983009808
        %v7480 = vunpack.c.0.s8 %v7479
        %v7481 = vperm.slane %v7473, %v7480
        %v7482 = vrot.slane %v1674, 4
        %v7483 = vsel %vm1746, %v7482, %v1578
        %v7484 = vrot.slane %v1578, 4
        %v7485 = vsel %vm1746, %v1674, %v7484
        %v7487 = vunpack.c.l.s4 1983009808
        %v7488 = vunpack.c.0.s8 %v7487
        %v7489 = vperm.slane %v7483, %v7488
        %v7491 = vunpack.c.l.s4 1983009808
        %v7492 = vunpack.c.0.s8 %v7491
        %v7493 = vperm.slane %v7485, %v7492
        %v7494 = vrot.slane %v1722, 4
        %v7495 = vsel %vm1746, %v7494, %v1626
        %v7496 = vrot.slane %v1626, 4
        %v7497 = vsel %vm1746, %v1722, %v7496
        %v7499 = vunpack.c.l.s4 1983009808
        %v7500 = vunpack.c.0.s8 %v7499
        %v7501 = vperm.slane %v7495, %v7500
        %v7503 = vunpack.c.l.s4 1983009808
        %v7504 = vunpack.c.0.s8 %v7503
        %v7505 = vperm.slane %v7497, %v7504
        %v7506 = vrot.slane %v7477, 4
        %v7507 = vsel %vm1746, %v7506, %v7465
        %v7508 = vrot.slane %v7465, 4
        %v7509 = vsel %vm1746, %v7477, %v7508
        %v7511 = vunpack.c.l.s4 1934713408
        %v7512 = vunpack.c.0.s8 %v7511
        %v7513 = vperm.slane %v7507, %v7512
        %v7515 = vunpack.c.l.s4 1934713408
        %v7516 = vunpack.c.0.s8 %v7515
        %v7517 = vperm.slane %v7509, %v7516
        %v7518 = vrot.slane %v7481, 4
        %v7519 = vsel %vm1746, %v7518, %v7469
        %v7520 = vrot.slane %v7469, 4
        %v7521 = vsel %vm1746, %v7481, %v7520
        %v7523 = vunpack.c.l.s4 1934713408
        %v7524 = vunpack.c.0.s8 %v7523
        %v7525 = vperm.slane %v7519, %v7524
        %v7527 = vunpack.c.l.s4 1934713408
        %v7528 = vunpack.c.0.s8 %v7527
        %v7529 = vperm.slane %v7521, %v7528
        %v7530 = vrot.slane %v7501, 4
        %v7531 = vsel %vm1746, %v7530, %v7489
        %v7532 = vrot.slane %v7489, 4
        %v7533 = vsel %vm1746, %v7501, %v7532
        %v7535 = vunpack.c.l.s4 1934713408
        %v7536 = vunpack.c.0.s8 %v7535
        %v7537 = vperm.slane %v7531, %v7536
        %v7539 = vunpack.c.l.s4 1934713408
        %v7540 = vunpack.c.0.s8 %v7539
        %v7541 = vperm.slane %v7533, %v7540
        %v7542 = vrot.slane %v7505, 4
        %v7543 = vsel %vm1746, %v7542, %v7493
        %v7544 = vrot.slane %v7493, 4
        %v7545 = vsel %vm1746, %v7505, %v7544
        %v7547 = vunpack.c.l.s4 1934713408
        %v7548 = vunpack.c.0.s8 %v7547
        %v7549 = vperm.slane %v7543, %v7548
        %v7551 = vunpack.c.l.s4 1934713408
        %v7552 = vunpack.c.0.s8 %v7551
        %v7553 = vperm.slane %v7545, %v7552
        %v7554 = vrot.slane %v7537, 4
        %v7555 = vsel %vm1746, %v7554, %v7513
        %v7556 = vrot.slane %v7513, 4
        %v7557 = vsel %vm1746, %v7537, %v7556
        %v7558 = vrot.slane %v7541, 4
        %v7559 = vsel %vm1746, %v7558, %v7517
        %v7560 = vrot.slane %v7517, 4
        %v7561 = vsel %vm1746, %v7541, %v7560
        %v7562 = vrot.slane %v7549, 4
        %v7563 = vsel %vm1746, %v7562, %v7525
        %v7564 = vrot.slane %v7525, 4
        %v7565 = vsel %vm1746, %v7549, %v7564
        %v7566 = vrot.slane %v7553, 4
        %v7567 = vsel %vm1746, %v7566, %v7529
        %v7568 = vrot.slane %v7529, 4
        %v7569 = vsel %vm1746, %v7553, %v7568
        %v7570 = vrot.slane %v332, 4
        %v7571 = vsel %vm1746, %v7570, %v238
        %v7572 = vrot.slane %v238, 4
        %v7573 = vsel %vm1746, %v332, %v7572
        %v7575 = vunpack.c.l.s4 1983009808
        %v7576 = vunpack.c.0.s8 %v7575
        %v7577 = vperm.slane %v7571, %v7576
        %v7579 = vunpack.c.l.s4 1983009808
        %v7580 = vunpack.c.0.s8 %v7579
        %v7581 = vperm.slane %v7573, %v7580
        %v7582 = vrot.slane %v380, 4
        %v7583 = vsel %vm1746, %v7582, %v284
        %v7584 = vrot.slane %v284, 4
        %v7585 = vsel %vm1746, %v380, %v7584
        %v7587 = vunpack.c.l.s4 1983009808
        %v7588 = vunpack.c.0.s8 %v7587
        %v7589 = vperm.slane %v7583, %v7588
        %v7591 = vunpack.c.l.s4 1983009808
        %v7592 = vunpack.c.0.s8 %v7591
        %v7593 = vperm.slane %v7585, %v7592
        %v7594 = vrot.slane %v524, 4
        %v7595 = vsel %vm1746, %v7594, %v428
        %v7596 = vrot.slane %v428, 4
        %v7597 = vsel %vm1746, %v524, %v7596
        %v7599 = vunpack.c.l.s4 1983009808
        %v7600 = vunpack.c.0.s8 %v7599
        %v7601 = vperm.slane %v7595, %v7600
        %v7603 = vunpack.c.l.s4 1983009808
        %v7604 = vunpack.c.0.s8 %v7603
        %v7605 = vperm.slane %v7597, %v7604
        %v7606 = vrot.slane %v572, 4
        %v7607 = vsel %vm1746, %v7606, %v476
        %v7608 = vrot.slane %v476, 4
        %v7609 = vsel %vm1746, %v572, %v7608
        %v7611 = vunpack.c.l.s4 1983009808
        %v7612 = vunpack.c.0.s8 %v7611
        %v7613 = vperm.slane %v7607, %v7612
        %v7615 = vunpack.c.l.s4 1983009808
        %v7616 = vunpack.c.0.s8 %v7615
        %v7617 = vperm.slane %v7609, %v7616
        %v7618 = vrot.slane %v7589, 4
        %v7619 = vsel %vm1746, %v7618, %v7577
        %v7620 = vrot.slane %v7577, 4
        %v7621 = vsel %vm1746, %v7589, %v7620
        %v7623 = vunpack.c.l.s4 1934713408
        %v7624 = vunpack.c.0.s8 %v7623
        %v7625 = vperm.slane %v7619, %v7624
        %v7627 = vunpack.c.l.s4 1934713408
        %v7628 = vunpack.c.0.s8 %v7627
        %v7629 = vperm.slane %v7621, %v7628
        %v7630 = vrot.slane %v7593, 4
        %v7631 = vsel %vm1746, %v7630, %v7581
        %v7632 = vrot.slane %v7581, 4
        %v7633 = vsel %vm1746, %v7593, %v7632
        %v7635 = vunpack.c.l.s4 1934713408
        %v7636 = vunpack.c.0.s8 %v7635
        %v7637 = vperm.slane %v7631, %v7636
        %v7639 = vunpack.c.l.s4 1934713408
        %v7640 = vunpack.c.0.s8 %v7639
        %v7641 = vperm.slane %v7633, %v7640
        %v7642 = vrot.slane %v7613, 4
        %v7643 = vsel %vm1746, %v7642, %v7601
        %v7644 = vrot.slane %v7601, 4
        %v7645 = vsel %vm1746, %v7613, %v7644
        %v7647 = vunpack.c.l.s4 1934713408
        %v7648 = vunpack.c.0.s8 %v7647
        %v7649 = vperm.slane %v7643, %v7648
        %v7651 = vunpack.c.l.s4 1934713408
        %v7652 = vunpack.c.0.s8 %v7651
        %v7653 = vperm.slane %v7645, %v7652
        %v7654 = vrot.slane %v7617, 4
        %v7655 = vsel %vm1746, %v7654, %v7605
        %v7656 = vrot.slane %v7605, 4
        %v7657 = vsel %vm1746, %v7617, %v7656
        %v7659 = vunpack.c.l.s4 1934713408
        %v7660 = vunpack.c.0.s8 %v7659
        %v7661 = vperm.slane %v7655, %v7660
        %v7663 = vunpack.c.l.s4 1934713408
        %v7664 = vunpack.c.0.s8 %v7663
        %v7665 = vperm.slane %v7657, %v7664
        %v7666 = vrot.slane %v7649, 4
        %v7667 = vsel %vm1746, %v7666, %v7625
        %v7668 = vrot.slane %v7625, 4
        %v7669 = vsel %vm1746, %v7649, %v7668
        %v7670 = vrot.slane %v7653, 4
        %v7671 = vsel %vm1746, %v7670, %v7629
        %v7672 = vrot.slane %v7629, 4
        %v7673 = vsel %vm1746, %v7653, %v7672
        %v7674 = vrot.slane %v7661, 4
        %v7675 = vsel %vm1746, %v7674, %v7637
        %v7676 = vrot.slane %v7637, 4
        %v7677 = vsel %vm1746, %v7661, %v7676
        %v7678 = vrot.slane %v7665, 4
        %v7679 = vsel %vm1746, %v7678, %v7641
        %v7680 = vrot.slane %v7641, 4
        %v7681 = vsel %vm1746, %v7665, %v7680
        %v7682 = vrot.slane %v716, 4
        %v7683 = vsel %vm1746, %v7682, %v620
        %v7684 = vrot.slane %v620, 4
        %v7685 = vsel %vm1746, %v716, %v7684
        %v7687 = vunpack.c.l.s4 1983009808
        %v7688 = vunpack.c.0.s8 %v7687
        %v7689 = vperm.slane %v7683, %v7688
        %v7691 = vunpack.c.l.s4 1983009808
        %v7692 = vunpack.c.0.s8 %v7691
        %v7693 = vperm.slane %v7685, %v7692
        %v7694 = vrot.slane %v764, 4
        %v7695 = vsel %vm1746, %v7694, %v668
        %v7696 = vrot.slane %v668, 4
        %v7697 = vsel %vm1746, %v764, %v7696
        %v7699 = vunpack.c.l.s4 1983009808
        %v7700 = vunpack.c.0.s8 %v7699
        %v7701 = vperm.slane %v7695, %v7700
        %v7703 = vunpack.c.l.s4 1983009808
        %v7704 = vunpack.c.0.s8 %v7703
        %v7705 = vperm.slane %v7697, %v7704
        %v7706 = vrot.slane %v908, 4
        %v7707 = vsel %vm1746, %v7706, %v812
        %v7708 = vrot.slane %v812, 4
        %v7709 = vsel %vm1746, %v908, %v7708
        %v7711 = vunpack.c.l.s4 1983009808
        %v7712 = vunpack.c.0.s8 %v7711
        %v7713 = vperm.slane %v7707, %v7712
        %v7715 = vunpack.c.l.s4 1983009808
        %v7716 = vunpack.c.0.s8 %v7715
        %v7717 = vperm.slane %v7709, %v7716
        %v7718 = vrot.slane %v956, 4
        %v7719 = vsel %vm1746, %v7718, %v860
        %v7720 = vrot.slane %v860, 4
        %v7721 = vsel %vm1746, %v956, %v7720
        %v7723 = vunpack.c.l.s4 1983009808
        %v7724 = vunpack.c.0.s8 %v7723
        %v7725 = vperm.slane %v7719, %v7724
        %v7727 = vunpack.c.l.s4 1983009808
        %v7728 = vunpack.c.0.s8 %v7727
        %v7729 = vperm.slane %v7721, %v7728
        %v7730 = vrot.slane %v7701, 4
        %v7731 = vsel %vm1746, %v7730, %v7689
        %v7732 = vrot.slane %v7689, 4
        %v7733 = vsel %vm1746, %v7701, %v7732
        %v7735 = vunpack.c.l.s4 1934713408
        %v7736 = vunpack.c.0.s8 %v7735
        %v7737 = vperm.slane %v7731, %v7736
        %v7739 = vunpack.c.l.s4 1934713408
        %v7740 = vunpack.c.0.s8 %v7739
        %v7741 = vperm.slane %v7733, %v7740
        %v7742 = vrot.slane %v7705, 4
        %v7743 = vsel %vm1746, %v7742, %v7693
        %v7744 = vrot.slane %v7693, 4
        %v7745 = vsel %vm1746, %v7705, %v7744
        %v7747 = vunpack.c.l.s4 1934713408
        %v7748 = vunpack.c.0.s8 %v7747
        %v7749 = vperm.slane %v7743, %v7748
        %v7751 = vunpack.c.l.s4 1934713408
        %v7752 = vunpack.c.0.s8 %v7751
        %v7753 = vperm.slane %v7745, %v7752
        %v7754 = vrot.slane %v7725, 4
        %v7755 = vsel %vm1746, %v7754, %v7713
        %v7756 = vrot.slane %v7713, 4
        %v7757 = vsel %vm1746, %v7725, %v7756
        %v7759 = vunpack.c.l.s4 1934713408
        %v7760 = vunpack.c.0.s8 %v7759
        %v7761 = vperm.slane %v7755, %v7760
        %v7763 = vunpack.c.l.s4 1934713408
        %v7764 = vunpack.c.0.s8 %v7763
        %v7765 = vperm.slane %v7757, %v7764
        %v7766 = vrot.slane %v7729, 4
        %v7767 = vsel %vm1746, %v7766, %v7717
        %v7768 = vrot.slane %v7717, 4
        %v7769 = vsel %vm1746, %v7729, %v7768
        %v7771 = vunpack.c.l.s4 1934713408
        %v7772 = vunpack.c.0.s8 %v7771
        %v7773 = vperm.slane %v7767, %v7772
        %v7775 = vunpack.c.l.s4 1934713408
        %v7776 = vunpack.c.0.s8 %v7775
        %v7777 = vperm.slane %v7769, %v7776
        %v7778 = vrot.slane %v7761, 4
        %v7779 = vsel %vm1746, %v7778, %v7737
        %v7780 = vrot.slane %v7737, 4
        %v7781 = vsel %vm1746, %v7761, %v7780
        %v7782 = vrot.slane %v7765, 4
        %v7783 = vsel %vm1746, %v7782, %v7741
        %v7784 = vrot.slane %v7741, 4
        %v7785 = vsel %vm1746, %v7765, %v7784
        %v7786 = vrot.slane %v7773, 4
        %v7787 = vsel %vm1746, %v7786, %v7749
        %v7788 = vrot.slane %v7749, 4
        %v7789 = vsel %vm1746, %v7773, %v7788
        %v7790 = vrot.slane %v7777, 4
        %v7791 = vsel %vm1746, %v7790, %v7753
        %v7792 = vrot.slane %v7753, 4
        %v7793 = vsel %vm1746, %v7777, %v7792
        %v7794 = vrot.slane %v1100, 4
        %v7795 = vsel %vm1746, %v7794, %v1004
        %v7796 = vrot.slane %v1004, 4
        %v7797 = vsel %vm1746, %v1100, %v7796
        %v7799 = vunpack.c.l.s4 1983009808
        %v7800 = vunpack.c.0.s8 %v7799
        %v7801 = vperm.slane %v7795, %v7800
        %v7803 = vunpack.c.l.s4 1983009808
        %v7804 = vunpack.c.0.s8 %v7803
        %v7805 = vperm.slane %v7797, %v7804
        %v7806 = vrot.slane %v1148, 4
        %v7807 = vsel %vm1746, %v7806, %v1052
        %v7808 = vrot.slane %v1052, 4
        %v7809 = vsel %vm1746, %v1148, %v7808
        %v7811 = vunpack.c.l.s4 1983009808
        %v7812 = vunpack.c.0.s8 %v7811
        %v7813 = vperm.slane %v7807, %v7812
        %v7815 = vunpack.c.l.s4 1983009808
        %v7816 = vunpack.c.0.s8 %v7815
        %v7817 = vperm.slane %v7809, %v7816
        %v7818 = vrot.slane %v1292, 4
        %v7819 = vsel %vm1746, %v7818, %v1196
        %v7820 = vrot.slane %v1196, 4
        %v7821 = vsel %vm1746, %v1292, %v7820
        %v7823 = vunpack.c.l.s4 1983009808
        %v7824 = vunpack.c.0.s8 %v7823
        %v7825 = vperm.slane %v7819, %v7824
        %v7827 = vunpack.c.l.s4 1983009808
        %v7828 = vunpack.c.0.s8 %v7827
        %v7829 = vperm.slane %v7821, %v7828
        %v7830 = vrot.slane %v1340, 4
        %v7831 = vsel %vm1746, %v7830, %v1244
        %v7832 = vrot.slane %v1244, 4
        %v7833 = vsel %vm1746, %v1340, %v7832
        %v7835 = vunpack.c.l.s4 1983009808
        %v7836 = vunpack.c.0.s8 %v7835
        %v7837 = vperm.slane %v7831, %v7836
        %v7839 = vunpack.c.l.s4 1983009808
        %v7840 = vunpack.c.0.s8 %v7839
        %v7841 = vperm.slane %v7833, %v7840
        %v7842 = vrot.slane %v7813, 4
        %v7843 = vsel %vm1746, %v7842, %v7801
        %v7844 = vrot.slane %v7801, 4
        %v7845 = vsel %vm1746, %v7813, %v7844
        %v7847 = vunpack.c.l.s4 1934713408
        %v7848 = vunpack.c.0.s8 %v7847
        %v7849 = vperm.slane %v7843, %v7848
        %v7851 = vunpack.c.l.s4 1934713408
        %v7852 = vunpack.c.0.s8 %v7851
        %v7853 = vperm.slane %v7845, %v7852
        %v7854 = vrot.slane %v7817, 4
        %v7855 = vsel %vm1746, %v7854, %v7805
        %v7856 = vrot.slane %v7805, 4
        %v7857 = vsel %vm1746, %v7817, %v7856
        %v7859 = vunpack.c.l.s4 1934713408
        %v7860 = vunpack.c.0.s8 %v7859
        %v7861 = vperm.slane %v7855, %v7860
        %v7863 = vunpack.c.l.s4 1934713408
        %v7864 = vunpack.c.0.s8 %v7863
        %v7865 = vperm.slane %v7857, %v7864
        %v7866 = vrot.slane %v7837, 4
        %v7867 = vsel %vm1746, %v7866, %v7825
        %v7868 = vrot.slane %v7825, 4
        %v7869 = vsel %vm1746, %v7837, %v7868
        %v7871 = vunpack.c.l.s4 1934713408
        %v7872 = vunpack.c.0.s8 %v7871
        %v7873 = vperm.slane %v7867, %v7872
        %v7875 = vunpack.c.l.s4 1934713408
        %v7876 = vunpack.c.0.s8 %v7875
        %v7877 = vperm.slane %v7869, %v7876
        %v7878 = vrot.slane %v7841, 4
        %v7879 = vsel %vm1746, %v7878, %v7829
        %v7880 = vrot.slane %v7829, 4
        %v7881 = vsel %vm1746, %v7841, %v7880
        %v7883 = vunpack.c.l.s4 1934713408
        %v7884 = vunpack.c.0.s8 %v7883
        %v7885 = vperm.slane %v7879, %v7884
        %v7887 = vunpack.c.l.s4 1934713408
        %v7888 = vunpack.c.0.s8 %v7887
        %v7889 = vperm.slane %v7881, %v7888
        %v7890 = vrot.slane %v7873, 4
        %v7891 = vsel %vm1746, %v7890, %v7849
        %v7892 = vrot.slane %v7849, 4
        %v7893 = vsel %vm1746, %v7873, %v7892
        %v7894 = vrot.slane %v7877, 4
        %v7895 = vsel %vm1746, %v7894, %v7853
        %v7896 = vrot.slane %v7853, 4
        %v7897 = vsel %vm1746, %v7877, %v7896
        %v7898 = vrot.slane %v7885, 4
        %v7899 = vsel %vm1746, %v7898, %v7861
        %v7900 = vrot.slane %v7861, 4
        %v7901 = vsel %vm1746, %v7885, %v7900
        %v7902 = vrot.slane %v7889, 4
        %v7903 = vsel %vm1746, %v7902, %v7865
        %v7904 = vrot.slane %v7865, 4
        %v7905 = vsel %vm1746, %v7889, %v7904
        %v7906 = vrot.slane %v1484, 4
        %v7907 = vsel %vm1746, %v7906, %v1388
        %v7908 = vrot.slane %v1388, 4
        %v7909 = vsel %vm1746, %v1484, %v7908
        %v7911 = vunpack.c.l.s4 1983009808
        %v7912 = vunpack.c.0.s8 %v7911
        %v7913 = vperm.slane %v7907, %v7912
        %v7915 = vunpack.c.l.s4 1983009808
        %v7916 = vunpack.c.0.s8 %v7915
        %v7917 = vperm.slane %v7909, %v7916
        %v7918 = vrot.slane %v1532, 4
        %v7919 = vsel %vm1746, %v7918, %v1436
        %v7920 = vrot.slane %v1436, 4
        %v7921 = vsel %vm1746, %v1532, %v7920
        %v7923 = vunpack.c.l.s4 1983009808
        %v7924 = vunpack.c.0.s8 %v7923
        %v7925 = vperm.slane %v7919, %v7924
        %v7927 = vunpack.c.l.s4 1983009808
        %v7928 = vunpack.c.0.s8 %v7927
        %v7929 = vperm.slane %v7921, %v7928
        %v7930 = vrot.slane %v1676, 4
        %v7931 = vsel %vm1746, %v7930, %v1580
        %v7932 = vrot.slane %v1580, 4
        %v7933 = vsel %vm1746, %v1676, %v7932
        %v7935 = vunpack.c.l.s4 1983009808
        %v7936 = vunpack.c.0.s8 %v7935
        %v7937 = vperm.slane %v7931, %v7936
        %v7939 = vunpack.c.l.s4 1983009808
        %v7940 = vunpack.c.0.s8 %v7939
        %v7941 = vperm.slane %v7933, %v7940
        %v7942 = vrot.slane %v1724, 4
        %v7943 = vsel %vm1746, %v7942, %v1628
        %v7944 = vrot.slane %v1628, 4
        %v7945 = vsel %vm1746, %v1724, %v7944
        %v7947 = vunpack.c.l.s4 1983009808
        %v7948 = vunpack.c.0.s8 %v7947
        %v7949 = vperm.slane %v7943, %v7948
        %v7951 = vunpack.c.l.s4 1983009808
        %v7952 = vunpack.c.0.s8 %v7951
        %v7953 = vperm.slane %v7945, %v7952
        %v7954 = vrot.slane %v7925, 4
        %v7955 = vsel %vm1746, %v7954, %v7913
        %v7956 = vrot.slane %v7913, 4
        %v7957 = vsel %vm1746, %v7925, %v7956
        %v7959 = vunpack.c.l.s4 1934713408
        %v7960 = vunpack.c.0.s8 %v7959
        %v7961 = vperm.slane %v7955, %v7960
        %v7963 = vunpack.c.l.s4 1934713408
        %v7964 = vunpack.c.0.s8 %v7963
        %v7965 = vperm.slane %v7957, %v7964
        %v7966 = vrot.slane %v7929, 4
        %v7967 = vsel %vm1746, %v7966, %v7917
        %v7968 = vrot.slane %v7917, 4
        %v7969 = vsel %vm1746, %v7929, %v7968
        %v7971 = vunpack.c.l.s4 1934713408
        %v7972 = vunpack.c.0.s8 %v7971
        %v7973 = vperm.slane %v7967, %v7972
        %v7975 = vunpack.c.l.s4 1934713408
        %v7976 = vunpack.c.0.s8 %v7975
        %v7977 = vperm.slane %v7969, %v7976
        %v7978 = vrot.slane %v7949, 4
        %v7979 = vsel %vm1746, %v7978, %v7937
        %v7980 = vrot.slane %v7937, 4
        %v7981 = vsel %vm1746, %v7949, %v7980
        %v7983 = vunpack.c.l.s4 1934713408
        %v7984 = vunpack.c.0.s8 %v7983
        %v7985 = vperm.slane %v7979, %v7984
        %v7987 = vunpack.c.l.s4 1934713408
        %v7988 = vunpack.c.0.s8 %v7987
        %v7989 = vperm.slane %v7981, %v7988
        %v7990 = vrot.slane %v7953, 4
        %v7991 = vsel %vm1746, %v7990, %v7941
        %v7992 = vrot.slane %v7941, 4
        %v7993 = vsel %vm1746, %v7953, %v7992
        %v7995 = vunpack.c.l.s4 1934713408
        %v7996 = vunpack.c.0.s8 %v7995
        %v7997 = vperm.slane %v7991, %v7996
        %v7999 = vunpack.c.l.s4 1934713408
        %v8000 = vunpack.c.0.s8 %v7999
        %v8001 = vperm.slane %v7993, %v8000
        %v8002 = vrot.slane %v7985, 4
        %v8003 = vsel %vm1746, %v8002, %v7961
        %v8004 = vrot.slane %v7961, 4
        %v8005 = vsel %vm1746, %v7985, %v8004
        %v8006 = vrot.slane %v7989, 4
        %v8007 = vsel %vm1746, %v8006, %v7965
        %v8008 = vrot.slane %v7965, 4
        %v8009 = vsel %vm1746, %v7989, %v8008
        %v8010 = vrot.slane %v7997, 4
        %v8011 = vsel %vm1746, %v8010, %v7973
        %v8012 = vrot.slane %v7973, 4
        %v8013 = vsel %vm1746, %v7997, %v8012
        %v8014 = vrot.slane %v8001, 4
        %v8015 = vsel %vm1746, %v8014, %v7977
        %v8016 = vrot.slane %v7977, 4
        %v8017 = vsel %vm1746, %v8001, %v8016
        %v8018 = vrot.slane %v334, 4
        %v8019 = vsel %vm1746, %v8018, %v239
        %v8020 = vrot.slane %v239, 4
        %v8021 = vsel %vm1746, %v334, %v8020
        %v8023 = vunpack.c.l.s4 1983009808
        %v8024 = vunpack.c.0.s8 %v8023
        %v8025 = vperm.slane %v8019, %v8024
        %v8027 = vunpack.c.l.s4 1983009808
        %v8028 = vunpack.c.0.s8 %v8027
        %v8029 = vperm.slane %v8021, %v8028
        %v8030 = vrot.slane %v382, 4
        %v8031 = vsel %vm1746, %v8030, %v286
        %v8032 = vrot.slane %v286, 4
        %v8033 = vsel %vm1746, %v382, %v8032
        %v8035 = vunpack.c.l.s4 1983009808
        %v8036 = vunpack.c.0.s8 %v8035
        %v8037 = vperm.slane %v8031, %v8036
        %v8039 = vunpack.c.l.s4 1983009808
        %v8040 = vunpack.c.0.s8 %v8039
        %v8041 = vperm.slane %v8033, %v8040
        %v8042 = vrot.slane %v526, 4
        %v8043 = vsel %vm1746, %v8042, %v430
        %v8044 = vrot.slane %v430, 4
        %v8045 = vsel %vm1746, %v526, %v8044
        %v8047 = vunpack.c.l.s4 1983009808
        %v8048 = vunpack.c.0.s8 %v8047
        %v8049 = vperm.slane %v8043, %v8048
        %v8051 = vunpack.c.l.s4 1983009808
        %v8052 = vunpack.c.0.s8 %v8051
        %v8053 = vperm.slane %v8045, %v8052
        %v8054 = vrot.slane %v574, 4
        %v8055 = vsel %vm1746, %v8054, %v478
        %v8056 = vrot.slane %v478, 4
        %v8057 = vsel %vm1746, %v574, %v8056
        %v8059 = vunpack.c.l.s4 1983009808
        %v8060 = vunpack.c.0.s8 %v8059
        %v8061 = vperm.slane %v8055, %v8060
        %v8063 = vunpack.c.l.s4 1983009808
        %v8064 = vunpack.c.0.s8 %v8063
        %v8065 = vperm.slane %v8057, %v8064
        %v8066 = vrot.slane %v8037, 4
        %v8067 = vsel %vm1746, %v8066, %v8025
        %v8068 = vrot.slane %v8025, 4
        %v8069 = vsel %vm1746, %v8037, %v8068
        %v8071 = vunpack.c.l.s4 1934713408
        %v8072 = vunpack.c.0.s8 %v8071
        %v8073 = vperm.slane %v8067, %v8072
        %v8075 = vunpack.c.l.s4 1934713408
        %v8076 = vunpack.c.0.s8 %v8075
        %v8077 = vperm.slane %v8069, %v8076
        %v8078 = vrot.slane %v8041, 4
        %v8079 = vsel %vm1746, %v8078, %v8029
        %v8080 = vrot.slane %v8029, 4
        %v8081 = vsel %vm1746, %v8041, %v8080
        %v8083 = vunpack.c.l.s4 1934713408
        %v8084 = vunpack.c.0.s8 %v8083
        %v8085 = vperm.slane %v8079, %v8084
        %v8087 = vunpack.c.l.s4 1934713408
        %v8088 = vunpack.c.0.s8 %v8087
        %v8089 = vperm.slane %v8081, %v8088
        %v8090 = vrot.slane %v8061, 4
        %v8091 = vsel %vm1746, %v8090, %v8049
        %v8092 = vrot.slane %v8049, 4
        %v8093 = vsel %vm1746, %v8061, %v8092
        %v8095 = vunpack.c.l.s4 1934713408
        %v8096 = vunpack.c.0.s8 %v8095
        %v8097 = vperm.slane %v8091, %v8096
        %v8099 = vunpack.c.l.s4 1934713408
        %v8100 = vunpack.c.0.s8 %v8099
        %v8101 = vperm.slane %v8093, %v8100
        %v8102 = vrot.slane %v8065, 4
        %v8103 = vsel %vm1746, %v8102, %v8053
        %v8104 = vrot.slane %v8053, 4
        %v8105 = vsel %vm1746, %v8065, %v8104
        %v8107 = vunpack.c.l.s4 1934713408
        %v8108 = vunpack.c.0.s8 %v8107
        %v8109 = vperm.slane %v8103, %v8108
        %v8111 = vunpack.c.l.s4 1934713408
        %v8112 = vunpack.c.0.s8 %v8111
        %v8113 = vperm.slane %v8105, %v8112
        %v8114 = vrot.slane %v8097, 4
        %v8115 = vsel %vm1746, %v8114, %v8073
        %v8116 = vrot.slane %v8073, 4
        %v8117 = vsel %vm1746, %v8097, %v8116
        %v8118 = vrot.slane %v8101, 4
        %v8119 = vsel %vm1746, %v8118, %v8077
        %v8120 = vrot.slane %v8077, 4
        %v8121 = vsel %vm1746, %v8101, %v8120
        %v8122 = vrot.slane %v8109, 4
        %v8123 = vsel %vm1746, %v8122, %v8085
        %v8124 = vrot.slane %v8085, 4
        %v8125 = vsel %vm1746, %v8109, %v8124
        %v8126 = vrot.slane %v8113, 4
        %v8127 = vsel %vm1746, %v8126, %v8089
        %v8128 = vrot.slane %v8089, 4
        %v8129 = vsel %vm1746, %v8113, %v8128
        %v8130 = vrot.slane %v718, 4
        %v8131 = vsel %vm1746, %v8130, %v622
        %v8132 = vrot.slane %v622, 4
        %v8133 = vsel %vm1746, %v718, %v8132
        %v8135 = vunpack.c.l.s4 1983009808
        %v8136 = vunpack.c.0.s8 %v8135
        %v8137 = vperm.slane %v8131, %v8136
        %v8139 = vunpack.c.l.s4 1983009808
        %v8140 = vunpack.c.0.s8 %v8139
        %v8141 = vperm.slane %v8133, %v8140
        %v8142 = vrot.slane %v766, 4
        %v8143 = vsel %vm1746, %v8142, %v670
        %v8144 = vrot.slane %v670, 4
        %v8145 = vsel %vm1746, %v766, %v8144
        %v8147 = vunpack.c.l.s4 1983009808
        %v8148 = vunpack.c.0.s8 %v8147
        %v8149 = vperm.slane %v8143, %v8148
        %v8151 = vunpack.c.l.s4 1983009808
        %v8152 = vunpack.c.0.s8 %v8151
        %v8153 = vperm.slane %v8145, %v8152
        %v8154 = vrot.slane %v910, 4
        %v8155 = vsel %vm1746, %v8154, %v814
        %v8156 = vrot.slane %v814, 4
        %v8157 = vsel %vm1746, %v910, %v8156
        %v8159 = vunpack.c.l.s4 1983009808
        %v8160 = vunpack.c.0.s8 %v8159
        %v8161 = vperm.slane %v8155, %v8160
        %v8163 = vunpack.c.l.s4 1983009808
        %v8164 = vunpack.c.0.s8 %v8163
        %v8165 = vperm.slane %v8157, %v8164
        %v8166 = vrot.slane %v958, 4
        %v8167 = vsel %vm1746, %v8166, %v862
        %v8168 = vrot.slane %v862, 4
        %v8169 = vsel %vm1746, %v958, %v8168
        %v8171 = vunpack.c.l.s4 1983009808
        %v8172 = vunpack.c.0.s8 %v8171
        %v8173 = vperm.slane %v8167, %v8172
        %v8175 = vunpack.c.l.s4 1983009808
        %v8176 = vunpack.c.0.s8 %v8175
        %v8177 = vperm.slane %v8169, %v8176
        %v8178 = vrot.slane %v8149, 4
        %v8179 = vsel %vm1746, %v8178, %v8137
        %v8180 = vrot.slane %v8137, 4
        %v8181 = vsel %vm1746, %v8149, %v8180
        %v8183 = vunpack.c.l.s4 1934713408
        %v8184 = vunpack.c.0.s8 %v8183
        %v8185 = vperm.slane %v8179, %v8184
        %v8187 = vunpack.c.l.s4 1934713408
        %v8188 = vunpack.c.0.s8 %v8187
        %v8189 = vperm.slane %v8181, %v8188
        %v8190 = vrot.slane %v8153, 4
        %v8191 = vsel %vm1746, %v8190, %v8141
        %v8192 = vrot.slane %v8141, 4
        %v8193 = vsel %vm1746, %v8153, %v8192
        %v8195 = vunpack.c.l.s4 1934713408
        %v8196 = vunpack.c.0.s8 %v8195
        %v8197 = vperm.slane %v8191, %v8196
        %v8199 = vunpack.c.l.s4 1934713408
        %v8200 = vunpack.c.0.s8 %v8199
        %v8201 = vperm.slane %v8193, %v8200
        %v8202 = vrot.slane %v8173, 4
        %v8203 = vsel %vm1746, %v8202, %v8161
        %v8204 = vrot.slane %v8161, 4
        %v8205 = vsel %vm1746, %v8173, %v8204
        %v8207 = vunpack.c.l.s4 1934713408
        %v8208 = vunpack.c.0.s8 %v8207
        %v8209 = vperm.slane %v8203, %v8208
        %v8211 = vunpack.c.l.s4 1934713408
        %v8212 = vunpack.c.0.s8 %v8211
        %v8213 = vperm.slane %v8205, %v8212
        %v8214 = vrot.slane %v8177, 4
        %v8215 = vsel %vm1746, %v8214, %v8165
        %v8216 = vrot.slane %v8165, 4
        %v8217 = vsel %vm1746, %v8177, %v8216
        %v8219 = vunpack.c.l.s4 1934713408
        %v8220 = vunpack.c.0.s8 %v8219
        %v8221 = vperm.slane %v8215, %v8220
        %v8223 = vunpack.c.l.s4 1934713408
        %v8224 = vunpack.c.0.s8 %v8223
        %v8225 = vperm.slane %v8217, %v8224
        %v8226 = vrot.slane %v8209, 4
        %v8227 = vsel %vm1746, %v8226, %v8185
        %v8228 = vrot.slane %v8185, 4
        %v8229 = vsel %vm1746, %v8209, %v8228
        %v8230 = vrot.slane %v8213, 4
        %v8231 = vsel %vm1746, %v8230, %v8189
        %v8232 = vrot.slane %v8189, 4
        %v8233 = vsel %vm1746, %v8213, %v8232
        %v8234 = vrot.slane %v8221, 4
        %v8235 = vsel %vm1746, %v8234, %v8197
        %v8236 = vrot.slane %v8197, 4
        %v8237 = vsel %vm1746, %v8221, %v8236
        %v8238 = vrot.slane %v8225, 4
        %v8239 = vsel %vm1746, %v8238, %v8201
        %v8240 = vrot.slane %v8201, 4
        %v8241 = vsel %vm1746, %v8225, %v8240
        %v8242 = vrot.slane %v1102, 4
        %v8243 = vsel %vm1746, %v8242, %v1006
        %v8244 = vrot.slane %v1006, 4
        %v8245 = vsel %vm1746, %v1102, %v8244
        %v8247 = vunpack.c.l.s4 1983009808
        %v8248 = vunpack.c.0.s8 %v8247
        %v8249 = vperm.slane %v8243, %v8248
        %v8251 = vunpack.c.l.s4 1983009808
        %v8252 = vunpack.c.0.s8 %v8251
        %v8253 = vperm.slane %v8245, %v8252
        %v8254 = vrot.slane %v1150, 4
        %v8255 = vsel %vm1746, %v8254, %v1054
        %v8256 = vrot.slane %v1054, 4
        %v8257 = vsel %vm1746, %v1150, %v8256
        %v8259 = vunpack.c.l.s4 1983009808
        %v8260 = vunpack.c.0.s8 %v8259
        %v8261 = vperm.slane %v8255, %v8260
        %v8263 = vunpack.c.l.s4 1983009808
        %v8264 = vunpack.c.0.s8 %v8263
        %v8265 = vperm.slane %v8257, %v8264
        %v8266 = vrot.slane %v1294, 4
        %v8267 = vsel %vm1746, %v8266, %v1198
        %v8268 = vrot.slane %v1198, 4
        %v8269 = vsel %vm1746, %v1294, %v8268
        %v8271 = vunpack.c.l.s4 1983009808
        %v8272 = vunpack.c.0.s8 %v8271
        %v8273 = vperm.slane %v8267, %v8272
        %v8275 = vunpack.c.l.s4 1983009808
        %v8276 = vunpack.c.0.s8 %v8275
        %v8277 = vperm.slane %v8269, %v8276
        %v8278 = vrot.slane %v1342, 4
        %v8279 = vsel %vm1746, %v8278, %v1246
        %v8280 = vrot.slane %v1246, 4
        %v8281 = vsel %vm1746, %v1342, %v8280
        %v8283 = vunpack.c.l.s4 1983009808
        %v8284 = vunpack.c.0.s8 %v8283
        %v8285 = vperm.slane %v8279, %v8284
        %v8287 = vunpack.c.l.s4 1983009808
        %v8288 = vunpack.c.0.s8 %v8287
        %v8289 = vperm.slane %v8281, %v8288
        %v8290 = vrot.slane %v8261, 4
        %v8291 = vsel %vm1746, %v8290, %v8249
        %v8292 = vrot.slane %v8249, 4
        %v8293 = vsel %vm1746, %v8261, %v8292
        %v8295 = vunpack.c.l.s4 1934713408
        %v8296 = vunpack.c.0.s8 %v8295
        %v8297 = vperm.slane %v8291, %v8296
        %v8299 = vunpack.c.l.s4 1934713408
        %v8300 = vunpack.c.0.s8 %v8299
        %v8301 = vperm.slane %v8293, %v8300
        %v8302 = vrot.slane %v8265, 4
        %v8303 = vsel %vm1746, %v8302, %v8253
        %v8304 = vrot.slane %v8253, 4
        %v8305 = vsel %vm1746, %v8265, %v8304
        %v8307 = vunpack.c.l.s4 1934713408
        %v8308 = vunpack.c.0.s8 %v8307
        %v8309 = vperm.slane %v8303, %v8308
        %v8311 = vunpack.c.l.s4 1934713408
        %v8312 = vunpack.c.0.s8 %v8311
        %v8313 = vperm.slane %v8305, %v8312
        %v8314 = vrot.slane %v8285, 4
        %v8315 = vsel %vm1746, %v8314, %v8273
        %v8316 = vrot.slane %v8273, 4
        %v8317 = vsel %vm1746, %v8285, %v8316
        %v8319 = vunpack.c.l.s4 1934713408
        %v8320 = vunpack.c.0.s8 %v8319
        %v8321 = vperm.slane %v8315, %v8320
        %v8323 = vunpack.c.l.s4 1934713408
        %v8324 = vunpack.c.0.s8 %v8323
        %v8325 = vperm.slane %v8317, %v8324
        %v8326 = vrot.slane %v8289, 4
        %v8327 = vsel %vm1746, %v8326, %v8277
        %v8328 = vrot.slane %v8277, 4
        %v8329 = vsel %vm1746, %v8289, %v8328
        %v8331 = vunpack.c.l.s4 1934713408
        %v8332 = vunpack.c.0.s8 %v8331
        %v8333 = vperm.slane %v8327, %v8332
        %v8335 = vunpack.c.l.s4 1934713408
        %v8336 = vunpack.c.0.s8 %v8335
        %v8337 = vperm.slane %v8329, %v8336
        %v8338 = vrot.slane %v8321, 4
        %v8339 = vsel %vm1746, %v8338, %v8297
        %v8340 = vrot.slane %v8297, 4
        %v8341 = vsel %vm1746, %v8321, %v8340
        %v8342 = vrot.slane %v8325, 4
        %v8343 = vsel %vm1746, %v8342, %v8301
        %v8344 = vrot.slane %v8301, 4
        %v8345 = vsel %vm1746, %v8325, %v8344
        %v8346 = vrot.slane %v8333, 4
        %v8347 = vsel %vm1746, %v8346, %v8309
        %v8348 = vrot.slane %v8309, 4
        %v8349 = vsel %vm1746, %v8333, %v8348
        %v8350 = vrot.slane %v8337, 4
        %v8351 = vsel %vm1746, %v8350, %v8313
        %v8352 = vrot.slane %v8313, 4
        %v8353 = vsel %vm1746, %v8337, %v8352
        %v8354 = vrot.slane %v1486, 4
        %v8355 = vsel %vm1746, %v8354, %v1390
        %v8356 = vrot.slane %v1390, 4
        %v8357 = vsel %vm1746, %v1486, %v8356
        %v8359 = vunpack.c.l.s4 1983009808
        %v8360 = vunpack.c.0.s8 %v8359
        %v8361 = vperm.slane %v8355, %v8360
        %v8363 = vunpack.c.l.s4 1983009808
        %v8364 = vunpack.c.0.s8 %v8363
        %v8365 = vperm.slane %v8357, %v8364
        %v8366 = vrot.slane %v1534, 4
        %v8367 = vsel %vm1746, %v8366, %v1438
        %v8368 = vrot.slane %v1438, 4
        %v8369 = vsel %vm1746, %v1534, %v8368
        %v8371 = vunpack.c.l.s4 1983009808
        %v8372 = vunpack.c.0.s8 %v8371
        %v8373 = vperm.slane %v8367, %v8372
        %v8375 = vunpack.c.l.s4 1983009808
        %v8376 = vunpack.c.0.s8 %v8375
        %v8377 = vperm.slane %v8369, %v8376
        %v8378 = vrot.slane %v1678, 4
        %v8379 = vsel %vm1746, %v8378, %v1582
        %v8380 = vrot.slane %v1582, 4
        %v8381 = vsel %vm1746, %v1678, %v8380
        %v8383 = vunpack.c.l.s4 1983009808
        %v8384 = vunpack.c.0.s8 %v8383
        %v8385 = vperm.slane %v8379, %v8384
        %v8387 = vunpack.c.l.s4 1983009808
        %v8388 = vunpack.c.0.s8 %v8387
        %v8389 = vperm.slane %v8381, %v8388
        %v8390 = vrot.slane %v1726, 4
        %v8391 = vsel %vm1746, %v8390, %v1630
        %v8392 = vrot.slane %v1630, 4
        %v8393 = vsel %vm1746, %v1726, %v8392
        %v8395 = vunpack.c.l.s4 1983009808
        %v8396 = vunpack.c.0.s8 %v8395
        %v8397 = vperm.slane %v8391, %v8396
        %v8399 = vunpack.c.l.s4 1983009808
        %v8400 = vunpack.c.0.s8 %v8399
        %v8401 = vperm.slane %v8393, %v8400
        %v8402 = vrot.slane %v8373, 4
        %v8403 = vsel %vm1746, %v8402, %v8361
        %v8404 = vrot.slane %v8361, 4
        %v8405 = vsel %vm1746, %v8373, %v8404
        %v8407 = vunpack.c.l.s4 1934713408
        %v8408 = vunpack.c.0.s8 %v8407
        %v8409 = vperm.slane %v8403, %v8408
        %v8411 = vunpack.c.l.s4 1934713408
        %v8412 = vunpack.c.0.s8 %v8411
        %v8413 = vperm.slane %v8405, %v8412
        %v8414 = vrot.slane %v8377, 4
        %v8415 = vsel %vm1746, %v8414, %v8365
        %v8416 = vrot.slane %v8365, 4
        %v8417 = vsel %vm1746, %v8377, %v8416
        %v8419 = vunpack.c.l.s4 1934713408
        %v8420 = vunpack.c.0.s8 %v8419
        %v8421 = vperm.slane %v8415, %v8420
        %v8423 = vunpack.c.l.s4 1934713408
        %v8424 = vunpack.c.0.s8 %v8423
        %v8425 = vperm.slane %v8417, %v8424
        %v8426 = vrot.slane %v8397, 4
        %v8427 = vsel %vm1746, %v8426, %v8385
        %v8428 = vrot.slane %v8385, 4
        %v8429 = vsel %vm1746, %v8397, %v8428
        %v8431 = vunpack.c.l.s4 1934713408
        %v8432 = vunpack.c.0.s8 %v8431
        %v8433 = vperm.slane %v8427, %v8432
        %v8435 = vunpack.c.l.s4 1934713408
        %v8436 = vunpack.c.0.s8 %v8435
        %v8437 = vperm.slane %v8429, %v8436
        %v8438 = vrot.slane %v8401, 4
        %v8439 = vsel %vm1746, %v8438, %v8389
        %v8440 = vrot.slane %v8389, 4
        %v8441 = vsel %vm1746, %v8401, %v8440
        %v8443 = vunpack.c.l.s4 1934713408
        %v8444 = vunpack.c.0.s8 %v8443
        %v8445 = vperm.slane %v8439, %v8444
        %v8447 = vunpack.c.l.s4 1934713408
        %v8448 = vunpack.c.0.s8 %v8447
        %v8449 = vperm.slane %v8441, %v8448
        %v8450 = vrot.slane %v8433, 4
        %v8451 = vsel %vm1746, %v8450, %v8409
        %v8452 = vrot.slane %v8409, 4
        %v8453 = vsel %vm1746, %v8433, %v8452
        %v8454 = vrot.slane %v8437, 4
        %v8455 = vsel %vm1746, %v8454, %v8413
        %v8456 = vrot.slane %v8413, 4
        %v8457 = vsel %vm1746, %v8437, %v8456
        %v8458 = vrot.slane %v8445, 4
        %v8459 = vsel %vm1746, %v8458, %v8421
        %v8460 = vrot.slane %v8421, 4
        %v8461 = vsel %vm1746, %v8445, %v8460
        %v8462 = vrot.slane %v8449, 4
        %v8463 = vsel %vm1746, %v8462, %v8425
        %v8464 = vrot.slane %v8425, 4
        %v8465 = vsel %vm1746, %v8449, %v8464
        %v8466 = vrot.slane %v336, 4
        %v8467 = vsel %vm1746, %v8466, %v240
        %v8468 = vrot.slane %v240, 4
        %v8469 = vsel %vm1746, %v336, %v8468
        %v8471 = vunpack.c.l.s4 1983009808
        %v8472 = vunpack.c.0.s8 %v8471
        %v8473 = vperm.slane %v8467, %v8472
        %v8475 = vunpack.c.l.s4 1983009808
        %v8476 = vunpack.c.0.s8 %v8475
        %v8477 = vperm.slane %v8469, %v8476
        %v8478 = vrot.slane %v384, 4
        %v8479 = vsel %vm1746, %v8478, %v288
        %v8480 = vrot.slane %v288, 4
        %v8481 = vsel %vm1746, %v384, %v8480
        %v8483 = vunpack.c.l.s4 1983009808
        %v8484 = vunpack.c.0.s8 %v8483
        %v8485 = vperm.slane %v8479, %v8484
        %v8487 = vunpack.c.l.s4 1983009808
        %v8488 = vunpack.c.0.s8 %v8487
        %v8489 = vperm.slane %v8481, %v8488
        %v8490 = vrot.slane %v528, 4
        %v8491 = vsel %vm1746, %v8490, %v432
        %v8492 = vrot.slane %v432, 4
        %v8493 = vsel %vm1746, %v528, %v8492
        %v8495 = vunpack.c.l.s4 1983009808
        %v8496 = vunpack.c.0.s8 %v8495
        %v8497 = vperm.slane %v8491, %v8496
        %v8499 = vunpack.c.l.s4 1983009808
        %v8500 = vunpack.c.0.s8 %v8499
        %v8501 = vperm.slane %v8493, %v8500
        %v8502 = vrot.slane %v576, 4
        %v8503 = vsel %vm1746, %v8502, %v480
        %v8504 = vrot.slane %v480, 4
        %v8505 = vsel %vm1746, %v576, %v8504
        %v8507 = vunpack.c.l.s4 1983009808
        %v8508 = vunpack.c.0.s8 %v8507
        %v8509 = vperm.slane %v8503, %v8508
        %v8511 = vunpack.c.l.s4 1983009808
        %v8512 = vunpack.c.0.s8 %v8511
        %v8513 = vperm.slane %v8505, %v8512
        %v8514 = vrot.slane %v8485, 4
        %v8515 = vsel %vm1746, %v8514, %v8473
        %v8516 = vrot.slane %v8473, 4
        %v8517 = vsel %vm1746, %v8485, %v8516
        %v8519 = vunpack.c.l.s4 1934713408
        %v8520 = vunpack.c.0.s8 %v8519
        %v8521 = vperm.slane %v8515, %v8520
        %v8523 = vunpack.c.l.s4 1934713408
        %v8524 = vunpack.c.0.s8 %v8523
        %v8525 = vperm.slane %v8517, %v8524
        %v8526 = vrot.slane %v8489, 4
        %v8527 = vsel %vm1746, %v8526, %v8477
        %v8528 = vrot.slane %v8477, 4
        %v8529 = vsel %vm1746, %v8489, %v8528
        %v8531 = vunpack.c.l.s4 1934713408
        %v8532 = vunpack.c.0.s8 %v8531
        %v8533 = vperm.slane %v8527, %v8532
        %v8535 = vunpack.c.l.s4 1934713408
        %v8536 = vunpack.c.0.s8 %v8535
        %v8537 = vperm.slane %v8529, %v8536
        %v8538 = vrot.slane %v8509, 4
        %v8539 = vsel %vm1746, %v8538, %v8497
        %v8540 = vrot.slane %v8497, 4
        %v8541 = vsel %vm1746, %v8509, %v8540
        %v8543 = vunpack.c.l.s4 1934713408
        %v8544 = vunpack.c.0.s8 %v8543
        %v8545 = vperm.slane %v8539, %v8544
        %v8547 = vunpack.c.l.s4 1934713408
        %v8548 = vunpack.c.0.s8 %v8547
        %v8549 = vperm.slane %v8541, %v8548
        %v8550 = vrot.slane %v8513, 4
        %v8551 = vsel %vm1746, %v8550, %v8501
        %v8552 = vrot.slane %v8501, 4
        %v8553 = vsel %vm1746, %v8513, %v8552
        %v8555 = vunpack.c.l.s4 1934713408
        %v8556 = vunpack.c.0.s8 %v8555
        %v8557 = vperm.slane %v8551, %v8556
        %v8559 = vunpack.c.l.s4 1934713408
        %v8560 = vunpack.c.0.s8 %v8559
        %v8561 = vperm.slane %v8553, %v8560
        %v8562 = vrot.slane %v8545, 4
        %v8563 = vsel %vm1746, %v8562, %v8521
        %v8564 = vrot.slane %v8521, 4
        %v8565 = vsel %vm1746, %v8545, %v8564
        %v8566 = vrot.slane %v8549, 4
        %v8567 = vsel %vm1746, %v8566, %v8525
        %v8568 = vrot.slane %v8525, 4
        %v8569 = vsel %vm1746, %v8549, %v8568
        %v8570 = vrot.slane %v8557, 4
        %v8571 = vsel %vm1746, %v8570, %v8533
        %v8572 = vrot.slane %v8533, 4
        %v8573 = vsel %vm1746, %v8557, %v8572
        %v8574 = vrot.slane %v8561, 4
        %v8575 = vsel %vm1746, %v8574, %v8537
        %v8576 = vrot.slane %v8537, 4
        %v8577 = vsel %vm1746, %v8561, %v8576
        %v8578 = vrot.slane %v720, 4
        %v8579 = vsel %vm1746, %v8578, %v624
        %v8580 = vrot.slane %v624, 4
        %v8581 = vsel %vm1746, %v720, %v8580
        %v8583 = vunpack.c.l.s4 1983009808
        %v8584 = vunpack.c.0.s8 %v8583
        %v8585 = vperm.slane %v8579, %v8584
        %v8587 = vunpack.c.l.s4 1983009808
        %v8588 = vunpack.c.0.s8 %v8587
        %v8589 = vperm.slane %v8581, %v8588
        %v8590 = vrot.slane %v768, 4
        %v8591 = vsel %vm1746, %v8590, %v672
        %v8592 = vrot.slane %v672, 4
        %v8593 = vsel %vm1746, %v768, %v8592
        %v8595 = vunpack.c.l.s4 1983009808
        %v8596 = vunpack.c.0.s8 %v8595
        %v8597 = vperm.slane %v8591, %v8596
        %v8599 = vunpack.c.l.s4 1983009808
        %v8600 = vunpack.c.0.s8 %v8599
        %v8601 = vperm.slane %v8593, %v8600
        %v8602 = vrot.slane %v912, 4
        %v8603 = vsel %vm1746, %v8602, %v816
        %v8604 = vrot.slane %v816, 4
        %v8605 = vsel %vm1746, %v912, %v8604
        %v8607 = vunpack.c.l.s4 1983009808
        %v8608 = vunpack.c.0.s8 %v8607
        %v8609 = vperm.slane %v8603, %v8608
        %v8611 = vunpack.c.l.s4 1983009808
        %v8612 = vunpack.c.0.s8 %v8611
        %v8613 = vperm.slane %v8605, %v8612
        %v8614 = vrot.slane %v960, 4
        %v8615 = vsel %vm1746, %v8614, %v864
        %v8616 = vrot.slane %v864, 4
        %v8617 = vsel %vm1746, %v960, %v8616
        %v8619 = vunpack.c.l.s4 1983009808
        %v8620 = vunpack.c.0.s8 %v8619
        %v8621 = vperm.slane %v8615, %v8620
        %v8623 = vunpack.c.l.s4 1983009808
        %v8624 = vunpack.c.0.s8 %v8623
        %v8625 = vperm.slane %v8617, %v8624
        %v8626 = vrot.slane %v8597, 4
        %v8627 = vsel %vm1746, %v8626, %v8585
        %v8628 = vrot.slane %v8585, 4
        %v8629 = vsel %vm1746, %v8597, %v8628
        %v8631 = vunpack.c.l.s4 1934713408
        %v8632 = vunpack.c.0.s8 %v8631
        %v8633 = vperm.slane %v8627, %v8632
        %v8635 = vunpack.c.l.s4 1934713408
        %v8636 = vunpack.c.0.s8 %v8635
        %v8637 = vperm.slane %v8629, %v8636
        %v8638 = vrot.slane %v8601, 4
        %v8639 = vsel %vm1746, %v8638, %v8589
        %v8640 = vrot.slane %v8589, 4
        %v8641 = vsel %vm1746, %v8601, %v8640
        %v8643 = vunpack.c.l.s4 1934713408
        %v8644 = vunpack.c.0.s8 %v8643
        %v8645 = vperm.slane %v8639, %v8644
        %v8647 = vunpack.c.l.s4 1934713408
        %v8648 = vunpack.c.0.s8 %v8647
        %v8649 = vperm.slane %v8641, %v8648
        %v8650 = vrot.slane %v8621, 4
        %v8651 = vsel %vm1746, %v8650, %v8609
        %v8652 = vrot.slane %v8609, 4
        %v8653 = vsel %vm1746, %v8621, %v8652
        %v8655 = vunpack.c.l.s4 1934713408
        %v8656 = vunpack.c.0.s8 %v8655
        %v8657 = vperm.slane %v8651, %v8656
        %v8659 = vunpack.c.l.s4 1934713408
        %v8660 = vunpack.c.0.s8 %v8659
        %v8661 = vperm.slane %v8653, %v8660
        %v8662 = vrot.slane %v8625, 4
        %v8663 = vsel %vm1746, %v8662, %v8613
        %v8664 = vrot.slane %v8613, 4
        %v8665 = vsel %vm1746, %v8625, %v8664
        %v8667 = vunpack.c.l.s4 1934713408
        %v8668 = vunpack.c.0.s8 %v8667
        %v8669 = vperm.slane %v8663, %v8668
        %v8671 = vunpack.c.l.s4 1934713408
        %v8672 = vunpack.c.0.s8 %v8671
        %v8673 = vperm.slane %v8665, %v8672
        %v8674 = vrot.slane %v8657, 4
        %v8675 = vsel %vm1746, %v8674, %v8633
        %v8676 = vrot.slane %v8633, 4
        %v8677 = vsel %vm1746, %v8657, %v8676
        %v8678 = vrot.slane %v8661, 4
        %v8679 = vsel %vm1746, %v8678, %v8637
        %v8680 = vrot.slane %v8637, 4
        %v8681 = vsel %vm1746, %v8661, %v8680
        %v8682 = vrot.slane %v8669, 4
        %v8683 = vsel %vm1746, %v8682, %v8645
        %v8684 = vrot.slane %v8645, 4
        %v8685 = vsel %vm1746, %v8669, %v8684
        %v8686 = vrot.slane %v8673, 4
        %v8687 = vsel %vm1746, %v8686, %v8649
        %v8688 = vrot.slane %v8649, 4
        %v8689 = vsel %vm1746, %v8673, %v8688
        %v8690 = vrot.slane %v1104, 4
        %v8691 = vsel %vm1746, %v8690, %v1008
        %v8692 = vrot.slane %v1008, 4
        %v8693 = vsel %vm1746, %v1104, %v8692
        %v8695 = vunpack.c.l.s4 1983009808
        %v8696 = vunpack.c.0.s8 %v8695
        %v8697 = vperm.slane %v8691, %v8696
        %v8699 = vunpack.c.l.s4 1983009808
        %v8700 = vunpack.c.0.s8 %v8699
        %v8701 = vperm.slane %v8693, %v8700
        %v8702 = vrot.slane %v1152, 4
        %v8703 = vsel %vm1746, %v8702, %v1056
        %v8704 = vrot.slane %v1056, 4
        %v8705 = vsel %vm1746, %v1152, %v8704
        %v8707 = vunpack.c.l.s4 1983009808
        %v8708 = vunpack.c.0.s8 %v8707
        %v8709 = vperm.slane %v8703, %v8708
        %v8711 = vunpack.c.l.s4 1983009808
        %v8712 = vunpack.c.0.s8 %v8711
        %v8713 = vperm.slane %v8705, %v8712
        %v8714 = vrot.slane %v1296, 4
        %v8715 = vsel %vm1746, %v8714, %v1200
        %v8716 = vrot.slane %v1200, 4
        %v8717 = vsel %vm1746, %v1296, %v8716
        %v8719 = vunpack.c.l.s4 1983009808
        %v8720 = vunpack.c.0.s8 %v8719
        %v8721 = vperm.slane %v8715, %v8720
        %v8723 = vunpack.c.l.s4 1983009808
        %v8724 = vunpack.c.0.s8 %v8723
        %v8725 = vperm.slane %v8717, %v8724
        %v8726 = vrot.slane %v1344, 4
        %v8727 = vsel %vm1746, %v8726, %v1248
        %v8728 = vrot.slane %v1248, 4
        %v8729 = vsel %vm1746, %v1344, %v8728
        %v8731 = vunpack.c.l.s4 1983009808
        %v8732 = vunpack.c.0.s8 %v8731
        %v8733 = vperm.slane %v8727, %v8732
        %v8735 = vunpack.c.l.s4 1983009808
        %v8736 = vunpack.c.0.s8 %v8735
        %v8737 = vperm.slane %v8729, %v8736
        %v8738 = vrot.slane %v8709, 4
        %v8739 = vsel %vm1746, %v8738, %v8697
        %v8740 = vrot.slane %v8697, 4
        %v8741 = vsel %vm1746, %v8709, %v8740
        %v8743 = vunpack.c.l.s4 1934713408
        %v8744 = vunpack.c.0.s8 %v8743
        %v8745 = vperm.slane %v8739, %v8744
        %v8747 = vunpack.c.l.s4 1934713408
        %v8748 = vunpack.c.0.s8 %v8747
        %v8749 = vperm.slane %v8741, %v8748
        %v8750 = vrot.slane %v8713, 4
        %v8751 = vsel %vm1746, %v8750, %v8701
        %v8752 = vrot.slane %v8701, 4
        %v8753 = vsel %vm1746, %v8713, %v8752
        %v8755 = vunpack.c.l.s4 1934713408
        %v8756 = vunpack.c.0.s8 %v8755
        %v8757 = vperm.slane %v8751, %v8756
        %v8759 = vunpack.c.l.s4 1934713408
        %v8760 = vunpack.c.0.s8 %v8759
        %v8761 = vperm.slane %v8753, %v8760
        %v8762 = vrot.slane %v8733, 4
        %v8763 = vsel %vm1746, %v8762, %v8721
        %v8764 = vrot.slane %v8721, 4
        %v8765 = vsel %vm1746, %v8733, %v8764
        %v8767 = vunpack.c.l.s4 1934713408
        %v8768 = vunpack.c.0.s8 %v8767
        %v8769 = vperm.slane %v8763, %v8768
        %v8771 = vunpack.c.l.s4 1934713408
        %v8772 = vunpack.c.0.s8 %v8771
        %v8773 = vperm.slane %v8765, %v8772
        %v8774 = vrot.slane %v8737, 4
        %v8775 = vsel %vm1746, %v8774, %v8725
        %v8776 = vrot.slane %v8725, 4
        %v8777 = vsel %vm1746, %v8737, %v8776
        %v8779 = vunpack.c.l.s4 1934713408
        %v8780 = vunpack.c.0.s8 %v8779
        %v8781 = vperm.slane %v8775, %v8780
        %v8783 = vunpack.c.l.s4 1934713408
        %v8784 = vunpack.c.0.s8 %v8783
        %v8785 = vperm.slane %v8777, %v8784
        %v8786 = vrot.slane %v8769, 4
        %v8787 = vsel %vm1746, %v8786, %v8745
        %v8788 = vrot.slane %v8745, 4
        %v8789 = vsel %vm1746, %v8769, %v8788
        %v8790 = vrot.slane %v8773, 4
        %v8791 = vsel %vm1746, %v8790, %v8749
        %v8792 = vrot.slane %v8749, 4
        %v8793 = vsel %vm1746, %v8773, %v8792
        %v8794 = vrot.slane %v8781, 4
        %v8795 = vsel %vm1746, %v8794, %v8757
        %v8796 = vrot.slane %v8757, 4
        %v8797 = vsel %vm1746, %v8781, %v8796
        %v8798 = vrot.slane %v8785, 4
        %v8799 = vsel %vm1746, %v8798, %v8761
        %v8800 = vrot.slane %v8761, 4
        %v8801 = vsel %vm1746, %v8785, %v8800
        %v8802 = vrot.slane %v1488, 4
        %v8803 = vsel %vm1746, %v8802, %v1392
        %v8804 = vrot.slane %v1392, 4
        %v8805 = vsel %vm1746, %v1488, %v8804
        %v8807 = vunpack.c.l.s4 1983009808
        %v8808 = vunpack.c.0.s8 %v8807
        %v8809 = vperm.slane %v8803, %v8808
        %v8811 = vunpack.c.l.s4 1983009808
        %v8812 = vunpack.c.0.s8 %v8811
        %v8813 = vperm.slane %v8805, %v8812
        %v8814 = vrot.slane %v1536, 4
        %v8815 = vsel %vm1746, %v8814, %v1440
        %v8816 = vrot.slane %v1440, 4
        %v8817 = vsel %vm1746, %v1536, %v8816
        %v8819 = vunpack.c.l.s4 1983009808
        %v8820 = vunpack.c.0.s8 %v8819
        %v8821 = vperm.slane %v8815, %v8820
        %v8823 = vunpack.c.l.s4 1983009808
        %v8824 = vunpack.c.0.s8 %v8823
        %v8825 = vperm.slane %v8817, %v8824
        %v8826 = vrot.slane %v1680, 4
        %v8827 = vsel %vm1746, %v8826, %v1584
        %v8828 = vrot.slane %v1584, 4
        %v8829 = vsel %vm1746, %v1680, %v8828
        %v8831 = vunpack.c.l.s4 1983009808
        %v8832 = vunpack.c.0.s8 %v8831
        %v8833 = vperm.slane %v8827, %v8832
        %v8835 = vunpack.c.l.s4 1983009808
        %v8836 = vunpack.c.0.s8 %v8835
        %v8837 = vperm.slane %v8829, %v8836
        %v8838 = vrot.slane %v1728, 4
        %v8839 = vsel %vm1746, %v8838, %v1632
        %v8840 = vrot.slane %v1632, 4
        %v8841 = vsel %vm1746, %v1728, %v8840
        %v8843 = vunpack.c.l.s4 1983009808
        %v8844 = vunpack.c.0.s8 %v8843
        %v8845 = vperm.slane %v8839, %v8844
        %v8847 = vunpack.c.l.s4 1983009808
        %v8848 = vunpack.c.0.s8 %v8847
        %v8849 = vperm.slane %v8841, %v8848
        %v8850 = vrot.slane %v8821, 4
        %v8851 = vsel %vm1746, %v8850, %v8809
        %v8852 = vrot.slane %v8809, 4
        %v8853 = vsel %vm1746, %v8821, %v8852
        %v8855 = vunpack.c.l.s4 1934713408
        %v8856 = vunpack.c.0.s8 %v8855
        %v8857 = vperm.slane %v8851, %v8856
        %v8859 = vunpack.c.l.s4 1934713408
        %v8860 = vunpack.c.0.s8 %v8859
        %v8861 = vperm.slane %v8853, %v8860
        %v8862 = vrot.slane %v8825, 4
        %v8863 = vsel %vm1746, %v8862, %v8813
        %v8864 = vrot.slane %v8813, 4
        %v8865 = vsel %vm1746, %v8825, %v8864
        %v8867 = vunpack.c.l.s4 1934713408
        %v8868 = vunpack.c.0.s8 %v8867
        %v8869 = vperm.slane %v8863, %v8868
        %v8871 = vunpack.c.l.s4 1934713408
        %v8872 = vunpack.c.0.s8 %v8871
        %v8873 = vperm.slane %v8865, %v8872
        %v8874 = vrot.slane %v8845, 4
        %v8875 = vsel %vm1746, %v8874, %v8833
        %v8876 = vrot.slane %v8833, 4
        %v8877 = vsel %vm1746, %v8845, %v8876
        %v8879 = vunpack.c.l.s4 1934713408
        %v8880 = vunpack.c.0.s8 %v8879
        %v8881 = vperm.slane %v8875, %v8880
        %v8883 = vunpack.c.l.s4 1934713408
        %v8884 = vunpack.c.0.s8 %v8883
        %v8885 = vperm.slane %v8877, %v8884
        %v8886 = vrot.slane %v8849, 4
        %v8887 = vsel %vm1746, %v8886, %v8837
        %v8888 = vrot.slane %v8837, 4
        %v8889 = vsel %vm1746, %v8849, %v8888
        %v8891 = vunpack.c.l.s4 1934713408
        %v8892 = vunpack.c.0.s8 %v8891
        %v8893 = vperm.slane %v8887, %v8892
        %v8895 = vunpack.c.l.s4 1934713408
        %v8896 = vunpack.c.0.s8 %v8895
        %v8897 = vperm.slane %v8889, %v8896
        %v8898 = vrot.slane %v8881, 4
        %v8899 = vsel %vm1746, %v8898, %v8857
        %v8900 = vrot.slane %v8857, 4
        %v8901 = vsel %vm1746, %v8881, %v8900
        %v8902 = vrot.slane %v8885, 4
        %v8903 = vsel %vm1746, %v8902, %v8861
        %v8904 = vrot.slane %v8861, 4
        %v8905 = vsel %vm1746, %v8885, %v8904
        %v8906 = vrot.slane %v8893, 4
        %v8907 = vsel %vm1746, %v8906, %v8869
        %v8908 = vrot.slane %v8869, 4
        %v8909 = vsel %vm1746, %v8893, %v8908
        %v8910 = vrot.slane %v8897, 4
        %v8911 = vsel %vm1746, %v8910, %v8873
        %v8912 = vrot.slane %v8873, 4
        %v8913 = vsel %vm1746, %v8897, %v8912
        %vm8914 = vcmask 15360
        %v8915 = vsel %vm8914, %v1843, -inf
        %8916 = vmax.xlane.f32.xlu0 %v8915
        %v8917 = vpop.xlane.xlu0 %8916
        %v8918 = vsel %vm8914, %v1955, -inf
        %8919 = vmax.xlane.f32.xlu0 %v8918
        %v8920 = vpop.xlane.xlu0 %8919
        %v8921 = vsel %vm8914, %v2067, -inf
        %8922 = vmax.xlane.f32.xlu0 %v8921
        %v8923 = vpop.xlane.xlu0 %8922
        %v8924 = vsel %vm8914, %v2179, -inf
        %8925 = vmax.xlane.f32.xlu0 %v8924
        %v8926 = vpop.xlane.xlu0 %8925
        %v8927 = vsel %vm8914, %v1845, -inf
        %8928 = vmax.xlane.f32.xlu0 %v8927
        %v8929 = vpop.xlane.xlu0 %8928
        %v8930 = vsel %vm8914, %v1957, -inf
        %8931 = vmax.xlane.f32.xlu0 %v8930
        %v8932 = vpop.xlane.xlu0 %8931
        %v8933 = vsel %vm8914, %v2069, -inf
        %8934 = vmax.xlane.f32.xlu0 %v8933
        %v8935 = vpop.xlane.xlu0 %8934
        %v8936 = vsel %vm8914, %v2181, -inf
        %8937 = vmax.xlane.f32.xlu0 %v8936
        %v8938 = vpop.xlane.xlu0 %8937
        %v8939 = vsel %vm8914, %v1847, -inf
        %8940 = vmax.xlane.f32.xlu0 %v8939
        %v8941 = vpop.xlane.xlu0 %8940
        %v8942 = vsel %vm8914, %v1959, -inf
        %8943 = vmax.xlane.f32.xlu0 %v8942
        %v8944 = vpop.xlane.xlu0 %8943
        %v8945 = vsel %vm8914, %v2071, -inf
        %8946 = vmax.xlane.f32.xlu0 %v8945
        %v8947 = vpop.xlane.xlu0 %8946
        %v8948 = vsel %vm8914, %v2183, -inf
        %8949 = vmax.xlane.f32.xlu0 %v8948
        %v8950 = vpop.xlane.xlu0 %8949
        %v8951 = vsel %vm8914, %v1849, -inf
        %8952 = vmax.xlane.f32.xlu0 %v8951
        %v8953 = vpop.xlane.xlu0 %8952
        %v8954 = vsel %vm8914, %v1961, -inf
        %8955 = vmax.xlane.f32.xlu0 %v8954
        %v8956 = vpop.xlane.xlu0 %8955
        %v8957 = vsel %vm8914, %v2073, -inf
        %8958 = vmax.xlane.f32.xlu0 %v8957
        %v8959 = vpop.xlane.xlu0 %8958
        %v8960 = vsel %vm8914, %v2185, -inf
        %8961 = vmax.xlane.f32.xlu0 %v8960
        %v8962 = vpop.xlane.xlu0 %8961
        %v8963 = vsel %vm8914, %v1851, -inf
        %8964 = vmax.xlane.f32.xlu0 %v8963
        %v8965 = vpop.xlane.xlu0 %8964
        %v8966 = vsel %vm8914, %v1963, -inf
        %8967 = vmax.xlane.f32.xlu0 %v8966
        %v8968 = vpop.xlane.xlu0 %8967
        %v8969 = vsel %vm8914, %v2075, -inf
        %8970 = vmax.xlane.f32.xlu0 %v8969
        %v8971 = vpop.xlane.xlu0 %8970
        %v8972 = vsel %vm8914, %v2187, -inf
        %8973 = vmax.xlane.f32.xlu0 %v8972
        %v8974 = vpop.xlane.xlu0 %8973
        %v8975 = vsel %vm8914, %v1853, -inf
        %8976 = vmax.xlane.f32.xlu0 %v8975
        %v8977 = vpop.xlane.xlu0 %8976
        %v8978 = vsel %vm8914, %v1965, -inf
        %8979 = vmax.xlane.f32.xlu0 %v8978
        %v8980 = vpop.xlane.xlu0 %8979
        %v8981 = vsel %vm8914, %v2077, -inf
        %8982 = vmax.xlane.f32.xlu0 %v8981
        %v8983 = vpop.xlane.xlu0 %8982
        %v8984 = vsel %vm8914, %v2189, -inf
        %8985 = vmax.xlane.f32.xlu0 %v8984
        %v8986 = vpop.xlane.xlu0 %8985
        %v8987 = vsel %vm8914, %v1855, -inf
        %8988 = vmax.xlane.f32.xlu0 %v8987
        %v8989 = vpop.xlane.xlu0 %8988
        %v8990 = vsel %vm8914, %v1967, -inf
        %8991 = vmax.xlane.f32.xlu0 %v8990
        %v8992 = vpop.xlane.xlu0 %8991
        %v8993 = vsel %vm8914, %v2079, -inf
        %8994 = vmax.xlane.f32.xlu0 %v8993
        %v8995 = vpop.xlane.xlu0 %8994
        %v8996 = vsel %vm8914, %v2191, -inf
        %8997 = vmax.xlane.f32.xlu0 %v8996
        %v8998 = vpop.xlane.xlu0 %8997
        %v8999 = vsel %vm8914, %v1857, -inf
        %9000 = vmax.xlane.f32.xlu0 %v8999
        %v9001 = vpop.xlane.xlu0 %9000
        %v9002 = vsel %vm8914, %v1969, -inf
        %9003 = vmax.xlane.f32.xlu0 %v9002
        %v9004 = vpop.xlane.xlu0 %9003
        %v9005 = vsel %vm8914, %v2081, -inf
        %9006 = vmax.xlane.f32.xlu0 %v9005
        %v9007 = vpop.xlane.xlu0 %9006
        %v9008 = vsel %vm8914, %v2193, -inf
        %9009 = vmax.xlane.f32.xlu0 %v9008
        %v9010 = vpop.xlane.xlu0 %9009
        %v9011 = vsel %vm8914, %v2291, -inf
        %9012 = vmax.xlane.f32.xlu0 %v9011
        %v9013 = vpop.xlane.xlu0 %9012
        %v9014 = vsel %vm8914, %v2403, -inf
        %9015 = vmax.xlane.f32.xlu0 %v9014
        %v9016 = vpop.xlane.xlu0 %9015
        %v9017 = vsel %vm8914, %v2515, -inf
        %9018 = vmax.xlane.f32.xlu0 %v9017
        %v9019 = vpop.xlane.xlu0 %9018
        %v9020 = vsel %vm8914, %v2627, -inf
        %9021 = vmax.xlane.f32.xlu0 %v9020
        %v9022 = vpop.xlane.xlu0 %9021
        %v9023 = vsel %vm8914, %v2293, -inf
        %9024 = vmax.xlane.f32.xlu0 %v9023
        %v9025 = vpop.xlane.xlu0 %9024
        %v9026 = vsel %vm8914, %v2405, -inf
        %9027 = vmax.xlane.f32.xlu0 %v9026
        %v9028 = vpop.xlane.xlu0 %9027
        %v9029 = vsel %vm8914, %v2517, -inf
        %9030 = vmax.xlane.f32.xlu0 %v9029
        %v9031 = vpop.xlane.xlu0 %9030
        %v9032 = vsel %vm8914, %v2629, -inf
        %9033 = vmax.xlane.f32.xlu0 %v9032
        %v9034 = vpop.xlane.xlu0 %9033
        %v9035 = vsel %vm8914, %v2295, -inf
        %9036 = vmax.xlane.f32.xlu0 %v9035
        %v9037 = vpop.xlane.xlu0 %9036
        %v9038 = vsel %vm8914, %v2407, -inf
        %9039 = vmax.xlane.f32.xlu0 %v9038
        %v9040 = vpop.xlane.xlu0 %9039
        %v9041 = vsel %vm8914, %v2519, -inf
        %9042 = vmax.xlane.f32.xlu0 %v9041
        %v9043 = vpop.xlane.xlu0 %9042
        %v9044 = vsel %vm8914, %v2631, -inf
        %9045 = vmax.xlane.f32.xlu0 %v9044
        %v9046 = vpop.xlane.xlu0 %9045
        %v9047 = vsel %vm8914, %v2297, -inf
        %9048 = vmax.xlane.f32.xlu0 %v9047
        %v9049 = vpop.xlane.xlu0 %9048
        %v9050 = vsel %vm8914, %v2409, -inf
        %9051 = vmax.xlane.f32.xlu0 %v9050
        %v9052 = vpop.xlane.xlu0 %9051
        %v9053 = vsel %vm8914, %v2521, -inf
        %9054 = vmax.xlane.f32.xlu0 %v9053
        %v9055 = vpop.xlane.xlu0 %9054
        %v9056 = vsel %vm8914, %v2633, -inf
        %9057 = vmax.xlane.f32.xlu0 %v9056
        %v9058 = vpop.xlane.xlu0 %9057
        %v9059 = vsel %vm8914, %v2299, -inf
        %9060 = vmax.xlane.f32.xlu0 %v9059
        %v9061 = vpop.xlane.xlu0 %9060
        %v9062 = vsel %vm8914, %v2411, -inf
        %9063 = vmax.xlane.f32.xlu0 %v9062
        %v9064 = vpop.xlane.xlu0 %9063
        %v9065 = vsel %vm8914, %v2523, -inf
        %9066 = vmax.xlane.f32.xlu0 %v9065
        %v9067 = vpop.xlane.xlu0 %9066
        %v9068 = vsel %vm8914, %v2635, -inf
        %9069 = vmax.xlane.f32.xlu0 %v9068
        %v9070 = vpop.xlane.xlu0 %9069
        %v9071 = vsel %vm8914, %v2301, -inf
        %9072 = vmax.xlane.f32.xlu0 %v9071
        %v9073 = vpop.xlane.xlu0 %9072
        %v9074 = vsel %vm8914, %v2413, -inf
        %9075 = vmax.xlane.f32.xlu0 %v9074
        %v9076 = vpop.xlane.xlu0 %9075
        %v9077 = vsel %vm8914, %v2525, -inf
        %9078 = vmax.xlane.f32.xlu0 %v9077
        %v9079 = vpop.xlane.xlu0 %9078
        %v9080 = vsel %vm8914, %v2637, -inf
        %9081 = vmax.xlane.f32.xlu0 %v9080
        %v9082 = vpop.xlane.xlu0 %9081
        %v9083 = vsel %vm8914, %v2303, -inf
        %9084 = vmax.xlane.f32.xlu0 %v9083
        %v9085 = vpop.xlane.xlu0 %9084
        %v9086 = vsel %vm8914, %v2415, -inf
        %9087 = vmax.xlane.f32.xlu0 %v9086
        %v9088 = vpop.xlane.xlu0 %9087
        %v9089 = vsel %vm8914, %v2527, -inf
        %9090 = vmax.xlane.f32.xlu0 %v9089
        %v9091 = vpop.xlane.xlu0 %9090
        %v9092 = vsel %vm8914, %v2639, -inf
        %9093 = vmax.xlane.f32.xlu0 %v9092
        %v9094 = vpop.xlane.xlu0 %9093
        %v9095 = vsel %vm8914, %v2305, -inf
        %9096 = vmax.xlane.f32.xlu0 %v9095
        %v9097 = vpop.xlane.xlu0 %9096
        %v9098 = vsel %vm8914, %v2417, -inf
        %9099 = vmax.xlane.f32.xlu0 %v9098
        %v9100 = vpop.xlane.xlu0 %9099
        %v9101 = vsel %vm8914, %v2529, -inf
        %9102 = vmax.xlane.f32.xlu0 %v9101
        %v9103 = vpop.xlane.xlu0 %9102
        %v9104 = vsel %vm8914, %v2641, -inf
        %9105 = vmax.xlane.f32.xlu0 %v9104
        %v9106 = vpop.xlane.xlu0 %9105
        %v9107 = vsel %vm8914, %v2739, -inf
        %9108 = vmax.xlane.f32.xlu0 %v9107
        %v9109 = vpop.xlane.xlu0 %9108
        %v9110 = vsel %vm8914, %v2851, -inf
        %9111 = vmax.xlane.f32.xlu0 %v9110
        %v9112 = vpop.xlane.xlu0 %9111
        %v9113 = vsel %vm8914, %v2963, -inf
        %9114 = vmax.xlane.f32.xlu0 %v9113
        %v9115 = vpop.xlane.xlu0 %9114
        %v9116 = vsel %vm8914, %v3075, -inf
        %9117 = vmax.xlane.f32.xlu0 %v9116
        %v9118 = vpop.xlane.xlu0 %9117
        %v9119 = vsel %vm8914, %v2741, -inf
        %9120 = vmax.xlane.f32.xlu0 %v9119
        %v9121 = vpop.xlane.xlu0 %9120
        %v9122 = vsel %vm8914, %v2853, -inf
        %9123 = vmax.xlane.f32.xlu0 %v9122
        %v9124 = vpop.xlane.xlu0 %9123
        %v9125 = vsel %vm8914, %v2965, -inf
        %9126 = vmax.xlane.f32.xlu0 %v9125
        %v9127 = vpop.xlane.xlu0 %9126
        %v9128 = vsel %vm8914, %v3077, -inf
        %9129 = vmax.xlane.f32.xlu0 %v9128
        %v9130 = vpop.xlane.xlu0 %9129
        %v9131 = vsel %vm8914, %v2743, -inf
        %9132 = vmax.xlane.f32.xlu0 %v9131
        %v9133 = vpop.xlane.xlu0 %9132
        %v9134 = vsel %vm8914, %v2855, -inf
        %9135 = vmax.xlane.f32.xlu0 %v9134
        %v9136 = vpop.xlane.xlu0 %9135
        %v9137 = vsel %vm8914, %v2967, -inf
        %9138 = vmax.xlane.f32.xlu0 %v9137
        %v9139 = vpop.xlane.xlu0 %9138
        %v9140 = vsel %vm8914, %v3079, -inf
        %9141 = vmax.xlane.f32.xlu0 %v9140
        %v9142 = vpop.xlane.xlu0 %9141
        %v9143 = vsel %vm8914, %v2745, -inf
        %9144 = vmax.xlane.f32.xlu0 %v9143
        %v9145 = vpop.xlane.xlu0 %9144
        %v9146 = vsel %vm8914, %v2857, -inf
        %9147 = vmax.xlane.f32.xlu0 %v9146
        %v9148 = vpop.xlane.xlu0 %9147
        %v9149 = vsel %vm8914, %v2969, -inf
        %9150 = vmax.xlane.f32.xlu0 %v9149
        %v9151 = vpop.xlane.xlu0 %9150
        %v9152 = vsel %vm8914, %v3081, -inf
        %9153 = vmax.xlane.f32.xlu0 %v9152
        %v9154 = vpop.xlane.xlu0 %9153
        %v9155 = vsel %vm8914, %v2747, -inf
        %9156 = vmax.xlane.f32.xlu0 %v9155
        %v9157 = vpop.xlane.xlu0 %9156
        %v9158 = vsel %vm8914, %v2859, -inf
        %9159 = vmax.xlane.f32.xlu0 %v9158
        %v9160 = vpop.xlane.xlu0 %9159
        %v9161 = vsel %vm8914, %v2971, -inf
        %9162 = vmax.xlane.f32.xlu0 %v9161
        %v9163 = vpop.xlane.xlu0 %9162
        %v9164 = vsel %vm8914, %v3083, -inf
        %9165 = vmax.xlane.f32.xlu0 %v9164
        %v9166 = vpop.xlane.xlu0 %9165
        %v9167 = vsel %vm8914, %v2749, -inf
        %9168 = vmax.xlane.f32.xlu0 %v9167
        %v9169 = vpop.xlane.xlu0 %9168
        %v9170 = vsel %vm8914, %v2861, -inf
        %9171 = vmax.xlane.f32.xlu0 %v9170
        %v9172 = vpop.xlane.xlu0 %9171
        %v9173 = vsel %vm8914, %v2973, -inf
        %9174 = vmax.xlane.f32.xlu0 %v9173
        %v9175 = vpop.xlane.xlu0 %9174
        %v9176 = vsel %vm8914, %v3085, -inf
        %9177 = vmax.xlane.f32.xlu0 %v9176
        %v9178 = vpop.xlane.xlu0 %9177
        %v9179 = vsel %vm8914, %v2751, -inf
        %9180 = vmax.xlane.f32.xlu0 %v9179
        %v9181 = vpop.xlane.xlu0 %9180
        %v9182 = vsel %vm8914, %v2863, -inf
        %9183 = vmax.xlane.f32.xlu0 %v9182
        %v9184 = vpop.xlane.xlu0 %9183
        %v9185 = vsel %vm8914, %v2975, -inf
        %9186 = vmax.xlane.f32.xlu0 %v9185
        %v9187 = vpop.xlane.xlu0 %9186
        %v9188 = vsel %vm8914, %v3087, -inf
        %9189 = vmax.xlane.f32.xlu0 %v9188
        %v9190 = vpop.xlane.xlu0 %9189
        %v9191 = vsel %vm8914, %v2753, -inf
        %9192 = vmax.xlane.f32.xlu0 %v9191
        %v9193 = vpop.xlane.xlu0 %9192
        %v9194 = vsel %vm8914, %v2865, -inf
        %9195 = vmax.xlane.f32.xlu0 %v9194
        %v9196 = vpop.xlane.xlu0 %9195
        %v9197 = vsel %vm8914, %v2977, -inf
        %9198 = vmax.xlane.f32.xlu0 %v9197
        %v9199 = vpop.xlane.xlu0 %9198
        %v9200 = vsel %vm8914, %v3089, -inf
        %9201 = vmax.xlane.f32.xlu0 %v9200
        %v9202 = vpop.xlane.xlu0 %9201
        %v9203 = vsel %vm8914, %v3187, -inf
        %9204 = vmax.xlane.f32.xlu0 %v9203
        %v9205 = vpop.xlane.xlu0 %9204
        %v9206 = vsel %vm8914, %v3299, -inf
        %9207 = vmax.xlane.f32.xlu0 %v9206
        %v9208 = vpop.xlane.xlu0 %9207
        %v9209 = vsel %vm8914, %v3411, -inf
        %9210 = vmax.xlane.f32.xlu0 %v9209
        %v9211 = vpop.xlane.xlu0 %9210
        %v9212 = vsel %vm8914, %v3523, -inf
        %9213 = vmax.xlane.f32.xlu0 %v9212
        %v9214 = vpop.xlane.xlu0 %9213
        %v9215 = vsel %vm8914, %v3189, -inf
        %9216 = vmax.xlane.f32.xlu0 %v9215
        %v9217 = vpop.xlane.xlu0 %9216
        %v9218 = vsel %vm8914, %v3301, -inf
        %9219 = vmax.xlane.f32.xlu0 %v9218
        %v9220 = vpop.xlane.xlu0 %9219
        %v9221 = vsel %vm8914, %v3413, -inf
        %9222 = vmax.xlane.f32.xlu0 %v9221
        %v9223 = vpop.xlane.xlu0 %9222
        %v9224 = vsel %vm8914, %v3525, -inf
        %9225 = vmax.xlane.f32.xlu0 %v9224
        %v9226 = vpop.xlane.xlu0 %9225
        %v9227 = vsel %vm8914, %v3191, -inf
        %9228 = vmax.xlane.f32.xlu0 %v9227
        %v9229 = vpop.xlane.xlu0 %9228
        %v9230 = vsel %vm8914, %v3303, -inf
        %9231 = vmax.xlane.f32.xlu0 %v9230
        %v9232 = vpop.xlane.xlu0 %9231
        %v9233 = vsel %vm8914, %v3415, -inf
        %9234 = vmax.xlane.f32.xlu0 %v9233
        %v9235 = vpop.xlane.xlu0 %9234
        %v9236 = vsel %vm8914, %v3527, -inf
        %9237 = vmax.xlane.f32.xlu0 %v9236
        %v9238 = vpop.xlane.xlu0 %9237
        %v9239 = vsel %vm8914, %v3193, -inf
        %9240 = vmax.xlane.f32.xlu0 %v9239
        %v9241 = vpop.xlane.xlu0 %9240
        %v9242 = vsel %vm8914, %v3305, -inf
        %9243 = vmax.xlane.f32.xlu0 %v9242
        %v9244 = vpop.xlane.xlu0 %9243
        %v9245 = vsel %vm8914, %v3417, -inf
        %9246 = vmax.xlane.f32.xlu0 %v9245
        %v9247 = vpop.xlane.xlu0 %9246
        %v9248 = vsel %vm8914, %v3529, -inf
        %9249 = vmax.xlane.f32.xlu0 %v9248
        %v9250 = vpop.xlane.xlu0 %9249
        %v9251 = vsel %vm8914, %v3195, -inf
        %9252 = vmax.xlane.f32.xlu0 %v9251
        %v9253 = vpop.xlane.xlu0 %9252
        %v9254 = vsel %vm8914, %v3307, -inf
        %9255 = vmax.xlane.f32.xlu0 %v9254
        %v9256 = vpop.xlane.xlu0 %9255
        %v9257 = vsel %vm8914, %v3419, -inf
        %9258 = vmax.xlane.f32.xlu0 %v9257
        %v9259 = vpop.xlane.xlu0 %9258
        %v9260 = vsel %vm8914, %v3531, -inf
        %9261 = vmax.xlane.f32.xlu0 %v9260
        %v9262 = vpop.xlane.xlu0 %9261
        %v9263 = vsel %vm8914, %v3197, -inf
        %9264 = vmax.xlane.f32.xlu0 %v9263
        %v9265 = vpop.xlane.xlu0 %9264
        %v9266 = vsel %vm8914, %v3309, -inf
        %9267 = vmax.xlane.f32.xlu0 %v9266
        %v9268 = vpop.xlane.xlu0 %9267
        %v9269 = vsel %vm8914, %v3421, -inf
        %9270 = vmax.xlane.f32.xlu0 %v9269
        %v9271 = vpop.xlane.xlu0 %9270
        %v9272 = vsel %vm8914, %v3533, -inf
        %9273 = vmax.xlane.f32.xlu0 %v9272
        %v9274 = vpop.xlane.xlu0 %9273
        %v9275 = vsel %vm8914, %v3199, -inf
        %9276 = vmax.xlane.f32.xlu0 %v9275
        %v9277 = vpop.xlane.xlu0 %9276
        %v9278 = vsel %vm8914, %v3311, -inf
        %9279 = vmax.xlane.f32.xlu0 %v9278
        %v9280 = vpop.xlane.xlu0 %9279
        %v9281 = vsel %vm8914, %v3423, -inf
        %9282 = vmax.xlane.f32.xlu0 %v9281
        %v9283 = vpop.xlane.xlu0 %9282
        %v9284 = vsel %vm8914, %v3535, -inf
        %9285 = vmax.xlane.f32.xlu0 %v9284
        %v9286 = vpop.xlane.xlu0 %9285
        %v9287 = vsel %vm8914, %v3201, -inf
        %9288 = vmax.xlane.f32.xlu0 %v9287
        %v9289 = vpop.xlane.xlu0 %9288
        %v9290 = vsel %vm8914, %v3313, -inf
        %9291 = vmax.xlane.f32.xlu0 %v9290
        %v9292 = vpop.xlane.xlu0 %9291
        %v9293 = vsel %vm8914, %v3425, -inf
        %9294 = vmax.xlane.f32.xlu0 %v9293
        %v9295 = vpop.xlane.xlu0 %9294
        %v9296 = vsel %vm8914, %v3537, -inf
        %9297 = vmax.xlane.f32.xlu0 %v9296
        %v9298 = vpop.xlane.xlu0 %9297
        %v9299 = vsel %vm8914, %v3635, -inf
        %9300 = vmax.xlane.f32.xlu0 %v9299
        %v9301 = vpop.xlane.xlu0 %9300
        %v9302 = vsel %vm8914, %v3747, -inf
        %9303 = vmax.xlane.f32.xlu0 %v9302
        %v9304 = vpop.xlane.xlu0 %9303
        %v9305 = vsel %vm8914, %v3859, -inf
        %9306 = vmax.xlane.f32.xlu0 %v9305
        %v9307 = vpop.xlane.xlu0 %9306
        %v9308 = vsel %vm8914, %v3971, -inf
        %9309 = vmax.xlane.f32.xlu0 %v9308
        %v9310 = vpop.xlane.xlu0 %9309
        %v9311 = vsel %vm8914, %v3637, -inf
        %9312 = vmax.xlane.f32.xlu0 %v9311
        %v9313 = vpop.xlane.xlu0 %9312
        %v9314 = vsel %vm8914, %v3749, -inf
        %9315 = vmax.xlane.f32.xlu0 %v9314
        %v9316 = vpop.xlane.xlu0 %9315
        %v9317 = vsel %vm8914, %v3861, -inf
        %9318 = vmax.xlane.f32.xlu0 %v9317
        %v9319 = vpop.xlane.xlu0 %9318
        %v9320 = vsel %vm8914, %v3973, -inf
        %9321 = vmax.xlane.f32.xlu0 %v9320
        %v9322 = vpop.xlane.xlu0 %9321
        %v9323 = vsel %vm8914, %v3639, -inf
        %9324 = vmax.xlane.f32.xlu0 %v9323
        %v9325 = vpop.xlane.xlu0 %9324
        %v9326 = vsel %vm8914, %v3751, -inf
        %9327 = vmax.xlane.f32.xlu0 %v9326
        %v9328 = vpop.xlane.xlu0 %9327
        %v9329 = vsel %vm8914, %v3863, -inf
        %9330 = vmax.xlane.f32.xlu0 %v9329
        %v9331 = vpop.xlane.xlu0 %9330
        %v9332 = vsel %vm8914, %v3975, -inf
        %9333 = vmax.xlane.f32.xlu0 %v9332
        %v9334 = vpop.xlane.xlu0 %9333
        %v9335 = vsel %vm8914, %v3641, -inf
        %9336 = vmax.xlane.f32.xlu0 %v9335
        %v9337 = vpop.xlane.xlu0 %9336
        %v9338 = vsel %vm8914, %v3753, -inf
        %9339 = vmax.xlane.f32.xlu0 %v9338
        %v9340 = vpop.xlane.xlu0 %9339
        %v9341 = vsel %vm8914, %v3865, -inf
        %9342 = vmax.xlane.f32.xlu0 %v9341
        %v9343 = vpop.xlane.xlu0 %9342
        %v9344 = vsel %vm8914, %v3977, -inf
        %9345 = vmax.xlane.f32.xlu0 %v9344
        %v9346 = vpop.xlane.xlu0 %9345
        %v9347 = vsel %vm8914, %v3643, -inf
        %9348 = vmax.xlane.f32.xlu0 %v9347
        %v9349 = vpop.xlane.xlu0 %9348
        %v9350 = vsel %vm8914, %v3755, -inf
        %9351 = vmax.xlane.f32.xlu0 %v9350
        %v9352 = vpop.xlane.xlu0 %9351
        %v9353 = vsel %vm8914, %v3867, -inf
        %9354 = vmax.xlane.f32.xlu0 %v9353
        %v9355 = vpop.xlane.xlu0 %9354
        %v9356 = vsel %vm8914, %v3979, -inf
        %9357 = vmax.xlane.f32.xlu0 %v9356
        %v9358 = vpop.xlane.xlu0 %9357
        %v9359 = vsel %vm8914, %v3645, -inf
        %9360 = vmax.xlane.f32.xlu0 %v9359
        %v9361 = vpop.xlane.xlu0 %9360
        %v9362 = vsel %vm8914, %v3757, -inf
        %9363 = vmax.xlane.f32.xlu0 %v9362
        %v9364 = vpop.xlane.xlu0 %9363
        %v9365 = vsel %vm8914, %v3869, -inf
        %9366 = vmax.xlane.f32.xlu0 %v9365
        %v9367 = vpop.xlane.xlu0 %9366
        %v9368 = vsel %vm8914, %v3981, -inf
        %9369 = vmax.xlane.f32.xlu0 %v9368
        %v9370 = vpop.xlane.xlu0 %9369
        %v9371 = vsel %vm8914, %v3647, -inf
        %9372 = vmax.xlane.f32.xlu0 %v9371
        %v9373 = vpop.xlane.xlu0 %9372
        %v9374 = vsel %vm8914, %v3759, -inf
        %9375 = vmax.xlane.f32.xlu0 %v9374
        %v9376 = vpop.xlane.xlu0 %9375
        %v9377 = vsel %vm8914, %v3871, -inf
        %9378 = vmax.xlane.f32.xlu0 %v9377
        %v9379 = vpop.xlane.xlu0 %9378
        %v9380 = vsel %vm8914, %v3983, -inf
        %9381 = vmax.xlane.f32.xlu0 %v9380
        %v9382 = vpop.xlane.xlu0 %9381
        %v9383 = vsel %vm8914, %v3649, -inf
        %9384 = vmax.xlane.f32.xlu0 %v9383
        %v9385 = vpop.xlane.xlu0 %9384
        %v9386 = vsel %vm8914, %v3761, -inf
        %9387 = vmax.xlane.f32.xlu0 %v9386
        %v9388 = vpop.xlane.xlu0 %9387
        %v9389 = vsel %vm8914, %v3873, -inf
        %9390 = vmax.xlane.f32.xlu0 %v9389
        %v9391 = vpop.xlane.xlu0 %9390
        %v9392 = vsel %vm8914, %v3985, -inf
        %9393 = vmax.xlane.f32.xlu0 %v9392
        %v9394 = vpop.xlane.xlu0 %9393
        %v9395 = vsel %vm8914, %v4083, -inf
        %9396 = vmax.xlane.f32.xlu0 %v9395
        %v9397 = vpop.xlane.xlu0 %9396
        %v9398 = vsel %vm8914, %v4195, -inf
        %9399 = vmax.xlane.f32.xlu0 %v9398
        %v9400 = vpop.xlane.xlu0 %9399
        %v9401 = vsel %vm8914, %v4307, -inf
        %9402 = vmax.xlane.f32.xlu0 %v9401
        %v9403 = vpop.xlane.xlu0 %9402
        %v9404 = vsel %vm8914, %v4419, -inf
        %9405 = vmax.xlane.f32.xlu0 %v9404
        %v9406 = vpop.xlane.xlu0 %9405
        %v9407 = vsel %vm8914, %v4085, -inf
        %9408 = vmax.xlane.f32.xlu0 %v9407
        %v9409 = vpop.xlane.xlu0 %9408
        %v9410 = vsel %vm8914, %v4197, -inf
        %9411 = vmax.xlane.f32.xlu0 %v9410
        %v9412 = vpop.xlane.xlu0 %9411
        %v9413 = vsel %vm8914, %v4309, -inf
        %9414 = vmax.xlane.f32.xlu0 %v9413
        %v9415 = vpop.xlane.xlu0 %9414
        %v9416 = vsel %vm8914, %v4421, -inf
        %9417 = vmax.xlane.f32.xlu0 %v9416
        %v9418 = vpop.xlane.xlu0 %9417
        %v9419 = vsel %vm8914, %v4087, -inf
        %9420 = vmax.xlane.f32.xlu0 %v9419
        %v9421 = vpop.xlane.xlu0 %9420
        %v9422 = vsel %vm8914, %v4199, -inf
        %9423 = vmax.xlane.f32.xlu0 %v9422
        %v9424 = vpop.xlane.xlu0 %9423
        %v9425 = vsel %vm8914, %v4311, -inf
        %9426 = vmax.xlane.f32.xlu0 %v9425
        %v9427 = vpop.xlane.xlu0 %9426
        %v9428 = vsel %vm8914, %v4423, -inf
        %9429 = vmax.xlane.f32.xlu0 %v9428
        %v9430 = vpop.xlane.xlu0 %9429
        %v9431 = vsel %vm8914, %v4089, -inf
        %9432 = vmax.xlane.f32.xlu0 %v9431
        %v9433 = vpop.xlane.xlu0 %9432
        %v9434 = vsel %vm8914, %v4201, -inf
        %9435 = vmax.xlane.f32.xlu0 %v9434
        %v9436 = vpop.xlane.xlu0 %9435
        %v9437 = vsel %vm8914, %v4313, -inf
        %9438 = vmax.xlane.f32.xlu0 %v9437
        %v9439 = vpop.xlane.xlu0 %9438
        %v9440 = vsel %vm8914, %v4425, -inf
        %9441 = vmax.xlane.f32.xlu0 %v9440
        %v9442 = vpop.xlane.xlu0 %9441
        %v9443 = vsel %vm8914, %v4091, -inf
        %9444 = vmax.xlane.f32.xlu0 %v9443
        %v9445 = vpop.xlane.xlu0 %9444
        %v9446 = vsel %vm8914, %v4203, -inf
        %9447 = vmax.xlane.f32.xlu0 %v9446
        %v9448 = vpop.xlane.xlu0 %9447
        %v9449 = vsel %vm8914, %v4315, -inf
        %9450 = vmax.xlane.f32.xlu0 %v9449
        %v9451 = vpop.xlane.xlu0 %9450
        %v9452 = vsel %vm8914, %v4427, -inf
        %9453 = vmax.xlane.f32.xlu0 %v9452
        %v9454 = vpop.xlane.xlu0 %9453
        %v9455 = vsel %vm8914, %v4093, -inf
        %9456 = vmax.xlane.f32.xlu0 %v9455
        %v9457 = vpop.xlane.xlu0 %9456
        %v9458 = vsel %vm8914, %v4205, -inf
        %9459 = vmax.xlane.f32.xlu0 %v9458
        %v9460 = vpop.xlane.xlu0 %9459
        %v9461 = vsel %vm8914, %v4317, -inf
        %9462 = vmax.xlane.f32.xlu0 %v9461
        %v9463 = vpop.xlane.xlu0 %9462
        %v9464 = vsel %vm8914, %v4429, -inf
        %9465 = vmax.xlane.f32.xlu0 %v9464
        %v9466 = vpop.xlane.xlu0 %9465
        %v9467 = vsel %vm8914, %v4095, -inf
        %9468 = vmax.xlane.f32.xlu0 %v9467
        %v9469 = vpop.xlane.xlu0 %9468
        %v9470 = vsel %vm8914, %v4207, -inf
        %9471 = vmax.xlane.f32.xlu0 %v9470
        %v9472 = vpop.xlane.xlu0 %9471
        %v9473 = vsel %vm8914, %v4319, -inf
        %9474 = vmax.xlane.f32.xlu0 %v9473
        %v9475 = vpop.xlane.xlu0 %9474
        %v9476 = vsel %vm8914, %v4431, -inf
        %9477 = vmax.xlane.f32.xlu0 %v9476
        %v9478 = vpop.xlane.xlu0 %9477
        %v9479 = vsel %vm8914, %v4097, -inf
        %9480 = vmax.xlane.f32.xlu0 %v9479
        %v9481 = vpop.xlane.xlu0 %9480
        %v9482 = vsel %vm8914, %v4209, -inf
        %9483 = vmax.xlane.f32.xlu0 %v9482
        %v9484 = vpop.xlane.xlu0 %9483
        %v9485 = vsel %vm8914, %v4321, -inf
        %9486 = vmax.xlane.f32.xlu0 %v9485
        %v9487 = vpop.xlane.xlu0 %9486
        %v9488 = vsel %vm8914, %v4433, -inf
        %9489 = vmax.xlane.f32.xlu0 %v9488
        %v9490 = vpop.xlane.xlu0 %9489
        %v9491 = vsel %vm8914, %v4531, -inf
        %9492 = vmax.xlane.f32.xlu0 %v9491
        %v9493 = vpop.xlane.xlu0 %9492
        %v9494 = vsel %vm8914, %v4643, -inf
        %9495 = vmax.xlane.f32.xlu0 %v9494
        %v9496 = vpop.xlane.xlu0 %9495
        %v9497 = vsel %vm8914, %v4755, -inf
        %9498 = vmax.xlane.f32.xlu0 %v9497
        %v9499 = vpop.xlane.xlu0 %9498
        %v9500 = vsel %vm8914, %v4867, -inf
        %9501 = vmax.xlane.f32.xlu0 %v9500
        %v9502 = vpop.xlane.xlu0 %9501
        %v9503 = vsel %vm8914, %v4533, -inf
        %9504 = vmax.xlane.f32.xlu0 %v9503
        %v9505 = vpop.xlane.xlu0 %9504
        %v9506 = vsel %vm8914, %v4645, -inf
        %9507 = vmax.xlane.f32.xlu0 %v9506
        %v9508 = vpop.xlane.xlu0 %9507
        %v9509 = vsel %vm8914, %v4757, -inf
        %9510 = vmax.xlane.f32.xlu0 %v9509
        %v9511 = vpop.xlane.xlu0 %9510
        %v9512 = vsel %vm8914, %v4869, -inf
        %9513 = vmax.xlane.f32.xlu0 %v9512
        %v9514 = vpop.xlane.xlu0 %9513
        %v9515 = vsel %vm8914, %v4535, -inf
        %9516 = vmax.xlane.f32.xlu0 %v9515
        %v9517 = vpop.xlane.xlu0 %9516
        %v9518 = vsel %vm8914, %v4647, -inf
        %9519 = vmax.xlane.f32.xlu0 %v9518
        %v9520 = vpop.xlane.xlu0 %9519
        %v9521 = vsel %vm8914, %v4759, -inf
        %9522 = vmax.xlane.f32.xlu0 %v9521
        %v9523 = vpop.xlane.xlu0 %9522
        %v9524 = vsel %vm8914, %v4871, -inf
        %9525 = vmax.xlane.f32.xlu0 %v9524
        %v9526 = vpop.xlane.xlu0 %9525
        %v9527 = vsel %vm8914, %v4537, -inf
        %9528 = vmax.xlane.f32.xlu0 %v9527
        %v9529 = vpop.xlane.xlu0 %9528
        %v9530 = vsel %vm8914, %v4649, -inf
        %9531 = vmax.xlane.f32.xlu0 %v9530
        %v9532 = vpop.xlane.xlu0 %9531
        %v9533 = vsel %vm8914, %v4761, -inf
        %9534 = vmax.xlane.f32.xlu0 %v9533
        %v9535 = vpop.xlane.xlu0 %9534
        %v9536 = vsel %vm8914, %v4873, -inf
        %9537 = vmax.xlane.f32.xlu0 %v9536
        %v9538 = vpop.xlane.xlu0 %9537
        %v9539 = vsel %vm8914, %v4539, -inf
        %9540 = vmax.xlane.f32.xlu0 %v9539
        %v9541 = vpop.xlane.xlu0 %9540
        %v9542 = vsel %vm8914, %v4651, -inf
        %9543 = vmax.xlane.f32.xlu0 %v9542
        %v9544 = vpop.xlane.xlu0 %9543
        %v9545 = vsel %vm8914, %v4763, -inf
        %9546 = vmax.xlane.f32.xlu0 %v9545
        %v9547 = vpop.xlane.xlu0 %9546
        %v9548 = vsel %vm8914, %v4875, -inf
        %9549 = vmax.xlane.f32.xlu0 %v9548
        %v9550 = vpop.xlane.xlu0 %9549
        %v9551 = vsel %vm8914, %v4541, -inf
        %9552 = vmax.xlane.f32.xlu0 %v9551
        %v9553 = vpop.xlane.xlu0 %9552
        %v9554 = vsel %vm8914, %v4653, -inf
        %9555 = vmax.xlane.f32.xlu0 %v9554
        %v9556 = vpop.xlane.xlu0 %9555
        %v9557 = vsel %vm8914, %v4765, -inf
        %9558 = vmax.xlane.f32.xlu0 %v9557
        %v9559 = vpop.xlane.xlu0 %9558
        %v9560 = vsel %vm8914, %v4877, -inf
        %9561 = vmax.xlane.f32.xlu0 %v9560
        %v9562 = vpop.xlane.xlu0 %9561
        %v9563 = vsel %vm8914, %v4543, -inf
        %9564 = vmax.xlane.f32.xlu0 %v9563
        %v9565 = vpop.xlane.xlu0 %9564
        %v9566 = vsel %vm8914, %v4655, -inf
        %9567 = vmax.xlane.f32.xlu0 %v9566
        %v9568 = vpop.xlane.xlu0 %9567
        %v9569 = vsel %vm8914, %v4767, -inf
        %9570 = vmax.xlane.f32.xlu0 %v9569
        %v9571 = vpop.xlane.xlu0 %9570
        %v9572 = vsel %vm8914, %v4879, -inf
        %9573 = vmax.xlane.f32.xlu0 %v9572
        %v9574 = vpop.xlane.xlu0 %9573
        %v9575 = vsel %vm8914, %v4545, -inf
        %9576 = vmax.xlane.f32.xlu0 %v9575
        %v9577 = vpop.xlane.xlu0 %9576
        %v9578 = vsel %vm8914, %v4657, -inf
        %9579 = vmax.xlane.f32.xlu0 %v9578
        %v9580 = vpop.xlane.xlu0 %9579
        %v9581 = vsel %vm8914, %v4769, -inf
        %9582 = vmax.xlane.f32.xlu0 %v9581
        %v9583 = vpop.xlane.xlu0 %9582
        %v9584 = vsel %vm8914, %v4881, -inf
        %9585 = vmax.xlane.f32.xlu0 %v9584
        %v9586 = vpop.xlane.xlu0 %9585
        %v9587 = vsel %vm8914, %v4979, -inf
        %9588 = vmax.xlane.f32.xlu0 %v9587
        %v9589 = vpop.xlane.xlu0 %9588
        %v9590 = vsel %vm8914, %v5091, -inf
        %9591 = vmax.xlane.f32.xlu0 %v9590
        %v9592 = vpop.xlane.xlu0 %9591
        %v9593 = vsel %vm8914, %v5203, -inf
        %9594 = vmax.xlane.f32.xlu0 %v9593
        %v9595 = vpop.xlane.xlu0 %9594
        %v9596 = vsel %vm8914, %v5315, -inf
        %9597 = vmax.xlane.f32.xlu0 %v9596
        %v9598 = vpop.xlane.xlu0 %9597
        %v9599 = vsel %vm8914, %v4981, -inf
        %9600 = vmax.xlane.f32.xlu0 %v9599
        %v9601 = vpop.xlane.xlu0 %9600
        %v9602 = vsel %vm8914, %v5093, -inf
        %9603 = vmax.xlane.f32.xlu0 %v9602
        %v9604 = vpop.xlane.xlu0 %9603
        %v9605 = vsel %vm8914, %v5205, -inf
        %9606 = vmax.xlane.f32.xlu0 %v9605
        %v9607 = vpop.xlane.xlu0 %9606
        %v9608 = vsel %vm8914, %v5317, -inf
        %9609 = vmax.xlane.f32.xlu0 %v9608
        %v9610 = vpop.xlane.xlu0 %9609
        %v9611 = vsel %vm8914, %v4983, -inf
        %9612 = vmax.xlane.f32.xlu0 %v9611
        %v9613 = vpop.xlane.xlu0 %9612
        %v9614 = vsel %vm8914, %v5095, -inf
        %9615 = vmax.xlane.f32.xlu0 %v9614
        %v9616 = vpop.xlane.xlu0 %9615
        %v9617 = vsel %vm8914, %v5207, -inf
        %9618 = vmax.xlane.f32.xlu0 %v9617
        %v9619 = vpop.xlane.xlu0 %9618
        %v9620 = vsel %vm8914, %v5319, -inf
        %9621 = vmax.xlane.f32.xlu0 %v9620
        %v9622 = vpop.xlane.xlu0 %9621
        %v9623 = vsel %vm8914, %v4985, -inf
        %9624 = vmax.xlane.f32.xlu0 %v9623
        %v9625 = vpop.xlane.xlu0 %9624
        %v9626 = vsel %vm8914, %v5097, -inf
        %9627 = vmax.xlane.f32.xlu0 %v9626
        %v9628 = vpop.xlane.xlu0 %9627
        %v9629 = vsel %vm8914, %v5209, -inf
        %9630 = vmax.xlane.f32.xlu0 %v9629
        %v9631 = vpop.xlane.xlu0 %9630
        %v9632 = vsel %vm8914, %v5321, -inf
        %9633 = vmax.xlane.f32.xlu0 %v9632
        %v9634 = vpop.xlane.xlu0 %9633
        %v9635 = vsel %vm8914, %v4987, -inf
        %9636 = vmax.xlane.f32.xlu0 %v9635
        %v9637 = vpop.xlane.xlu0 %9636
        %v9638 = vsel %vm8914, %v5099, -inf
        %9639 = vmax.xlane.f32.xlu0 %v9638
        %v9640 = vpop.xlane.xlu0 %9639
        %v9641 = vsel %vm8914, %v5211, -inf
        %9642 = vmax.xlane.f32.xlu0 %v9641
        %v9643 = vpop.xlane.xlu0 %9642
        %v9644 = vsel %vm8914, %v5323, -inf
        %9645 = vmax.xlane.f32.xlu0 %v9644
        %v9646 = vpop.xlane.xlu0 %9645
        %v9647 = vsel %vm8914, %v4989, -inf
        %9648 = vmax.xlane.f32.xlu0 %v9647
        %v9649 = vpop.xlane.xlu0 %9648
        %v9650 = vsel %vm8914, %v5101, -inf
        %9651 = vmax.xlane.f32.xlu0 %v9650
        %v9652 = vpop.xlane.xlu0 %9651
        %v9653 = vsel %vm8914, %v5213, -inf
        %9654 = vmax.xlane.f32.xlu0 %v9653
        %v9655 = vpop.xlane.xlu0 %9654
        %v9656 = vsel %vm8914, %v5325, -inf
        %9657 = vmax.xlane.f32.xlu0 %v9656
        %v9658 = vpop.xlane.xlu0 %9657
        %v9659 = vsel %vm8914, %v4991, -inf
        %9660 = vmax.xlane.f32.xlu0 %v9659
        %v9661 = vpop.xlane.xlu0 %9660
        %v9662 = vsel %vm8914, %v5103, -inf
        %9663 = vmax.xlane.f32.xlu0 %v9662
        %v9664 = vpop.xlane.xlu0 %9663
        %v9665 = vsel %vm8914, %v5215, -inf
        %9666 = vmax.xlane.f32.xlu0 %v9665
        %v9667 = vpop.xlane.xlu0 %9666
        %v9668 = vsel %vm8914, %v5327, -inf
        %9669 = vmax.xlane.f32.xlu0 %v9668
        %v9670 = vpop.xlane.xlu0 %9669
        %v9671 = vsel %vm8914, %v4993, -inf
        %9672 = vmax.xlane.f32.xlu0 %v9671
        %v9673 = vpop.xlane.xlu0 %9672
        %v9674 = vsel %vm8914, %v5105, -inf
        %9675 = vmax.xlane.f32.xlu0 %v9674
        %v9676 = vpop.xlane.xlu0 %9675
        %v9677 = vsel %vm8914, %v5217, -inf
        %9678 = vmax.xlane.f32.xlu0 %v9677
        %v9679 = vpop.xlane.xlu0 %9678
        %v9680 = vsel %vm8914, %v5329, -inf
        %9681 = vmax.xlane.f32.xlu0 %v9680
        %v9682 = vpop.xlane.xlu0 %9681
        %v9683 = vsel %vm8914, %v5427, -inf
        %9684 = vmax.xlane.f32.xlu0 %v9683
        %v9685 = vpop.xlane.xlu0 %9684
        %v9686 = vsel %vm8914, %v5539, -inf
        %9687 = vmax.xlane.f32.xlu0 %v9686
        %v9688 = vpop.xlane.xlu0 %9687
        %v9689 = vsel %vm8914, %v5651, -inf
        %9690 = vmax.xlane.f32.xlu0 %v9689
        %v9691 = vpop.xlane.xlu0 %9690
        %v9692 = vsel %vm8914, %v5763, -inf
        %9693 = vmax.xlane.f32.xlu0 %v9692
        %v9694 = vpop.xlane.xlu0 %9693
        %v9695 = vsel %vm8914, %v5429, -inf
        %9696 = vmax.xlane.f32.xlu0 %v9695
        %v9697 = vpop.xlane.xlu0 %9696
        %v9698 = vsel %vm8914, %v5541, -inf
        %9699 = vmax.xlane.f32.xlu0 %v9698
        %v9700 = vpop.xlane.xlu0 %9699
        %v9701 = vsel %vm8914, %v5653, -inf
        %9702 = vmax.xlane.f32.xlu0 %v9701
        %v9703 = vpop.xlane.xlu0 %9702
        %v9704 = vsel %vm8914, %v5765, -inf
        %9705 = vmax.xlane.f32.xlu0 %v9704
        %v9706 = vpop.xlane.xlu0 %9705
        %v9707 = vsel %vm8914, %v5431, -inf
        %9708 = vmax.xlane.f32.xlu0 %v9707
        %v9709 = vpop.xlane.xlu0 %9708
        %v9710 = vsel %vm8914, %v5543, -inf
        %9711 = vmax.xlane.f32.xlu0 %v9710
        %v9712 = vpop.xlane.xlu0 %9711
        %v9713 = vsel %vm8914, %v5655, -inf
        %9714 = vmax.xlane.f32.xlu0 %v9713
        %v9715 = vpop.xlane.xlu0 %9714
        %v9716 = vsel %vm8914, %v5767, -inf
        %9717 = vmax.xlane.f32.xlu0 %v9716
        %v9718 = vpop.xlane.xlu0 %9717
        %v9719 = vsel %vm8914, %v5433, -inf
        %9720 = vmax.xlane.f32.xlu0 %v9719
        %v9721 = vpop.xlane.xlu0 %9720
        %v9722 = vsel %vm8914, %v5545, -inf
        %9723 = vmax.xlane.f32.xlu0 %v9722
        %v9724 = vpop.xlane.xlu0 %9723
        %v9725 = vsel %vm8914, %v5657, -inf
        %9726 = vmax.xlane.f32.xlu0 %v9725
        %v9727 = vpop.xlane.xlu0 %9726
        %v9728 = vsel %vm8914, %v5769, -inf
        %9729 = vmax.xlane.f32.xlu0 %v9728
        %v9730 = vpop.xlane.xlu0 %9729
        %v9731 = vsel %vm8914, %v5435, -inf
        %9732 = vmax.xlane.f32.xlu0 %v9731
        %v9733 = vpop.xlane.xlu0 %9732
        %v9734 = vsel %vm8914, %v5547, -inf
        %9735 = vmax.xlane.f32.xlu0 %v9734
        %v9736 = vpop.xlane.xlu0 %9735
        %v9737 = vsel %vm8914, %v5659, -inf
        %9738 = vmax.xlane.f32.xlu0 %v9737
        %v9739 = vpop.xlane.xlu0 %9738
        %v9740 = vsel %vm8914, %v5771, -inf
        %9741 = vmax.xlane.f32.xlu0 %v9740
        %v9742 = vpop.xlane.xlu0 %9741
        %v9743 = vsel %vm8914, %v5437, -inf
        %9744 = vmax.xlane.f32.xlu0 %v9743
        %v9745 = vpop.xlane.xlu0 %9744
        %v9746 = vsel %vm8914, %v5549, -inf
        %9747 = vmax.xlane.f32.xlu0 %v9746
        %v9748 = vpop.xlane.xlu0 %9747
        %v9749 = vsel %vm8914, %v5661, -inf
        %9750 = vmax.xlane.f32.xlu0 %v9749
        %v9751 = vpop.xlane.xlu0 %9750
        %v9752 = vsel %vm8914, %v5773, -inf
        %9753 = vmax.xlane.f32.xlu0 %v9752
        %v9754 = vpop.xlane.xlu0 %9753
        %v9755 = vsel %vm8914, %v5439, -inf
        %9756 = vmax.xlane.f32.xlu0 %v9755
        %v9757 = vpop.xlane.xlu0 %9756
        %v9758 = vsel %vm8914, %v5551, -inf
        %9759 = vmax.xlane.f32.xlu0 %v9758
        %v9760 = vpop.xlane.xlu0 %9759
        %v9761 = vsel %vm8914, %v5663, -inf
        %9762 = vmax.xlane.f32.xlu0 %v9761
        %v9763 = vpop.xlane.xlu0 %9762
        %v9764 = vsel %vm8914, %v5775, -inf
        %9765 = vmax.xlane.f32.xlu0 %v9764
        %v9766 = vpop.xlane.xlu0 %9765
        %v9767 = vsel %vm8914, %v5441, -inf
        %9768 = vmax.xlane.f32.xlu0 %v9767
        %v9769 = vpop.xlane.xlu0 %9768
        %v9770 = vsel %vm8914, %v5553, -inf
        %9771 = vmax.xlane.f32.xlu0 %v9770
        %v9772 = vpop.xlane.xlu0 %9771
        %v9773 = vsel %vm8914, %v5665, -inf
        %9774 = vmax.xlane.f32.xlu0 %v9773
        %v9775 = vpop.xlane.xlu0 %9774
        %v9776 = vsel %vm8914, %v5777, -inf
        %9777 = vmax.xlane.f32.xlu0 %v9776
        %v9778 = vpop.xlane.xlu0 %9777
        %v9779 = vsel %vm8914, %v5875, -inf
        %9780 = vmax.xlane.f32.xlu0 %v9779
        %v9781 = vpop.xlane.xlu0 %9780
        %v9782 = vsel %vm8914, %v5987, -inf
        %9783 = vmax.xlane.f32.xlu0 %v9782
        %v9784 = vpop.xlane.xlu0 %9783
        %v9785 = vsel %vm8914, %v6099, -inf
        %9786 = vmax.xlane.f32.xlu0 %v9785
        %v9787 = vpop.xlane.xlu0 %9786
        %v9788 = vsel %vm8914, %v6211, -inf
        %9789 = vmax.xlane.f32.xlu0 %v9788
        %v9790 = vpop.xlane.xlu0 %9789
        %v9791 = vsel %vm8914, %v5877, -inf
        %9792 = vmax.xlane.f32.xlu0 %v9791
        %v9793 = vpop.xlane.xlu0 %9792
        %v9794 = vsel %vm8914, %v5989, -inf
        %9795 = vmax.xlane.f32.xlu0 %v9794
        %v9796 = vpop.xlane.xlu0 %9795
        %v9797 = vsel %vm8914, %v6101, -inf
        %9798 = vmax.xlane.f32.xlu0 %v9797
        %v9799 = vpop.xlane.xlu0 %9798
        %v9800 = vsel %vm8914, %v6213, -inf
        %9801 = vmax.xlane.f32.xlu0 %v9800
        %v9802 = vpop.xlane.xlu0 %9801
        %v9803 = vsel %vm8914, %v5879, -inf
        %9804 = vmax.xlane.f32.xlu0 %v9803
        %v9805 = vpop.xlane.xlu0 %9804
        %v9806 = vsel %vm8914, %v5991, -inf
        %9807 = vmax.xlane.f32.xlu0 %v9806
        %v9808 = vpop.xlane.xlu0 %9807
        %v9809 = vsel %vm8914, %v6103, -inf
        %9810 = vmax.xlane.f32.xlu0 %v9809
        %v9811 = vpop.xlane.xlu0 %9810
        %v9812 = vsel %vm8914, %v6215, -inf
        %9813 = vmax.xlane.f32.xlu0 %v9812
        %v9814 = vpop.xlane.xlu0 %9813
        %v9815 = vsel %vm8914, %v5881, -inf
        %9816 = vmax.xlane.f32.xlu0 %v9815
        %v9817 = vpop.xlane.xlu0 %9816
        %v9818 = vsel %vm8914, %v5993, -inf
        %9819 = vmax.xlane.f32.xlu0 %v9818
        %v9820 = vpop.xlane.xlu0 %9819
        %v9821 = vsel %vm8914, %v6105, -inf
        %9822 = vmax.xlane.f32.xlu0 %v9821
        %v9823 = vpop.xlane.xlu0 %9822
        %v9824 = vsel %vm8914, %v6217, -inf
        %9825 = vmax.xlane.f32.xlu0 %v9824
        %v9826 = vpop.xlane.xlu0 %9825
        %v9827 = vsel %vm8914, %v5883, -inf
        %9828 = vmax.xlane.f32.xlu0 %v9827
        %v9829 = vpop.xlane.xlu0 %9828
        %v9830 = vsel %vm8914, %v5995, -inf
        %9831 = vmax.xlane.f32.xlu0 %v9830
        %v9832 = vpop.xlane.xlu0 %9831
        %v9833 = vsel %vm8914, %v6107, -inf
        %9834 = vmax.xlane.f32.xlu0 %v9833
        %v9835 = vpop.xlane.xlu0 %9834
        %v9836 = vsel %vm8914, %v6219, -inf
        %9837 = vmax.xlane.f32.xlu0 %v9836
        %v9838 = vpop.xlane.xlu0 %9837
        %v9839 = vsel %vm8914, %v5885, -inf
        %9840 = vmax.xlane.f32.xlu0 %v9839
        %v9841 = vpop.xlane.xlu0 %9840
        %v9842 = vsel %vm8914, %v5997, -inf
        %9843 = vmax.xlane.f32.xlu0 %v9842
        %v9844 = vpop.xlane.xlu0 %9843
        %v9845 = vsel %vm8914, %v6109, -inf
        %9846 = vmax.xlane.f32.xlu0 %v9845
        %v9847 = vpop.xlane.xlu0 %9846
        %v9848 = vsel %vm8914, %v6221, -inf
        %9849 = vmax.xlane.f32.xlu0 %v9848
        %v9850 = vpop.xlane.xlu0 %9849
        %v9851 = vsel %vm8914, %v5887, -inf
        %9852 = vmax.xlane.f32.xlu0 %v9851
        %v9853 = vpop.xlane.xlu0 %9852
        %v9854 = vsel %vm8914, %v5999, -inf
        %9855 = vmax.xlane.f32.xlu0 %v9854
        %v9856 = vpop.xlane.xlu0 %9855
        %v9857 = vsel %vm8914, %v6111, -inf
        %9858 = vmax.xlane.f32.xlu0 %v9857
        %v9859 = vpop.xlane.xlu0 %9858
        %v9860 = vsel %vm8914, %v6223, -inf
        %9861 = vmax.xlane.f32.xlu0 %v9860
        %v9862 = vpop.xlane.xlu0 %9861
        %v9863 = vsel %vm8914, %v5889, -inf
        %9864 = vmax.xlane.f32.xlu0 %v9863
        %v9865 = vpop.xlane.xlu0 %9864
        %v9866 = vsel %vm8914, %v6001, -inf
        %9867 = vmax.xlane.f32.xlu0 %v9866
        %v9868 = vpop.xlane.xlu0 %9867
        %v9869 = vsel %vm8914, %v6113, -inf
        %9870 = vmax.xlane.f32.xlu0 %v9869
        %v9871 = vpop.xlane.xlu0 %9870
        %v9872 = vsel %vm8914, %v6225, -inf
        %9873 = vmax.xlane.f32.xlu0 %v9872
        %v9874 = vpop.xlane.xlu0 %9873
        %v9875 = vsel %vm8914, %v6323, -inf
        %9876 = vmax.xlane.f32.xlu0 %v9875
        %v9877 = vpop.xlane.xlu0 %9876
        %v9878 = vsel %vm8914, %v6435, -inf
        %9879 = vmax.xlane.f32.xlu0 %v9878
        %v9880 = vpop.xlane.xlu0 %9879
        %v9881 = vsel %vm8914, %v6547, -inf
        %9882 = vmax.xlane.f32.xlu0 %v9881
        %v9883 = vpop.xlane.xlu0 %9882
        %v9884 = vsel %vm8914, %v6659, -inf
        %9885 = vmax.xlane.f32.xlu0 %v9884
        %v9886 = vpop.xlane.xlu0 %9885
        %v9887 = vsel %vm8914, %v6325, -inf
        %9888 = vmax.xlane.f32.xlu0 %v9887
        %v9889 = vpop.xlane.xlu0 %9888
        %v9890 = vsel %vm8914, %v6437, -inf
        %9891 = vmax.xlane.f32.xlu0 %v9890
        %v9892 = vpop.xlane.xlu0 %9891
        %v9893 = vsel %vm8914, %v6549, -inf
        %9894 = vmax.xlane.f32.xlu0 %v9893
        %v9895 = vpop.xlane.xlu0 %9894
        %v9896 = vsel %vm8914, %v6661, -inf
        %9897 = vmax.xlane.f32.xlu0 %v9896
        %v9898 = vpop.xlane.xlu0 %9897
        %v9899 = vsel %vm8914, %v6327, -inf
        %9900 = vmax.xlane.f32.xlu0 %v9899
        %v9901 = vpop.xlane.xlu0 %9900
        %v9902 = vsel %vm8914, %v6439, -inf
        %9903 = vmax.xlane.f32.xlu0 %v9902
        %v9904 = vpop.xlane.xlu0 %9903
        %v9905 = vsel %vm8914, %v6551, -inf
        %9906 = vmax.xlane.f32.xlu0 %v9905
        %v9907 = vpop.xlane.xlu0 %9906
        %v9908 = vsel %vm8914, %v6663, -inf
        %9909 = vmax.xlane.f32.xlu0 %v9908
        %v9910 = vpop.xlane.xlu0 %9909
        %v9911 = vsel %vm8914, %v6329, -inf
        %9912 = vmax.xlane.f32.xlu0 %v9911
        %v9913 = vpop.xlane.xlu0 %9912
        %v9914 = vsel %vm8914, %v6441, -inf
        %9915 = vmax.xlane.f32.xlu0 %v9914
        %v9916 = vpop.xlane.xlu0 %9915
        %v9917 = vsel %vm8914, %v6553, -inf
        %9918 = vmax.xlane.f32.xlu0 %v9917
        %v9919 = vpop.xlane.xlu0 %9918
        %v9920 = vsel %vm8914, %v6665, -inf
        %9921 = vmax.xlane.f32.xlu0 %v9920
        %v9922 = vpop.xlane.xlu0 %9921
        %v9923 = vsel %vm8914, %v6331, -inf
        %9924 = vmax.xlane.f32.xlu0 %v9923
        %v9925 = vpop.xlane.xlu0 %9924
        %v9926 = vsel %vm8914, %v6443, -inf
        %9927 = vmax.xlane.f32.xlu0 %v9926
        %v9928 = vpop.xlane.xlu0 %9927
        %v9929 = vsel %vm8914, %v6555, -inf
        %9930 = vmax.xlane.f32.xlu0 %v9929
        %v9931 = vpop.xlane.xlu0 %9930
        %v9932 = vsel %vm8914, %v6667, -inf
        %9933 = vmax.xlane.f32.xlu0 %v9932
        %v9934 = vpop.xlane.xlu0 %9933
        %v9935 = vsel %vm8914, %v6333, -inf
        %9936 = vmax.xlane.f32.xlu0 %v9935
        %v9937 = vpop.xlane.xlu0 %9936
        %v9938 = vsel %vm8914, %v6445, -inf
        %9939 = vmax.xlane.f32.xlu0 %v9938
        %v9940 = vpop.xlane.xlu0 %9939
        %v9941 = vsel %vm8914, %v6557, -inf
        %9942 = vmax.xlane.f32.xlu0 %v9941
        %v9943 = vpop.xlane.xlu0 %9942
        %v9944 = vsel %vm8914, %v6669, -inf
        %9945 = vmax.xlane.f32.xlu0 %v9944
        %v9946 = vpop.xlane.xlu0 %9945
        %v9947 = vsel %vm8914, %v6335, -inf
        %9948 = vmax.xlane.f32.xlu0 %v9947
        %v9949 = vpop.xlane.xlu0 %9948
        %v9950 = vsel %vm8914, %v6447, -inf
        %9951 = vmax.xlane.f32.xlu0 %v9950
        %v9952 = vpop.xlane.xlu0 %9951
        %v9953 = vsel %vm8914, %v6559, -inf
        %9954 = vmax.xlane.f32.xlu0 %v9953
        %v9955 = vpop.xlane.xlu0 %9954
        %v9956 = vsel %vm8914, %v6671, -inf
        %9957 = vmax.xlane.f32.xlu0 %v9956
        %v9958 = vpop.xlane.xlu0 %9957
        %v9959 = vsel %vm8914, %v6337, -inf
        %9960 = vmax.xlane.f32.xlu0 %v9959
        %v9961 = vpop.xlane.xlu0 %9960
        %v9962 = vsel %vm8914, %v6449, -inf
        %9963 = vmax.xlane.f32.xlu0 %v9962
        %v9964 = vpop.xlane.xlu0 %9963
        %v9965 = vsel %vm8914, %v6561, -inf
        %9966 = vmax.xlane.f32.xlu0 %v9965
        %v9967 = vpop.xlane.xlu0 %9966
        %v9968 = vsel %vm8914, %v6673, -inf
        %9969 = vmax.xlane.f32.xlu0 %v9968
        %v9970 = vpop.xlane.xlu0 %9969
        %v9971 = vsel %vm8914, %v6771, -inf
        %9972 = vmax.xlane.f32.xlu0 %v9971
        %v9973 = vpop.xlane.xlu0 %9972
        %v9974 = vsel %vm8914, %v6883, -inf
        %9975 = vmax.xlane.f32.xlu0 %v9974
        %v9976 = vpop.xlane.xlu0 %9975
        %v9977 = vsel %vm8914, %v6995, -inf
        %9978 = vmax.xlane.f32.xlu0 %v9977
        %v9979 = vpop.xlane.xlu0 %9978
        %v9980 = vsel %vm8914, %v7107, -inf
        %9981 = vmax.xlane.f32.xlu0 %v9980
        %v9982 = vpop.xlane.xlu0 %9981
        %v9983 = vsel %vm8914, %v6773, -inf
        %9984 = vmax.xlane.f32.xlu0 %v9983
        %v9985 = vpop.xlane.xlu0 %9984
        %v9986 = vsel %vm8914, %v6885, -inf
        %9987 = vmax.xlane.f32.xlu0 %v9986
        %v9988 = vpop.xlane.xlu0 %9987
        %v9989 = vsel %vm8914, %v6997, -inf
        %9990 = vmax.xlane.f32.xlu0 %v9989
        %v9991 = vpop.xlane.xlu0 %9990
        %v9992 = vsel %vm8914, %v7109, -inf
        %9993 = vmax.xlane.f32.xlu0 %v9992
        %v9994 = vpop.xlane.xlu0 %9993
        %v9995 = vsel %vm8914, %v6775, -inf
        %9996 = vmax.xlane.f32.xlu0 %v9995
        %v9997 = vpop.xlane.xlu0 %9996
        %v9998 = vsel %vm8914, %v6887, -inf
        %9999 = vmax.xlane.f32.xlu0 %v9998
        %v10000 = vpop.xlane.xlu0 %9999
        %v10001 = vsel %vm8914, %v6999, -inf
        %10002 = vmax.xlane.f32.xlu0 %v10001
        %v10003 = vpop.xlane.xlu0 %10002
        %v10004 = vsel %vm8914, %v7111, -inf
        %10005 = vmax.xlane.f32.xlu0 %v10004
        %v10006 = vpop.xlane.xlu0 %10005
        %v10007 = vsel %vm8914, %v6777, -inf
        %10008 = vmax.xlane.f32.xlu0 %v10007
        %v10009 = vpop.xlane.xlu0 %10008
        %v10010 = vsel %vm8914, %v6889, -inf
        %10011 = vmax.xlane.f32.xlu0 %v10010
        %v10012 = vpop.xlane.xlu0 %10011
        %v10013 = vsel %vm8914, %v7001, -inf
        %10014 = vmax.xlane.f32.xlu0 %v10013
        %v10015 = vpop.xlane.xlu0 %10014
        %v10016 = vsel %vm8914, %v7113, -inf
        %10017 = vmax.xlane.f32.xlu0 %v10016
        %v10018 = vpop.xlane.xlu0 %10017
        %v10019 = vsel %vm8914, %v6779, -inf
        %10020 = vmax.xlane.f32.xlu0 %v10019
        %v10021 = vpop.xlane.xlu0 %10020
        %v10022 = vsel %vm8914, %v6891, -inf
        %10023 = vmax.xlane.f32.xlu0 %v10022
        %v10024 = vpop.xlane.xlu0 %10023
        %v10025 = vsel %vm8914, %v7003, -inf
        %10026 = vmax.xlane.f32.xlu0 %v10025
        %v10027 = vpop.xlane.xlu0 %10026
        %v10028 = vsel %vm8914, %v7115, -inf
        %10029 = vmax.xlane.f32.xlu0 %v10028
        %v10030 = vpop.xlane.xlu0 %10029
        %v10031 = vsel %vm8914, %v6781, -inf
        %10032 = vmax.xlane.f32.xlu0 %v10031
        %v10033 = vpop.xlane.xlu0 %10032
        %v10034 = vsel %vm8914, %v6893, -inf
        %10035 = vmax.xlane.f32.xlu0 %v10034
        %v10036 = vpop.xlane.xlu0 %10035
        %v10037 = vsel %vm8914, %v7005, -inf
        %10038 = vmax.xlane.f32.xlu0 %v10037
        %v10039 = vpop.xlane.xlu0 %10038
        %v10040 = vsel %vm8914, %v7117, -inf
        %10041 = vmax.xlane.f32.xlu0 %v10040
        %v10042 = vpop.xlane.xlu0 %10041
        %v10043 = vsel %vm8914, %v6783, -inf
        %10044 = vmax.xlane.f32.xlu0 %v10043
        %v10045 = vpop.xlane.xlu0 %10044
        %v10046 = vsel %vm8914, %v6895, -inf
        %10047 = vmax.xlane.f32.xlu0 %v10046
        %v10048 = vpop.xlane.xlu0 %10047
        %v10049 = vsel %vm8914, %v7007, -inf
        %10050 = vmax.xlane.f32.xlu0 %v10049
        %v10051 = vpop.xlane.xlu0 %10050
        %v10052 = vsel %vm8914, %v7119, -inf
        %10053 = vmax.xlane.f32.xlu0 %v10052
        %v10054 = vpop.xlane.xlu0 %10053
        %v10055 = vsel %vm8914, %v6785, -inf
        %10056 = vmax.xlane.f32.xlu0 %v10055
        %v10057 = vpop.xlane.xlu0 %10056
        %v10058 = vsel %vm8914, %v6897, -inf
        %10059 = vmax.xlane.f32.xlu0 %v10058
        %v10060 = vpop.xlane.xlu0 %10059
        %v10061 = vsel %vm8914, %v7009, -inf
        %10062 = vmax.xlane.f32.xlu0 %v10061
        %v10063 = vpop.xlane.xlu0 %10062
        %v10064 = vsel %vm8914, %v7121, -inf
        %10065 = vmax.xlane.f32.xlu0 %v10064
        %v10066 = vpop.xlane.xlu0 %10065
        %v10067 = vsel %vm8914, %v7219, -inf
        %10068 = vmax.xlane.f32.xlu0 %v10067
        %v10069 = vpop.xlane.xlu0 %10068
        %v10070 = vsel %vm8914, %v7331, -inf
        %10071 = vmax.xlane.f32.xlu0 %v10070
        %v10072 = vpop.xlane.xlu0 %10071
        %v10073 = vsel %vm8914, %v7443, -inf
        %10074 = vmax.xlane.f32.xlu0 %v10073
        %v10075 = vpop.xlane.xlu0 %10074
        %v10076 = vsel %vm8914, %v7555, -inf
        %10077 = vmax.xlane.f32.xlu0 %v10076
        %v10078 = vpop.xlane.xlu0 %10077
        %v10079 = vsel %vm8914, %v7221, -inf
        %10080 = vmax.xlane.f32.xlu0 %v10079
        %v10081 = vpop.xlane.xlu0 %10080
        %v10082 = vsel %vm8914, %v7333, -inf
        %10083 = vmax.xlane.f32.xlu0 %v10082
        %v10084 = vpop.xlane.xlu0 %10083
        %v10085 = vsel %vm8914, %v7445, -inf
        %10086 = vmax.xlane.f32.xlu0 %v10085
        %v10087 = vpop.xlane.xlu0 %10086
        %v10088 = vsel %vm8914, %v7557, -inf
        %10089 = vmax.xlane.f32.xlu0 %v10088
        %v10090 = vpop.xlane.xlu0 %10089
        %v10091 = vsel %vm8914, %v7223, -inf
        %10092 = vmax.xlane.f32.xlu0 %v10091
        %v10093 = vpop.xlane.xlu0 %10092
        %v10094 = vsel %vm8914, %v7335, -inf
        %10095 = vmax.xlane.f32.xlu0 %v10094
        %v10096 = vpop.xlane.xlu0 %10095
        %v10097 = vsel %vm8914, %v7447, -inf
        %10098 = vmax.xlane.f32.xlu0 %v10097
        %v10099 = vpop.xlane.xlu0 %10098
        %v10100 = vsel %vm8914, %v7559, -inf
        %10101 = vmax.xlane.f32.xlu0 %v10100
        %v10102 = vpop.xlane.xlu0 %10101
        %v10103 = vsel %vm8914, %v7225, -inf
        %10104 = vmax.xlane.f32.xlu0 %v10103
        %v10105 = vpop.xlane.xlu0 %10104
        %v10106 = vsel %vm8914, %v7337, -inf
        %10107 = vmax.xlane.f32.xlu0 %v10106
        %v10108 = vpop.xlane.xlu0 %10107
        %v10109 = vsel %vm8914, %v7449, -inf
        %10110 = vmax.xlane.f32.xlu0 %v10109
        %v10111 = vpop.xlane.xlu0 %10110
        %v10112 = vsel %vm8914, %v7561, -inf
        %10113 = vmax.xlane.f32.xlu0 %v10112
        %v10114 = vpop.xlane.xlu0 %10113
        %v10115 = vsel %vm8914, %v7227, -inf
        %10116 = vmax.xlane.f32.xlu0 %v10115
        %v10117 = vpop.xlane.xlu0 %10116
        %v10118 = vsel %vm8914, %v7339, -inf
        %10119 = vmax.xlane.f32.xlu0 %v10118
        %v10120 = vpop.xlane.xlu0 %10119
        %v10121 = vsel %vm8914, %v7451, -inf
        %10122 = vmax.xlane.f32.xlu0 %v10121
        %v10123 = vpop.xlane.xlu0 %10122
        %v10124 = vsel %vm8914, %v7563, -inf
        %10125 = vmax.xlane.f32.xlu0 %v10124
        %v10126 = vpop.xlane.xlu0 %10125
        %v10127 = vsel %vm8914, %v7229, -inf
        %10128 = vmax.xlane.f32.xlu0 %v10127
        %v10129 = vpop.xlane.xlu0 %10128
        %v10130 = vsel %vm8914, %v7341, -inf
        %10131 = vmax.xlane.f32.xlu0 %v10130
        %v10132 = vpop.xlane.xlu0 %10131
        %v10133 = vsel %vm8914, %v7453, -inf
        %10134 = vmax.xlane.f32.xlu0 %v10133
        %v10135 = vpop.xlane.xlu0 %10134
        %v10136 = vsel %vm8914, %v7565, -inf
        %10137 = vmax.xlane.f32.xlu0 %v10136
        %v10138 = vpop.xlane.xlu0 %10137
        %v10139 = vsel %vm8914, %v7231, -inf
        %10140 = vmax.xlane.f32.xlu0 %v10139
        %v10141 = vpop.xlane.xlu0 %10140
        %v10142 = vsel %vm8914, %v7343, -inf
        %10143 = vmax.xlane.f32.xlu0 %v10142
        %v10144 = vpop.xlane.xlu0 %10143
        %v10145 = vsel %vm8914, %v7455, -inf
        %10146 = vmax.xlane.f32.xlu0 %v10145
        %v10147 = vpop.xlane.xlu0 %10146
        %v10148 = vsel %vm8914, %v7567, -inf
        %10149 = vmax.xlane.f32.xlu0 %v10148
        %v10150 = vpop.xlane.xlu0 %10149
        %v10151 = vsel %vm8914, %v7233, -inf
        %10152 = vmax.xlane.f32.xlu0 %v10151
        %v10153 = vpop.xlane.xlu0 %10152
        %v10154 = vsel %vm8914, %v7345, -inf
        %10155 = vmax.xlane.f32.xlu0 %v10154
        %v10156 = vpop.xlane.xlu0 %10155
        %v10157 = vsel %vm8914, %v7457, -inf
        %10158 = vmax.xlane.f32.xlu0 %v10157
        %v10159 = vpop.xlane.xlu0 %10158
        %v10160 = vsel %vm8914, %v7569, -inf
        %10161 = vmax.xlane.f32.xlu0 %v10160
        %v10162 = vpop.xlane.xlu0 %10161
        %v10163 = vsel %vm8914, %v7667, -inf
        %10164 = vmax.xlane.f32.xlu0 %v10163
        %v10165 = vpop.xlane.xlu0 %10164
        %v10166 = vsel %vm8914, %v7779, -inf
        %10167 = vmax.xlane.f32.xlu0 %v10166
        %v10168 = vpop.xlane.xlu0 %10167
        %v10169 = vsel %vm8914, %v7891, -inf
        %10170 = vmax.xlane.f32.xlu0 %v10169
        %v10171 = vpop.xlane.xlu0 %10170
        %v10172 = vsel %vm8914, %v8003, -inf
        %10173 = vmax.xlane.f32.xlu0 %v10172
        %v10174 = vpop.xlane.xlu0 %10173
        %v10175 = vsel %vm8914, %v7669, -inf
        %10176 = vmax.xlane.f32.xlu0 %v10175
        %v10177 = vpop.xlane.xlu0 %10176
        %v10178 = vsel %vm8914, %v7781, -inf
        %10179 = vmax.xlane.f32.xlu0 %v10178
        %v10180 = vpop.xlane.xlu0 %10179
        %v10181 = vsel %vm8914, %v7893, -inf
        %10182 = vmax.xlane.f32.xlu0 %v10181
        %v10183 = vpop.xlane.xlu0 %10182
        %v10184 = vsel %vm8914, %v8005, -inf
        %10185 = vmax.xlane.f32.xlu0 %v10184
        %v10186 = vpop.xlane.xlu0 %10185
        %v10187 = vsel %vm8914, %v7671, -inf
        %10188 = vmax.xlane.f32.xlu0 %v10187
        %v10189 = vpop.xlane.xlu0 %10188
        %v10190 = vsel %vm8914, %v7783, -inf
        %10191 = vmax.xlane.f32.xlu0 %v10190
        %v10192 = vpop.xlane.xlu0 %10191
        %v10193 = vsel %vm8914, %v7895, -inf
        %10194 = vmax.xlane.f32.xlu0 %v10193
        %v10195 = vpop.xlane.xlu0 %10194
        %v10196 = vsel %vm8914, %v8007, -inf
        %10197 = vmax.xlane.f32.xlu0 %v10196
        %v10198 = vpop.xlane.xlu0 %10197
        %v10199 = vsel %vm8914, %v7673, -inf
        %10200 = vmax.xlane.f32.xlu0 %v10199
        %v10201 = vpop.xlane.xlu0 %10200
        %v10202 = vsel %vm8914, %v7785, -inf
        %10203 = vmax.xlane.f32.xlu0 %v10202
        %v10204 = vpop.xlane.xlu0 %10203
        %v10205 = vsel %vm8914, %v7897, -inf
        %10206 = vmax.xlane.f32.xlu0 %v10205
        %v10207 = vpop.xlane.xlu0 %10206
        %v10208 = vsel %vm8914, %v8009, -inf
        %10209 = vmax.xlane.f32.xlu0 %v10208
        %v10210 = vpop.xlane.xlu0 %10209
        %v10211 = vsel %vm8914, %v7675, -inf
        %10212 = vmax.xlane.f32.xlu0 %v10211
        %v10213 = vpop.xlane.xlu0 %10212
        %v10214 = vsel %vm8914, %v7787, -inf
        %10215 = vmax.xlane.f32.xlu0 %v10214
        %v10216 = vpop.xlane.xlu0 %10215
        %v10217 = vsel %vm8914, %v7899, -inf
        %10218 = vmax.xlane.f32.xlu0 %v10217
        %v10219 = vpop.xlane.xlu0 %10218
        %v10220 = vsel %vm8914, %v8011, -inf
        %10221 = vmax.xlane.f32.xlu0 %v10220
        %v10222 = vpop.xlane.xlu0 %10221
        %v10223 = vsel %vm8914, %v7677, -inf
        %10224 = vmax.xlane.f32.xlu0 %v10223
        %v10225 = vpop.xlane.xlu0 %10224
        %v10226 = vsel %vm8914, %v7789, -inf
        %10227 = vmax.xlane.f32.xlu0 %v10226
        %v10228 = vpop.xlane.xlu0 %10227
        %v10229 = vsel %vm8914, %v7901, -inf
        %10230 = vmax.xlane.f32.xlu0 %v10229
        %v10231 = vpop.xlane.xlu0 %10230
        %v10232 = vsel %vm8914, %v8013, -inf
        %10233 = vmax.xlane.f32.xlu0 %v10232
        %v10234 = vpop.xlane.xlu0 %10233
        %v10235 = vsel %vm8914, %v7679, -inf
        %10236 = vmax.xlane.f32.xlu0 %v10235
        %v10237 = vpop.xlane.xlu0 %10236
        %v10238 = vsel %vm8914, %v7791, -inf
        %10239 = vmax.xlane.f32.xlu0 %v10238
        %v10240 = vpop.xlane.xlu0 %10239
        %v10241 = vsel %vm8914, %v7903, -inf
        %10242 = vmax.xlane.f32.xlu0 %v10241
        %v10243 = vpop.xlane.xlu0 %10242
        %v10244 = vsel %vm8914, %v8015, -inf
        %10245 = vmax.xlane.f32.xlu0 %v10244
        %v10246 = vpop.xlane.xlu0 %10245
        %v10247 = vsel %vm8914, %v7681, -inf
        %10248 = vmax.xlane.f32.xlu0 %v10247
        %v10249 = vpop.xlane.xlu0 %10248
        %v10250 = vsel %vm8914, %v7793, -inf
        %10251 = vmax.xlane.f32.xlu0 %v10250
        %v10252 = vpop.xlane.xlu0 %10251
        %v10253 = vsel %vm8914, %v7905, -inf
        %10254 = vmax.xlane.f32.xlu0 %v10253
        %v10255 = vpop.xlane.xlu0 %10254
        %v10256 = vsel %vm8914, %v8017, -inf
        %10257 = vmax.xlane.f32.xlu0 %v10256
        %v10258 = vpop.xlane.xlu0 %10257
        %v10259 = vsel %vm8914, %v8115, -inf
        %10260 = vmax.xlane.f32.xlu0 %v10259
        %v10261 = vpop.xlane.xlu0 %10260
        %v10262 = vsel %vm8914, %v8227, -inf
        %10263 = vmax.xlane.f32.xlu0 %v10262
        %v10264 = vpop.xlane.xlu0 %10263
        %v10265 = vsel %vm8914, %v8339, -inf
        %10266 = vmax.xlane.f32.xlu0 %v10265
        %v10267 = vpop.xlane.xlu0 %10266
        %v10268 = vsel %vm8914, %v8451, -inf
        %10269 = vmax.xlane.f32.xlu0 %v10268
        %v10270 = vpop.xlane.xlu0 %10269
        %v10271 = vsel %vm8914, %v8117, -inf
        %10272 = vmax.xlane.f32.xlu0 %v10271
        %v10273 = vpop.xlane.xlu0 %10272
        %v10274 = vsel %vm8914, %v8229, -inf
        %10275 = vmax.xlane.f32.xlu0 %v10274
        %v10276 = vpop.xlane.xlu0 %10275
        %v10277 = vsel %vm8914, %v8341, -inf
        %10278 = vmax.xlane.f32.xlu0 %v10277
        %v10279 = vpop.xlane.xlu0 %10278
        %v10280 = vsel %vm8914, %v8453, -inf
        %10281 = vmax.xlane.f32.xlu0 %v10280
        %v10282 = vpop.xlane.xlu0 %10281
        %v10283 = vsel %vm8914, %v8119, -inf
        %10284 = vmax.xlane.f32.xlu0 %v10283
        %v10285 = vpop.xlane.xlu0 %10284
        %v10286 = vsel %vm8914, %v8231, -inf
        %10287 = vmax.xlane.f32.xlu0 %v10286
        %v10288 = vpop.xlane.xlu0 %10287
        %v10289 = vsel %vm8914, %v8343, -inf
        %10290 = vmax.xlane.f32.xlu0 %v10289
        %v10291 = vpop.xlane.xlu0 %10290
        %v10292 = vsel %vm8914, %v8455, -inf
        %10293 = vmax.xlane.f32.xlu0 %v10292
        %v10294 = vpop.xlane.xlu0 %10293
        %v10295 = vsel %vm8914, %v8121, -inf
        %10296 = vmax.xlane.f32.xlu0 %v10295
        %v10297 = vpop.xlane.xlu0 %10296
        %v10298 = vsel %vm8914, %v8233, -inf
        %10299 = vmax.xlane.f32.xlu0 %v10298
        %v10300 = vpop.xlane.xlu0 %10299
        %v10301 = vsel %vm8914, %v8345, -inf
        %10302 = vmax.xlane.f32.xlu0 %v10301
        %v10303 = vpop.xlane.xlu0 %10302
        %v10304 = vsel %vm8914, %v8457, -inf
        %10305 = vmax.xlane.f32.xlu0 %v10304
        %v10306 = vpop.xlane.xlu0 %10305
        %v10307 = vsel %vm8914, %v8123, -inf
        %10308 = vmax.xlane.f32.xlu0 %v10307
        %v10309 = vpop.xlane.xlu0 %10308
        %v10310 = vsel %vm8914, %v8235, -inf
        %10311 = vmax.xlane.f32.xlu0 %v10310
        %v10312 = vpop.xlane.xlu0 %10311
        %v10313 = vsel %vm8914, %v8347, -inf
        %10314 = vmax.xlane.f32.xlu0 %v10313
        %v10315 = vpop.xlane.xlu0 %10314
        %v10316 = vsel %vm8914, %v8459, -inf
        %10317 = vmax.xlane.f32.xlu0 %v10316
        %v10318 = vpop.xlane.xlu0 %10317
        %v10319 = vsel %vm8914, %v8125, -inf
        %10320 = vmax.xlane.f32.xlu0 %v10319
        %v10321 = vpop.xlane.xlu0 %10320
        %v10322 = vsel %vm8914, %v8237, -inf
        %10323 = vmax.xlane.f32.xlu0 %v10322
        %v10324 = vpop.xlane.xlu0 %10323
        %v10325 = vsel %vm8914, %v8349, -inf
        %10326 = vmax.xlane.f32.xlu0 %v10325
        %v10327 = vpop.xlane.xlu0 %10326
        %v10328 = vsel %vm8914, %v8461, -inf
        %10329 = vmax.xlane.f32.xlu0 %v10328
        %v10330 = vpop.xlane.xlu0 %10329
        %v10331 = vsel %vm8914, %v8127, -inf
        %10332 = vmax.xlane.f32.xlu0 %v10331
        %v10333 = vpop.xlane.xlu0 %10332
        %v10334 = vsel %vm8914, %v8239, -inf
        %10335 = vmax.xlane.f32.xlu0 %v10334
        %v10336 = vpop.xlane.xlu0 %10335
        %v10337 = vsel %vm8914, %v8351, -inf
        %10338 = vmax.xlane.f32.xlu0 %v10337
        %v10339 = vpop.xlane.xlu0 %10338
        %v10340 = vsel %vm8914, %v8463, -inf
        %10341 = vmax.xlane.f32.xlu0 %v10340
        %v10342 = vpop.xlane.xlu0 %10341
        %v10343 = vsel %vm8914, %v8129, -inf
        %10344 = vmax.xlane.f32.xlu0 %v10343
        %v10345 = vpop.xlane.xlu0 %10344
        %v10346 = vsel %vm8914, %v8241, -inf
        %10347 = vmax.xlane.f32.xlu0 %v10346
        %v10348 = vpop.xlane.xlu0 %10347
        %v10349 = vsel %vm8914, %v8353, -inf
        %10350 = vmax.xlane.f32.xlu0 %v10349
        %v10351 = vpop.xlane.xlu0 %10350
        %v10352 = vsel %vm8914, %v8465, -inf
        %10353 = vmax.xlane.f32.xlu0 %v10352
        %v10354 = vpop.xlane.xlu0 %10353
        %v10355 = vsel %vm8914, %v8563, -inf
        %10356 = vmax.xlane.f32.xlu0 %v10355
        %v10357 = vpop.xlane.xlu0 %10356
        %v10358 = vsel %vm8914, %v8675, -inf
        %10359 = vmax.xlane.f32.xlu0 %v10358
        %v10360 = vpop.xlane.xlu0 %10359
        %v10361 = vsel %vm8914, %v8787, -inf
        %10362 = vmax.xlane.f32.xlu0 %v10361
        %v10363 = vpop.xlane.xlu0 %10362
        %v10364 = vsel %vm8914, %v8899, -inf
        %10365 = vmax.xlane.f32.xlu0 %v10364
        %v10366 = vpop.xlane.xlu0 %10365
        %v10367 = vsel %vm8914, %v8565, -inf
        %10368 = vmax.xlane.f32.xlu0 %v10367
        %v10369 = vpop.xlane.xlu0 %10368
        %v10370 = vsel %vm8914, %v8677, -inf
        %10371 = vmax.xlane.f32.xlu0 %v10370
        %v10372 = vpop.xlane.xlu0 %10371
        %v10373 = vsel %vm8914, %v8789, -inf
        %10374 = vmax.xlane.f32.xlu0 %v10373
        %v10375 = vpop.xlane.xlu0 %10374
        %v10376 = vsel %vm8914, %v8901, -inf
        %10377 = vmax.xlane.f32.xlu0 %v10376
        %v10378 = vpop.xlane.xlu0 %10377
        %v10379 = vsel %vm8914, %v8567, -inf
        %10380 = vmax.xlane.f32.xlu0 %v10379
        %v10381 = vpop.xlane.xlu0 %10380
        %v10382 = vsel %vm8914, %v8679, -inf
        %10383 = vmax.xlane.f32.xlu0 %v10382
        %v10384 = vpop.xlane.xlu0 %10383
        %v10385 = vsel %vm8914, %v8791, -inf
        %10386 = vmax.xlane.f32.xlu0 %v10385
        %v10387 = vpop.xlane.xlu0 %10386
        %v10388 = vsel %vm8914, %v8903, -inf
        %10389 = vmax.xlane.f32.xlu0 %v10388
        %v10390 = vpop.xlane.xlu0 %10389
        %v10391 = vsel %vm8914, %v8569, -inf
        %10392 = vmax.xlane.f32.xlu0 %v10391
        %v10393 = vpop.xlane.xlu0 %10392
        %v10394 = vsel %vm8914, %v8681, -inf
        %10395 = vmax.xlane.f32.xlu0 %v10394
        %v10396 = vpop.xlane.xlu0 %10395
        %v10397 = vsel %vm8914, %v8793, -inf
        %10398 = vmax.xlane.f32.xlu0 %v10397
        %v10399 = vpop.xlane.xlu0 %10398
        %v10400 = vsel %vm8914, %v8905, -inf
        %10401 = vmax.xlane.f32.xlu0 %v10400
        %v10402 = vpop.xlane.xlu0 %10401
        %v10403 = vsel %vm8914, %v8571, -inf
        %10404 = vmax.xlane.f32.xlu0 %v10403
        %v10405 = vpop.xlane.xlu0 %10404
        %v10406 = vsel %vm8914, %v8683, -inf
        %10407 = vmax.xlane.f32.xlu0 %v10406
        %v10408 = vpop.xlane.xlu0 %10407
        %v10409 = vsel %vm8914, %v8795, -inf
        %10410 = vmax.xlane.f32.xlu0 %v10409
        %v10411 = vpop.xlane.xlu0 %10410
        %v10412 = vsel %vm8914, %v8907, -inf
        %10413 = vmax.xlane.f32.xlu0 %v10412
        %v10414 = vpop.xlane.xlu0 %10413
        %v10415 = vsel %vm8914, %v8573, -inf
        %10416 = vmax.xlane.f32.xlu0 %v10415
        %v10417 = vpop.xlane.xlu0 %10416
        %v10418 = vsel %vm8914, %v8685, -inf
        %10419 = vmax.xlane.f32.xlu0 %v10418
        %v10420 = vpop.xlane.xlu0 %10419
        %v10421 = vsel %vm8914, %v8797, -inf
        %10422 = vmax.xlane.f32.xlu0 %v10421
        %v10423 = vpop.xlane.xlu0 %10422
        %v10424 = vsel %vm8914, %v8909, -inf
        %10425 = vmax.xlane.f32.xlu0 %v10424
        %v10426 = vpop.xlane.xlu0 %10425
        %v10427 = vsel %vm8914, %v8575, -inf
        %10428 = vmax.xlane.f32.xlu0 %v10427
        %v10429 = vpop.xlane.xlu0 %10428
        %v10430 = vsel %vm8914, %v8687, -inf
        %10431 = vmax.xlane.f32.xlu0 %v10430
        %v10432 = vpop.xlane.xlu0 %10431
        %v10433 = vsel %vm8914, %v8799, -inf
        %10434 = vmax.xlane.f32.xlu0 %v10433
        %v10435 = vpop.xlane.xlu0 %10434
        %v10436 = vsel %vm8914, %v8911, -inf
        %10437 = vmax.xlane.f32.xlu0 %v10436
        %v10438 = vpop.xlane.xlu0 %10437
        %v10439 = vsel %vm8914, %v8577, -inf
        %10440 = vmax.xlane.f32.xlu0 %v10439
        %v10441 = vpop.xlane.xlu0 %10440
        %v10442 = vsel %vm8914, %v8689, -inf
        %10443 = vmax.xlane.f32.xlu0 %v10442
        %v10444 = vpop.xlane.xlu0 %10443
        %v10445 = vsel %vm8914, %v8801, -inf
        %10446 = vmax.xlane.f32.xlu0 %v10445
        %v10447 = vpop.xlane.xlu0 %10446
        %v10448 = vsel %vm8914, %v8913, -inf
        %10449 = vmax.xlane.f32.xlu0 %v10448
        %v10450 = vpop.xlane.xlu0 %10449
        %v10963 = vlaneseq
        %v10964 = vand.u32 %v10963, 127
        %v10965 = vperm.slane %v8917, %v10964
        %v10966 = vadd.s32 %v10964, 4294967288
        %v10967 = vperm.slane %v8920, %v10966
        %vm10968 = vcmask 130112
        %v10969 = vsel %vm10968, %v10967, %v10965
        %v10970 = vadd.s32 %v10964, 4294967280
        %v10971 = vperm.slane %v8923, %v10970
        %vm10972 = vcmask 195712
        %v10973 = vsel %vm10972, %v10971, %v10969
        %v10974 = vadd.s32 %v10964, 4294967272
        %v10975 = vperm.slane %v8926, %v10974
        %vm10976 = vcmask 261312
        %v10977 = vsel %vm10976, %v10975, %v10973
        %v10978 = vperm.slane %v8929, %v10964
        %v10979 = vperm.slane %v8932, %v10966
        %v10980 = vsel %vm10968, %v10979, %v10978
        %v10981 = vperm.slane %v8935, %v10970
        %v10982 = vsel %vm10972, %v10981, %v10980
        %v10983 = vperm.slane %v8938, %v10974
        %v10984 = vsel %vm10976, %v10983, %v10982
        %v10985 = vperm.slane %v8941, %v10964
        %v10986 = vperm.slane %v8944, %v10966
        %v10987 = vsel %vm10968, %v10986, %v10985
        %v10988 = vperm.slane %v8947, %v10970
        %v10989 = vsel %vm10972, %v10988, %v10987
        %v10990 = vperm.slane %v8950, %v10974
        %v10991 = vsel %vm10976, %v10990, %v10989
        %v10992 = vperm.slane %v8953, %v10964
        %v10993 = vperm.slane %v8956, %v10966
        %v10994 = vsel %vm10968, %v10993, %v10992
        %v10995 = vperm.slane %v8959, %v10970
        %v10996 = vsel %vm10972, %v10995, %v10994
        %v10997 = vperm.slane %v8962, %v10974
        %v10998 = vsel %vm10976, %v10997, %v10996
        %v10999 = vperm.slane %v8965, %v10964
        %v11000 = vperm.slane %v8968, %v10966
        %v11001 = vsel %vm10968, %v11000, %v10999
        %v11002 = vperm.slane %v8971, %v10970
        %v11003 = vsel %vm10972, %v11002, %v11001
        %v11004 = vperm.slane %v8974, %v10974
        %v11005 = vsel %vm10976, %v11004, %v11003
        %v11006 = vperm.slane %v8977, %v10964
        %v11007 = vperm.slane %v8980, %v10966
        %v11008 = vsel %vm10968, %v11007, %v11006
        %v11009 = vperm.slane %v8983, %v10970
        %v11010 = vsel %vm10972, %v11009, %v11008
        %v11011 = vperm.slane %v8986, %v10974
        %v11012 = vsel %vm10976, %v11011, %v11010
        %v11013 = vperm.slane %v8989, %v10964
        %v11014 = vperm.slane %v8992, %v10966
        %v11015 = vsel %vm10968, %v11014, %v11013
        %v11016 = vperm.slane %v8995, %v10970
        %v11017 = vsel %vm10972, %v11016, %v11015
        %v11018 = vperm.slane %v8998, %v10974
        %v11019 = vsel %vm10976, %v11018, %v11017
        %v11020 = vperm.slane %v9001, %v10964
        %v11021 = vperm.slane %v9004, %v10966
        %v11022 = vsel %vm10968, %v11021, %v11020
        %v11023 = vperm.slane %v9007, %v10970
        %v11024 = vsel %vm10972, %v11023, %v11022
        %v11025 = vperm.slane %v9010, %v10974
        %v11026 = vsel %vm10976, %v11025, %v11024
        %v11027 = vperm.slane %v9013, %v10964
        %v11028 = vperm.slane %v9016, %v10966
        %v11029 = vsel %vm10968, %v11028, %v11027
        %v11030 = vperm.slane %v9019, %v10970
        %v11031 = vsel %vm10972, %v11030, %v11029
        %v11032 = vperm.slane %v9022, %v10974
        %v11033 = vsel %vm10976, %v11032, %v11031
        %v11034 = vperm.slane %v9025, %v10964
        %v11035 = vperm.slane %v9028, %v10966
        %v11036 = vsel %vm10968, %v11035, %v11034
        %v11037 = vperm.slane %v9031, %v10970
        %v11038 = vsel %vm10972, %v11037, %v11036
        %v11039 = vperm.slane %v9034, %v10974
        %v11040 = vsel %vm10976, %v11039, %v11038
        %v11041 = vperm.slane %v9037, %v10964
        %v11042 = vperm.slane %v9040, %v10966
        %v11043 = vsel %vm10968, %v11042, %v11041
        %v11044 = vperm.slane %v9043, %v10970
        %v11045 = vsel %vm10972, %v11044, %v11043
        %v11046 = vperm.slane %v9046, %v10974
        %v11047 = vsel %vm10976, %v11046, %v11045
        %v11048 = vperm.slane %v9049, %v10964
        %v11049 = vperm.slane %v9052, %v10966
        %v11050 = vsel %vm10968, %v11049, %v11048
        %v11051 = vperm.slane %v9055, %v10970
        %v11052 = vsel %vm10972, %v11051, %v11050
        %v11053 = vperm.slane %v9058, %v10974
        %v11054 = vsel %vm10976, %v11053, %v11052
        %v11055 = vperm.slane %v9061, %v10964
        %v11056 = vperm.slane %v9064, %v10966
        %v11057 = vsel %vm10968, %v11056, %v11055
        %v11058 = vperm.slane %v9067, %v10970
        %v11059 = vsel %vm10972, %v11058, %v11057
        %v11060 = vperm.slane %v9070, %v10974
        %v11061 = vsel %vm10976, %v11060, %v11059
        %v11062 = vperm.slane %v9073, %v10964
        %v11063 = vperm.slane %v9076, %v10966
        %v11064 = vsel %vm10968, %v11063, %v11062
        %v11065 = vperm.slane %v9079, %v10970
        %v11066 = vsel %vm10972, %v11065, %v11064
        %v11067 = vperm.slane %v9082, %v10974
        %v11068 = vsel %vm10976, %v11067, %v11066
        %v11069 = vperm.slane %v9085, %v10964
        %v11070 = vperm.slane %v9088, %v10966
        %v11071 = vsel %vm10968, %v11070, %v11069
        %v11072 = vperm.slane %v9091, %v10970
        %v11073 = vsel %vm10972, %v11072, %v11071
        %v11074 = vperm.slane %v9094, %v10974
        %v11075 = vsel %vm10976, %v11074, %v11073
        %v11076 = vperm.slane %v9097, %v10964
        %v11077 = vperm.slane %v9100, %v10966
        %v11078 = vsel %vm10968, %v11077, %v11076
        %v11079 = vperm.slane %v9103, %v10970
        %v11080 = vsel %vm10972, %v11079, %v11078
        %v11081 = vperm.slane %v9106, %v10974
        %v11082 = vsel %vm10976, %v11081, %v11080
        %v11083 = vperm.slane %v9109, %v10964
        %v11084 = vperm.slane %v9112, %v10966
        %v11085 = vsel %vm10968, %v11084, %v11083
        %v11086 = vperm.slane %v9115, %v10970
        %v11087 = vsel %vm10972, %v11086, %v11085
        %v11088 = vperm.slane %v9118, %v10974
        %v11089 = vsel %vm10976, %v11088, %v11087
        %v11090 = vperm.slane %v9121, %v10964
        %v11091 = vperm.slane %v9124, %v10966
        %v11092 = vsel %vm10968, %v11091, %v11090
        %v11093 = vperm.slane %v9127, %v10970
        %v11094 = vsel %vm10972, %v11093, %v11092
        %v11095 = vperm.slane %v9130, %v10974
        %v11096 = vsel %vm10976, %v11095, %v11094
        %v11097 = vperm.slane %v9133, %v10964
        %v11098 = vperm.slane %v9136, %v10966
        %v11099 = vsel %vm10968, %v11098, %v11097
        %v11100 = vperm.slane %v9139, %v10970
        %v11101 = vsel %vm10972, %v11100, %v11099
        %v11102 = vperm.slane %v9142, %v10974
        %v11103 = vsel %vm10976, %v11102, %v11101
        %v11104 = vperm.slane %v9145, %v10964
        %v11105 = vperm.slane %v9148, %v10966
        %v11106 = vsel %vm10968, %v11105, %v11104
        %v11107 = vperm.slane %v9151, %v10970
        %v11108 = vsel %vm10972, %v11107, %v11106
        %v11109 = vperm.slane %v9154, %v10974
        %v11110 = vsel %vm10976, %v11109, %v11108
        %v11111 = vperm.slane %v9157, %v10964
        %v11112 = vperm.slane %v9160, %v10966
        %v11113 = vsel %vm10968, %v11112, %v11111
        %v11114 = vperm.slane %v9163, %v10970
        %v11115 = vsel %vm10972, %v11114, %v11113
        %v11116 = vperm.slane %v9166, %v10974
        %v11117 = vsel %vm10976, %v11116, %v11115
        %v11118 = vperm.slane %v9169, %v10964
        %v11119 = vperm.slane %v9172, %v10966
        %v11120 = vsel %vm10968, %v11119, %v11118
        %v11121 = vperm.slane %v9175, %v10970
        %v11122 = vsel %vm10972, %v11121, %v11120
        %v11123 = vperm.slane %v9178, %v10974
        %v11124 = vsel %vm10976, %v11123, %v11122
        %v11125 = vperm.slane %v9181, %v10964
        %v11126 = vperm.slane %v9184, %v10966
        %v11127 = vsel %vm10968, %v11126, %v11125
        %v11128 = vperm.slane %v9187, %v10970
        %v11129 = vsel %vm10972, %v11128, %v11127
        %v11130 = vperm.slane %v9190, %v10974
        %v11131 = vsel %vm10976, %v11130, %v11129
        %v11132 = vperm.slane %v9193, %v10964
        %v11133 = vperm.slane %v9196, %v10966
        %v11134 = vsel %vm10968, %v11133, %v11132
        %v11135 = vperm.slane %v9199, %v10970
        %v11136 = vsel %vm10972, %v11135, %v11134
        %v11137 = vperm.slane %v9202, %v10974
        %v11138 = vsel %vm10976, %v11137, %v11136
        %v11139 = vperm.slane %v9205, %v10964
        %v11140 = vperm.slane %v9208, %v10966
        %v11141 = vsel %vm10968, %v11140, %v11139
        %v11142 = vperm.slane %v9211, %v10970
        %v11143 = vsel %vm10972, %v11142, %v11141
        %v11144 = vperm.slane %v9214, %v10974
        %v11145 = vsel %vm10976, %v11144, %v11143
        %v11146 = vperm.slane %v9217, %v10964
        %v11147 = vperm.slane %v9220, %v10966
        %v11148 = vsel %vm10968, %v11147, %v11146
        %v11149 = vperm.slane %v9223, %v10970
        %v11150 = vsel %vm10972, %v11149, %v11148
        %v11151 = vperm.slane %v9226, %v10974
        %v11152 = vsel %vm10976, %v11151, %v11150
        %v11153 = vperm.slane %v9229, %v10964
        %v11154 = vperm.slane %v9232, %v10966
        %v11155 = vsel %vm10968, %v11154, %v11153
        %v11156 = vperm.slane %v9235, %v10970
        %v11157 = vsel %vm10972, %v11156, %v11155
        %v11158 = vperm.slane %v9238, %v10974
        %v11159 = vsel %vm10976, %v11158, %v11157
        %v11160 = vperm.slane %v9241, %v10964
        %v11161 = vperm.slane %v9244, %v10966
        %v11162 = vsel %vm10968, %v11161, %v11160
        %v11163 = vperm.slane %v9247, %v10970
        %v11164 = vsel %vm10972, %v11163, %v11162
        %v11165 = vperm.slane %v9250, %v10974
        %v11166 = vsel %vm10976, %v11165, %v11164
        %v11167 = vperm.slane %v9253, %v10964
        %v11168 = vperm.slane %v9256, %v10966
        %v11169 = vsel %vm10968, %v11168, %v11167
        %v11170 = vperm.slane %v9259, %v10970
        %v11171 = vsel %vm10972, %v11170, %v11169
        %v11172 = vperm.slane %v9262, %v10974
        %v11173 = vsel %vm10976, %v11172, %v11171
        %v11174 = vperm.slane %v9265, %v10964
        %v11175 = vperm.slane %v9268, %v10966
        %v11176 = vsel %vm10968, %v11175, %v11174
        %v11177 = vperm.slane %v9271, %v10970
        %v11178 = vsel %vm10972, %v11177, %v11176
        %v11179 = vperm.slane %v9274, %v10974
        %v11180 = vsel %vm10976, %v11179, %v11178
        %v11181 = vperm.slane %v9277, %v10964
        %v11182 = vperm.slane %v9280, %v10966
        %v11183 = vsel %vm10968, %v11182, %v11181
        %v11184 = vperm.slane %v9283, %v10970
        %v11185 = vsel %vm10972, %v11184, %v11183
        %v11186 = vperm.slane %v9286, %v10974
        %v11187 = vsel %vm10976, %v11186, %v11185
        %v11188 = vperm.slane %v9289, %v10964
        %v11189 = vperm.slane %v9292, %v10966
        %v11190 = vsel %vm10968, %v11189, %v11188
        %v11191 = vperm.slane %v9295, %v10970
        %v11192 = vsel %vm10972, %v11191, %v11190
        %v11193 = vperm.slane %v9298, %v10974
        %v11194 = vsel %vm10976, %v11193, %v11192
        %v11195 = vperm.slane %v9301, %v10964
        %v11196 = vperm.slane %v9304, %v10966
        %v11197 = vsel %vm10968, %v11196, %v11195
        %v11198 = vperm.slane %v9307, %v10970
        %v11199 = vsel %vm10972, %v11198, %v11197
        %v11200 = vperm.slane %v9310, %v10974
        %v11201 = vsel %vm10976, %v11200, %v11199
        %v11202 = vperm.slane %v9313, %v10964
        %v11203 = vperm.slane %v9316, %v10966
        %v11204 = vsel %vm10968, %v11203, %v11202
        %v11205 = vperm.slane %v9319, %v10970
        %v11206 = vsel %vm10972, %v11205, %v11204
        %v11207 = vperm.slane %v9322, %v10974
        %v11208 = vsel %vm10976, %v11207, %v11206
        %v11209 = vperm.slane %v9325, %v10964
        %v11210 = vperm.slane %v9328, %v10966
        %v11211 = vsel %vm10968, %v11210, %v11209
        %v11212 = vperm.slane %v9331, %v10970
        %v11213 = vsel %vm10972, %v11212, %v11211
        %v11214 = vperm.slane %v9334, %v10974
        %v11215 = vsel %vm10976, %v11214, %v11213
        %v11216 = vperm.slane %v9337, %v10964
        %v11217 = vperm.slane %v9340, %v10966
        %v11218 = vsel %vm10968, %v11217, %v11216
        %v11219 = vperm.slane %v9343, %v10970
        %v11220 = vsel %vm10972, %v11219, %v11218
        %v11221 = vperm.slane %v9346, %v10974
        %v11222 = vsel %vm10976, %v11221, %v11220
        %v11223 = vperm.slane %v9349, %v10964
        %v11224 = vperm.slane %v9352, %v10966
        %v11225 = vsel %vm10968, %v11224, %v11223
        %v11226 = vperm.slane %v9355, %v10970
        %v11227 = vsel %vm10972, %v11226, %v11225
        %v11228 = vperm.slane %v9358, %v10974
        %v11229 = vsel %vm10976, %v11228, %v11227
        %v11230 = vperm.slane %v9361, %v10964
        %v11231 = vperm.slane %v9364, %v10966
        %v11232 = vsel %vm10968, %v11231, %v11230
        %v11233 = vperm.slane %v9367, %v10970
        %v11234 = vsel %vm10972, %v11233, %v11232
        %v11235 = vperm.slane %v9370, %v10974
        %v11236 = vsel %vm10976, %v11235, %v11234
        %v11237 = vperm.slane %v9373, %v10964
        %v11238 = vperm.slane %v9376, %v10966
        %v11239 = vsel %vm10968, %v11238, %v11237
        %v11240 = vperm.slane %v9379, %v10970
        %v11241 = vsel %vm10972, %v11240, %v11239
        %v11242 = vperm.slane %v9382, %v10974
        %v11243 = vsel %vm10976, %v11242, %v11241
        %v11244 = vperm.slane %v9385, %v10964
        %v11245 = vperm.slane %v9388, %v10966
        %v11246 = vsel %vm10968, %v11245, %v11244
        %v11247 = vperm.slane %v9391, %v10970
        %v11248 = vsel %vm10972, %v11247, %v11246
        %v11249 = vperm.slane %v9394, %v10974
        %v11250 = vsel %vm10976, %v11249, %v11248
        %v11251 = vperm.slane %v9397, %v10964
        %v11252 = vperm.slane %v9400, %v10966
        %v11253 = vsel %vm10968, %v11252, %v11251
        %v11254 = vperm.slane %v9403, %v10970
        %v11255 = vsel %vm10972, %v11254, %v11253
        %v11256 = vperm.slane %v9406, %v10974
        %v11257 = vsel %vm10976, %v11256, %v11255
        %v11258 = vperm.slane %v9409, %v10964
        %v11259 = vperm.slane %v9412, %v10966
        %v11260 = vsel %vm10968, %v11259, %v11258
        %v11261 = vperm.slane %v9415, %v10970
        %v11262 = vsel %vm10972, %v11261, %v11260
        %v11263 = vperm.slane %v9418, %v10974
        %v11264 = vsel %vm10976, %v11263, %v11262
        %v11265 = vperm.slane %v9421, %v10964
        %v11266 = vperm.slane %v9424, %v10966
        %v11267 = vsel %vm10968, %v11266, %v11265
        %v11268 = vperm.slane %v9427, %v10970
        %v11269 = vsel %vm10972, %v11268, %v11267
        %v11270 = vperm.slane %v9430, %v10974
        %v11271 = vsel %vm10976, %v11270, %v11269
        %v11272 = vperm.slane %v9433, %v10964
        %v11273 = vperm.slane %v9436, %v10966
        %v11274 = vsel %vm10968, %v11273, %v11272
        %v11275 = vperm.slane %v9439, %v10970
        %v11276 = vsel %vm10972, %v11275, %v11274
        %v11277 = vperm.slane %v9442, %v10974
        %v11278 = vsel %vm10976, %v11277, %v11276
        %v11279 = vperm.slane %v9445, %v10964
        %v11280 = vperm.slane %v9448, %v10966
        %v11281 = vsel %vm10968, %v11280, %v11279
        %v11282 = vperm.slane %v9451, %v10970
        %v11283 = vsel %vm10972, %v11282, %v11281
        %v11284 = vperm.slane %v9454, %v10974
        %v11285 = vsel %vm10976, %v11284, %v11283
        %v11286 = vperm.slane %v9457, %v10964
        %v11287 = vperm.slane %v9460, %v10966
        %v11288 = vsel %vm10968, %v11287, %v11286
        %v11289 = vperm.slane %v9463, %v10970
        %v11290 = vsel %vm10972, %v11289, %v11288
        %v11291 = vperm.slane %v9466, %v10974
        %v11292 = vsel %vm10976, %v11291, %v11290
        %v11293 = vperm.slane %v9469, %v10964
        %v11294 = vperm.slane %v9472, %v10966
        %v11295 = vsel %vm10968, %v11294, %v11293
        %v11296 = vperm.slane %v9475, %v10970
        %v11297 = vsel %vm10972, %v11296, %v11295
        %v11298 = vperm.slane %v9478, %v10974
        %v11299 = vsel %vm10976, %v11298, %v11297
        %v11300 = vperm.slane %v9481, %v10964
        %v11301 = vperm.slane %v9484, %v10966
        %v11302 = vsel %vm10968, %v11301, %v11300
        %v11303 = vperm.slane %v9487, %v10970
        %v11304 = vsel %vm10972, %v11303, %v11302
        %v11305 = vperm.slane %v9490, %v10974
        %v11306 = vsel %vm10976, %v11305, %v11304
        %v11307 = vperm.slane %v9493, %v10964
        %v11308 = vperm.slane %v9496, %v10966
        %v11309 = vsel %vm10968, %v11308, %v11307
        %v11310 = vperm.slane %v9499, %v10970
        %v11311 = vsel %vm10972, %v11310, %v11309
        %v11312 = vperm.slane %v9502, %v10974
        %v11313 = vsel %vm10976, %v11312, %v11311
        %v11314 = vperm.slane %v9505, %v10964
        %v11315 = vperm.slane %v9508, %v10966
        %v11316 = vsel %vm10968, %v11315, %v11314
        %v11317 = vperm.slane %v9511, %v10970
        %v11318 = vsel %vm10972, %v11317, %v11316
        %v11319 = vperm.slane %v9514, %v10974
        %v11320 = vsel %vm10976, %v11319, %v11318
        %v11321 = vperm.slane %v9517, %v10964
        %v11322 = vperm.slane %v9520, %v10966
        %v11323 = vsel %vm10968, %v11322, %v11321
        %v11324 = vperm.slane %v9523, %v10970
        %v11325 = vsel %vm10972, %v11324, %v11323
        %v11326 = vperm.slane %v9526, %v10974
        %v11327 = vsel %vm10976, %v11326, %v11325
        %v11328 = vperm.slane %v9529, %v10964
        %v11329 = vperm.slane %v9532, %v10966
        %v11330 = vsel %vm10968, %v11329, %v11328
        %v11331 = vperm.slane %v9535, %v10970
        %v11332 = vsel %vm10972, %v11331, %v11330
        %v11333 = vperm.slane %v9538, %v10974
        %v11334 = vsel %vm10976, %v11333, %v11332
        %v11335 = vperm.slane %v9541, %v10964
        %v11336 = vperm.slane %v9544, %v10966
        %v11337 = vsel %vm10968, %v11336, %v11335
        %v11338 = vperm.slane %v9547, %v10970
        %v11339 = vsel %vm10972, %v11338, %v11337
        %v11340 = vperm.slane %v9550, %v10974
        %v11341 = vsel %vm10976, %v11340, %v11339
        %v11342 = vperm.slane %v9553, %v10964
        %v11343 = vperm.slane %v9556, %v10966
        %v11344 = vsel %vm10968, %v11343, %v11342
        %v11345 = vperm.slane %v9559, %v10970
        %v11346 = vsel %vm10972, %v11345, %v11344
        %v11347 = vperm.slane %v9562, %v10974
        %v11348 = vsel %vm10976, %v11347, %v11346
        %v11349 = vperm.slane %v9565, %v10964
        %v11350 = vperm.slane %v9568, %v10966
        %v11351 = vsel %vm10968, %v11350, %v11349
        %v11352 = vperm.slane %v9571, %v10970
        %v11353 = vsel %vm10972, %v11352, %v11351
        %v11354 = vperm.slane %v9574, %v10974
        %v11355 = vsel %vm10976, %v11354, %v11353
        %v11356 = vperm.slane %v9577, %v10964
        %v11357 = vperm.slane %v9580, %v10966
        %v11358 = vsel %vm10968, %v11357, %v11356
        %v11359 = vperm.slane %v9583, %v10970
        %v11360 = vsel %vm10972, %v11359, %v11358
        %v11361 = vperm.slane %v9586, %v10974
        %v11362 = vsel %vm10976, %v11361, %v11360
        %v11363 = vperm.slane %v9589, %v10964
        %v11364 = vperm.slane %v9592, %v10966
        %v11365 = vsel %vm10968, %v11364, %v11363
        %v11366 = vperm.slane %v9595, %v10970
        %v11367 = vsel %vm10972, %v11366, %v11365
        %v11368 = vperm.slane %v9598, %v10974
        %v11369 = vsel %vm10976, %v11368, %v11367
        %v11370 = vperm.slane %v9601, %v10964
        %v11371 = vperm.slane %v9604, %v10966
        %v11372 = vsel %vm10968, %v11371, %v11370
        %v11373 = vperm.slane %v9607, %v10970
        %v11374 = vsel %vm10972, %v11373, %v11372
        %v11375 = vperm.slane %v9610, %v10974
        %v11376 = vsel %vm10976, %v11375, %v11374
        %v11377 = vperm.slane %v9613, %v10964
        %v11378 = vperm.slane %v9616, %v10966
        %v11379 = vsel %vm10968, %v11378, %v11377
        %v11380 = vperm.slane %v9619, %v10970
        %v11381 = vsel %vm10972, %v11380, %v11379
        %v11382 = vperm.slane %v9622, %v10974
        %v11383 = vsel %vm10976, %v11382, %v11381
        %v11384 = vperm.slane %v9625, %v10964
        %v11385 = vperm.slane %v9628, %v10966
        %v11386 = vsel %vm10968, %v11385, %v11384
        %v11387 = vperm.slane %v9631, %v10970
        %v11388 = vsel %vm10972, %v11387, %v11386
        %v11389 = vperm.slane %v9634, %v10974
        %v11390 = vsel %vm10976, %v11389, %v11388
        %v11391 = vperm.slane %v9637, %v10964
        %v11392 = vperm.slane %v9640, %v10966
        %v11393 = vsel %vm10968, %v11392, %v11391
        %v11394 = vperm.slane %v9643, %v10970
        %v11395 = vsel %vm10972, %v11394, %v11393
        %v11396 = vperm.slane %v9646, %v10974
        %v11397 = vsel %vm10976, %v11396, %v11395
        %v11398 = vperm.slane %v9649, %v10964
        %v11399 = vperm.slane %v9652, %v10966
        %v11400 = vsel %vm10968, %v11399, %v11398
        %v11401 = vperm.slane %v9655, %v10970
        %v11402 = vsel %vm10972, %v11401, %v11400
        %v11403 = vperm.slane %v9658, %v10974
        %v11404 = vsel %vm10976, %v11403, %v11402
        %v11405 = vperm.slane %v9661, %v10964
        %v11406 = vperm.slane %v9664, %v10966
        %v11407 = vsel %vm10968, %v11406, %v11405
        %v11408 = vperm.slane %v9667, %v10970
        %v11409 = vsel %vm10972, %v11408, %v11407
        %v11410 = vperm.slane %v9670, %v10974
        %v11411 = vsel %vm10976, %v11410, %v11409
        %v11412 = vperm.slane %v9673, %v10964
        %v11413 = vperm.slane %v9676, %v10966
        %v11414 = vsel %vm10968, %v11413, %v11412
        %v11415 = vperm.slane %v9679, %v10970
        %v11416 = vsel %vm10972, %v11415, %v11414
        %v11417 = vperm.slane %v9682, %v10974
        %v11418 = vsel %vm10976, %v11417, %v11416
        %v11419 = vperm.slane %v9685, %v10964
        %v11420 = vperm.slane %v9688, %v10966
        %v11421 = vsel %vm10968, %v11420, %v11419
        %v11422 = vperm.slane %v9691, %v10970
        %v11423 = vsel %vm10972, %v11422, %v11421
        %v11424 = vperm.slane %v9694, %v10974
        %v11425 = vsel %vm10976, %v11424, %v11423
        %v11426 = vperm.slane %v9697, %v10964
        %v11427 = vperm.slane %v9700, %v10966
        %v11428 = vsel %vm10968, %v11427, %v11426
        %v11429 = vperm.slane %v9703, %v10970
        %v11430 = vsel %vm10972, %v11429, %v11428
        %v11431 = vperm.slane %v9706, %v10974
        %v11432 = vsel %vm10976, %v11431, %v11430
        %v11433 = vperm.slane %v9709, %v10964
        %v11434 = vperm.slane %v9712, %v10966
        %v11435 = vsel %vm10968, %v11434, %v11433
        %v11436 = vperm.slane %v9715, %v10970
        %v11437 = vsel %vm10972, %v11436, %v11435
        %v11438 = vperm.slane %v9718, %v10974
        %v11439 = vsel %vm10976, %v11438, %v11437
        %v11440 = vperm.slane %v9721, %v10964
        %v11441 = vperm.slane %v9724, %v10966
        %v11442 = vsel %vm10968, %v11441, %v11440
        %v11443 = vperm.slane %v9727, %v10970
        %v11444 = vsel %vm10972, %v11443, %v11442
        %v11445 = vperm.slane %v9730, %v10974
        %v11446 = vsel %vm10976, %v11445, %v11444
        %v11447 = vperm.slane %v9733, %v10964
        %v11448 = vperm.slane %v9736, %v10966
        %v11449 = vsel %vm10968, %v11448, %v11447
        %v11450 = vperm.slane %v9739, %v10970
        %v11451 = vsel %vm10972, %v11450, %v11449
        %v11452 = vperm.slane %v9742, %v10974
        %v11453 = vsel %vm10976, %v11452, %v11451
        %v11454 = vperm.slane %v9745, %v10964
        %v11455 = vperm.slane %v9748, %v10966
        %v11456 = vsel %vm10968, %v11455, %v11454
        %v11457 = vperm.slane %v9751, %v10970
        %v11458 = vsel %vm10972, %v11457, %v11456
        %v11459 = vperm.slane %v9754, %v10974
        %v11460 = vsel %vm10976, %v11459, %v11458
        %v11461 = vperm.slane %v9757, %v10964
        %v11462 = vperm.slane %v9760, %v10966
        %v11463 = vsel %vm10968, %v11462, %v11461
        %v11464 = vperm.slane %v9763, %v10970
        %v11465 = vsel %vm10972, %v11464, %v11463
        %v11466 = vperm.slane %v9766, %v10974
        %v11467 = vsel %vm10976, %v11466, %v11465
        %v11468 = vperm.slane %v9769, %v10964
        %v11469 = vperm.slane %v9772, %v10966
        %v11470 = vsel %vm10968, %v11469, %v11468
        %v11471 = vperm.slane %v9775, %v10970
        %v11472 = vsel %vm10972, %v11471, %v11470
        %v11473 = vperm.slane %v9778, %v10974
        %v11474 = vsel %vm10976, %v11473, %v11472
        %v11475 = vperm.slane %v9781, %v10964
        %v11476 = vperm.slane %v9784, %v10966
        %v11477 = vsel %vm10968, %v11476, %v11475
        %v11478 = vperm.slane %v9787, %v10970
        %v11479 = vsel %vm10972, %v11478, %v11477
        %v11480 = vperm.slane %v9790, %v10974
        %v11481 = vsel %vm10976, %v11480, %v11479
        %v11482 = vperm.slane %v9793, %v10964
        %v11483 = vperm.slane %v9796, %v10966
        %v11484 = vsel %vm10968, %v11483, %v11482
        %v11485 = vperm.slane %v9799, %v10970
        %v11486 = vsel %vm10972, %v11485, %v11484
        %v11487 = vperm.slane %v9802, %v10974
        %v11488 = vsel %vm10976, %v11487, %v11486
        %v11489 = vperm.slane %v9805, %v10964
        %v11490 = vperm.slane %v9808, %v10966
        %v11491 = vsel %vm10968, %v11490, %v11489
        %v11492 = vperm.slane %v9811, %v10970
        %v11493 = vsel %vm10972, %v11492, %v11491
        %v11494 = vperm.slane %v9814, %v10974
        %v11495 = vsel %vm10976, %v11494, %v11493
        %v11496 = vperm.slane %v9817, %v10964
        %v11497 = vperm.slane %v9820, %v10966
        %v11498 = vsel %vm10968, %v11497, %v11496
        %v11499 = vperm.slane %v9823, %v10970
        %v11500 = vsel %vm10972, %v11499, %v11498
        %v11501 = vperm.slane %v9826, %v10974
        %v11502 = vsel %vm10976, %v11501, %v11500
        %v11503 = vperm.slane %v9829, %v10964
        %v11504 = vperm.slane %v9832, %v10966
        %v11505 = vsel %vm10968, %v11504, %v11503
        %v11506 = vperm.slane %v9835, %v10970
        %v11507 = vsel %vm10972, %v11506, %v11505
        %v11508 = vperm.slane %v9838, %v10974
        %v11509 = vsel %vm10976, %v11508, %v11507
        %v11510 = vperm.slane %v9841, %v10964
        %v11511 = vperm.slane %v9844, %v10966
        %v11512 = vsel %vm10968, %v11511, %v11510
        %v11513 = vperm.slane %v9847, %v10970
        %v11514 = vsel %vm10972, %v11513, %v11512
        %v11515 = vperm.slane %v9850, %v10974
        %v11516 = vsel %vm10976, %v11515, %v11514
        %v11517 = vperm.slane %v9853, %v10964
        %v11518 = vperm.slane %v9856, %v10966
        %v11519 = vsel %vm10968, %v11518, %v11517
        %v11520 = vperm.slane %v9859, %v10970
        %v11521 = vsel %vm10972, %v11520, %v11519
        %v11522 = vperm.slane %v9862, %v10974
        %v11523 = vsel %vm10976, %v11522, %v11521
        %v11524 = vperm.slane %v9865, %v10964
        %v11525 = vperm.slane %v9868, %v10966
        %v11526 = vsel %vm10968, %v11525, %v11524
        %v11527 = vperm.slane %v9871, %v10970
        %v11528 = vsel %vm10972, %v11527, %v11526
        %v11529 = vperm.slane %v9874, %v10974
        %v11530 = vsel %vm10976, %v11529, %v11528
        %v11531 = vperm.slane %v9877, %v10964
        %v11532 = vperm.slane %v9880, %v10966
        %v11533 = vsel %vm10968, %v11532, %v11531
        %v11534 = vperm.slane %v9883, %v10970
        %v11535 = vsel %vm10972, %v11534, %v11533
        %v11536 = vperm.slane %v9886, %v10974
        %v11537 = vsel %vm10976, %v11536, %v11535
        %v11538 = vperm.slane %v9889, %v10964
        %v11539 = vperm.slane %v9892, %v10966
        %v11540 = vsel %vm10968, %v11539, %v11538
        %v11541 = vperm.slane %v9895, %v10970
        %v11542 = vsel %vm10972, %v11541, %v11540
        %v11543 = vperm.slane %v9898, %v10974
        %v11544 = vsel %vm10976, %v11543, %v11542
        %v11545 = vperm.slane %v9901, %v10964
        %v11546 = vperm.slane %v9904, %v10966
        %v11547 = vsel %vm10968, %v11546, %v11545
        %v11548 = vperm.slane %v9907, %v10970
        %v11549 = vsel %vm10972, %v11548, %v11547
        %v11550 = vperm.slane %v9910, %v10974
        %v11551 = vsel %vm10976, %v11550, %v11549
        %v11552 = vperm.slane %v9913, %v10964
        %v11553 = vperm.slane %v9916, %v10966
        %v11554 = vsel %vm10968, %v11553, %v11552
        %v11555 = vperm.slane %v9919, %v10970
        %v11556 = vsel %vm10972, %v11555, %v11554
        %v11557 = vperm.slane %v9922, %v10974
        %v11558 = vsel %vm10976, %v11557, %v11556
        %v11559 = vperm.slane %v9925, %v10964
        %v11560 = vperm.slane %v9928, %v10966
        %v11561 = vsel %vm10968, %v11560, %v11559
        %v11562 = vperm.slane %v9931, %v10970
        %v11563 = vsel %vm10972, %v11562, %v11561
        %v11564 = vperm.slane %v9934, %v10974
        %v11565 = vsel %vm10976, %v11564, %v11563
        %v11566 = vperm.slane %v9937, %v10964
        %v11567 = vperm.slane %v9940, %v10966
        %v11568 = vsel %vm10968, %v11567, %v11566
        %v11569 = vperm.slane %v9943, %v10970
        %v11570 = vsel %vm10972, %v11569, %v11568
        %v11571 = vperm.slane %v9946, %v10974
        %v11572 = vsel %vm10976, %v11571, %v11570
        %v11573 = vperm.slane %v9949, %v10964
        %v11574 = vperm.slane %v9952, %v10966
        %v11575 = vsel %vm10968, %v11574, %v11573
        %v11576 = vperm.slane %v9955, %v10970
        %v11577 = vsel %vm10972, %v11576, %v11575
        %v11578 = vperm.slane %v9958, %v10974
        %v11579 = vsel %vm10976, %v11578, %v11577
        %v11580 = vperm.slane %v9961, %v10964
        %v11581 = vperm.slane %v9964, %v10966
        %v11582 = vsel %vm10968, %v11581, %v11580
        %v11583 = vperm.slane %v9967, %v10970
        %v11584 = vsel %vm10972, %v11583, %v11582
        %v11585 = vperm.slane %v9970, %v10974
        %v11586 = vsel %vm10976, %v11585, %v11584
        %v11587 = vperm.slane %v9973, %v10964
        %v11588 = vperm.slane %v9976, %v10966
        %v11589 = vsel %vm10968, %v11588, %v11587
        %v11590 = vperm.slane %v9979, %v10970
        %v11591 = vsel %vm10972, %v11590, %v11589
        %v11592 = vperm.slane %v9982, %v10974
        %v11593 = vsel %vm10976, %v11592, %v11591
        %v11594 = vperm.slane %v9985, %v10964
        %v11595 = vperm.slane %v9988, %v10966
        %v11596 = vsel %vm10968, %v11595, %v11594
        %v11597 = vperm.slane %v9991, %v10970
        %v11598 = vsel %vm10972, %v11597, %v11596
        %v11599 = vperm.slane %v9994, %v10974
        %v11600 = vsel %vm10976, %v11599, %v11598
        %v11601 = vperm.slane %v9997, %v10964
        %v11602 = vperm.slane %v10000, %v10966
        %v11603 = vsel %vm10968, %v11602, %v11601
        %v11604 = vperm.slane %v10003, %v10970
        %v11605 = vsel %vm10972, %v11604, %v11603
        %v11606 = vperm.slane %v10006, %v10974
        %v11607 = vsel %vm10976, %v11606, %v11605
        %v11608 = vperm.slane %v10009, %v10964
        %v11609 = vperm.slane %v10012, %v10966
        %v11610 = vsel %vm10968, %v11609, %v11608
        %v11611 = vperm.slane %v10015, %v10970
        %v11612 = vsel %vm10972, %v11611, %v11610
        %v11613 = vperm.slane %v10018, %v10974
        %v11614 = vsel %vm10976, %v11613, %v11612
        %v11615 = vperm.slane %v10021, %v10964
        %v11616 = vperm.slane %v10024, %v10966
        %v11617 = vsel %vm10968, %v11616, %v11615
        %v11618 = vperm.slane %v10027, %v10970
        %v11619 = vsel %vm10972, %v11618, %v11617
        %v11620 = vperm.slane %v10030, %v10974
        %v11621 = vsel %vm10976, %v11620, %v11619
        %v11622 = vperm.slane %v10033, %v10964
        %v11623 = vperm.slane %v10036, %v10966
        %v11624 = vsel %vm10968, %v11623, %v11622
        %v11625 = vperm.slane %v10039, %v10970
        %v11626 = vsel %vm10972, %v11625, %v11624
        %v11627 = vperm.slane %v10042, %v10974
        %v11628 = vsel %vm10976, %v11627, %v11626
        %v11629 = vperm.slane %v10045, %v10964
        %v11630 = vperm.slane %v10048, %v10966
        %v11631 = vsel %vm10968, %v11630, %v11629
        %v11632 = vperm.slane %v10051, %v10970
        %v11633 = vsel %vm10972, %v11632, %v11631
        %v11634 = vperm.slane %v10054, %v10974
        %v11635 = vsel %vm10976, %v11634, %v11633
        %v11636 = vperm.slane %v10057, %v10964
        %v11637 = vperm.slane %v10060, %v10966
        %v11638 = vsel %vm10968, %v11637, %v11636
        %v11639 = vperm.slane %v10063, %v10970
        %v11640 = vsel %vm10972, %v11639, %v11638
        %v11641 = vperm.slane %v10066, %v10974
        %v11642 = vsel %vm10976, %v11641, %v11640
        %v11643 = vperm.slane %v10069, %v10964
        %v11644 = vperm.slane %v10072, %v10966
        %v11645 = vsel %vm10968, %v11644, %v11643
        %v11646 = vperm.slane %v10075, %v10970
        %v11647 = vsel %vm10972, %v11646, %v11645
        %v11648 = vperm.slane %v10078, %v10974
        %v11649 = vsel %vm10976, %v11648, %v11647
        %v11650 = vperm.slane %v10081, %v10964
        %v11651 = vperm.slane %v10084, %v10966
        %v11652 = vsel %vm10968, %v11651, %v11650
        %v11653 = vperm.slane %v10087, %v10970
        %v11654 = vsel %vm10972, %v11653, %v11652
        %v11655 = vperm.slane %v10090, %v10974
        %v11656 = vsel %vm10976, %v11655, %v11654
        %v11657 = vperm.slane %v10093, %v10964
        %v11658 = vperm.slane %v10096, %v10966
        %v11659 = vsel %vm10968, %v11658, %v11657
        %v11660 = vperm.slane %v10099, %v10970
        %v11661 = vsel %vm10972, %v11660, %v11659
        %v11662 = vperm.slane %v10102, %v10974
        %v11663 = vsel %vm10976, %v11662, %v11661
        %v11664 = vperm.slane %v10105, %v10964
        %v11665 = vperm.slane %v10108, %v10966
        %v11666 = vsel %vm10968, %v11665, %v11664
        %v11667 = vperm.slane %v10111, %v10970
        %v11668 = vsel %vm10972, %v11667, %v11666
        %v11669 = vperm.slane %v10114, %v10974
        %v11670 = vsel %vm10976, %v11669, %v11668
        %v11671 = vperm.slane %v10117, %v10964
        %v11672 = vperm.slane %v10120, %v10966
        %v11673 = vsel %vm10968, %v11672, %v11671
        %v11674 = vperm.slane %v10123, %v10970
        %v11675 = vsel %vm10972, %v11674, %v11673
        %v11676 = vperm.slane %v10126, %v10974
        %v11677 = vsel %vm10976, %v11676, %v11675
        %v11678 = vperm.slane %v10129, %v10964
        %v11679 = vperm.slane %v10132, %v10966
        %v11680 = vsel %vm10968, %v11679, %v11678
        %v11681 = vperm.slane %v10135, %v10970
        %v11682 = vsel %vm10972, %v11681, %v11680
        %v11683 = vperm.slane %v10138, %v10974
        %v11684 = vsel %vm10976, %v11683, %v11682
        %v11685 = vperm.slane %v10141, %v10964
        %v11686 = vperm.slane %v10144, %v10966
        %v11687 = vsel %vm10968, %v11686, %v11685
        %v11688 = vperm.slane %v10147, %v10970
        %v11689 = vsel %vm10972, %v11688, %v11687
        %v11690 = vperm.slane %v10150, %v10974
        %v11691 = vsel %vm10976, %v11690, %v11689
        %v11692 = vperm.slane %v10153, %v10964
        %v11693 = vperm.slane %v10156, %v10966
        %v11694 = vsel %vm10968, %v11693, %v11692
        %v11695 = vperm.slane %v10159, %v10970
        %v11696 = vsel %vm10972, %v11695, %v11694
        %v11697 = vperm.slane %v10162, %v10974
        %v11698 = vsel %vm10976, %v11697, %v11696
        %v11699 = vperm.slane %v10165, %v10964
        %v11700 = vperm.slane %v10168, %v10966
        %v11701 = vsel %vm10968, %v11700, %v11699
        %v11702 = vperm.slane %v10171, %v10970
        %v11703 = vsel %vm10972, %v11702, %v11701
        %v11704 = vperm.slane %v10174, %v10974
        %v11705 = vsel %vm10976, %v11704, %v11703
        %v11706 = vperm.slane %v10177, %v10964
        %v11707 = vperm.slane %v10180, %v10966
        %v11708 = vsel %vm10968, %v11707, %v11706
        %v11709 = vperm.slane %v10183, %v10970
        %v11710 = vsel %vm10972, %v11709, %v11708
        %v11711 = vperm.slane %v10186, %v10974
        %v11712 = vsel %vm10976, %v11711, %v11710
        %v11713 = vperm.slane %v10189, %v10964
        %v11714 = vperm.slane %v10192, %v10966
        %v11715 = vsel %vm10968, %v11714, %v11713
        %v11716 = vperm.slane %v10195, %v10970
        %v11717 = vsel %vm10972, %v11716, %v11715
        %v11718 = vperm.slane %v10198, %v10974
        %v11719 = vsel %vm10976, %v11718, %v11717
        %v11720 = vperm.slane %v10201, %v10964
        %v11721 = vperm.slane %v10204, %v10966
        %v11722 = vsel %vm10968, %v11721, %v11720
        %v11723 = vperm.slane %v10207, %v10970
        %v11724 = vsel %vm10972, %v11723, %v11722
        %v11725 = vperm.slane %v10210, %v10974
        %v11726 = vsel %vm10976, %v11725, %v11724
        %v11727 = vperm.slane %v10213, %v10964
        %v11728 = vperm.slane %v10216, %v10966
        %v11729 = vsel %vm10968, %v11728, %v11727
        %v11730 = vperm.slane %v10219, %v10970
        %v11731 = vsel %vm10972, %v11730, %v11729
        %v11732 = vperm.slane %v10222, %v10974
        %v11733 = vsel %vm10976, %v11732, %v11731
        %v11734 = vperm.slane %v10225, %v10964
        %v11735 = vperm.slane %v10228, %v10966
        %v11736 = vsel %vm10968, %v11735, %v11734
        %v11737 = vperm.slane %v10231, %v10970
        %v11738 = vsel %vm10972, %v11737, %v11736
        %v11739 = vperm.slane %v10234, %v10974
        %v11740 = vsel %vm10976, %v11739, %v11738
        %v11741 = vperm.slane %v10237, %v10964
        %v11742 = vperm.slane %v10240, %v10966
        %v11743 = vsel %vm10968, %v11742, %v11741
        %v11744 = vperm.slane %v10243, %v10970
        %v11745 = vsel %vm10972, %v11744, %v11743
        %v11746 = vperm.slane %v10246, %v10974
        %v11747 = vsel %vm10976, %v11746, %v11745
        %v11748 = vperm.slane %v10249, %v10964
        %v11749 = vperm.slane %v10252, %v10966
        %v11750 = vsel %vm10968, %v11749, %v11748
        %v11751 = vperm.slane %v10255, %v10970
        %v11752 = vsel %vm10972, %v11751, %v11750
        %v11753 = vperm.slane %v10258, %v10974
        %v11754 = vsel %vm10976, %v11753, %v11752
        %v11755 = vperm.slane %v10261, %v10964
        %v11756 = vperm.slane %v10264, %v10966
        %v11757 = vsel %vm10968, %v11756, %v11755
        %v11758 = vperm.slane %v10267, %v10970
        %v11759 = vsel %vm10972, %v11758, %v11757
        %v11760 = vperm.slane %v10270, %v10974
        %v11761 = vsel %vm10976, %v11760, %v11759
        %v11762 = vperm.slane %v10273, %v10964
        %v11763 = vperm.slane %v10276, %v10966
        %v11764 = vsel %vm10968, %v11763, %v11762
        %v11765 = vperm.slane %v10279, %v10970
        %v11766 = vsel %vm10972, %v11765, %v11764
        %v11767 = vperm.slane %v10282, %v10974
        %v11768 = vsel %vm10976, %v11767, %v11766
        %v11769 = vperm.slane %v10285, %v10964
        %v11770 = vperm.slane %v10288, %v10966
        %v11771 = vsel %vm10968, %v11770, %v11769
        %v11772 = vperm.slane %v10291, %v10970
        %v11773 = vsel %vm10972, %v11772, %v11771
        %v11774 = vperm.slane %v10294, %v10974
        %v11775 = vsel %vm10976, %v11774, %v11773
        %v11776 = vperm.slane %v10297, %v10964
        %v11777 = vperm.slane %v10300, %v10966
        %v11778 = vsel %vm10968, %v11777, %v11776
        %v11779 = vperm.slane %v10303, %v10970
        %v11780 = vsel %vm10972, %v11779, %v11778
        %v11781 = vperm.slane %v10306, %v10974
        %v11782 = vsel %vm10976, %v11781, %v11780
        %v11783 = vperm.slane %v10309, %v10964
        %v11784 = vperm.slane %v10312, %v10966
        %v11785 = vsel %vm10968, %v11784, %v11783
        %v11786 = vperm.slane %v10315, %v10970
        %v11787 = vsel %vm10972, %v11786, %v11785
        %v11788 = vperm.slane %v10318, %v10974
        %v11789 = vsel %vm10976, %v11788, %v11787
        %v11790 = vperm.slane %v10321, %v10964
        %v11791 = vperm.slane %v10324, %v10966
        %v11792 = vsel %vm10968, %v11791, %v11790
        %v11793 = vperm.slane %v10327, %v10970
        %v11794 = vsel %vm10972, %v11793, %v11792
        %v11795 = vperm.slane %v10330, %v10974
        %v11796 = vsel %vm10976, %v11795, %v11794
        %v11797 = vperm.slane %v10333, %v10964
        %v11798 = vperm.slane %v10336, %v10966
        %v11799 = vsel %vm10968, %v11798, %v11797
        %v11800 = vperm.slane %v10339, %v10970
        %v11801 = vsel %vm10972, %v11800, %v11799
        %v11802 = vperm.slane %v10342, %v10974
        %v11803 = vsel %vm10976, %v11802, %v11801
        %v11804 = vperm.slane %v10345, %v10964
        %v11805 = vperm.slane %v10348, %v10966
        %v11806 = vsel %vm10968, %v11805, %v11804
        %v11807 = vperm.slane %v10351, %v10970
        %v11808 = vsel %vm10972, %v11807, %v11806
        %v11809 = vperm.slane %v10354, %v10974
        %v11810 = vsel %vm10976, %v11809, %v11808
        %v11811 = vperm.slane %v10357, %v10964
        %v11812 = vperm.slane %v10360, %v10966
        %v11813 = vsel %vm10968, %v11812, %v11811
        %v11814 = vperm.slane %v10363, %v10970
        %v11815 = vsel %vm10972, %v11814, %v11813
        %v11816 = vperm.slane %v10366, %v10974
        %v11817 = vsel %vm10976, %v11816, %v11815
        %v11818 = vperm.slane %v10369, %v10964
        %v11819 = vperm.slane %v10372, %v10966
        %v11820 = vsel %vm10968, %v11819, %v11818
        %v11821 = vperm.slane %v10375, %v10970
        %v11822 = vsel %vm10972, %v11821, %v11820
        %v11823 = vperm.slane %v10378, %v10974
        %v11824 = vsel %vm10976, %v11823, %v11822
        %v11825 = vperm.slane %v10381, %v10964
        %v11826 = vperm.slane %v10384, %v10966
        %v11827 = vsel %vm10968, %v11826, %v11825
        %v11828 = vperm.slane %v10387, %v10970
        %v11829 = vsel %vm10972, %v11828, %v11827
        %v11830 = vperm.slane %v10390, %v10974
        %v11831 = vsel %vm10976, %v11830, %v11829
        %v11832 = vperm.slane %v10393, %v10964
        %v11833 = vperm.slane %v10396, %v10966
        %v11834 = vsel %vm10968, %v11833, %v11832
        %v11835 = vperm.slane %v10399, %v10970
        %v11836 = vsel %vm10972, %v11835, %v11834
        %v11837 = vperm.slane %v10402, %v10974
        %v11838 = vsel %vm10976, %v11837, %v11836
        %v11839 = vperm.slane %v10405, %v10964
        %v11840 = vperm.slane %v10408, %v10966
        %v11841 = vsel %vm10968, %v11840, %v11839
        %v11842 = vperm.slane %v10411, %v10970
        %v11843 = vsel %vm10972, %v11842, %v11841
        %v11844 = vperm.slane %v10414, %v10974
        %v11845 = vsel %vm10976, %v11844, %v11843
        %v11846 = vperm.slane %v10417, %v10964
        %v11847 = vperm.slane %v10420, %v10966
        %v11848 = vsel %vm10968, %v11847, %v11846
        %v11849 = vperm.slane %v10423, %v10970
        %v11850 = vsel %vm10972, %v11849, %v11848
        %v11851 = vperm.slane %v10426, %v10974
        %v11852 = vsel %vm10976, %v11851, %v11850
        %v11853 = vperm.slane %v10429, %v10964
        %v11854 = vperm.slane %v10432, %v10966
        %v11855 = vsel %vm10968, %v11854, %v11853
        %v11856 = vperm.slane %v10435, %v10970
        %v11857 = vsel %vm10972, %v11856, %v11855
        %v11858 = vperm.slane %v10438, %v10974
        %v11859 = vsel %vm10976, %v11858, %v11857
        %v11860 = vperm.slane %v10441, %v10964
        %v11861 = vperm.slane %v10444, %v10966
        %v11862 = vsel %vm10968, %v11861, %v11860
        %v11863 = vperm.slane %v10447, %v10970
        %v11864 = vsel %vm10972, %v11863, %v11862
        %v11865 = vperm.slane %v10450, %v10974
        %v11866 = vsel %vm10976, %v11865, %v11864
        %vm11867 = vcmask 1041409
        %v11868 = vsel %vm11867, %v10984, %v10977
        %vm11869 = vcmask 1042434
        %v11870 = vsel %vm11869, %v10991, %v11868
        %vm11871 = vcmask 1043459
        %v11872 = vsel %vm11871, %v10998, %v11870
        %vm11873 = vcmask 1044484
        %v11874 = vsel %vm11873, %v11005, %v11872
        %vm11875 = vcmask 1045509
        %v11876 = vsel %vm11875, %v11012, %v11874
        %vm11877 = vcmask 1046534
        %v11878 = vsel %vm11877, %v11019, %v11876
        %vm11879 = vcmask 1047559
        %v11880 = vsel %vm11879, %v11026, %v11878
        %v11881 = vsel %vm11867, %v11040, %v11033
        %v11882 = vsel %vm11869, %v11047, %v11881
        %v11883 = vsel %vm11871, %v11054, %v11882
        %v11884 = vsel %vm11873, %v11061, %v11883
        %v11885 = vsel %vm11875, %v11068, %v11884
        %v11886 = vsel %vm11877, %v11075, %v11885
        %v11887 = vsel %vm11879, %v11082, %v11886
        %v11888 = vsel %vm11867, %v11096, %v11089
        %v11889 = vsel %vm11869, %v11103, %v11888
        %v11890 = vsel %vm11871, %v11110, %v11889
        %v11891 = vsel %vm11873, %v11117, %v11890
        %v11892 = vsel %vm11875, %v11124, %v11891
        %v11893 = vsel %vm11877, %v11131, %v11892
        %v11894 = vsel %vm11879, %v11138, %v11893
        %v11895 = vsel %vm11867, %v11152, %v11145
        %v11896 = vsel %vm11869, %v11159, %v11895
        %v11897 = vsel %vm11871, %v11166, %v11896
        %v11898 = vsel %vm11873, %v11173, %v11897
        %v11899 = vsel %vm11875, %v11180, %v11898
        %v11900 = vsel %vm11877, %v11187, %v11899
        %v11901 = vsel %vm11879, %v11194, %v11900
        %v11902 = vsel %vm11867, %v11208, %v11201
        %v11903 = vsel %vm11869, %v11215, %v11902
        %v11904 = vsel %vm11871, %v11222, %v11903
        %v11905 = vsel %vm11873, %v11229, %v11904
        %v11906 = vsel %vm11875, %v11236, %v11905
        %v11907 = vsel %vm11877, %v11243, %v11906
        %v11908 = vsel %vm11879, %v11250, %v11907
        %v11909 = vsel %vm11867, %v11264, %v11257
        %v11910 = vsel %vm11869, %v11271, %v11909
        %v11911 = vsel %vm11871, %v11278, %v11910
        %v11912 = vsel %vm11873, %v11285, %v11911
        %v11913 = vsel %vm11875, %v11292, %v11912
        %v11914 = vsel %vm11877, %v11299, %v11913
        %v11915 = vsel %vm11879, %v11306, %v11914
        %v11916 = vsel %vm11867, %v11320, %v11313
        %v11917 = vsel %vm11869, %v11327, %v11916
        %v11918 = vsel %vm11871, %v11334, %v11917
        %v11919 = vsel %vm11873, %v11341, %v11918
        %v11920 = vsel %vm11875, %v11348, %v11919
        %v11921 = vsel %vm11877, %v11355, %v11920
        %v11922 = vsel %vm11879, %v11362, %v11921
        %v11923 = vsel %vm11867, %v11376, %v11369
        %v11924 = vsel %vm11869, %v11383, %v11923
        %v11925 = vsel %vm11871, %v11390, %v11924
        %v11926 = vsel %vm11873, %v11397, %v11925
        %v11927 = vsel %vm11875, %v11404, %v11926
        %v11928 = vsel %vm11877, %v11411, %v11927
        %v11929 = vsel %vm11879, %v11418, %v11928
        %v11930 = vsel %vm11867, %v11432, %v11425
        %v11931 = vsel %vm11869, %v11439, %v11930
        %v11932 = vsel %vm11871, %v11446, %v11931
        %v11933 = vsel %vm11873, %v11453, %v11932
        %v11934 = vsel %vm11875, %v11460, %v11933
        %v11935 = vsel %vm11877, %v11467, %v11934
        %v11936 = vsel %vm11879, %v11474, %v11935
        %v11937 = vsel %vm11867, %v11488, %v11481
        %v11938 = vsel %vm11869, %v11495, %v11937
        %v11939 = vsel %vm11871, %v11502, %v11938
        %v11940 = vsel %vm11873, %v11509, %v11939
        %v11941 = vsel %vm11875, %v11516, %v11940
        %v11942 = vsel %vm11877, %v11523, %v11941
        %v11943 = vsel %vm11879, %v11530, %v11942
        %v11944 = vsel %vm11867, %v11544, %v11537
        %v11945 = vsel %vm11869, %v11551, %v11944
        %v11946 = vsel %vm11871, %v11558, %v11945
        %v11947 = vsel %vm11873, %v11565, %v11946
        %v11948 = vsel %vm11875, %v11572, %v11947
        %v11949 = vsel %vm11877, %v11579, %v11948
        %v11950 = vsel %vm11879, %v11586, %v11949
        %v11951 = vsel %vm11867, %v11600, %v11593
        %v11952 = vsel %vm11869, %v11607, %v11951
        %v11953 = vsel %vm11871, %v11614, %v11952
        %v11954 = vsel %vm11873, %v11621, %v11953
        %v11955 = vsel %vm11875, %v11628, %v11954
        %v11956 = vsel %vm11877, %v11635, %v11955
        %v11957 = vsel %vm11879, %v11642, %v11956
        %v11958 = vsel %vm11867, %v11656, %v11649
        %v11959 = vsel %vm11869, %v11663, %v11958
        %v11960 = vsel %vm11871, %v11670, %v11959
        %v11961 = vsel %vm11873, %v11677, %v11960
        %v11962 = vsel %vm11875, %v11684, %v11961
        %v11963 = vsel %vm11877, %v11691, %v11962
        %v11964 = vsel %vm11879, %v11698, %v11963
        %v11965 = vsel %vm11867, %v11712, %v11705
        %v11966 = vsel %vm11869, %v11719, %v11965
        %v11967 = vsel %vm11871, %v11726, %v11966
        %v11968 = vsel %vm11873, %v11733, %v11967
        %v11969 = vsel %vm11875, %v11740, %v11968
        %v11970 = vsel %vm11877, %v11747, %v11969
        %v11971 = vsel %vm11879, %v11754, %v11970
        %v11972 = vsel %vm11867, %v11768, %v11761
        %v11973 = vsel %vm11869, %v11775, %v11972
        %v11974 = vsel %vm11871, %v11782, %v11973
        %v11975 = vsel %vm11873, %v11789, %v11974
        %v11976 = vsel %vm11875, %v11796, %v11975
        %v11977 = vsel %vm11877, %v11803, %v11976
        %v11978 = vsel %vm11879, %v11810, %v11977
        %v11979 = vsel %vm11867, %v11824, %v11817
        %v11980 = vsel %vm11869, %v11831, %v11979
        %v11981 = vsel %vm11871, %v11838, %v11980
        %v11982 = vsel %vm11873, %v11845, %v11981
        %v11983 = vsel %vm11875, %v11852, %v11982
        %v11984 = vsel %vm11877, %v11859, %v11983
        %v11985 = vsel %vm11879, %v11866, %v11984
        %s12002 = smul.u32 0, 32
        %s12003 = scalar_lea.vmem %s155, %s12002 [#allocation5]
        %vm12004 = vcmask 261120
        %12005 = vst.msk [vmem:[%s12003] sm:$0xff] %vm12004, %v11880
        %12006 = vst.msk [vmem:[%s12003 + $0x8] sm:$0xff] %vm12004, %v11887
        %12007 = vst.msk [vmem:[%s12003 + $0x10] sm:$0xff] %vm12004, %v11894
        %12008 = vst.msk [vmem:[%s12003 + $0x18] sm:$0xff] %vm12004, %v11901
        %12009 = vst.msk [vmem:[%s12003 + $0x20] sm:$0xff] %vm12004, %v11908
        %12010 = vst.msk [vmem:[%s12003 + $0x28] sm:$0xff] %vm12004, %v11915
        %12011 = vst.msk [vmem:[%s12003 + $0x30] sm:$0xff] %vm12004, %v11922
        %12012 = vst.msk [vmem:[%s12003 + $0x38] sm:$0xff] %vm12004, %v11929
        %12013 = vst.msk [vmem:[%s12003 + $0x40] sm:$0xff] %vm12004, %v11936
        %12014 = vst.msk [vmem:[%s12003 + $0x48] sm:$0xff] %vm12004, %v11943
        %12015 = vst.msk [vmem:[%s12003 + $0x50] sm:$0xff] %vm12004, %v11950
        %12016 = vst.msk [vmem:[%s12003 + $0x58] sm:$0xff] %vm12004, %v11957
        %12017 = vst.msk [vmem:[%s12003 + $0x60] sm:$0xff] %vm12004, %v11964
        %12018 = vst.msk [vmem:[%s12003 + $0x68] sm:$0xff] %vm12004, %v11971
        %12019 = vst.msk [vmem:[%s12003 + $0x70] sm:$0xff] %vm12004, %v11978
        %12020 = vst.msk [vmem:[%s12003 + $0x78] sm:$0xff] %vm12004, %v11985
        %s12021 = sand.u32 %s68, 1
        %s12022 = scalar_lea.sflag [#allocation4], %s12021
        %s12023 = sand.u32 %s68, 1
        %s12024 = smul.addr %s12023, 128
        %s12025 = scalar_lea.vmem [#allocation5], %s12024
        // Predicated region
        $region29: #{maxpool2d_pallas.1} parent=23 // pred_check
          %p12026 = pneg %p78
        $region30: #{maxpool2d_pallas.1} parent=23 // pred_check_branch
          %12028 = sbr.rel (%p12026) target = $region32
        $region31: #{maxpool2d_pallas.1} parent=23 // pred_region
          %s12029 = smul.u32 4, %s22
          %s12030 = smul.u32 4, %s23
          %12032 = vsyncadd %s12022, 0
          %s12033 = smul.addr %s12029, 4
          %s12034 = sadd.s32 %s12030, %s12033
          %s12035 = smul.addr %s12034, 8
          %s12036 = scalar_lea.hbm %s1, %s12035
          %s12037 = sshll.u32 %s12025, 4
          %s12038 = int_to_ptr.vmem [resolvable:$true] %s12037
          %s12039 = sshll.u32 %s12036, 4
          %s12040 = int_to_ptr.hbm [resolvable:$true] %s12039
          %12045 = dma.vmem_to_hbm [thread:$0]  %s12038, 2048, %s12040, %s12022, 128, 128, 8
        $region32: #{maxpool2d_pallas.1} parent=23 // pred_fallthru
          _
      $region24: #{maxpool2d_pallas.1} parent=5 // pred_fallthru
        _
      %p12046 = scmp.le.s32.totalorder 2, %s13
      // Predicated region
      $region33: #{maxpool2d_pallas.1} parent=5 // pred_check
        %p12047 = pneg %p12046
      $region34: #{maxpool2d_pallas.1} parent=5 // pred_check_branch
        %12049 = sbr.rel (%p12047) target = $region36
      $region35: #{maxpool2d_pallas.1} parent=5 // pred_region
        %s12050 = ssub.s32 %s13, 2
        // Predicated region
        $region37: #{maxpool2d_pallas.1} parent=35 // pred_check
          %p12051 = pneg %p84
        $region38: #{maxpool2d_pallas.1} parent=35 // pred_check_branch
          %12053 = sbr.rel (%p12051) target = $region40
        $region39: #{maxpool2d_pallas.1} parent=35 // pred_region
          %s12054 = sand.u32 %s69, 1
          %s12055 = scalar_lea.sflag [#allocation4], %s12054
          %s12056 = sand.u32 %s69, 1
          %s12057 = smul.addr %s12056, 128
          %s12058 = scalar_lea.vmem [#allocation5], %s12057
          %12060 = dma.done %s12055, 2048
        $region40: #{maxpool2d_pallas.1} parent=35 // pred_fallthru
          _
      $region36: #{maxpool2d_pallas.1} parent=5 // pred_fallthru
        _
    $region6: #{maxpool2d_pallas.1} parent=1 // loop_footer
      %s17 = sadd.s32 1, %s13
    $region7: #{maxpool2d_pallas.1} parent=1 // loop_footer_branch
      %12 = sbr.rel target = $region3
    $region8: #{maxpool2d_pallas.1} parent=1 // loop_exit
      _
    %12061 = vsyncpa [#allocation3], 1
    %s12062 = scalar_lea.sflag [#allocation3], 1
    %12063 = vsyncpa %s12062, 1
    %12064 = vsyncpa [#allocation4], 1
    %s12065 = scalar_lea.sflag [#allocation4], 1
    %12066 = vsyncpa %s12065, 1

</llo_original>
